<compile_context>
chip_gen: v7x
topology: tpu7x:2x2x1
jax: 0.10.0
libtpu: 0.0.40
codegen_flags: <defaults>
</compile_context>

<pallas_src>
import functools
import math

import jax
import jax.numpy as jnp
from jax import lax
from jax.experimental import pallas as pl
from jax.experimental.pallas import tpu as pltpu

LN_EPS = 1e-5  # PyTorch LayerNorm default


# ---------------------------------------------------------------------------
# in-kernel helpers
# ---------------------------------------------------------------------------
def _mm(x, w_bf16):
    # x (rows, in) -> bf16 @ pre-transposed bf16 weight (in, out); f32 accumulate.
    return jnp.dot(x.astype(jnp.bfloat16), w_bf16,
                   preferred_element_type=jnp.float32)


def _layernorm(x, w, b):
    mu = jnp.mean(x, axis=-1, keepdims=True)
    var = jnp.mean((x - mu) ** 2, axis=-1, keepdims=True)
    return (x - mu) * lax.rsqrt(var + LN_EPS) * w + b


def _const_spec(w, single_buffer):
    # Full-array block with a constant index_map: the weight is fetched once.
    idx = lambda i, r=w.ndim: (0,) * r
    if single_buffer:
        # Constant-index blocks never change between grid steps; single-buffer
        # them so they do not pay the default 2x double-buffer VMEM cost.
        return pl.BlockSpec(w.shape, idx,
                            pipeline_mode=pl.Buffered(buffer_count=1))
    return pl.BlockSpec(w.shape, idx)


def _vmem_limit_bytes(frac=0.8, hi=100 << 20):
    # ~100 MiB on v5e/v6e (128 MiB physical), ~51 MiB on v7x (64 MiB physical).
    try:
        cap = int(pltpu.get_tpu_info().vmem_capacity_bytes)
        return int(min(cap * frac, hi))
    except Exception:
        return None  # leave the compiler default if the query is unavailable


def _call_with_fallback(build, args):
    # First try with single-buffered (Buffered(1)) constant weight blocks; if
    # this jax build rejects pipeline_mode, retry with default specs.
    try:
        return build(True)(*args)
    except Exception:
        return build(False)(*args)


# ---------------------------------------------------------------------------
# Kernel 1: fused SingleParaEncoder / SingleLogEncoder trunk
#   all transformer layers + ffn (Linear/ReLU/Linear) + AdaptiveAvgPool1d(1)
#   in a single kernel; grid iterates over batch tiles (Bt sequences each).
# ---------------------------------------------------------------------------
def _encoder_kernel(x_ref,
                    wqkv_ref, bqkv_ref, wo_ref, bo_ref,
                    ln1w_ref, ln1b_ref, ln2w_ref, ln2b_ref,
                    w1_ref, b1_ref, w2_ref, b2_ref,
                    fw1_ref, fb1_ref, fw2_ref, fb2_ref,
                    out_ref, *, n_heads, n_layers):
    bt, seq, d_model = x_ref.shape
    dh = d_model // n_heads
    rows = bt * seq
    x = x_ref[...].reshape(rows, d_model)             # (R, D) f32, whole batch tile

    for l in range(n_layers):                         # fused static layer loop
        # ---- multi-head self-attention (post-norm, eval-mode dropout) ----
        # One (R,D)@(D,3D) projection; Q columns pre-scaled by 1/sqrt(dh).
        qkv = _mm(x, wqkv_ref[l]) + bqkv_ref[l]       # (R, 3D) f32
        # Single bf16 cast of the whole projection (replaces 3*H per-head casts
        # and halves the relayout bytes of the head slices below).
        qkv_bf = qkv.astype(jnp.bfloat16).reshape(bt, seq, 3 * d_model)
        # q/k/v split at D boundaries (128-lane aligned at production D=768).
        q = qkv_bf[:, :, 0 * d_model:1 * d_model]
        k = qkv_bf[:, :, 1 * d_model:2 * d_model]
        v = qkv_bf[:, :, 2 * d_model:3 * d_model]

        head_outs = []
        for h in range(n_heads):
            qh = q[:, :, h * dh:(h + 1) * dh]         # (bt, seq, dh) bf16
            kh = k[:, :, h * dh:(h + 1) * dh]
            vh = v[:, :, h * dh:(h + 1) * dh]
            s = jnp.einsum('bqd,bkd->bqk', qh, kh,
                           preferred_element_type=jnp.float32)
            s = s - jnp.max(s, axis=-1, keepdims=True)
            p = jnp.exp(s)
            # exact softmax normalization, applied to the small (bt,seq,dh)
            # head output instead of the (bt,seq,seq) probability matrix.
            inv = 1.0 / jnp.sum(p, axis=-1, keepdims=True)
            oh = jnp.einsum('bqk,bkd->bqd', p.astype(jnp.bfloat16), vh,
                            preferred_element_type=jnp.float32)
            head_outs.append(oh * inv)
        # Concatenate heads and do ONE K=D output projection (good MXU fill),
        # instead of H K=dh matmuls folded with f32 accumulations.
        concat = jnp.concatenate(head_outs, axis=-1).reshape(rows, d_model)
        attn = _mm(concat, wo_ref[l]) + bo_ref[l]

        # ---- post-norm residual blocks ----
        y = _layernorm(x + attn, ln1w_ref[l], ln1b_ref[l])
        ff = jnp.maximum(_mm(y, w1_ref[l]) + b1_ref[l], 0.0)
        ff = _mm(ff, w2_ref[l]) + b2_ref[l]
        x = _layernorm(y + ff, ln2w_ref[l], ln2b_ref[l])

    # ---- ffn head (Linear -> ReLU -> Linear) then AdaptiveAvgPool1d(1) ----
    hid = jnp.maximum(_mm(x, fw1_ref[...]) + fb1_ref[...], 0.0)
    o = _mm(hid, fw2_ref[...]) + fb2_ref[...]          # (R, D)
    out_ref[...] = jnp.mean(o.reshape(bt, seq, d_model), axis=1)   # (Bt, D)


_ENC_WEIGHT_NAMES = ("wqkv", "bqkv", "wo", "bo", "ln1w", "ln1b", "ln2w", "ln2b",
                     "w1", "b1", "w2", "b2", "fw1", "fb1", "fw2", "fb2")


def _pick_block_b(batch, seq, target_rows=512, max_rows=1024):
    """Pick the batch tile Bt.

    Output block (Bt, D) needs Bt % 8 == 0 or Bt == batch; prefer >= 2 grid
    steps (so ("parallel",) can shard across v7x's two TensorCores), then the
    largest tile within a row budget that reaches >= target_rows MXU rows.
    """
    divisors = [d for d in range(1, batch + 1)
                if batch % d == 0 and (d % 8 == 0 or d == batch)]
    multi = [d for d in divisors if batch // d >= 2]
    pool = multi if multi else divisors
    within = [d for d in pool if d * seq <= max_rows]
    pool = within if within else [min(pool)]
    reach = [d for d in pool if d * seq >= target_rows]
    return max(reach) if reach else max(pool)


def encoder_forward(x, ep, n_heads):
    """x: (B, S, D) token embeddings -> (B, D) pooled representation."""
    B, S, D = x.shape
    n_layers = ep["wqkv"].shape[0]
    weights = [ep[n] for n in _ENC_WEIGHT_NAMES]
    bt = _pick_block_b(B, S)
    kernel = functools.partial(_encoder_kernel, n_heads=n_heads, n_layers=n_layers)

    def build(single_buffer):
        return pl.pallas_call(
            kernel,
            out_shape=jax.ShapeDtypeStruct((B, D), jnp.float32),
            grid=(B // bt,),
            in_specs=[pl.BlockSpec((bt, S, D), lambda i: (i, 0, 0))]
                    + [_const_spec(w, single_buffer) for w in weights],
            out_specs=pl.BlockSpec((bt, D), lambda i: (i, 0)),
            compiler_params=pltpu.CompilerParams(
                dimension_semantics=("parallel",),
                vmem_limit_bytes=_vmem_limit_bytes()),
        )

    return _call_with_fallback(build, [x] + weights)


# ---------------------------------------------------------------------------
# Kernel 2: fused tail — per-group parameter mean-pool, shared linear applied
#   as (para+log)@W + 2b, then the whole seq_len==1 sequence-transformer stack
#   (attention degenerates to out_proj(v_proj(x))) and the identity final pool.
#   Tiny FLOPs (G rows) — kept in Pallas with single-buffered weights and a
#   small VMEM limit.
# ---------------------------------------------------------------------------
def _combine_seq_kernel(para_ref, log_ref, lw_ref, lb_ref,
                        wv_ref, bv_ref, wo_ref, bo_ref,
                        ln1w_ref, ln1b_ref, ln2w_ref, ln2b_ref,
                        w1_ref, b1_ref, w2_ref, b2_ref,
                        out_ref, *, n_layers):
    # linear(para_pooled) + linear(log_rep) == (para_pooled + log_rep) @ W + 2*b
    para_mean = jnp.mean(para_ref[...], axis=1)                 # (G, D)
    x = _mm(para_mean + log_ref[...], lw_ref[...]) + 2.0 * lb_ref[...]
    for l in range(n_layers):
        # seq_len == 1: softmax over a 1x1 score is 1 -> attn = (x@Wv+bv)@Wo+bo
        v = _mm(x, wv_ref[l]) + bv_ref[l]
        attn = _mm(v, wo_ref[l]) + bo_ref[l]
        y = _layernorm(x + attn, ln1w_ref[l], ln1b_ref[l])
        ff = jnp.maximum(_mm(y, w1_ref[l]) + b1_ref[l], 0.0)
        ff = _mm(ff, w2_ref[l]) + b2_ref[l]
        x = _layernorm(y + ff, ln2w_ref[l], ln2b_ref[l])
    out_ref[...] = x          # final AdaptiveAvgPool1d(1) over seq_len==1 is identity


_SEQ_WEIGHT_NAMES = ("wv", "bv", "wo", "bo", "ln1w", "ln1b", "ln2w", "ln2b",
                     "w1", "b1", "w2", "b2")


def combine_seq_forward(para_reps, log_reps, prepared):
    """para_reps: (G, P, D), log_reps: (G, D) -> (G, D)."""
    G, P, D = para_reps.shape
    sp = prepared["seq"]
    n_layers = sp["wv"].shape[0]
    weights = [prepared["lin_w"], prepared["lin_b"]] + [sp[n] for n in _SEQ_WEIGHT_NAMES]
    kernel = functools.partial(_combine_seq_kernel, n_layers=n_layers)

    def build(single_buffer):
        return pl.pallas_call(
            kernel,
            out_shape=jax.ShapeDtypeStruct((G, D), jnp.float32),
            grid=(1,),
            in_specs=[pl.BlockSpec((G, P, D), lambda i: (0, 0, 0)),
                      pl.BlockSpec((G, D), lambda i: (0, 0))]
                    + [_const_spec(w, single_buffer) for w in weights],
            out_specs=pl.BlockSpec((G, D), lambda i: (0, 0)),
            compiler_params=pltpu.CompilerParams(
                dimension_semantics=("arbitrary",),
                vmem_limit_bytes=_vmem_limit_bytes(hi=32 << 20)),
        )

    return _call_with_fallback(build, [para_reps, log_reps] + weights)


# ---------------------------------------------------------------------------
# Parameter initialization (deterministic, synthetic; PyTorch (out, in) layout)
# ---------------------------------------------------------------------------
def init_transformer_layer(key, d_model, dim_ff):
    ks = jax.random.split(key, 8)
    s = 0.02
    n = lambda k, shp: (jax.random.normal(k, shp, jnp.float32) * s)
    return dict(
        wqkv=n(ks[0], (3 * d_model, d_model)), bqkv=n(ks[1], (1, 3 * d_model)),
        wo=n(ks[2], (d_model, d_model)),       bo=n(ks[3], (1, d_model)),
        ln1w=jnp.ones((1, d_model), jnp.float32),
        ln1b=jnp.zeros((1, d_model), jnp.float32),
        ln2w=jnp.ones((1, d_model), jnp.float32),
        ln2b=jnp.zeros((1, d_model), jnp.float32),
        w1=n(ks[4], (dim_ff, d_model)), b1=n(ks[5], (1, dim_ff)),
        w2=n(ks[6], (d_model, dim_ff)), b2=n(ks[7], (1, d_model)),
    )


def init_single_encoder(key, d_model, dim_ff, n_layers):
    ks = jax.random.split(key, n_layers + 4)
    s = 0.02
    n = lambda k, shp: (jax.random.normal(k, shp, jnp.float32) * s)
    return dict(
        layers=[init_transformer_layer(ks[i], d_model, dim_ff)
                for i in range(n_layers)],
        ffn=dict(fw1=n(ks[n_layers + 0], (d_model, d_model)),
                 fb1=n(ks[n_layers + 1], (1, d_model)),
                 fw2=n(ks[n_layers + 2], (d_model, d_model)),
                 fb2=n(ks[n_layers + 3], (1, d_model))),
    )


def init_parameter_encoder(key, d_model, dim_ff, n_layers):
    k_para, k_log, k_seq, k_lin_w, k_lin_b = jax.random.split(key, 5)
    seq_keys = jax.random.split(k_seq, n_layers)
    s = 0.02
    return dict(
        para_encoder=init_single_encoder(k_para, d_model, dim_ff, n_layers),
        log_encoder=init_single_encoder(k_log, d_model, dim_ff, n_layers),
        seq_layers=[init_transformer_layer(seq_keys[i], d_model, dim_ff)
                    for i in range(n_layers)],
        linear_w=jax.random.normal(k_lin_w, (d_model, d_model), jnp.float32) * s,
        linear_b=jax.random.normal(k_lin_b, (1, d_model), jnp.float32) * s,
    )


# ---------------------------------------------------------------------------
# One-time host-side weight preparation: transpose to (in, out), cast matmul
# weights to bf16, fold 1/sqrt(dh) into the Q projection, and stack per-layer
# weights so one kernel consumes the whole layer stack.
# TODO(synk): fp8 weight storage for wqkv/w1/w2 (v7x MXU bf16 x fp8) needs
#             per-channel scaling; left as bf16.
# ---------------------------------------------------------------------------
def _stack_layers(layer_dicts):
    return {k: jnp.stack([ld[k] for ld in layer_dicts], axis=0) for k in layer_dicts[0]}


def prepare_encoder_layer(p, n_heads, d_model):
    dh = d_model // n_heads
    scale = 1.0 / math.sqrt(dh)
    qs = jnp.concatenate([jnp.full((d_model,), scale, jnp.float32),
                          jnp.ones((2 * d_model,), jnp.float32)])
    return dict(
        wqkv=(p["wqkv"] * qs[:, None]).T.astype(jnp.bfloat16),   # (D, 3D)
        bqkv=(p["bqkv"] * qs[None, :]).astype(jnp.float32),      # (1, 3D)
        wo=p["wo"].T.astype(jnp.bfloat16),                       # (D, D): single Wo matmul
        bo=p["bo"],
        ln1w=p["ln1w"], ln1b=p["ln1b"], ln2w=p["ln2w"], ln2b=p["ln2b"],
        w1=p["w1"].T.astype(jnp.bfloat16), b1=p["b1"],
        w2=p["w2"].T.astype(jnp.bfloat16), b2=p["b2"],
    )


def prepare_single_encoder(params, n_heads, d_model):
    ep = _stack_layers([prepare_encoder_layer(lp, n_heads, d_model)
                        for lp in params["layers"]])
    f = params["ffn"]
    ep.update(fw1=f["fw1"].T.astype(jnp.bfloat16), fb1=f["fb1"],
              fw2=f["fw2"].T.astype(jnp.bfloat16), fb2=f["fb2"])
    return ep


def prepare_seq_layer(p, d_model):
    # seq_len == 1: only the V part of the in-projection is ever needed.
    return dict(
        wv=p["wqkv"][2 * d_model:, :].T.astype(jnp.bfloat16),   # (D, D)
        bv=p["bqkv"][:, 2 * d_model:],                          # (1, D)
        wo=p["wo"].T.astype(jnp.bfloat16), bo=p["bo"],
        ln1w=p["ln1w"], ln1b=p["ln1b"], ln2w=p["ln2w"], ln2b=p["ln2b"],
        w1=p["w1"].T.astype(jnp.bfloat16), b1=p["b1"],
        w2=p["w2"].T.astype(jnp.bfloat16), b2=p["b2"],
    )


def prepare_parameter_encoder(params, n_heads, d_model):
    return dict(
        para_encoder=prepare_single_encoder(params["para_encoder"], n_heads, d_model),
        log_encoder=prepare_single_encoder(params["log_encoder"], n_heads, d_model),
        seq=_stack_layers([prepare_seq_layer(lp, d_model)
                           for lp in params["seq_layers"]]),
        lin_w=params["linear_w"].T.astype(jnp.bfloat16),
        lin_b=params["linear_b"],
    )


# ---------------------------------------------------------------------------
# Forward pass (glue in plain JAX, all compute inside two fused Pallas kernels)
# ---------------------------------------------------------------------------
def parameter_encoder_forward(log_emb, para_emb, prepared, n_heads):
    """log_emb: (G, S_log, D); para_emb: (G, P, S_para, D) -> (G, D)."""
    G, _, D = log_emb.shape
    _, P, S_par, _ = para_emb.shape

    # SingleLogEncoder over each log template (batch = G)
    log_reps = encoder_forward(log_emb, prepared["log_encoder"], n_heads)     # (G, D)

    # SingleParaEncoder over every parameter of every group (batch = G*P)
    para_flat = para_emb.reshape(G * P, S_par, D)
    para_reps = encoder_forward(para_flat, prepared["para_encoder"],
                                n_heads).reshape(G, P, D)

    # parameter mean-pool + shared linear + seq transformer (+ identity final pool)
    return combine_seq_forward(para_reps, log_reps, prepared)                 # (G, D)


# ---------------------------------------------------------------------------
if __name__ == "__main__":
    D = 32        # embedding_dim   (768 in the original module)
    H = 4         # n_heads         (12 in the original module)
    FF = 64       # dim_feedforward (2048 PyTorch default)
    LAYERS = 2    # transformer_layers
    G = 3         # number of log-template groups
    P = 2         # parameters per group
    S_LOG = 8     # log-template token length
    S_PAR = 8     # parameter token length

    key = jax.random.PRNGKey(0)
    k_param, k_log, k_para = jax.random.split(key, 3)

    raw_params = init_parameter_encoder(k_param, D, FF, LAYERS)
    prepared = prepare_parameter_encoder(raw_params, H, D)

    log_emb = jax.random.normal(k_log, (G, S_LOG, D), jnp.float32)
    para_emb = jax.random.normal(k_para, (G, P, S_PAR, D), jnp.float32)

    out = parameter_encoder_forward(log_emb, para_emb, prepared, n_heads=H)
    out = jax.block_until_ready(out)

    assert out.shape == (G, D), out.shape
    assert jnp.all(jnp.isfinite(out))
    print("KERNEL_OK")
</pallas_src>

<mosaic_0001>
module attributes {stable_mosaic.version = 11 : i64} {
  func.func @_encoder_kernel(%arg0: i32, %arg1: memref<3x8x32xf32, #tpu.memory_space<vmem>>, %arg2: memref<2x32x96xbf16, #tpu.memory_space<vmem>>, %arg3: memref<2x1x96xf32, #tpu.memory_space<vmem>>, %arg4: memref<2x32x32xbf16, #tpu.memory_space<vmem>>, %arg5: memref<2x1x32xf32, #tpu.memory_space<vmem>>, %arg6: memref<2x1x32xf32, #tpu.memory_space<vmem>>, %arg7: memref<2x1x32xf32, #tpu.memory_space<vmem>>, %arg8: memref<2x1x32xf32, #tpu.memory_space<vmem>>, %arg9: memref<2x1x32xf32, #tpu.memory_space<vmem>>, %arg10: memref<2x32x64xbf16, #tpu.memory_space<vmem>>, %arg11: memref<2x1x64xf32, #tpu.memory_space<vmem>>, %arg12: memref<2x64x32xbf16, #tpu.memory_space<vmem>>, %arg13: memref<2x1x32xf32, #tpu.memory_space<vmem>>, %arg14: memref<32x32xbf16, #tpu.memory_space<vmem>>, %arg15: memref<1x32xf32, #tpu.memory_space<vmem>>, %arg16: memref<32x32xbf16, #tpu.memory_space<vmem>>, %arg17: memref<1x32xf32, #tpu.memory_space<vmem>>, %arg18: memref<3x32xf32, #tpu.memory_space<vmem>>) attributes {dimension_semantics = [#tpu.dimension_semantics<parallel>], iteration_bounds = array<i64: 1>, scalar_prefetch = 0 : i64, scratch_operands = 0 : i64, tpu.core_type = #tpu.core_type<tc>, window_params = [{transform_indices = @transform_0, window_bounds = array<i64: 3, 8, 32>}, {pipeline_mode = #tpu.pipeline_mode<synchronous>, transform_indices = @transform_1, window_bounds = array<i64: 2, 32, 96>}, {pipeline_mode = #tpu.pipeline_mode<synchronous>, transform_indices = @transform_2, window_bounds = array<i64: 2, 1, 96>}, {pipeline_mode = #tpu.pipeline_mode<synchronous>, transform_indices = @transform_3, window_bounds = array<i64: 2, 32, 32>}, {pipeline_mode = #tpu.pipeline_mode<synchronous>, transform_indices = @transform_4, window_bounds = array<i64: 2, 1, 32>}, {pipeline_mode = #tpu.pipeline_mode<synchronous>, transform_indices = @transform_5, window_bounds = array<i64: 2, 1, 32>}, {pipeline_mode = #tpu.pipeline_mode<synchronous>, transform_indices = @transform_6, window_bounds = array<i64: 2, 1, 32>}, {pipeline_mode = #tpu.pipeline_mode<synchronous>, transform_indices = @transform_7, window_bounds = array<i64: 2, 1, 32>}, {pipeline_mode = #tpu.pipeline_mode<synchronous>, transform_indices = @transform_8, window_bounds = array<i64: 2, 1, 32>}, {pipeline_mode = #tpu.pipeline_mode<synchronous>, transform_indices = @transform_9, window_bounds = array<i64: 2, 32, 64>}, {pipeline_mode = #tpu.pipeline_mode<synchronous>, transform_indices = @transform_10, window_bounds = array<i64: 2, 1, 64>}, {pipeline_mode = #tpu.pipeline_mode<synchronous>, transform_indices = @transform_11, window_bounds = array<i64: 2, 64, 32>}, {pipeline_mode = #tpu.pipeline_mode<synchronous>, transform_indices = @transform_12, window_bounds = array<i64: 2, 1, 32>}, {pipeline_mode = #tpu.pipeline_mode<synchronous>, transform_indices = @transform_13, window_bounds = array<i64: 32, 32>}, {pipeline_mode = #tpu.pipeline_mode<synchronous>, transform_indices = @transform_14, window_bounds = array<i64: 1, 32>}, {pipeline_mode = #tpu.pipeline_mode<synchronous>, transform_indices = @transform_15, window_bounds = array<i64: 32, 32>}, {pipeline_mode = #tpu.pipeline_mode<synchronous>, transform_indices = @transform_16, window_bounds = array<i64: 1, 32>}, {transform_indices = @transform_17, window_bounds = array<i64: 3, 32>}]} {
    %c0 = arith.constant 0 : index
    %c0_0 = arith.constant 0 : index
    %c0_1 = arith.constant 0 : index
    %0 = vector.load %arg1[%c0, %c0_0, %c0_1] : memref<3x8x32xf32, #tpu.memory_space<vmem>>, vector<3x8x32xf32>
    %1 = vector.shape_cast %0 : vector<3x8x32xf32> to vector<24x32xf32>
    %c0_2 = arith.constant 0 : index
    %c0_3 = arith.constant 0 : index
    %c0_4 = arith.constant 0 : index
    %2 = vector.load %arg2[%c0_2, %c0_3, %c0_4] : memref<2x32x96xbf16, #tpu.memory_space<vmem>>, vector<1x32x96xbf16>
    %3 = vector.shape_cast %2 : vector<1x32x96xbf16> to vector<32x96xbf16>
    %4 = arith.truncf %1 : vector<24x32xf32> to vector<24x32xbf16>
    %cst = arith.constant dense<0.000000e+00> : vector<24x96xf32>
    %5 = tpu.matmul %4, %3, %cst {dimension_numbers = #tpu.dot_dimension_numbers<[1], [0], [0], [1], [0, 0, 1, 1], [], []>} : vector<24x32xbf16>, vector<32x96xbf16>, vector<24x96xf32> -> vector<24x96xf32>
    %c0_5 = arith.constant 0 : index
    %c0_6 = arith.constant 0 : index
    %c0_7 = arith.constant 0 : index
    %6 = vector.load %arg3[%c0_5, %c0_6, %c0_7] : memref<2x1x96xf32, #tpu.memory_space<vmem>>, vector<1x1x96xf32>
    %7 = vector.shape_cast %6 : vector<1x1x96xf32> to vector<1x96xf32>
    %8 = vector.broadcast %7 : vector<1x96xf32> to vector<24x96xf32>
    %9 = arith.addf %5, %8 : vector<24x96xf32>
    %10 = arith.truncf %9 : vector<24x96xf32> to vector<24x96xbf16>
    %11 = vector.shape_cast %10 : vector<24x96xbf16> to vector<3x8x96xbf16>
    %12 = vector.extract_strided_slice %11 {offsets = [0, 0, 0], sizes = [3, 8, 32], strides = [1, 1, 1]} : vector<3x8x96xbf16> to vector<3x8x32xbf16>
    %13 = vector.extract_strided_slice %11 {offsets = [0, 0, 32], sizes = [3, 8, 32], strides = [1, 1, 1]} : vector<3x8x96xbf16> to vector<3x8x32xbf16>
    %14 = vector.extract_strided_slice %11 {offsets = [0, 0, 64], sizes = [3, 8, 32], strides = [1, 1, 1]} : vector<3x8x96xbf16> to vector<3x8x32xbf16>
    %15 = vector.extract_strided_slice %12 {offsets = [0, 0, 0], sizes = [3, 8, 8], strides = [1, 1, 1]} : vector<3x8x32xbf16> to vector<3x8x8xbf16>
    %16 = vector.extract_strided_slice %13 {offsets = [0, 0, 0], sizes = [3, 8, 8], strides = [1, 1, 1]} : vector<3x8x32xbf16> to vector<3x8x8xbf16>
    %17 = vector.extract_strided_slice %14 {offsets = [0, 0, 0], sizes = [3, 8, 8], strides = [1, 1, 1]} : vector<3x8x32xbf16> to vector<3x8x8xbf16>
    "tpu.trace_start"() <{level = 10 : i32, message = "bqd,bkd->bqk"}> : () -> ()
    %cst_8 = arith.constant dense<0.000000e+00> : vector<3x8x8xf32>
    %18 = tpu.matmul %15, %16, %cst_8 {dimension_numbers = #tpu.dot_dimension_numbers<[2], [2], [1], [1], [0, 0, 0, 1, 1, 1], [0], [0]>} : vector<3x8x8xbf16>, vector<3x8x8xbf16>, vector<3x8x8xf32> -> vector<3x8x8xf32>
    "tpu.trace_stop"() : () -> ()
    %cst_9 = arith.constant dense<0xFF800000> : vector<3x8xf32>
    %19 = vector.multi_reduction <maximumf>, %18, %cst_9 [2] : vector<3x8x8xf32> to vector<3x8xf32>
    %20 = vector.shape_cast %19 : vector<3x8xf32> to vector<3x8x1xf32>
    %21 = vector.broadcast %20 : vector<3x8x1xf32> to vector<3x8x8xf32>
    %22 = arith.subf %18, %21 : vector<3x8x8xf32>
    %23 = math.exp %22 : vector<3x8x8xf32>
    %cst_10 = arith.constant dense<0.000000e+00> : vector<3x8xf32>
    %24 = vector.multi_reduction <add>, %23, %cst_10 [2] : vector<3x8x8xf32> to vector<3x8xf32>
    %25 = vector.shape_cast %24 : vector<3x8xf32> to vector<3x8x1xf32>
    %cst_11 = arith.constant 1.000000e+00 : f32
    %26 = vector.broadcast %cst_11 : f32 to vector<3x8x1xf32>
    %27 = arith.divf %26, %25 : vector<3x8x1xf32>
    %28 = arith.truncf %23 : vector<3x8x8xf32> to vector<3x8x8xbf16>
    "tpu.trace_start"() <{level = 10 : i32, message = "bqk,bkd->bqd"}> : () -> ()
    %cst_12 = arith.constant dense<0.000000e+00> : vector<3x8x8xf32>
    %29 = tpu.matmul %28, %17, %cst_12 {dimension_numbers = #tpu.dot_dimension_numbers<[2], [1], [1], [2], [0, 0, 0, 1, 1, 2], [0], [0]>} : vector<3x8x8xbf16>, vector<3x8x8xbf16>, vector<3x8x8xf32> -> vector<3x8x8xf32>
    "tpu.trace_stop"() : () -> ()
    %30 = vector.broadcast %27 : vector<3x8x1xf32> to vector<3x8x8xf32>
    %31 = arith.mulf %29, %30 : vector<3x8x8xf32>
    %32 = vector.extract_strided_slice %12 {offsets = [0, 0, 8], sizes = [3, 8, 8], strides = [1, 1, 1]} : vector<3x8x32xbf16> to vector<3x8x8xbf16>
    %33 = vector.extract_strided_slice %13 {offsets = [0, 0, 8], sizes = [3, 8, 8], strides = [1, 1, 1]} : vector<3x8x32xbf16> to vector<3x8x8xbf16>
    %34 = vector.extract_strided_slice %14 {offsets = [0, 0, 8], sizes = [3, 8, 8], strides = [1, 1, 1]} : vector<3x8x32xbf16> to vector<3x8x8xbf16>
    "tpu.trace_start"() <{level = 10 : i32, message = "bqd,bkd->bqk"}> : () -> ()
    %cst_13 = arith.constant dense<0.000000e+00> : vector<3x8x8xf32>
    %35 = tpu.matmul %32, %33, %cst_13 {dimension_numbers = #tpu.dot_dimension_numbers<[2], [2], [1], [1], [0, 0, 0, 1, 1, 1], [0], [0]>} : vector<3x8x8xbf16>, vector<3x8x8xbf16>, vector<3x8x8xf32> -> vector<3x8x8xf32>
    "tpu.trace_stop"() : () -> ()
    %cst_14 = arith.constant dense<0xFF800000> : vector<3x8xf32>
    %36 = vector.multi_reduction <maximumf>, %35, %cst_14 [2] : vector<3x8x8xf32> to vector<3x8xf32>
    %37 = vector.shape_cast %36 : vector<3x8xf32> to vector<3x8x1xf32>
    %38 = vector.broadcast %37 : vector<3x8x1xf32> to vector<3x8x8xf32>
    %39 = arith.subf %35, %38 : vector<3x8x8xf32>
    %40 = math.exp %39 : vector<3x8x8xf32>
    %cst_15 = arith.constant dense<0.000000e+00> : vector<3x8xf32>
    %41 = vector.multi_reduction <add>, %40, %cst_15 [2] : vector<3x8x8xf32> to vector<3x8xf32>
    %42 = vector.shape_cast %41 : vector<3x8xf32> to vector<3x8x1xf32>
    %cst_16 = arith.constant 1.000000e+00 : f32
    %43 = vector.broadcast %cst_16 : f32 to vector<3x8x1xf32>
    %44 = arith.divf %43, %42 : vector<3x8x1xf32>
    %45 = arith.truncf %40 : vector<3x8x8xf32> to vector<3x8x8xbf16>
    "tpu.trace_start"() <{level = 10 : i32, message = "bqk,bkd->bqd"}> : () -> ()
    %cst_17 = arith.constant dense<0.000000e+00> : vector<3x8x8xf32>
    %46 = tpu.matmul %45, %34, %cst_17 {dimension_numbers = #tpu.dot_dimension_numbers<[2], [1], [1], [2], [0, 0, 0, 1, 1, 2], [0], [0]>} : vector<3x8x8xbf16>, vector<3x8x8xbf16>, vector<3x8x8xf32> -> vector<3x8x8xf32>
    "tpu.trace_stop"() : () -> ()
    %47 = vector.broadcast %44 : vector<3x8x1xf32> to vector<3x8x8xf32>
    %48 = arith.mulf %46, %47 : vector<3x8x8xf32>
    %49 = vector.extract_strided_slice %12 {offsets = [0, 0, 16], sizes = [3, 8, 8], strides = [1, 1, 1]} : vector<3x8x32xbf16> to vector<3x8x8xbf16>
    %50 = vector.extract_strided_slice %13 {offsets = [0, 0, 16], sizes = [3, 8, 8], strides = [1, 1, 1]} : vector<3x8x32xbf16> to vector<3x8x8xbf16>
    %51 = vector.extract_strided_slice %14 {offsets = [0, 0, 16], sizes = [3, 8, 8], strides = [1, 1, 1]} : vector<3x8x32xbf16> to vector<3x8x8xbf16>
    "tpu.trace_start"() <{level = 10 : i32, message = "bqd,bkd->bqk"}> : () -> ()
    %cst_18 = arith.constant dense<0.000000e+00> : vector<3x8x8xf32>
    %52 = tpu.matmul %49, %50, %cst_18 {dimension_numbers = #tpu.dot_dimension_numbers<[2], [2], [1], [1], [0, 0, 0, 1, 1, 1], [0], [0]>} : vector<3x8x8xbf16>, vector<3x8x8xbf16>, vector<3x8x8xf32> -> vector<3x8x8xf32>
    "tpu.trace_stop"() : () -> ()
    %cst_19 = arith.constant dense<0xFF800000> : vector<3x8xf32>
    %53 = vector.multi_reduction <maximumf>, %52, %cst_19 [2] : vector<3x8x8xf32> to vector<3x8xf32>
    %54 = vector.shape_cast %53 : vector<3x8xf32> to vector<3x8x1xf32>
    %55 = vector.broadcast %54 : vector<3x8x1xf32> to vector<3x8x8xf32>
    %56 = arith.subf %52, %55 : vector<3x8x8xf32>
    %57 = math.exp %56 : vector<3x8x8xf32>
    %cst_20 = arith.constant dense<0.000000e+00> : vector<3x8xf32>
    %58 = vector.multi_reduction <add>, %57, %cst_20 [2] : vector<3x8x8xf32> to vector<3x8xf32>
    %59 = vector.shape_cast %58 : vector<3x8xf32> to vector<3x8x1xf32>
    %cst_21 = arith.constant 1.000000e+00 : f32
    %60 = vector.broadcast %cst_21 : f32 to vector<3x8x1xf32>
    %61 = arith.divf %60, %59 : vector<3x8x1xf32>
    %62 = arith.truncf %57 : vector<3x8x8xf32> to vector<3x8x8xbf16>
    "tpu.trace_start"() <{level = 10 : i32, message = "bqk,bkd->bqd"}> : () -> ()
    %cst_22 = arith.constant dense<0.000000e+00> : vector<3x8x8xf32>
    %63 = tpu.matmul %62, %51, %cst_22 {dimension_numbers = #tpu.dot_dimension_numbers<[2], [1], [1], [2], [0, 0, 0, 1, 1, 2], [0], [0]>} : vector<3x8x8xbf16>, vector<3x8x8xbf16>, vector<3x8x8xf32> -> vector<3x8x8xf32>
    "tpu.trace_stop"() : () -> ()
    %64 = vector.broadcast %61 : vector<3x8x1xf32> to vector<3x8x8xf32>
    %65 = arith.mulf %63, %64 : vector<3x8x8xf32>
    %66 = vector.extract_strided_slice %12 {offsets = [0, 0, 24], sizes = [3, 8, 8], strides = [1, 1, 1]} : vector<3x8x32xbf16> to vector<3x8x8xbf16>
    %67 = vector.extract_strided_slice %13 {offsets = [0, 0, 24], sizes = [3, 8, 8], strides = [1, 1, 1]} : vector<3x8x32xbf16> to vector<3x8x8xbf16>
    %68 = vector.extract_strided_slice %14 {offsets = [0, 0, 24], sizes = [3, 8, 8], strides = [1, 1, 1]} : vector<3x8x32xbf16> to vector<3x8x8xbf16>
    "tpu.trace_start"() <{level = 10 : i32, message = "bqd,bkd->bqk"}> : () -> ()
    %cst_23 = arith.constant dense<0.000000e+00> : vector<3x8x8xf32>
    %69 = tpu.matmul %66, %67, %cst_23 {dimension_numbers = #tpu.dot_dimension_numbers<[2], [2], [1], [1], [0, 0, 0, 1, 1, 1], [0], [0]>} : vector<3x8x8xbf16>, vector<3x8x8xbf16>, vector<3x8x8xf32> -> vector<3x8x8xf32>
    "tpu.trace_stop"() : () -> ()
    %cst_24 = arith.constant dense<0xFF800000> : vector<3x8xf32>
    %70 = vector.multi_reduction <maximumf>, %69, %cst_24 [2] : vector<3x8x8xf32> to vector<3x8xf32>
    %71 = vector.shape_cast %70 : vector<3x8xf32> to vector<3x8x1xf32>
    %72 = vector.broadcast %71 : vector<3x8x1xf32> to vector<3x8x8xf32>
    %73 = arith.subf %69, %72 : vector<3x8x8xf32>
    %74 = math.exp %73 : vector<3x8x8xf32>
    %cst_25 = arith.constant dense<0.000000e+00> : vector<3x8xf32>
    %75 = vector.multi_reduction <add>, %74, %cst_25 [2] : vector<3x8x8xf32> to vector<3x8xf32>
    %76 = vector.shape_cast %75 : vector<3x8xf32> to vector<3x8x1xf32>
    %cst_26 = arith.constant 1.000000e+00 : f32
    %77 = vector.broadcast %cst_26 : f32 to vector<3x8x1xf32>
    %78 = arith.divf %77, %76 : vector<3x8x1xf32>
    %79 = arith.truncf %74 : vector<3x8x8xf32> to vector<3x8x8xbf16>
    "tpu.trace_start"() <{level = 10 : i32, message = "bqk,bkd->bqd"}> : () -> ()
    %cst_27 = arith.constant dense<0.000000e+00> : vector<3x8x8xf32>
    %80 = tpu.matmul %79, %68, %cst_27 {dimension_numbers = #tpu.dot_dimension_numbers<[2], [1], [1], [2], [0, 0, 0, 1, 1, 2], [0], [0]>} : vector<3x8x8xbf16>, vector<3x8x8xbf16>, vector<3x8x8xf32> -> vector<3x8x8xf32>
    "tpu.trace_stop"() : () -> ()
    %81 = vector.broadcast %78 : vector<3x8x1xf32> to vector<3x8x8xf32>
    %82 = arith.mulf %80, %81 : vector<3x8x8xf32>
    %83 = tpu.concatenate %31, %48, %65, %82 in 2 : vector<3x8x8xf32>, vector<3x8x8xf32>, vector<3x8x8xf32>, vector<3x8x8xf32> -> vector<3x8x32xf32>
    %84 = vector.shape_cast %83 : vector<3x8x32xf32> to vector<24x32xf32>
    %c0_28 = arith.constant 0 : index
    %c0_29 = arith.constant 0 : index
    %c0_30 = arith.constant 0 : index
    %85 = vector.load %arg4[%c0_28, %c0_29, %c0_30] : memref<2x32x32xbf16, #tpu.memory_space<vmem>>, vector<1x32x32xbf16>
    %86 = vector.shape_cast %85 : vector<1x32x32xbf16> to vector<32x32xbf16>
    %87 = arith.truncf %84 : vector<24x32xf32> to vector<24x32xbf16>
    %cst_31 = arith.constant dense<0.000000e+00> : vector<24x32xf32>
    %88 = tpu.matmul %87, %86, %cst_31 {dimension_numbers = #tpu.dot_dimension_numbers<[1], [0], [0], [1], [0, 0, 1, 1], [], []>} : vector<24x32xbf16>, vector<32x32xbf16>, vector<24x32xf32> -> vector<24x32xf32>
    %c0_32 = arith.constant 0 : index
    %c0_33 = arith.constant 0 : index
    %c0_34 = arith.constant 0 : index
    %89 = vector.load %arg5[%c0_32, %c0_33, %c0_34] : memref<2x1x32xf32, #tpu.memory_space<vmem>>, vector<1x1x32xf32>
    %90 = vector.shape_cast %89 : vector<1x1x32xf32> to vector<1x32xf32>
    %91 = vector.broadcast %90 : vector<1x32xf32> to vector<24x32xf32>
    %92 = arith.addf %88, %91 : vector<24x32xf32>
    %93 = arith.addf %1, %92 : vector<24x32xf32>
    %c0_35 = arith.constant 0 : index
    %c0_36 = arith.constant 0 : index
    %c0_37 = arith.constant 0 : index
    %94 = vector.load %arg6[%c0_35, %c0_36, %c0_37] : memref<2x1x32xf32, #tpu.memory_space<vmem>>, vector<1x1x32xf32>
    %95 = vector.shape_cast %94 : vector<1x1x32xf32> to vector<1x32xf32>
    %c0_38 = arith.constant 0 : index
    %c0_39 = arith.constant 0 : index
    %c0_40 = arith.constant 0 : index
    %96 = vector.load %arg7[%c0_38, %c0_39, %c0_40] : memref<2x1x32xf32, #tpu.memory_space<vmem>>, vector<1x1x32xf32>
    %97 = vector.shape_cast %96 : vector<1x1x32xf32> to vector<1x32xf32>
    %cst_41 = arith.constant dense<0.000000e+00> : vector<24xf32>
    %98 = vector.multi_reduction <add>, %93, %cst_41 [1] : vector<24x32xf32> to vector<24xf32>
    %99 = vector.shape_cast %98 : vector<24xf32> to vector<24x1xf32>
    %cst_42 = arith.constant 3.200000e+01 : f32
    %100 = vector.broadcast %cst_42 : f32 to vector<24x1xf32>
    %101 = arith.divf %99, %100 : vector<24x1xf32>
    %102 = vector.broadcast %101 : vector<24x1xf32> to vector<24x32xf32>
    %103 = arith.subf %93, %102 : vector<24x32xf32>
    %104 = arith.mulf %103, %103 : vector<24x32xf32>
    %cst_43 = arith.constant dense<0.000000e+00> : vector<24xf32>
    %105 = vector.multi_reduction <add>, %104, %cst_43 [1] : vector<24x32xf32> to vector<24xf32>
    %106 = vector.shape_cast %105 : vector<24xf32> to vector<24x1xf32>
    %cst_44 = arith.constant 3.200000e+01 : f32
    %107 = vector.broadcast %cst_44 : f32 to vector<24x1xf32>
    %108 = arith.divf %106, %107 : vector<24x1xf32>
    %109 = vector.broadcast %101 : vector<24x1xf32> to vector<24x32xf32>
    %110 = arith.subf %93, %109 : vector<24x32xf32>
    %cst_45 = arith.constant 9.99999974E-6 : f32
    %111 = vector.broadcast %cst_45 : f32 to vector<24x1xf32>
    %112 = arith.addf %108, %111 : vector<24x1xf32>
    %113 = math.rsqrt %112 : vector<24x1xf32>
    %114 = vector.broadcast %113 : vector<24x1xf32> to vector<24x32xf32>
    %115 = arith.mulf %110, %114 : vector<24x32xf32>
    %116 = vector.broadcast %95 : vector<1x32xf32> to vector<24x32xf32>
    %117 = arith.mulf %115, %116 : vector<24x32xf32>
    %118 = vector.broadcast %97 : vector<1x32xf32> to vector<24x32xf32>
    %119 = arith.addf %117, %118 : vector<24x32xf32>
    %c0_46 = arith.constant 0 : index
    %c0_47 = arith.constant 0 : index
    %c0_48 = arith.constant 0 : index
    %120 = vector.load %arg10[%c0_46, %c0_47, %c0_48] : memref<2x32x64xbf16, #tpu.memory_space<vmem>>, vector<1x32x64xbf16>
    %121 = vector.shape_cast %120 : vector<1x32x64xbf16> to vector<32x64xbf16>
    %122 = arith.truncf %119 : vector<24x32xf32> to vector<24x32xbf16>
    %cst_49 = arith.constant dense<0.000000e+00> : vector<24x64xf32>
    %123 = tpu.matmul %122, %121, %cst_49 {dimension_numbers = #tpu.dot_dimension_numbers<[1], [0], [0], [1], [0, 0, 1, 1], [], []>} : vector<24x32xbf16>, vector<32x64xbf16>, vector<24x64xf32> -> vector<24x64xf32>
    %c0_50 = arith.constant 0 : index
    %c0_51 = arith.constant 0 : index
    %c0_52 = arith.constant 0 : index
    %124 = vector.load %arg11[%c0_50, %c0_51, %c0_52] : memref<2x1x64xf32, #tpu.memory_space<vmem>>, vector<1x1x64xf32>
    %125 = vector.shape_cast %124 : vector<1x1x64xf32> to vector<1x64xf32>
    %126 = vector.broadcast %125 : vector<1x64xf32> to vector<24x64xf32>
    %127 = arith.addf %123, %126 : vector<24x64xf32>
    %cst_53 = arith.constant 0.000000e+00 : f32
    %128 = vector.broadcast %cst_53 : f32 to vector<24x64xf32>
    %129 = arith.maximumf %127, %128 : vector<24x64xf32>
    %c0_54 = arith.constant 0 : index
    %c0_55 = arith.constant 0 : index
    %c0_56 = arith.constant 0 : index
    %130 = vector.load %arg12[%c0_54, %c0_55, %c0_56] : memref<2x64x32xbf16, #tpu.memory_space<vmem>>, vector<1x64x32xbf16>
    %131 = vector.shape_cast %130 : vector<1x64x32xbf16> to vector<64x32xbf16>
    %132 = arith.truncf %129 : vector<24x64xf32> to vector<24x64xbf16>
    %cst_57 = arith.constant dense<0.000000e+00> : vector<24x32xf32>
    %133 = tpu.matmul %132, %131, %cst_57 {dimension_numbers = #tpu.dot_dimension_numbers<[1], [0], [0], [1], [0, 0, 1, 1], [], []>} : vector<24x64xbf16>, vector<64x32xbf16>, vector<24x32xf32> -> vector<24x32xf32>
    %c0_58 = arith.constant 0 : index
    %c0_59 = arith.constant 0 : index
    %c0_60 = arith.constant 0 : index
    %134 = vector.load %arg13[%c0_58, %c0_59, %c0_60] : memref<2x1x32xf32, #tpu.memory_space<vmem>>, vector<1x1x32xf32>
    %135 = vector.shape_cast %134 : vector<1x1x32xf32> to vector<1x32xf32>
    %136 = vector.broadcast %135 : vector<1x32xf32> to vector<24x32xf32>
    %137 = arith.addf %133, %136 : vector<24x32xf32>
    %138 = arith.addf %119, %137 : vector<24x32xf32>
    %c0_61 = arith.constant 0 : index
    %c0_62 = arith.constant 0 : index
    %c0_63 = arith.constant 0 : index
    %139 = vector.load %arg8[%c0_61, %c0_62, %c0_63] : memref<2x1x32xf32, #tpu.memory_space<vmem>>, vector<1x1x32xf32>
    %140 = vector.shape_cast %139 : vector<1x1x32xf32> to vector<1x32xf32>
    %c0_64 = arith.constant 0 : index
    %c0_65 = arith.constant 0 : index
    %c0_66 = arith.constant 0 : index
    %141 = vector.load %arg9[%c0_64, %c0_65, %c0_66] : memref<2x1x32xf32, #tpu.memory_space<vmem>>, vector<1x1x32xf32>
    %142 = vector.shape_cast %141 : vector<1x1x32xf32> to vector<1x32xf32>
    %cst_67 = arith.constant dense<0.000000e+00> : vector<24xf32>
    %143 = vector.multi_reduction <add>, %138, %cst_67 [1] : vector<24x32xf32> to vector<24xf32>
    %144 = vector.shape_cast %143 : vector<24xf32> to vector<24x1xf32>
    %cst_68 = arith.constant 3.200000e+01 : f32
    %145 = vector.broadcast %cst_68 : f32 to vector<24x1xf32>
    %146 = arith.divf %144, %145 : vector<24x1xf32>
    %147 = vector.broadcast %146 : vector<24x1xf32> to vector<24x32xf32>
    %148 = arith.subf %138, %147 : vector<24x32xf32>
    %149 = arith.mulf %148, %148 : vector<24x32xf32>
    %cst_69 = arith.constant dense<0.000000e+00> : vector<24xf32>
    %150 = vector.multi_reduction <add>, %149, %cst_69 [1] : vector<24x32xf32> to vector<24xf32>
    %151 = vector.shape_cast %150 : vector<24xf32> to vector<24x1xf32>
    %cst_70 = arith.constant 3.200000e+01 : f32
    %152 = vector.broadcast %cst_70 : f32 to vector<24x1xf32>
    %153 = arith.divf %151, %152 : vector<24x1xf32>
    %154 = vector.broadcast %146 : vector<24x1xf32> to vector<24x32xf32>
    %155 = arith.subf %138, %154 : vector<24x32xf32>
    %cst_71 = arith.constant 9.99999974E-6 : f32
    %156 = vector.broadcast %cst_71 : f32 to vector<24x1xf32>
    %157 = arith.addf %153, %156 : vector<24x1xf32>
    %158 = math.rsqrt %157 : vector<24x1xf32>
    %159 = vector.broadcast %158 : vector<24x1xf32> to vector<24x32xf32>
    %160 = arith.mulf %155, %159 : vector<24x32xf32>
    %161 = vector.broadcast %140 : vector<1x32xf32> to vector<24x32xf32>
    %162 = arith.mulf %160, %161 : vector<24x32xf32>
    %163 = vector.broadcast %142 : vector<1x32xf32> to vector<24x32xf32>
    %164 = arith.addf %162, %163 : vector<24x32xf32>
    %c1 = arith.constant 1 : index
    %c0_72 = arith.constant 0 : index
    %c0_73 = arith.constant 0 : index
    %165 = vector.load %arg2[%c1, %c0_72, %c0_73] : memref<2x32x96xbf16, #tpu.memory_space<vmem>>, vector<1x32x96xbf16>
    %166 = vector.shape_cast %165 : vector<1x32x96xbf16> to vector<32x96xbf16>
    %167 = arith.truncf %164 : vector<24x32xf32> to vector<24x32xbf16>
    %cst_74 = arith.constant dense<0.000000e+00> : vector<24x96xf32>
    %168 = tpu.matmul %167, %166, %cst_74 {dimension_numbers = #tpu.dot_dimension_numbers<[1], [0], [0], [1], [0, 0, 1, 1], [], []>} : vector<24x32xbf16>, vector<32x96xbf16>, vector<24x96xf32> -> vector<24x96xf32>
    %c1_75 = arith.constant 1 : index
    %c0_76 = arith.constant 0 : index
    %c0_77 = arith.constant 0 : index
    %169 = vector.load %arg3[%c1_75, %c0_76, %c0_77] : memref<2x1x96xf32, #tpu.memory_space<vmem>>, vector<1x1x96xf32>
    %170 = vector.shape_cast %169 : vector<1x1x96xf32> to vector<1x96xf32>
    %171 = vector.broadcast %170 : vector<1x96xf32> to vector<24x96xf32>
    %172 = arith.addf %168, %171 : vector<24x96xf32>
    %173 = arith.truncf %172 : vector<24x96xf32> to vector<24x96xbf16>
    %174 = vector.shape_cast %173 : vector<24x96xbf16> to vector<3x8x96xbf16>
    %175 = vector.extract_strided_slice %174 {offsets = [0, 0, 0], sizes = [3, 8, 32], strides = [1, 1, 1]} : vector<3x8x96xbf16> to vector<3x8x32xbf16>
    %176 = vector.extract_strided_slice %174 {offsets = [0, 0, 32], sizes = [3, 8, 32], strides = [1, 1, 1]} : vector<3x8x96xbf16> to vector<3x8x32xbf16>
    %177 = vector.extract_strided_slice %174 {offsets = [0, 0, 64], sizes = [3, 8, 32], strides = [1, 1, 1]} : vector<3x8x96xbf16> to vector<3x8x32xbf16>
    %178 = vector.extract_strided_slice %175 {offsets = [0, 0, 0], sizes = [3, 8, 8], strides = [1, 1, 1]} : vector<3x8x32xbf16> to vector<3x8x8xbf16>
    %179 = vector.extract_strided_slice %176 {offsets = [0, 0, 0], sizes = [3, 8, 8], strides = [1, 1, 1]} : vector<3x8x32xbf16> to vector<3x8x8xbf16>
    %180 = vector.extract_strided_slice %177 {offsets = [0, 0, 0], sizes = [3, 8, 8], strides = [1, 1, 1]} : vector<3x8x32xbf16> to vector<3x8x8xbf16>
    "tpu.trace_start"() <{level = 10 : i32, message = "bqd,bkd->bqk"}> : () -> ()
    %cst_78 = arith.constant dense<0.000000e+00> : vector<3x8x8xf32>
    %181 = tpu.matmul %178, %179, %cst_78 {dimension_numbers = #tpu.dot_dimension_numbers<[2], [2], [1], [1], [0, 0, 0, 1, 1, 1], [0], [0]>} : vector<3x8x8xbf16>, vector<3x8x8xbf16>, vector<3x8x8xf32> -> vector<3x8x8xf32>
    "tpu.trace_stop"() : () -> ()
    %cst_79 = arith.constant dense<0xFF800000> : vector<3x8xf32>
    %182 = vector.multi_reduction <maximumf>, %181, %cst_79 [2] : vector<3x8x8xf32> to vector<3x8xf32>
    %183 = vector.shape_cast %182 : vector<3x8xf32> to vector<3x8x1xf32>
    %184 = vector.broadcast %183 : vector<3x8x1xf32> to vector<3x8x8xf32>
    %185 = arith.subf %181, %184 : vector<3x8x8xf32>
    %186 = math.exp %185 : vector<3x8x8xf32>
    %cst_80 = arith.constant dense<0.000000e+00> : vector<3x8xf32>
    %187 = vector.multi_reduction <add>, %186, %cst_80 [2] : vector<3x8x8xf32> to vector<3x8xf32>
    %188 = vector.shape_cast %187 : vector<3x8xf32> to vector<3x8x1xf32>
    %cst_81 = arith.constant 1.000000e+00 : f32
    %189 = vector.broadcast %cst_81 : f32 to vector<3x8x1xf32>
    %190 = arith.divf %189, %188 : vector<3x8x1xf32>
    %191 = arith.truncf %186 : vector<3x8x8xf32> to vector<3x8x8xbf16>
    "tpu.trace_start"() <{level = 10 : i32, message = "bqk,bkd->bqd"}> : () -> ()
    %cst_82 = arith.constant dense<0.000000e+00> : vector<3x8x8xf32>
    %192 = tpu.matmul %191, %180, %cst_82 {dimension_numbers = #tpu.dot_dimension_numbers<[2], [1], [1], [2], [0, 0, 0, 1, 1, 2], [0], [0]>} : vector<3x8x8xbf16>, vector<3x8x8xbf16>, vector<3x8x8xf32> -> vector<3x8x8xf32>
    "tpu.trace_stop"() : () -> ()
    %193 = vector.broadcast %190 : vector<3x8x1xf32> to vector<3x8x8xf32>
    %194 = arith.mulf %192, %193 : vector<3x8x8xf32>
    %195 = vector.extract_strided_slice %175 {offsets = [0, 0, 8], sizes = [3, 8, 8], strides = [1, 1, 1]} : vector<3x8x32xbf16> to vector<3x8x8xbf16>
    %196 = vector.extract_strided_slice %176 {offsets = [0, 0, 8], sizes = [3, 8, 8], strides = [1, 1, 1]} : vector<3x8x32xbf16> to vector<3x8x8xbf16>
    %197 = vector.extract_strided_slice %177 {offsets = [0, 0, 8], sizes = [3, 8, 8], strides = [1, 1, 1]} : vector<3x8x32xbf16> to vector<3x8x8xbf16>
    "tpu.trace_start"() <{level = 10 : i32, message = "bqd,bkd->bqk"}> : () -> ()
    %cst_83 = arith.constant dense<0.000000e+00> : vector<3x8x8xf32>
    %198 = tpu.matmul %195, %196, %cst_83 {dimension_numbers = #tpu.dot_dimension_numbers<[2], [2], [1], [1], [0, 0, 0, 1, 1, 1], [0], [0]>} : vector<3x8x8xbf16>, vector<3x8x8xbf16>, vector<3x8x8xf32> -> vector<3x8x8xf32>
    "tpu.trace_stop"() : () -> ()
    %cst_84 = arith.constant dense<0xFF800000> : vector<3x8xf32>
    %199 = vector.multi_reduction <maximumf>, %198, %cst_84 [2] : vector<3x8x8xf32> to vector<3x8xf32>
    %200 = vector.shape_cast %199 : vector<3x8xf32> to vector<3x8x1xf32>
    %201 = vector.broadcast %200 : vector<3x8x1xf32> to vector<3x8x8xf32>
    %202 = arith.subf %198, %201 : vector<3x8x8xf32>
    %203 = math.exp %202 : vector<3x8x8xf32>
    %cst_85 = arith.constant dense<0.000000e+00> : vector<3x8xf32>
    %204 = vector.multi_reduction <add>, %203, %cst_85 [2] : vector<3x8x8xf32> to vector<3x8xf32>
    %205 = vector.shape_cast %204 : vector<3x8xf32> to vector<3x8x1xf32>
    %cst_86 = arith.constant 1.000000e+00 : f32
    %206 = vector.broadcast %cst_86 : f32 to vector<3x8x1xf32>
    %207 = arith.divf %206, %205 : vector<3x8x1xf32>
    %208 = arith.truncf %203 : vector<3x8x8xf32> to vector<3x8x8xbf16>
    "tpu.trace_start"() <{level = 10 : i32, message = "bqk,bkd->bqd"}> : () -> ()
    %cst_87 = arith.constant dense<0.000000e+00> : vector<3x8x8xf32>
    %209 = tpu.matmul %208, %197, %cst_87 {dimension_numbers = #tpu.dot_dimension_numbers<[2], [1], [1], [2], [0, 0, 0, 1, 1, 2], [0], [0]>} : vector<3x8x8xbf16>, vector<3x8x8xbf16>, vector<3x8x8xf32> -> vector<3x8x8xf32>
    "tpu.trace_stop"() : () -> ()
    %210 = vector.broadcast %207 : vector<3x8x1xf32> to vector<3x8x8xf32>
    %211 = arith.mulf %209, %210 : vector<3x8x8xf32>
    %212 = vector.extract_strided_slice %175 {offsets = [0, 0, 16], sizes = [3, 8, 8], strides = [1, 1, 1]} : vector<3x8x32xbf16> to vector<3x8x8xbf16>
    %213 = vector.extract_strided_slice %176 {offsets = [0, 0, 16], sizes = [3, 8, 8], strides = [1, 1, 1]} : vector<3x8x32xbf16> to vector<3x8x8xbf16>
    %214 = vector.extract_strided_slice %177 {offsets = [0, 0, 16], sizes = [3, 8, 8], strides = [1, 1, 1]} : vector<3x8x32xbf16> to vector<3x8x8xbf16>
    "tpu.trace_start"() <{level = 10 : i32, message = "bqd,bkd->bqk"}> : () -> ()
    %cst_88 = arith.constant dense<0.000000e+00> : vector<3x8x8xf32>
    %215 = tpu.matmul %212, %213, %cst_88 {dimension_numbers = #tpu.dot_dimension_numbers<[2], [2], [1], [1], [0, 0, 0, 1, 1, 1], [0], [0]>} : vector<3x8x8xbf16>, vector<3x8x8xbf16>, vector<3x8x8xf32> -> vector<3x8x8xf32>
    "tpu.trace_stop"() : () -> ()
    %cst_89 = arith.constant dense<0xFF800000> : vector<3x8xf32>
    %216 = vector.multi_reduction <maximumf>, %215, %cst_89 [2] : vector<3x8x8xf32> to vector<3x8xf32>
    %217 = vector.shape_cast %216 : vector<3x8xf32> to vector<3x8x1xf32>
    %218 = vector.broadcast %217 : vector<3x8x1xf32> to vector<3x8x8xf32>
    %219 = arith.subf %215, %218 : vector<3x8x8xf32>
    %220 = math.exp %219 : vector<3x8x8xf32>
    %cst_90 = arith.constant dense<0.000000e+00> : vector<3x8xf32>
    %221 = vector.multi_reduction <add>, %220, %cst_90 [2] : vector<3x8x8xf32> to vector<3x8xf32>
    %222 = vector.shape_cast %221 : vector<3x8xf32> to vector<3x8x1xf32>
    %cst_91 = arith.constant 1.000000e+00 : f32
    %223 = vector.broadcast %cst_91 : f32 to vector<3x8x1xf32>
    %224 = arith.divf %223, %222 : vector<3x8x1xf32>
    %225 = arith.truncf %220 : vector<3x8x8xf32> to vector<3x8x8xbf16>
    "tpu.trace_start"() <{level = 10 : i32, message = "bqk,bkd->bqd"}> : () -> ()
    %cst_92 = arith.constant dense<0.000000e+00> : vector<3x8x8xf32>
    %226 = tpu.matmul %225, %214, %cst_92 {dimension_numbers = #tpu.dot_dimension_numbers<[2], [1], [1], [2], [0, 0, 0, 1, 1, 2], [0], [0]>} : vector<3x8x8xbf16>, vector<3x8x8xbf16>, vector<3x8x8xf32> -> vector<3x8x8xf32>
    "tpu.trace_stop"() : () -> ()
    %227 = vector.broadcast %224 : vector<3x8x1xf32> to vector<3x8x8xf32>
    %228 = arith.mulf %226, %227 : vector<3x8x8xf32>
    %229 = vector.extract_strided_slice %175 {offsets = [0, 0, 24], sizes = [3, 8, 8], strides = [1, 1, 1]} : vector<3x8x32xbf16> to vector<3x8x8xbf16>
    %230 = vector.extract_strided_slice %176 {offsets = [0, 0, 24], sizes = [3, 8, 8], strides = [1, 1, 1]} : vector<3x8x32xbf16> to vector<3x8x8xbf16>
    %231 = vector.extract_strided_slice %177 {offsets = [0, 0, 24], sizes = [3, 8, 8], strides = [1, 1, 1]} : vector<3x8x32xbf16> to vector<3x8x8xbf16>
    "tpu.trace_start"() <{level = 10 : i32, message = "bqd,bkd->bqk"}> : () -> ()
    %cst_93 = arith.constant dense<0.000000e+00> : vector<3x8x8xf32>
    %232 = tpu.matmul %229, %230, %cst_93 {dimension_numbers = #tpu.dot_dimension_numbers<[2], [2], [1], [1], [0, 0, 0, 1, 1, 1], [0], [0]>} : vector<3x8x8xbf16>, vector<3x8x8xbf16>, vector<3x8x8xf32> -> vector<3x8x8xf32>
    "tpu.trace_stop"() : () -> ()
    %cst_94 = arith.constant dense<0xFF800000> : vector<3x8xf32>
    %233 = vector.multi_reduction <maximumf>, %232, %cst_94 [2] : vector<3x8x8xf32> to vector<3x8xf32>
    %234 = vector.shape_cast %233 : vector<3x8xf32> to vector<3x8x1xf32>
    %235 = vector.broadcast %234 : vector<3x8x1xf32> to vector<3x8x8xf32>
    %236 = arith.subf %232, %235 : vector<3x8x8xf32>
    %237 = math.exp %236 : vector<3x8x8xf32>
    %cst_95 = arith.constant dense<0.000000e+00> : vector<3x8xf32>
    %238 = vector.multi_reduction <add>, %237, %cst_95 [2] : vector<3x8x8xf32> to vector<3x8xf32>
    %239 = vector.shape_cast %238 : vector<3x8xf32> to vector<3x8x1xf32>
    %cst_96 = arith.constant 1.000000e+00 : f32
    %240 = vector.broadcast %cst_96 : f32 to vector<3x8x1xf32>
    %241 = arith.divf %240, %239 : vector<3x8x1xf32>
    %242 = arith.truncf %237 : vector<3x8x8xf32> to vector<3x8x8xbf16>
    "tpu.trace_start"() <{level = 10 : i32, message = "bqk,bkd->bqd"}> : () -> ()
    %cst_97 = arith.constant dense<0.000000e+00> : vector<3x8x8xf32>
    %243 = tpu.matmul %242, %231, %cst_97 {dimension_numbers = #tpu.dot_dimension_numbers<[2], [1], [1], [2], [0, 0, 0, 1, 1, 2], [0], [0]>} : vector<3x8x8xbf16>, vector<3x8x8xbf16>, vector<3x8x8xf32> -> vector<3x8x8xf32>
    "tpu.trace_stop"() : () -> ()
    %244 = vector.broadcast %241 : vector<3x8x1xf32> to vector<3x8x8xf32>
    %245 = arith.mulf %243, %244 : vector<3x8x8xf32>
    %246 = tpu.concatenate %194, %211, %228, %245 in 2 : vector<3x8x8xf32>, vector<3x8x8xf32>, vector<3x8x8xf32>, vector<3x8x8xf32> -> vector<3x8x32xf32>
    %247 = vector.shape_cast %246 : vector<3x8x32xf32> to vector<24x32xf32>
    %c1_98 = arith.constant 1 : index
    %c0_99 = arith.constant 0 : index
    %c0_100 = arith.constant 0 : index
    %248 = vector.load %arg4[%c1_98, %c0_99, %c0_100] : memref<2x32x32xbf16, #tpu.memory_space<vmem>>, vector<1x32x32xbf16>
    %249 = vector.shape_cast %248 : vector<1x32x32xbf16> to vector<32x32xbf16>
    %250 = arith.truncf %247 : vector<24x32xf32> to vector<24x32xbf16>
    %cst_101 = arith.constant dense<0.000000e+00> : vector<24x32xf32>
    %251 = tpu.matmul %250, %249, %cst_101 {dimension_numbers = #tpu.dot_dimension_numbers<[1], [0], [0], [1], [0, 0, 1, 1], [], []>} : vector<24x32xbf16>, vector<32x32xbf16>, vector<24x32xf32> -> vector<24x32xf32>
    %c1_102 = arith.constant 1 : index
    %c0_103 = arith.constant 0 : index
    %c0_104 = arith.constant 0 : index
    %252 = vector.load %arg5[%c1_102, %c0_103, %c0_104] : memref<2x1x32xf32, #tpu.memory_space<vmem>>, vector<1x1x32xf32>
    %253 = vector.shape_cast %252 : vector<1x1x32xf32> to vector<1x32xf32>
    %254 = vector.broadcast %253 : vector<1x32xf32> to vector<24x32xf32>
    %255 = arith.addf %251, %254 : vector<24x32xf32>
    %256 = arith.addf %164, %255 : vector<24x32xf32>
    %c1_105 = arith.constant 1 : index
    %c0_106 = arith.constant 0 : index
    %c0_107 = arith.constant 0 : index
    %257 = vector.load %arg6[%c1_105, %c0_106, %c0_107] : memref<2x1x32xf32, #tpu.memory_space<vmem>>, vector<1x1x32xf32>
    %258 = vector.shape_cast %257 : vector<1x1x32xf32> to vector<1x32xf32>
    %c1_108 = arith.constant 1 : index
    %c0_109 = arith.constant 0 : index
    %c0_110 = arith.constant 0 : index
    %259 = vector.load %arg7[%c1_108, %c0_109, %c0_110] : memref<2x1x32xf32, #tpu.memory_space<vmem>>, vector<1x1x32xf32>
    %260 = vector.shape_cast %259 : vector<1x1x32xf32> to vector<1x32xf32>
    %cst_111 = arith.constant dense<0.000000e+00> : vector<24xf32>
    %261 = vector.multi_reduction <add>, %256, %cst_111 [1] : vector<24x32xf32> to vector<24xf32>
    %262 = vector.shape_cast %261 : vector<24xf32> to vector<24x1xf32>
    %cst_112 = arith.constant 3.200000e+01 : f32
    %263 = vector.broadcast %cst_112 : f32 to vector<24x1xf32>
    %264 = arith.divf %262, %263 : vector<24x1xf32>
    %265 = vector.broadcast %264 : vector<24x1xf32> to vector<24x32xf32>
    %266 = arith.subf %256, %265 : vector<24x32xf32>
    %267 = arith.mulf %266, %266 : vector<24x32xf32>
    %cst_113 = arith.constant dense<0.000000e+00> : vector<24xf32>
    %268 = vector.multi_reduction <add>, %267, %cst_113 [1] : vector<24x32xf32> to vector<24xf32>
    %269 = vector.shape_cast %268 : vector<24xf32> to vector<24x1xf32>
    %cst_114 = arith.constant 3.200000e+01 : f32
    %270 = vector.broadcast %cst_114 : f32 to vector<24x1xf32>
    %271 = arith.divf %269, %270 : vector<24x1xf32>
    %272 = vector.broadcast %264 : vector<24x1xf32> to vector<24x32xf32>
    %273 = arith.subf %256, %272 : vector<24x32xf32>
    %cst_115 = arith.constant 9.99999974E-6 : f32
    %274 = vector.broadcast %cst_115 : f32 to vector<24x1xf32>
    %275 = arith.addf %271, %274 : vector<24x1xf32>
    %276 = math.rsqrt %275 : vector<24x1xf32>
    %277 = vector.broadcast %276 : vector<24x1xf32> to vector<24x32xf32>
    %278 = arith.mulf %273, %277 : vector<24x32xf32>
    %279 = vector.broadcast %258 : vector<1x32xf32> to vector<24x32xf32>
    %280 = arith.mulf %278, %279 : vector<24x32xf32>
    %281 = vector.broadcast %260 : vector<1x32xf32> to vector<24x32xf32>
    %282 = arith.addf %280, %281 : vector<24x32xf32>
    %c1_116 = arith.constant 1 : index
    %c0_117 = arith.constant 0 : index
    %c0_118 = arith.constant 0 : index
    %283 = vector.load %arg10[%c1_116, %c0_117, %c0_118] : memref<2x32x64xbf16, #tpu.memory_space<vmem>>, vector<1x32x64xbf16>
    %284 = vector.shape_cast %283 : vector<1x32x64xbf16> to vector<32x64xbf16>
    %285 = arith.truncf %282 : vector<24x32xf32> to vector<24x32xbf16>
    %cst_119 = arith.constant dense<0.000000e+00> : vector<24x64xf32>
    %286 = tpu.matmul %285, %284, %cst_119 {dimension_numbers = #tpu.dot_dimension_numbers<[1], [0], [0], [1], [0, 0, 1, 1], [], []>} : vector<24x32xbf16>, vector<32x64xbf16>, vector<24x64xf32> -> vector<24x64xf32>
    %c1_120 = arith.constant 1 : index
    %c0_121 = arith.constant 0 : index
    %c0_122 = arith.constant 0 : index
    %287 = vector.load %arg11[%c1_120, %c0_121, %c0_122] : memref<2x1x64xf32, #tpu.memory_space<vmem>>, vector<1x1x64xf32>
    %288 = vector.shape_cast %287 : vector<1x1x64xf32> to vector<1x64xf32>
    %289 = vector.broadcast %288 : vector<1x64xf32> to vector<24x64xf32>
    %290 = arith.addf %286, %289 : vector<24x64xf32>
    %cst_123 = arith.constant 0.000000e+00 : f32
    %291 = vector.broadcast %cst_123 : f32 to vector<24x64xf32>
    %292 = arith.maximumf %290, %291 : vector<24x64xf32>
    %c1_124 = arith.constant 1 : index
    %c0_125 = arith.constant 0 : index
    %c0_126 = arith.constant 0 : index
    %293 = vector.load %arg12[%c1_124, %c0_125, %c0_126] : memref<2x64x32xbf16, #tpu.memory_space<vmem>>, vector<1x64x32xbf16>
    %294 = vector.shape_cast %293 : vector<1x64x32xbf16> to vector<64x32xbf16>
    %295 = arith.truncf %292 : vector<24x64xf32> to vector<24x64xbf16>
    %cst_127 = arith.constant dense<0.000000e+00> : vector<24x32xf32>
    %296 = tpu.matmul %295, %294, %cst_127 {dimension_numbers = #tpu.dot_dimension_numbers<[1], [0], [0], [1], [0, 0, 1, 1], [], []>} : vector<24x64xbf16>, vector<64x32xbf16>, vector<24x32xf32> -> vector<24x32xf32>
    %c1_128 = arith.constant 1 : index
    %c0_129 = arith.constant 0 : index
    %c0_130 = arith.constant 0 : index
    %297 = vector.load %arg13[%c1_128, %c0_129, %c0_130] : memref<2x1x32xf32, #tpu.memory_space<vmem>>, vector<1x1x32xf32>
    %298 = vector.shape_cast %297 : vector<1x1x32xf32> to vector<1x32xf32>
    %299 = vector.broadcast %298 : vector<1x32xf32> to vector<24x32xf32>
    %300 = arith.addf %296, %299 : vector<24x32xf32>
    %301 = arith.addf %282, %300 : vector<24x32xf32>
    %c1_131 = arith.constant 1 : index
    %c0_132 = arith.constant 0 : index
    %c0_133 = arith.constant 0 : index
    %302 = vector.load %arg8[%c1_131, %c0_132, %c0_133] : memref<2x1x32xf32, #tpu.memory_space<vmem>>, vector<1x1x32xf32>
    %303 = vector.shape_cast %302 : vector<1x1x32xf32> to vector<1x32xf32>
    %c1_134 = arith.constant 1 : index
    %c0_135 = arith.constant 0 : index
    %c0_136 = arith.constant 0 : index
    %304 = vector.load %arg9[%c1_134, %c0_135, %c0_136] : memref<2x1x32xf32, #tpu.memory_space<vmem>>, vector<1x1x32xf32>
    %305 = vector.shape_cast %304 : vector<1x1x32xf32> to vector<1x32xf32>
    %cst_137 = arith.constant dense<0.000000e+00> : vector<24xf32>
    %306 = vector.multi_reduction <add>, %301, %cst_137 [1] : vector<24x32xf32> to vector<24xf32>
    %307 = vector.shape_cast %306 : vector<24xf32> to vector<24x1xf32>
    %cst_138 = arith.constant 3.200000e+01 : f32
    %308 = vector.broadcast %cst_138 : f32 to vector<24x1xf32>
    %309 = arith.divf %307, %308 : vector<24x1xf32>
    %310 = vector.broadcast %309 : vector<24x1xf32> to vector<24x32xf32>
    %311 = arith.subf %301, %310 : vector<24x32xf32>
    %312 = arith.mulf %311, %311 : vector<24x32xf32>
    %cst_139 = arith.constant dense<0.000000e+00> : vector<24xf32>
    %313 = vector.multi_reduction <add>, %312, %cst_139 [1] : vector<24x32xf32> to vector<24xf32>
    %314 = vector.shape_cast %313 : vector<24xf32> to vector<24x1xf32>
    %cst_140 = arith.constant 3.200000e+01 : f32
    %315 = vector.broadcast %cst_140 : f32 to vector<24x1xf32>
    %316 = arith.divf %314, %315 : vector<24x1xf32>
    %317 = vector.broadcast %309 : vector<24x1xf32> to vector<24x32xf32>
    %318 = arith.subf %301, %317 : vector<24x32xf32>
    %cst_141 = arith.constant 9.99999974E-6 : f32
    %319 = vector.broadcast %cst_141 : f32 to vector<24x1xf32>
    %320 = arith.addf %316, %319 : vector<24x1xf32>
    %321 = math.rsqrt %320 : vector<24x1xf32>
    %322 = vector.broadcast %321 : vector<24x1xf32> to vector<24x32xf32>
    %323 = arith.mulf %318, %322 : vector<24x32xf32>
    %324 = vector.broadcast %303 : vector<1x32xf32> to vector<24x32xf32>
    %325 = arith.mulf %323, %324 : vector<24x32xf32>
    %326 = vector.broadcast %305 : vector<1x32xf32> to vector<24x32xf32>
    %327 = arith.addf %325, %326 : vector<24x32xf32>
    %c0_142 = arith.constant 0 : index
    %c0_143 = arith.constant 0 : index
    %328 = vector.load %arg14[%c0_142, %c0_143] : memref<32x32xbf16, #tpu.memory_space<vmem>>, vector<32x32xbf16>
    %329 = arith.truncf %327 : vector<24x32xf32> to vector<24x32xbf16>
    %cst_144 = arith.constant dense<0.000000e+00> : vector<24x32xf32>
    %330 = tpu.matmul %329, %328, %cst_144 {dimension_numbers = #tpu.dot_dimension_numbers<[1], [0], [0], [1], [0, 0, 1, 1], [], []>} : vector<24x32xbf16>, vector<32x32xbf16>, vector<24x32xf32> -> vector<24x32xf32>
    %c0_145 = arith.constant 0 : index
    %c0_146 = arith.constant 0 : index
    %331 = vector.load %arg15[%c0_145, %c0_146] : memref<1x32xf32, #tpu.memory_space<vmem>>, vector<1x32xf32>
    %332 = vector.broadcast %331 : vector<1x32xf32> to vector<24x32xf32>
    %333 = arith.addf %330, %332 : vector<24x32xf32>
    %cst_147 = arith.constant 0.000000e+00 : f32
    %334 = vector.broadcast %cst_147 : f32 to vector<24x32xf32>
    %335 = arith.maximumf %333, %334 : vector<24x32xf32>
    %c0_148 = arith.constant 0 : index
    %c0_149 = arith.constant 0 : index
    %336 = vector.load %arg16[%c0_148, %c0_149] : memref<32x32xbf16, #tpu.memory_space<vmem>>, vector<32x32xbf16>
    %337 = arith.truncf %335 : vector<24x32xf32> to vector<24x32xbf16>
    %cst_150 = arith.constant dense<0.000000e+00> : vector<24x32xf32>
    %338 = tpu.matmul %337, %336, %cst_150 {dimension_numbers = #tpu.dot_dimension_numbers<[1], [0], [0], [1], [0, 0, 1, 1], [], []>} : vector<24x32xbf16>, vector<32x32xbf16>, vector<24x32xf32> -> vector<24x32xf32>
    %c0_151 = arith.constant 0 : index
    %c0_152 = arith.constant 0 : index
    %339 = vector.load %arg17[%c0_151, %c0_152] : memref<1x32xf32, #tpu.memory_space<vmem>>, vector<1x32xf32>
    %340 = vector.broadcast %339 : vector<1x32xf32> to vector<24x32xf32>
    %341 = arith.addf %338, %340 : vector<24x32xf32>
    %342 = vector.shape_cast %341 : vector<24x32xf32> to vector<3x8x32xf32>
    %cst_153 = arith.constant dense<0.000000e+00> : vector<3x32xf32>
    %343 = vector.multi_reduction <add>, %342, %cst_153 [1] : vector<3x8x32xf32> to vector<3x32xf32>
    %cst_154 = arith.constant 8.000000e+00 : f32
    %344 = vector.broadcast %cst_154 : f32 to vector<3x32xf32>
    %345 = arith.divf %343, %344 : vector<3x32xf32>
    %c0_155 = arith.constant 0 : index
    %c0_156 = arith.constant 0 : index
    %346 = vector.load %arg18[%c0_155, %c0_156] : memref<3x32xf32, #tpu.memory_space<vmem>>, vector<3x32xf32>
    tpu.vector_store %arg18[%c0_155, %c0_156], %345 {strides = array<i32>} : memref<3x32xf32, #tpu.memory_space<vmem>>, vector<3x32xf32>,
    return
  }
  func.func @transform_0(%arg0: i32) -> (i32, i32, i32) {
    %c0_i32 = arith.constant 0 : i32
    %c0_i32_0 = arith.constant 0 : i32
    %c0_i32_1 = arith.constant 0 : i32
    return %arg0, %c0_i32, %c0_i32_0 : i32, i32, i32
  }
  func.func @transform_1(%arg0: i32) -> (i32, i32, i32) {
    %c0_i32 = arith.constant 0 : i32
    %c0_i32_0 = arith.constant 0 : i32
    %c0_i32_1 = arith.constant 0 : i32
    %c0_i32_2 = arith.constant 0 : i32
    return %c0_i32, %c0_i32_0, %c0_i32_1 : i32, i32, i32
  }
  func.func @transform_2(%arg0: i32) -> (i32, i32, i32) {
    %c0_i32 = arith.constant 0 : i32
    %c0_i32_0 = arith.constant 0 : i32
    %c0_i32_1 = arith.constant 0 : i32
    %c0_i32_2 = arith.constant 0 : i32
    return %c0_i32, %c0_i32_0, %c0_i32_1 : i32, i32, i32
  }
  func.func @transform_3(%arg0: i32) -> (i32, i32, i32) {
    %c0_i32 = arith.constant 0 : i32
    %c0_i32_0 = arith.constant 0 : i32
    %c0_i32_1 = arith.constant 0 : i32
    %c0_i32_2 = arith.constant 0 : i32
    return %c0_i32, %c0_i32_0, %c0_i32_1 : i32, i32, i32
  }
  func.func @transform_4(%arg0: i32) -> (i32, i32, i32) {
    %c0_i32 = arith.constant 0 : i32
    %c0_i32_0 = arith.constant 0 : i32
    %c0_i32_1 = arith.constant 0 : i32
    %c0_i32_2 = arith.constant 0 : i32
    return %c0_i32, %c0_i32_0, %c0_i32_1 : i32, i32, i32
  }
  func.func @transform_5(%arg0: i32) -> (i32, i32, i32) {
    %c0_i32 = arith.constant 0 : i32
    %c0_i32_0 = arith.constant 0 : i32
    %c0_i32_1 = arith.constant 0 : i32
    %c0_i32_2 = arith.constant 0 : i32
    return %c0_i32, %c0_i32_0, %c0_i32_1 : i32, i32, i32
  }
  func.func @transform_6(%arg0: i32) -> (i32, i32, i32) {
    %c0_i32 = arith.constant 0 : i32
    %c0_i32_0 = arith.constant 0 : i32
    %c0_i32_1 = arith.constant 0 : i32
    %c0_i32_2 = arith.constant 0 : i32
    return %c0_i32, %c0_i32_0, %c0_i32_1 : i32, i32, i32
  }
  func.func @transform_7(%arg0: i32) -> (i32, i32, i32) {
    %c0_i32 = arith.constant 0 : i32
    %c0_i32_0 = arith.constant 0 : i32
    %c0_i32_1 = arith.constant 0 : i32
    %c0_i32_2 = arith.constant 0 : i32
    return %c0_i32, %c0_i32_0, %c0_i32_1 : i32, i32, i32
  }
  func.func @transform_8(%arg0: i32) -> (i32, i32, i32) {
    %c0_i32 = arith.constant 0 : i32
    %c0_i32_0 = arith.constant 0 : i32
    %c0_i32_1 = arith.constant 0 : i32
    %c0_i32_2 = arith.constant 0 : i32
    return %c0_i32, %c0_i32_0, %c0_i32_1 : i32, i32, i32
  }
  func.func @transform_9(%arg0: i32) -> (i32, i32, i32) {
    %c0_i32 = arith.constant 0 : i32
    %c0_i32_0 = arith.constant 0 : i32
    %c0_i32_1 = arith.constant 0 : i32
    %c0_i32_2 = arith.constant 0 : i32
    return %c0_i32, %c0_i32_0, %c0_i32_1 : i32, i32, i32
  }
  func.func @transform_10(%arg0: i32) -> (i32, i32, i32) {
    %c0_i32 = arith.constant 0 : i32
    %c0_i32_0 = arith.constant 0 : i32
    %c0_i32_1 = arith.constant 0 : i32
    %c0_i32_2 = arith.constant 0 : i32
    return %c0_i32, %c0_i32_0, %c0_i32_1 : i32, i32, i32
  }
  func.func @transform_11(%arg0: i32) -> (i32, i32, i32) {
    %c0_i32 = arith.constant 0 : i32
    %c0_i32_0 = arith.constant 0 : i32
    %c0_i32_1 = arith.constant 0 : i32
    %c0_i32_2 = arith.constant 0 : i32
    return %c0_i32, %c0_i32_0, %c0_i32_1 : i32, i32, i32
  }
  func.func @transform_12(%arg0: i32) -> (i32, i32, i32) {
    %c0_i32 = arith.constant 0 : i32
    %c0_i32_0 = arith.constant 0 : i32
    %c0_i32_1 = arith.constant 0 : i32
    %c0_i32_2 = arith.constant 0 : i32
    return %c0_i32, %c0_i32_0, %c0_i32_1 : i32, i32, i32
  }
  func.func @transform_13(%arg0: i32) -> (i32, i32) {
    %c0_i32 = arith.constant 0 : i32
    %c0_i32_0 = arith.constant 0 : i32
    %c0_i32_1 = arith.constant 0 : i32
    return %c0_i32, %c0_i32_0 : i32, i32
  }
  func.func @transform_14(%arg0: i32) -> (i32, i32) {
    %c0_i32 = arith.constant 0 : i32
    %c0_i32_0 = arith.constant 0 : i32
    %c0_i32_1 = arith.constant 0 : i32
    return %c0_i32, %c0_i32_0 : i32, i32
  }
  func.func @transform_15(%arg0: i32) -> (i32, i32) {
    %c0_i32 = arith.constant 0 : i32
    %c0_i32_0 = arith.constant 0 : i32
    %c0_i32_1 = arith.constant 0 : i32
    return %c0_i32, %c0_i32_0 : i32, i32
  }
  func.func @transform_16(%arg0: i32) -> (i32, i32) {
    %c0_i32 = arith.constant 0 : i32
    %c0_i32_0 = arith.constant 0 : i32
    %c0_i32_1 = arith.constant 0 : i32
    return %c0_i32, %c0_i32_0 : i32, i32
  }
  func.func @transform_17(%arg0: i32) -> (i32, i32) {
    %c0_i32 = arith.constant 0 : i32
    %c0_i32_0 = arith.constant 0 : i32
    return %arg0, %c0_i32 : i32, i32
  }
}

module attributes {stable_mosaic.version = 11 : i64} {
  func.func @_encoder_kernel(%arg0: i32, %arg1: memref<3x8x32xf32, #tpu.memory_space<vmem>>, %arg2: memref<2x32x96xbf16, #tpu.memory_space<vmem>>, %arg3: memref<2x1x96xf32, #tpu.memory_space<vmem>>, %arg4: memref<2x32x32xbf16, #tpu.memory_space<vmem>>, %arg5: memref<2x1x32xf32, #tpu.memory_space<vmem>>, %arg6: memref<2x1x32xf32, #tpu.memory_space<vmem>>, %arg7: memref<2x1x32xf32, #tpu.memory_space<vmem>>, %arg8: memref<2x1x32xf32, #tpu.memory_space<vmem>>, %arg9: memref<2x1x32xf32, #tpu.memory_space<vmem>>, %arg10: memref<2x32x64xbf16, #tpu.memory_space<vmem>>, %arg11: memref<2x1x64xf32, #tpu.memory_space<vmem>>, %arg12: memref<2x64x32xbf16, #tpu.memory_space<vmem>>, %arg13: memref<2x1x32xf32, #tpu.memory_space<vmem>>, %arg14: memref<32x32xbf16, #tpu.memory_space<vmem>>, %arg15: memref<1x32xf32, #tpu.memory_space<vmem>>, %arg16: memref<32x32xbf16, #tpu.memory_space<vmem>>, %arg17: memref<1x32xf32, #tpu.memory_space<vmem>>, %arg18: memref<3x32xf32, #tpu.memory_space<vmem>>) attributes {dimension_semantics = [#tpu.dimension_semantics<parallel>], iteration_bounds = array<i64: 1>, scalar_prefetch = 0 : i64, scratch_operands = 0 : i64, tpu.core_type = #tpu.core_type<tc>, window_params = [{transform_indices = @transform_0, window_bounds = array<i64: 3, 8, 32>}, {pipeline_mode = #tpu.pipeline_mode<synchronous>, transform_indices = @transform_1, window_bounds = array<i64: 2, 32, 96>}, {pipeline_mode = #tpu.pipeline_mode<synchronous>, transform_indices = @transform_2, window_bounds = array<i64: 2, 1, 96>}, {pipeline_mode = #tpu.pipeline_mode<synchronous>, transform_indices = @transform_3, window_bounds = array<i64: 2, 32, 32>}, {pipeline_mode = #tpu.pipeline_mode<synchronous>, transform_indices = @transform_4, window_bounds = array<i64: 2, 1, 32>}, {pipeline_mode = #tpu.pipeline_mode<synchronous>, transform_indices = @transform_5, window_bounds = array<i64: 2, 1, 32>}, {pipeline_mode = #tpu.pipeline_mode<synchronous>, transform_indices = @transform_6, window_bounds = array<i64: 2, 1, 32>}, {pipeline_mode = #tpu.pipeline_mode<synchronous>, transform_indices = @transform_7, window_bounds = array<i64: 2, 1, 32>}, {pipeline_mode = #tpu.pipeline_mode<synchronous>, transform_indices = @transform_8, window_bounds = array<i64: 2, 1, 32>}, {pipeline_mode = #tpu.pipeline_mode<synchronous>, transform_indices = @transform_9, window_bounds = array<i64: 2, 32, 64>}, {pipeline_mode = #tpu.pipeline_mode<synchronous>, transform_indices = @transform_10, window_bounds = array<i64: 2, 1, 64>}, {pipeline_mode = #tpu.pipeline_mode<synchronous>, transform_indices = @transform_11, window_bounds = array<i64: 2, 64, 32>}, {pipeline_mode = #tpu.pipeline_mode<synchronous>, transform_indices = @transform_12, window_bounds = array<i64: 2, 1, 32>}, {pipeline_mode = #tpu.pipeline_mode<synchronous>, transform_indices = @transform_13, window_bounds = array<i64: 32, 32>}, {pipeline_mode = #tpu.pipeline_mode<synchronous>, transform_indices = @transform_14, window_bounds = array<i64: 1, 32>}, {pipeline_mode = #tpu.pipeline_mode<synchronous>, transform_indices = @transform_15, window_bounds = array<i64: 32, 32>}, {pipeline_mode = #tpu.pipeline_mode<synchronous>, transform_indices = @transform_16, window_bounds = array<i64: 1, 32>}, {transform_indices = @transform_17, window_bounds = array<i64: 3, 32>}]} {
    %c0 = arith.constant 0 : index
    %c0_0 = arith.constant 0 : index
    %c0_1 = arith.constant 0 : index
    %0 = vector.load %arg1[%c0, %c0_0, %c0_1] : memref<3x8x32xf32, #tpu.memory_space<vmem>>, vector<3x8x32xf32>
    %1 = vector.shape_cast %0 : vector<3x8x32xf32> to vector<24x32xf32>
    %c0_2 = arith.constant 0 : index
    %c0_3 = arith.constant 0 : index
    %c0_4 = arith.constant 0 : index
    %2 = vector.load %arg2[%c0_2, %c0_3, %c0_4] : memref<2x32x96xbf16, #tpu.memory_space<vmem>>, vector<1x32x96xbf16>
    %3 = vector.shape_cast %2 : vector<1x32x96xbf16> to vector<32x96xbf16>
    %4 = arith.truncf %1 : vector<24x32xf32> to vector<24x32xbf16>
    %cst = arith.constant dense<0.000000e+00> : vector<24x96xf32>
    %5 = tpu.matmul %4, %3, %cst {dimension_numbers = #tpu.dot_dimension_numbers<[1], [0], [0], [1], [0, 0, 1, 1], [], []>} : vector<24x32xbf16>, vector<32x96xbf16>, vector<24x96xf32> -> vector<24x96xf32>
    %c0_5 = arith.constant 0 : index
    %c0_6 = arith.constant 0 : index
    %c0_7 = arith.constant 0 : index
    %6 = vector.load %arg3[%c0_5, %c0_6, %c0_7] : memref<2x1x96xf32, #tpu.memory_space<vmem>>, vector<1x1x96xf32>
    %7 = vector.shape_cast %6 : vector<1x1x96xf32> to vector<1x96xf32>
    %8 = vector.broadcast %7 : vector<1x96xf32> to vector<24x96xf32>
    %9 = arith.addf %5, %8 : vector<24x96xf32>
    %10 = arith.truncf %9 : vector<24x96xf32> to vector<24x96xbf16>
    %11 = vector.shape_cast %10 : vector<24x96xbf16> to vector<3x8x96xbf16>
    %12 = vector.extract_strided_slice %11 {offsets = [0, 0, 0], sizes = [3, 8, 32], strides = [1, 1, 1]} : vector<3x8x96xbf16> to vector<3x8x32xbf16>
    %13 = vector.extract_strided_slice %11 {offsets = [0, 0, 32], sizes = [3, 8, 32], strides = [1, 1, 1]} : vector<3x8x96xbf16> to vector<3x8x32xbf16>
    %14 = vector.extract_strided_slice %11 {offsets = [0, 0, 64], sizes = [3, 8, 32], strides = [1, 1, 1]} : vector<3x8x96xbf16> to vector<3x8x32xbf16>
    %15 = vector.extract_strided_slice %12 {offsets = [0, 0, 0], sizes = [3, 8, 8], strides = [1, 1, 1]} : vector<3x8x32xbf16> to vector<3x8x8xbf16>
    %16 = vector.extract_strided_slice %13 {offsets = [0, 0, 0], sizes = [3, 8, 8], strides = [1, 1, 1]} : vector<3x8x32xbf16> to vector<3x8x8xbf16>
    %17 = vector.extract_strided_slice %14 {offsets = [0, 0, 0], sizes = [3, 8, 8], strides = [1, 1, 1]} : vector<3x8x32xbf16> to vector<3x8x8xbf16>
    "tpu.trace_start"() <{level = 10 : i32, message = "bqd,bkd->bqk"}> : () -> ()
    %cst_8 = arith.constant dense<0.000000e+00> : vector<3x8x8xf32>
    %18 = tpu.matmul %15, %16, %cst_8 {dimension_numbers = #tpu.dot_dimension_numbers<[2], [2], [1], [1], [0, 0, 0, 1, 1, 1], [0], [0]>} : vector<3x8x8xbf16>, vector<3x8x8xbf16>, vector<3x8x8xf32> -> vector<3x8x8xf32>
    "tpu.trace_stop"() : () -> ()
    %cst_9 = arith.constant dense<0xFF800000> : vector<3x8xf32>
    %19 = vector.multi_reduction <maximumf>, %18, %cst_9 [2] : vector<3x8x8xf32> to vector<3x8xf32>
    %20 = vector.shape_cast %19 : vector<3x8xf32> to vector<3x8x1xf32>
    %21 = vector.broadcast %20 : vector<3x8x1xf32> to vector<3x8x8xf32>
    %22 = arith.subf %18, %21 : vector<3x8x8xf32>
    %23 = math.exp %22 : vector<3x8x8xf32>
    %cst_10 = arith.constant dense<0.000000e+00> : vector<3x8xf32>
    %24 = vector.multi_reduction <add>, %23, %cst_10 [2] : vector<3x8x8xf32> to vector<3x8xf32>
    %25 = vector.shape_cast %24 : vector<3x8xf32> to vector<3x8x1xf32>
    %cst_11 = arith.constant 1.000000e+00 : f32
    %26 = vector.broadcast %cst_11 : f32 to vector<3x8x1xf32>
    %27 = arith.divf %26, %25 : vector<3x8x1xf32>
    %28 = arith.truncf %23 : vector<3x8x8xf32> to vector<3x8x8xbf16>
    "tpu.trace_start"() <{level = 10 : i32, message = "bqk,bkd->bqd"}> : () -> ()
    %cst_12 = arith.constant dense<0.000000e+00> : vector<3x8x8xf32>
    %29 = tpu.matmul %28, %17, %cst_12 {dimension_numbers = #tpu.dot_dimension_numbers<[2], [1], [1], [2], [0, 0, 0, 1, 1, 2], [0], [0]>} : vector<3x8x8xbf16>, vector<3x8x8xbf16>, vector<3x8x8xf32> -> vector<3x8x8xf32>
    "tpu.trace_stop"() : () -> ()
    %30 = vector.broadcast %27 : vector<3x8x1xf32> to vector<3x8x8xf32>
    %31 = arith.mulf %29, %30 : vector<3x8x8xf32>
    %32 = vector.extract_strided_slice %12 {offsets = [0, 0, 8], sizes = [3, 8, 8], strides = [1, 1, 1]} : vector<3x8x32xbf16> to vector<3x8x8xbf16>
    %33 = vector.extract_strided_slice %13 {offsets = [0, 0, 8], sizes = [3, 8, 8], strides = [1, 1, 1]} : vector<3x8x32xbf16> to vector<3x8x8xbf16>
    %34 = vector.extract_strided_slice %14 {offsets = [0, 0, 8], sizes = [3, 8, 8], strides = [1, 1, 1]} : vector<3x8x32xbf16> to vector<3x8x8xbf16>
    "tpu.trace_start"() <{level = 10 : i32, message = "bqd,bkd->bqk"}> : () -> ()
    %cst_13 = arith.constant dense<0.000000e+00> : vector<3x8x8xf32>
    %35 = tpu.matmul %32, %33, %cst_13 {dimension_numbers = #tpu.dot_dimension_numbers<[2], [2], [1], [1], [0, 0, 0, 1, 1, 1], [0], [0]>} : vector<3x8x8xbf16>, vector<3x8x8xbf16>, vector<3x8x8xf32> -> vector<3x8x8xf32>
    "tpu.trace_stop"() : () -> ()
    %cst_14 = arith.constant dense<0xFF800000> : vector<3x8xf32>
    %36 = vector.multi_reduction <maximumf>, %35, %cst_14 [2] : vector<3x8x8xf32> to vector<3x8xf32>
    %37 = vector.shape_cast %36 : vector<3x8xf32> to vector<3x8x1xf32>
    %38 = vector.broadcast %37 : vector<3x8x1xf32> to vector<3x8x8xf32>
    %39 = arith.subf %35, %38 : vector<3x8x8xf32>
    %40 = math.exp %39 : vector<3x8x8xf32>
    %cst_15 = arith.constant dense<0.000000e+00> : vector<3x8xf32>
    %41 = vector.multi_reduction <add>, %40, %cst_15 [2] : vector<3x8x8xf32> to vector<3x8xf32>
    %42 = vector.shape_cast %41 : vector<3x8xf32> to vector<3x8x1xf32>
    %cst_16 = arith.constant 1.000000e+00 : f32
    %43 = vector.broadcast %cst_16 : f32 to vector<3x8x1xf32>
    %44 = arith.divf %43, %42 : vector<3x8x1xf32>
    %45 = arith.truncf %40 : vector<3x8x8xf32> to vector<3x8x8xbf16>
    "tpu.trace_start"() <{level = 10 : i32, message = "bqk,bkd->bqd"}> : () -> ()
    %cst_17 = arith.constant dense<0.000000e+00> : vector<3x8x8xf32>
    %46 = tpu.matmul %45, %34, %cst_17 {dimension_numbers = #tpu.dot_dimension_numbers<[2], [1], [1], [2], [0, 0, 0, 1, 1, 2], [0], [0]>} : vector<3x8x8xbf16>, vector<3x8x8xbf16>, vector<3x8x8xf32> -> vector<3x8x8xf32>
    "tpu.trace_stop"() : () -> ()
    %47 = vector.broadcast %44 : vector<3x8x1xf32> to vector<3x8x8xf32>
    %48 = arith.mulf %46, %47 : vector<3x8x8xf32>
    %49 = vector.extract_strided_slice %12 {offsets = [0, 0, 16], sizes = [3, 8, 8], strides = [1, 1, 1]} : vector<3x8x32xbf16> to vector<3x8x8xbf16>
    %50 = vector.extract_strided_slice %13 {offsets = [0, 0, 16], sizes = [3, 8, 8], strides = [1, 1, 1]} : vector<3x8x32xbf16> to vector<3x8x8xbf16>
    %51 = vector.extract_strided_slice %14 {offsets = [0, 0, 16], sizes = [3, 8, 8], strides = [1, 1, 1]} : vector<3x8x32xbf16> to vector<3x8x8xbf16>
    "tpu.trace_start"() <{level = 10 : i32, message = "bqd,bkd->bqk"}> : () -> ()
    %cst_18 = arith.constant dense<0.000000e+00> : vector<3x8x8xf32>
    %52 = tpu.matmul %49, %50, %cst_18 {dimension_numbers = #tpu.dot_dimension_numbers<[2], [2], [1], [1], [0, 0, 0, 1, 1, 1], [0], [0]>} : vector<3x8x8xbf16>, vector<3x8x8xbf16>, vector<3x8x8xf32> -> vector<3x8x8xf32>
    "tpu.trace_stop"() : () -> ()
    %cst_19 = arith.constant dense<0xFF800000> : vector<3x8xf32>
    %53 = vector.multi_reduction <maximumf>, %52, %cst_19 [2] : vector<3x8x8xf32> to vector<3x8xf32>
    %54 = vector.shape_cast %53 : vector<3x8xf32> to vector<3x8x1xf32>
    %55 = vector.broadcast %54 : vector<3x8x1xf32> to vector<3x8x8xf32>
    %56 = arith.subf %52, %55 : vector<3x8x8xf32>
    %57 = math.exp %56 : vector<3x8x8xf32>
    %cst_20 = arith.constant dense<0.000000e+00> : vector<3x8xf32>
    %58 = vector.multi_reduction <add>, %57, %cst_20 [2] : vector<3x8x8xf32> to vector<3x8xf32>
    %59 = vector.shape_cast %58 : vector<3x8xf32> to vector<3x8x1xf32>
    %cst_21 = arith.constant 1.000000e+00 : f32
    %60 = vector.broadcast %cst_21 : f32 to vector<3x8x1xf32>
    %61 = arith.divf %60, %59 : vector<3x8x1xf32>
    %62 = arith.truncf %57 : vector<3x8x8xf32> to vector<3x8x8xbf16>
    "tpu.trace_start"() <{level = 10 : i32, message = "bqk,bkd->bqd"}> : () -> ()
    %cst_22 = arith.constant dense<0.000000e+00> : vector<3x8x8xf32>
    %63 = tpu.matmul %62, %51, %cst_22 {dimension_numbers = #tpu.dot_dimension_numbers<[2], [1], [1], [2], [0, 0, 0, 1, 1, 2], [0], [0]>} : vector<3x8x8xbf16>, vector<3x8x8xbf16>, vector<3x8x8xf32> -> vector<3x8x8xf32>
    "tpu.trace_stop"() : () -> ()
    %64 = vector.broadcast %61 : vector<3x8x1xf32> to vector<3x8x8xf32>
    %65 = arith.mulf %63, %64 : vector<3x8x8xf32>
    %66 = vector.extract_strided_slice %12 {offsets = [0, 0, 24], sizes = [3, 8, 8], strides = [1, 1, 1]} : vector<3x8x32xbf16> to vector<3x8x8xbf16>
    %67 = vector.extract_strided_slice %13 {offsets = [0, 0, 24], sizes = [3, 8, 8], strides = [1, 1, 1]} : vector<3x8x32xbf16> to vector<3x8x8xbf16>
    %68 = vector.extract_strided_slice %14 {offsets = [0, 0, 24], sizes = [3, 8, 8], strides = [1, 1, 1]} : vector<3x8x32xbf16> to vector<3x8x8xbf16>
    "tpu.trace_start"() <{level = 10 : i32, message = "bqd,bkd->bqk"}> : () -> ()
    %cst_23 = arith.constant dense<0.000000e+00> : vector<3x8x8xf32>
    %69 = tpu.matmul %66, %67, %cst_23 {dimension_numbers = #tpu.dot_dimension_numbers<[2], [2], [1], [1], [0, 0, 0, 1, 1, 1], [0], [0]>} : vector<3x8x8xbf16>, vector<3x8x8xbf16>, vector<3x8x8xf32> -> vector<3x8x8xf32>
    "tpu.trace_stop"() : () -> ()
    %cst_24 = arith.constant dense<0xFF800000> : vector<3x8xf32>
    %70 = vector.multi_reduction <maximumf>, %69, %cst_24 [2] : vector<3x8x8xf32> to vector<3x8xf32>
    %71 = vector.shape_cast %70 : vector<3x8xf32> to vector<3x8x1xf32>
    %72 = vector.broadcast %71 : vector<3x8x1xf32> to vector<3x8x8xf32>
    %73 = arith.subf %69, %72 : vector<3x8x8xf32>
    %74 = math.exp %73 : vector<3x8x8xf32>
    %cst_25 = arith.constant dense<0.000000e+00> : vector<3x8xf32>
    %75 = vector.multi_reduction <add>, %74, %cst_25 [2] : vector<3x8x8xf32> to vector<3x8xf32>
    %76 = vector.shape_cast %75 : vector<3x8xf32> to vector<3x8x1xf32>
    %cst_26 = arith.constant 1.000000e+00 : f32
    %77 = vector.broadcast %cst_26 : f32 to vector<3x8x1xf32>
    %78 = arith.divf %77, %76 : vector<3x8x1xf32>
    %79 = arith.truncf %74 : vector<3x8x8xf32> to vector<3x8x8xbf16>
    "tpu.trace_start"() <{level = 10 : i32, message = "bqk,bkd->bqd"}> : () -> ()
    %cst_27 = arith.constant dense<0.000000e+00> : vector<3x8x8xf32>
    %80 = tpu.matmul %79, %68, %cst_27 {dimension_numbers = #tpu.dot_dimension_numbers<[2], [1], [1], [2], [0, 0, 0, 1, 1, 2], [0], [0]>} : vector<3x8x8xbf16>, vector<3x8x8xbf16>, vector<3x8x8xf32> -> vector<3x8x8xf32>
    "tpu.trace_stop"() : () -> ()
    %81 = vector.broadcast %78 : vector<3x8x1xf32> to vector<3x8x8xf32>
    %82 = arith.mulf %80, %81 : vector<3x8x8xf32>
    %83 = tpu.concatenate %31, %48, %65, %82 in 2 : vector<3x8x8xf32>, vector<3x8x8xf32>, vector<3x8x8xf32>, vector<3x8x8xf32> -> vector<3x8x32xf32>
    %84 = vector.shape_cast %83 : vector<3x8x32xf32> to vector<24x32xf32>
    %c0_28 = arith.constant 0 : index
    %c0_29 = arith.constant 0 : index
    %c0_30 = arith.constant 0 : index
    %85 = vector.load %arg4[%c0_28, %c0_29, %c0_30] : memref<2x32x32xbf16, #tpu.memory_space<vmem>>, vector<1x32x32xbf16>
    %86 = vector.shape_cast %85 : vector<1x32x32xbf16> to vector<32x32xbf16>
    %87 = arith.truncf %84 : vector<24x32xf32> to vector<24x32xbf16>
    %cst_31 = arith.constant dense<0.000000e+00> : vector<24x32xf32>
    %88 = tpu.matmul %87, %86, %cst_31 {dimension_numbers = #tpu.dot_dimension_numbers<[1], [0], [0], [1], [0, 0, 1, 1], [], []>} : vector<24x32xbf16>, vector<32x32xbf16>, vector<24x32xf32> -> vector<24x32xf32>
    %c0_32 = arith.constant 0 : index
    %c0_33 = arith.constant 0 : index
    %c0_34 = arith.constant 0 : index
    %89 = vector.load %arg5[%c0_32, %c0_33, %c0_34] : memref<2x1x32xf32, #tpu.memory_space<vmem>>, vector<1x1x32xf32>
    %90 = vector.shape_cast %89 : vector<1x1x32xf32> to vector<1x32xf32>
    %91 = vector.broadcast %90 : vector<1x32xf32> to vector<24x32xf32>
    %92 = arith.addf %88, %91 : vector<24x32xf32>
    %93 = arith.addf %1, %92 : vector<24x32xf32>
    %c0_35 = arith.constant 0 : index
    %c0_36 = arith.constant 0 : index
    %c0_37 = arith.constant 0 : index
    %94 = vector.load %arg6[%c0_35, %c0_36, %c0_37] : memref<2x1x32xf32, #tpu.memory_space<vmem>>, vector<1x1x32xf32>
    %95 = vector.shape_cast %94 : vector<1x1x32xf32> to vector<1x32xf32>
    %c0_38 = arith.constant 0 : index
    %c0_39 = arith.constant 0 : index
    %c0_40 = arith.constant 0 : index
    %96 = vector.load %arg7[%c0_38, %c0_39, %c0_40] : memref<2x1x32xf32, #tpu.memory_space<vmem>>, vector<1x1x32xf32>
    %97 = vector.shape_cast %96 : vector<1x1x32xf32> to vector<1x32xf32>
    %cst_41 = arith.constant dense<0.000000e+00> : vector<24xf32>
    %98 = vector.multi_reduction <add>, %93, %cst_41 [1] : vector<24x32xf32> to vector<24xf32>
    %99 = vector.shape_cast %98 : vector<24xf32> to vector<24x1xf32>
    %cst_42 = arith.constant 3.200000e+01 : f32
    %100 = vector.broadcast %cst_42 : f32 to vector<24x1xf32>
    %101 = arith.divf %99, %100 : vector<24x1xf32>
    %102 = vector.broadcast %101 : vector<24x1xf32> to vector<24x32xf32>
    %103 = arith.subf %93, %102 : vector<24x32xf32>
    %104 = arith.mulf %103, %103 : vector<24x32xf32>
    %cst_43 = arith.constant dense<0.000000e+00> : vector<24xf32>
    %105 = vector.multi_reduction <add>, %104, %cst_43 [1] : vector<24x32xf32> to vector<24xf32>
    %106 = vector.shape_cast %105 : vector<24xf32> to vector<24x1xf32>
    %cst_44 = arith.constant 3.200000e+01 : f32
    %107 = vector.broadcast %cst_44 : f32 to vector<24x1xf32>
    %108 = arith.divf %106, %107 : vector<24x1xf32>
    %109 = vector.broadcast %101 : vector<24x1xf32> to vector<24x32xf32>
    %110 = arith.subf %93, %109 : vector<24x32xf32>
    %cst_45 = arith.constant 9.99999974E-6 : f32
    %111 = vector.broadcast %cst_45 : f32 to vector<24x1xf32>
    %112 = arith.addf %108, %111 : vector<24x1xf32>
    %113 = math.rsqrt %112 : vector<24x1xf32>
    %114 = vector.broadcast %113 : vector<24x1xf32> to vector<24x32xf32>
    %115 = arith.mulf %110, %114 : vector<24x32xf32>
    %116 = vector.broadcast %95 : vector<1x32xf32> to vector<24x32xf32>
    %117 = arith.mulf %115, %116 : vector<24x32xf32>
    %118 = vector.broadcast %97 : vector<1x32xf32> to vector<24x32xf32>
    %119 = arith.addf %117, %118 : vector<24x32xf32>
    %c0_46 = arith.constant 0 : index
    %c0_47 = arith.constant 0 : index
    %c0_48 = arith.constant 0 : index
    %120 = vector.load %arg10[%c0_46, %c0_47, %c0_48] : memref<2x32x64xbf16, #tpu.memory_space<vmem>>, vector<1x32x64xbf16>
    %121 = vector.shape_cast %120 : vector<1x32x64xbf16> to vector<32x64xbf16>
    %122 = arith.truncf %119 : vector<24x32xf32> to vector<24x32xbf16>
    %cst_49 = arith.constant dense<0.000000e+00> : vector<24x64xf32>
    %123 = tpu.matmul %122, %121, %cst_49 {dimension_numbers = #tpu.dot_dimension_numbers<[1], [0], [0], [1], [0, 0, 1, 1], [], []>} : vector<24x32xbf16>, vector<32x64xbf16>, vector<24x64xf32> -> vector<24x64xf32>
    %c0_50 = arith.constant 0 : index
    %c0_51 = arith.constant 0 : index
    %c0_52 = arith.constant 0 : index
    %124 = vector.load %arg11[%c0_50, %c0_51, %c0_52] : memref<2x1x64xf32, #tpu.memory_space<vmem>>, vector<1x1x64xf32>
    %125 = vector.shape_cast %124 : vector<1x1x64xf32> to vector<1x64xf32>
    %126 = vector.broadcast %125 : vector<1x64xf32> to vector<24x64xf32>
    %127 = arith.addf %123, %126 : vector<24x64xf32>
    %cst_53 = arith.constant 0.000000e+00 : f32
    %128 = vector.broadcast %cst_53 : f32 to vector<24x64xf32>
    %129 = arith.maximumf %127, %128 : vector<24x64xf32>
    %c0_54 = arith.constant 0 : index
    %c0_55 = arith.constant 0 : index
    %c0_56 = arith.constant 0 : index
    %130 = vector.load %arg12[%c0_54, %c0_55, %c0_56] : memref<2x64x32xbf16, #tpu.memory_space<vmem>>, vector<1x64x32xbf16>
    %131 = vector.shape_cast %130 : vector<1x64x32xbf16> to vector<64x32xbf16>
    %132 = arith.truncf %129 : vector<24x64xf32> to vector<24x64xbf16>
    %cst_57 = arith.constant dense<0.000000e+00> : vector<24x32xf32>
    %133 = tpu.matmul %132, %131, %cst_57 {dimension_numbers = #tpu.dot_dimension_numbers<[1], [0], [0], [1], [0, 0, 1, 1], [], []>} : vector<24x64xbf16>, vector<64x32xbf16>, vector<24x32xf32> -> vector<24x32xf32>
    %c0_58 = arith.constant 0 : index
    %c0_59 = arith.constant 0 : index
    %c0_60 = arith.constant 0 : index
    %134 = vector.load %arg13[%c0_58, %c0_59, %c0_60] : memref<2x1x32xf32, #tpu.memory_space<vmem>>, vector<1x1x32xf32>
    %135 = vector.shape_cast %134 : vector<1x1x32xf32> to vector<1x32xf32>
    %136 = vector.broadcast %135 : vector<1x32xf32> to vector<24x32xf32>
    %137 = arith.addf %133, %136 : vector<24x32xf32>
    %138 = arith.addf %119, %137 : vector<24x32xf32>
    %c0_61 = arith.constant 0 : index
    %c0_62 = arith.constant 0 : index
    %c0_63 = arith.constant 0 : index
    %139 = vector.load %arg8[%c0_61, %c0_62, %c0_63] : memref<2x1x32xf32, #tpu.memory_space<vmem>>, vector<1x1x32xf32>
    %140 = vector.shape_cast %139 : vector<1x1x32xf32> to vector<1x32xf32>
    %c0_64 = arith.constant 0 : index
    %c0_65 = arith.constant 0 : index
    %c0_66 = arith.constant 0 : index
    %141 = vector.load %arg9[%c0_64, %c0_65, %c0_66] : memref<2x1x32xf32, #tpu.memory_space<vmem>>, vector<1x1x32xf32>
    %142 = vector.shape_cast %141 : vector<1x1x32xf32> to vector<1x32xf32>
    %cst_67 = arith.constant dense<0.000000e+00> : vector<24xf32>
    %143 = vector.multi_reduction <add>, %138, %cst_67 [1] : vector<24x32xf32> to vector<24xf32>
    %144 = vector.shape_cast %143 : vector<24xf32> to vector<24x1xf32>
    %cst_68 = arith.constant 3.200000e+01 : f32
    %145 = vector.broadcast %cst_68 : f32 to vector<24x1xf32>
    %146 = arith.divf %144, %145 : vector<24x1xf32>
    %147 = vector.broadcast %146 : vector<24x1xf32> to vector<24x32xf32>
    %148 = arith.subf %138, %147 : vector<24x32xf32>
    %149 = arith.mulf %148, %148 : vector<24x32xf32>
    %cst_69 = arith.constant dense<0.000000e+00> : vector<24xf32>
    %150 = vector.multi_reduction <add>, %149, %cst_69 [1] : vector<24x32xf32> to vector<24xf32>
    %151 = vector.shape_cast %150 : vector<24xf32> to vector<24x1xf32>
    %cst_70 = arith.constant 3.200000e+01 : f32
    %152 = vector.broadcast %cst_70 : f32 to vector<24x1xf32>
    %153 = arith.divf %151, %152 : vector<24x1xf32>
    %154 = vector.broadcast %146 : vector<24x1xf32> to vector<24x32xf32>
    %155 = arith.subf %138, %154 : vector<24x32xf32>
    %cst_71 = arith.constant 9.99999974E-6 : f32
    %156 = vector.broadcast %cst_71 : f32 to vector<24x1xf32>
    %157 = arith.addf %153, %156 : vector<24x1xf32>
    %158 = math.rsqrt %157 : vector<24x1xf32>
    %159 = vector.broadcast %158 : vector<24x1xf32> to vector<24x32xf32>
    %160 = arith.mulf %155, %159 : vector<24x32xf32>
    %161 = vector.broadcast %140 : vector<1x32xf32> to vector<24x32xf32>
    %162 = arith.mulf %160, %161 : vector<24x32xf32>
    %163 = vector.broadcast %142 : vector<1x32xf32> to vector<24x32xf32>
    %164 = arith.addf %162, %163 : vector<24x32xf32>
    %c1 = arith.constant 1 : index
    %c0_72 = arith.constant 0 : index
    %c0_73 = arith.constant 0 : index
    %165 = vector.load %arg2[%c1, %c0_72, %c0_73] : memref<2x32x96xbf16, #tpu.memory_space<vmem>>, vector<1x32x96xbf16>
    %166 = vector.shape_cast %165 : vector<1x32x96xbf16> to vector<32x96xbf16>
    %167 = arith.truncf %164 : vector<24x32xf32> to vector<24x32xbf16>
    %cst_74 = arith.constant dense<0.000000e+00> : vector<24x96xf32>
    %168 = tpu.matmul %167, %166, %cst_74 {dimension_numbers = #tpu.dot_dimension_numbers<[1], [0], [0], [1], [0, 0, 1, 1], [], []>} : vector<24x32xbf16>, vector<32x96xbf16>, vector<24x96xf32> -> vector<24x96xf32>
    %c1_75 = arith.constant 1 : index
    %c0_76 = arith.constant 0 : index
    %c0_77 = arith.constant 0 : index
    %169 = vector.load %arg3[%c1_75, %c0_76, %c0_77] : memref<2x1x96xf32, #tpu.memory_space<vmem>>, vector<1x1x96xf32>
    %170 = vector.shape_cast %169 : vector<1x1x96xf32> to vector<1x96xf32>
    %171 = vector.broadcast %170 : vector<1x96xf32> to vector<24x96xf32>
    %172 = arith.addf %168, %171 : vector<24x96xf32>
    %173 = arith.truncf %172 : vector<24x96xf32> to vector<24x96xbf16>
    %174 = vector.shape_cast %173 : vector<24x96xbf16> to vector<3x8x96xbf16>
    %175 = vector.extract_strided_slice %174 {offsets = [0, 0, 0], sizes = [3, 8, 32], strides = [1, 1, 1]} : vector<3x8x96xbf16> to vector<3x8x32xbf16>
    %176 = vector.extract_strided_slice %174 {offsets = [0, 0, 32], sizes = [3, 8, 32], strides = [1, 1, 1]} : vector<3x8x96xbf16> to vector<3x8x32xbf16>
    %177 = vector.extract_strided_slice %174 {offsets = [0, 0, 64], sizes = [3, 8, 32], strides = [1, 1, 1]} : vector<3x8x96xbf16> to vector<3x8x32xbf16>
    %178 = vector.extract_strided_slice %175 {offsets = [0, 0, 0], sizes = [3, 8, 8], strides = [1, 1, 1]} : vector<3x8x32xbf16> to vector<3x8x8xbf16>
    %179 = vector.extract_strided_slice %176 {offsets = [0, 0, 0], sizes = [3, 8, 8], strides = [1, 1, 1]} : vector<3x8x32xbf16> to vector<3x8x8xbf16>
    %180 = vector.extract_strided_slice %177 {offsets = [0, 0, 0], sizes = [3, 8, 8], strides = [1, 1, 1]} : vector<3x8x32xbf16> to vector<3x8x8xbf16>
    "tpu.trace_start"() <{level = 10 : i32, message = "bqd,bkd->bqk"}> : () -> ()
    %cst_78 = arith.constant dense<0.000000e+00> : vector<3x8x8xf32>
    %181 = tpu.matmul %178, %179, %cst_78 {dimension_numbers = #tpu.dot_dimension_numbers<[2], [2], [1], [1], [0, 0, 0, 1, 1, 1], [0], [0]>} : vector<3x8x8xbf16>, vector<3x8x8xbf16>, vector<3x8x8xf32> -> vector<3x8x8xf32>
    "tpu.trace_stop"() : () -> ()
    %cst_79 = arith.constant dense<0xFF800000> : vector<3x8xf32>
    %182 = vector.multi_reduction <maximumf>, %181, %cst_79 [2] : vector<3x8x8xf32> to vector<3x8xf32>
    %183 = vector.shape_cast %182 : vector<3x8xf32> to vector<3x8x1xf32>
    %184 = vector.broadcast %183 : vector<3x8x1xf32> to vector<3x8x8xf32>
    %185 = arith.subf %181, %184 : vector<3x8x8xf32>
    %186 = math.exp %185 : vector<3x8x8xf32>
    %cst_80 = arith.constant dense<0.000000e+00> : vector<3x8xf32>
    %187 = vector.multi_reduction <add>, %186, %cst_80 [2] : vector<3x8x8xf32> to vector<3x8xf32>
    %188 = vector.shape_cast %187 : vector<3x8xf32> to vector<3x8x1xf32>
    %cst_81 = arith.constant 1.000000e+00 : f32
    %189 = vector.broadcast %cst_81 : f32 to vector<3x8x1xf32>
    %190 = arith.divf %189, %188 : vector<3x8x1xf32>
    %191 = arith.truncf %186 : vector<3x8x8xf32> to vector<3x8x8xbf16>
    "tpu.trace_start"() <{level = 10 : i32, message = "bqk,bkd->bqd"}> : () -> ()
    %cst_82 = arith.constant dense<0.000000e+00> : vector<3x8x8xf32>
    %192 = tpu.matmul %191, %180, %cst_82 {dimension_numbers = #tpu.dot_dimension_numbers<[2], [1], [1], [2], [0, 0, 0, 1, 1, 2], [0], [0]>} : vector<3x8x8xbf16>, vector<3x8x8xbf16>, vector<3x8x8xf32> -> vector<3x8x8xf32>
    "tpu.trace_stop"() : () -> ()
    %193 = vector.broadcast %190 : vector<3x8x1xf32> to vector<3x8x8xf32>
    %194 = arith.mulf %192, %193 : vector<3x8x8xf32>
    %195 = vector.extract_strided_slice %175 {offsets = [0, 0, 8], sizes = [3, 8, 8], strides = [1, 1, 1]} : vector<3x8x32xbf16> to vector<3x8x8xbf16>
    %196 = vector.extract_strided_slice %176 {offsets = [0, 0, 8], sizes = [3, 8, 8], strides = [1, 1, 1]} : vector<3x8x32xbf16> to vector<3x8x8xbf16>
    %197 = vector.extract_strided_slice %177 {offsets = [0, 0, 8], sizes = [3, 8, 8], strides = [1, 1, 1]} : vector<3x8x32xbf16> to vector<3x8x8xbf16>
    "tpu.trace_start"() <{level = 10 : i32, message = "bqd,bkd->bqk"}> : () -> ()
    %cst_83 = arith.constant dense<0.000000e+00> : vector<3x8x8xf32>
    %198 = tpu.matmul %195, %196, %cst_83 {dimension_numbers = #tpu.dot_dimension_numbers<[2], [2], [1], [1], [0, 0, 0, 1, 1, 1], [0], [0]>} : vector<3x8x8xbf16>, vector<3x8x8xbf16>, vector<3x8x8xf32> -> vector<3x8x8xf32>
    "tpu.trace_stop"() : () -> ()
    %cst_84 = arith.constant dense<0xFF800000> : vector<3x8xf32>
    %199 = vector.multi_reduction <maximumf>, %198, %cst_84 [2] : vector<3x8x8xf32> to vector<3x8xf32>
    %200 = vector.shape_cast %199 : vector<3x8xf32> to vector<3x8x1xf32>
    %201 = vector.broadcast %200 : vector<3x8x1xf32> to vector<3x8x8xf32>
    %202 = arith.subf %198, %201 : vector<3x8x8xf32>
    %203 = math.exp %202 : vector<3x8x8xf32>
    %cst_85 = arith.constant dense<0.000000e+00> : vector<3x8xf32>
    %204 = vector.multi_reduction <add>, %203, %cst_85 [2] : vector<3x8x8xf32> to vector<3x8xf32>
    %205 = vector.shape_cast %204 : vector<3x8xf32> to vector<3x8x1xf32>
    %cst_86 = arith.constant 1.000000e+00 : f32
    %206 = vector.broadcast %cst_86 : f32 to vector<3x8x1xf32>
    %207 = arith.divf %206, %205 : vector<3x8x1xf32>
    %208 = arith.truncf %203 : vector<3x8x8xf32> to vector<3x8x8xbf16>
    "tpu.trace_start"() <{level = 10 : i32, message = "bqk,bkd->bqd"}> : () -> ()
    %cst_87 = arith.constant dense<0.000000e+00> : vector<3x8x8xf32>
    %209 = tpu.matmul %208, %197, %cst_87 {dimension_numbers = #tpu.dot_dimension_numbers<[2], [1], [1], [2], [0, 0, 0, 1, 1, 2], [0], [0]>} : vector<3x8x8xbf16>, vector<3x8x8xbf16>, vector<3x8x8xf32> -> vector<3x8x8xf32>
    "tpu.trace_stop"() : () -> ()
    %210 = vector.broadcast %207 : vector<3x8x1xf32> to vector<3x8x8xf32>
    %211 = arith.mulf %209, %210 : vector<3x8x8xf32>
    %212 = vector.extract_strided_slice %175 {offsets = [0, 0, 16], sizes = [3, 8, 8], strides = [1, 1, 1]} : vector<3x8x32xbf16> to vector<3x8x8xbf16>
    %213 = vector.extract_strided_slice %176 {offsets = [0, 0, 16], sizes = [3, 8, 8], strides = [1, 1, 1]} : vector<3x8x32xbf16> to vector<3x8x8xbf16>
    %214 = vector.extract_strided_slice %177 {offsets = [0, 0, 16], sizes = [3, 8, 8], strides = [1, 1, 1]} : vector<3x8x32xbf16> to vector<3x8x8xbf16>
    "tpu.trace_start"() <{level = 10 : i32, message = "bqd,bkd->bqk"}> : () -> ()
    %cst_88 = arith.constant dense<0.000000e+00> : vector<3x8x8xf32>
    %215 = tpu.matmul %212, %213, %cst_88 {dimension_numbers = #tpu.dot_dimension_numbers<[2], [2], [1], [1], [0, 0, 0, 1, 1, 1], [0], [0]>} : vector<3x8x8xbf16>, vector<3x8x8xbf16>, vector<3x8x8xf32> -> vector<3x8x8xf32>
    "tpu.trace_stop"() : () -> ()
    %cst_89 = arith.constant dense<0xFF800000> : vector<3x8xf32>
    %216 = vector.multi_reduction <maximumf>, %215, %cst_89 [2] : vector<3x8x8xf32> to vector<3x8xf32>
    %217 = vector.shape_cast %216 : vector<3x8xf32> to vector<3x8x1xf32>
    %218 = vector.broadcast %217 : vector<3x8x1xf32> to vector<3x8x8xf32>
    %219 = arith.subf %215, %218 : vector<3x8x8xf32>
    %220 = math.exp %219 : vector<3x8x8xf32>
    %cst_90 = arith.constant dense<0.000000e+00> : vector<3x8xf32>
    %221 = vector.multi_reduction <add>, %220, %cst_90 [2] : vector<3x8x8xf32> to vector<3x8xf32>
    %222 = vector.shape_cast %221 : vector<3x8xf32> to vector<3x8x1xf32>
    %cst_91 = arith.constant 1.000000e+00 : f32
    %223 = vector.broadcast %cst_91 : f32 to vector<3x8x1xf32>
    %224 = arith.divf %223, %222 : vector<3x8x1xf32>
    %225 = arith.truncf %220 : vector<3x8x8xf32> to vector<3x8x8xbf16>
    "tpu.trace_start"() <{level = 10 : i32, message = "bqk,bkd->bqd"}> : () -> ()
    %cst_92 = arith.constant dense<0.000000e+00> : vector<3x8x8xf32>
    %226 = tpu.matmul %225, %214, %cst_92 {dimension_numbers = #tpu.dot_dimension_numbers<[2], [1], [1], [2], [0, 0, 0, 1, 1, 2], [0], [0]>} : vector<3x8x8xbf16>, vector<3x8x8xbf16>, vector<3x8x8xf32> -> vector<3x8x8xf32>
    "tpu.trace_stop"() : () -> ()
    %227 = vector.broadcast %224 : vector<3x8x1xf32> to vector<3x8x8xf32>
    %228 = arith.mulf %226, %227 : vector<3x8x8xf32>
    %229 = vector.extract_strided_slice %175 {offsets = [0, 0, 24], sizes = [3, 8, 8], strides = [1, 1, 1]} : vector<3x8x32xbf16> to vector<3x8x8xbf16>
    %230 = vector.extract_strided_slice %176 {offsets = [0, 0, 24], sizes = [3, 8, 8], strides = [1, 1, 1]} : vector<3x8x32xbf16> to vector<3x8x8xbf16>
    %231 = vector.extract_strided_slice %177 {offsets = [0, 0, 24], sizes = [3, 8, 8], strides = [1, 1, 1]} : vector<3x8x32xbf16> to vector<3x8x8xbf16>
    "tpu.trace_start"() <{level = 10 : i32, message = "bqd,bkd->bqk"}> : () -> ()
    %cst_93 = arith.constant dense<0.000000e+00> : vector<3x8x8xf32>
    %232 = tpu.matmul %229, %230, %cst_93 {dimension_numbers = #tpu.dot_dimension_numbers<[2], [2], [1], [1], [0, 0, 0, 1, 1, 1], [0], [0]>} : vector<3x8x8xbf16>, vector<3x8x8xbf16>, vector<3x8x8xf32> -> vector<3x8x8xf32>
    "tpu.trace_stop"() : () -> ()
    %cst_94 = arith.constant dense<0xFF800000> : vector<3x8xf32>
    %233 = vector.multi_reduction <maximumf>, %232, %cst_94 [2] : vector<3x8x8xf32> to vector<3x8xf32>
    %234 = vector.shape_cast %233 : vector<3x8xf32> to vector<3x8x1xf32>
    %235 = vector.broadcast %234 : vector<3x8x1xf32> to vector<3x8x8xf32>
    %236 = arith.subf %232, %235 : vector<3x8x8xf32>
    %237 = math.exp %236 : vector<3x8x8xf32>
    %cst_95 = arith.constant dense<0.000000e+00> : vector<3x8xf32>
    %238 = vector.multi_reduction <add>, %237, %cst_95 [2] : vector<3x8x8xf32> to vector<3x8xf32>
    %239 = vector.shape_cast %238 : vector<3x8xf32> to vector<3x8x1xf32>
    %cst_96 = arith.constant 1.000000e+00 : f32
    %240 = vector.broadcast %cst_96 : f32 to vector<3x8x1xf32>
    %241 = arith.divf %240, %239 : vector<3x8x1xf32>
    %242 = arith.truncf %237 : vector<3x8x8xf32> to vector<3x8x8xbf16>
    "tpu.trace_start"() <{level = 10 : i32, message = "bqk,bkd->bqd"}> : () -> ()
    %cst_97 = arith.constant dense<0.000000e+00> : vector<3x8x8xf32>
    %243 = tpu.matmul %242, %231, %cst_97 {dimension_numbers = #tpu.dot_dimension_numbers<[2], [1], [1], [2], [0, 0, 0, 1, 1, 2], [0], [0]>} : vector<3x8x8xbf16>, vector<3x8x8xbf16>, vector<3x8x8xf32> -> vector<3x8x8xf32>
    "tpu.trace_stop"() : () -> ()
    %244 = vector.broadcast %241 : vector<3x8x1xf32> to vector<3x8x8xf32>
    %245 = arith.mulf %243, %244 : vector<3x8x8xf32>
    %246 = tpu.concatenate %194, %211, %228, %245 in 2 : vector<3x8x8xf32>, vector<3x8x8xf32>, vector<3x8x8xf32>, vector<3x8x8xf32> -> vector<3x8x32xf32>
    %247 = vector.shape_cast %246 : vector<3x8x32xf32> to vector<24x32xf32>
    %c1_98 = arith.constant 1 : index
    %c0_99 = arith.constant 0 : index
    %c0_100 = arith.constant 0 : index
    %248 = vector.load %arg4[%c1_98, %c0_99, %c0_100] : memref<2x32x32xbf16, #tpu.memory_space<vmem>>, vector<1x32x32xbf16>
    %249 = vector.shape_cast %248 : vector<1x32x32xbf16> to vector<32x32xbf16>
    %250 = arith.truncf %247 : vector<24x32xf32> to vector<24x32xbf16>
    %cst_101 = arith.constant dense<0.000000e+00> : vector<24x32xf32>
    %251 = tpu.matmul %250, %249, %cst_101 {dimension_numbers = #tpu.dot_dimension_numbers<[1], [0], [0], [1], [0, 0, 1, 1], [], []>} : vector<24x32xbf16>, vector<32x32xbf16>, vector<24x32xf32> -> vector<24x32xf32>
    %c1_102 = arith.constant 1 : index
    %c0_103 = arith.constant 0 : index
    %c0_104 = arith.constant 0 : index
    %252 = vector.load %arg5[%c1_102, %c0_103, %c0_104] : memref<2x1x32xf32, #tpu.memory_space<vmem>>, vector<1x1x32xf32>
    %253 = vector.shape_cast %252 : vector<1x1x32xf32> to vector<1x32xf32>
    %254 = vector.broadcast %253 : vector<1x32xf32> to vector<24x32xf32>
    %255 = arith.addf %251, %254 : vector<24x32xf32>
    %256 = arith.addf %164, %255 : vector<24x32xf32>
    %c1_105 = arith.constant 1 : index
    %c0_106 = arith.constant 0 : index
    %c0_107 = arith.constant 0 : index
    %257 = vector.load %arg6[%c1_105, %c0_106, %c0_107] : memref<2x1x32xf32, #tpu.memory_space<vmem>>, vector<1x1x32xf32>
    %258 = vector.shape_cast %257 : vector<1x1x32xf32> to vector<1x32xf32>
    %c1_108 = arith.constant 1 : index
    %c0_109 = arith.constant 0 : index
    %c0_110 = arith.constant 0 : index
    %259 = vector.load %arg7[%c1_108, %c0_109, %c0_110] : memref<2x1x32xf32, #tpu.memory_space<vmem>>, vector<1x1x32xf32>
    %260 = vector.shape_cast %259 : vector<1x1x32xf32> to vector<1x32xf32>
    %cst_111 = arith.constant dense<0.000000e+00> : vector<24xf32>
    %261 = vector.multi_reduction <add>, %256, %cst_111 [1] : vector<24x32xf32> to vector<24xf32>
    %262 = vector.shape_cast %261 : vector<24xf32> to vector<24x1xf32>
    %cst_112 = arith.constant 3.200000e+01 : f32
    %263 = vector.broadcast %cst_112 : f32 to vector<24x1xf32>
    %264 = arith.divf %262, %263 : vector<24x1xf32>
    %265 = vector.broadcast %264 : vector<24x1xf32> to vector<24x32xf32>
    %266 = arith.subf %256, %265 : vector<24x32xf32>
    %267 = arith.mulf %266, %266 : vector<24x32xf32>
    %cst_113 = arith.constant dense<0.000000e+00> : vector<24xf32>
    %268 = vector.multi_reduction <add>, %267, %cst_113 [1] : vector<24x32xf32> to vector<24xf32>
    %269 = vector.shape_cast %268 : vector<24xf32> to vector<24x1xf32>
    %cst_114 = arith.constant 3.200000e+01 : f32
    %270 = vector.broadcast %cst_114 : f32 to vector<24x1xf32>
    %271 = arith.divf %269, %270 : vector<24x1xf32>
    %272 = vector.broadcast %264 : vector<24x1xf32> to vector<24x32xf32>
    %273 = arith.subf %256, %272 : vector<24x32xf32>
    %cst_115 = arith.constant 9.99999974E-6 : f32
    %274 = vector.broadcast %cst_115 : f32 to vector<24x1xf32>
    %275 = arith.addf %271, %274 : vector<24x1xf32>
    %276 = math.rsqrt %275 : vector<24x1xf32>
    %277 = vector.broadcast %276 : vector<24x1xf32> to vector<24x32xf32>
    %278 = arith.mulf %273, %277 : vector<24x32xf32>
    %279 = vector.broadcast %258 : vector<1x32xf32> to vector<24x32xf32>
    %280 = arith.mulf %278, %279 : vector<24x32xf32>
    %281 = vector.broadcast %260 : vector<1x32xf32> to vector<24x32xf32>
    %282 = arith.addf %280, %281 : vector<24x32xf32>
    %c1_116 = arith.constant 1 : index
    %c0_117 = arith.constant 0 : index
    %c0_118 = arith.constant 0 : index
    %283 = vector.load %arg10[%c1_116, %c0_117, %c0_118] : memref<2x32x64xbf16, #tpu.memory_space<vmem>>, vector<1x32x64xbf16>
    %284 = vector.shape_cast %283 : vector<1x32x64xbf16> to vector<32x64xbf16>
    %285 = arith.truncf %282 : vector<24x32xf32> to vector<24x32xbf16>
    %cst_119 = arith.constant dense<0.000000e+00> : vector<24x64xf32>
    %286 = tpu.matmul %285, %284, %cst_119 {dimension_numbers = #tpu.dot_dimension_numbers<[1], [0], [0], [1], [0, 0, 1, 1], [], []>} : vector<24x32xbf16>, vector<32x64xbf16>, vector<24x64xf32> -> vector<24x64xf32>
    %c1_120 = arith.constant 1 : index
    %c0_121 = arith.constant 0 : index
    %c0_122 = arith.constant 0 : index
    %287 = vector.load %arg11[%c1_120, %c0_121, %c0_122] : memref<2x1x64xf32, #tpu.memory_space<vmem>>, vector<1x1x64xf32>
    %288 = vector.shape_cast %287 : vector<1x1x64xf32> to vector<1x64xf32>
    %289 = vector.broadcast %288 : vector<1x64xf32> to vector<24x64xf32>
    %290 = arith.addf %286, %289 : vector<24x64xf32>
    %cst_123 = arith.constant 0.000000e+00 : f32
    %291 = vector.broadcast %cst_123 : f32 to vector<24x64xf32>
    %292 = arith.maximumf %290, %291 : vector<24x64xf32>
    %c1_124 = arith.constant 1 : index
    %c0_125 = arith.constant 0 : index
    %c0_126 = arith.constant 0 : index
    %293 = vector.load %arg12[%c1_124, %c0_125, %c0_126] : memref<2x64x32xbf16, #tpu.memory_space<vmem>>, vector<1x64x32xbf16>
    %294 = vector.shape_cast %293 : vector<1x64x32xbf16> to vector<64x32xbf16>
    %295 = arith.truncf %292 : vector<24x64xf32> to vector<24x64xbf16>
    %cst_127 = arith.constant dense<0.000000e+00> : vector<24x32xf32>
    %296 = tpu.matmul %295, %294, %cst_127 {dimension_numbers = #tpu.dot_dimension_numbers<[1], [0], [0], [1], [0, 0, 1, 1], [], []>} : vector<24x64xbf16>, vector<64x32xbf16>, vector<24x32xf32> -> vector<24x32xf32>
    %c1_128 = arith.constant 1 : index
    %c0_129 = arith.constant 0 : index
    %c0_130 = arith.constant 0 : index
    %297 = vector.load %arg13[%c1_128, %c0_129, %c0_130] : memref<2x1x32xf32, #tpu.memory_space<vmem>>, vector<1x1x32xf32>
    %298 = vector.shape_cast %297 : vector<1x1x32xf32> to vector<1x32xf32>
    %299 = vector.broadcast %298 : vector<1x32xf32> to vector<24x32xf32>
    %300 = arith.addf %296, %299 : vector<24x32xf32>
    %301 = arith.addf %282, %300 : vector<24x32xf32>
    %c1_131 = arith.constant 1 : index
    %c0_132 = arith.constant 0 : index
    %c0_133 = arith.constant 0 : index
    %302 = vector.load %arg8[%c1_131, %c0_132, %c0_133] : memref<2x1x32xf32, #tpu.memory_space<vmem>>, vector<1x1x32xf32>
    %303 = vector.shape_cast %302 : vector<1x1x32xf32> to vector<1x32xf32>
    %c1_134 = arith.constant 1 : index
    %c0_135 = arith.constant 0 : index
    %c0_136 = arith.constant 0 : index
    %304 = vector.load %arg9[%c1_134, %c0_135, %c0_136] : memref<2x1x32xf32, #tpu.memory_space<vmem>>, vector<1x1x32xf32>
    %305 = vector.shape_cast %304 : vector<1x1x32xf32> to vector<1x32xf32>
    %cst_137 = arith.constant dense<0.000000e+00> : vector<24xf32>
    %306 = vector.multi_reduction <add>, %301, %cst_137 [1] : vector<24x32xf32> to vector<24xf32>
    %307 = vector.shape_cast %306 : vector<24xf32> to vector<24x1xf32>
    %cst_138 = arith.constant 3.200000e+01 : f32
    %308 = vector.broadcast %cst_138 : f32 to vector<24x1xf32>
    %309 = arith.divf %307, %308 : vector<24x1xf32>
    %310 = vector.broadcast %309 : vector<24x1xf32> to vector<24x32xf32>
    %311 = arith.subf %301, %310 : vector<24x32xf32>
    %312 = arith.mulf %311, %311 : vector<24x32xf32>
    %cst_139 = arith.constant dense<0.000000e+00> : vector<24xf32>
    %313 = vector.multi_reduction <add>, %312, %cst_139 [1] : vector<24x32xf32> to vector<24xf32>
    %314 = vector.shape_cast %313 : vector<24xf32> to vector<24x1xf32>
    %cst_140 = arith.constant 3.200000e+01 : f32
    %315 = vector.broadcast %cst_140 : f32 to vector<24x1xf32>
    %316 = arith.divf %314, %315 : vector<24x1xf32>
    %317 = vector.broadcast %309 : vector<24x1xf32> to vector<24x32xf32>
    %318 = arith.subf %301, %317 : vector<24x32xf32>
    %cst_141 = arith.constant 9.99999974E-6 : f32
    %319 = vector.broadcast %cst_141 : f32 to vector<24x1xf32>
    %320 = arith.addf %316, %319 : vector<24x1xf32>
    %321 = math.rsqrt %320 : vector<24x1xf32>
    %322 = vector.broadcast %321 : vector<24x1xf32> to vector<24x32xf32>
    %323 = arith.mulf %318, %322 : vector<24x32xf32>
    %324 = vector.broadcast %303 : vector<1x32xf32> to vector<24x32xf32>
    %325 = arith.mulf %323, %324 : vector<24x32xf32>
    %326 = vector.broadcast %305 : vector<1x32xf32> to vector<24x32xf32>
    %327 = arith.addf %325, %326 : vector<24x32xf32>
    %c0_142 = arith.constant 0 : index
    %c0_143 = arith.constant 0 : index
    %328 = vector.load %arg14[%c0_142, %c0_143] : memref<32x32xbf16, #tpu.memory_space<vmem>>, vector<32x32xbf16>
    %329 = arith.truncf %327 : vector<24x32xf32> to vector<24x32xbf16>
    %cst_144 = arith.constant dense<0.000000e+00> : vector<24x32xf32>
    %330 = tpu.matmul %329, %328, %cst_144 {dimension_numbers = #tpu.dot_dimension_numbers<[1], [0], [0], [1], [0, 0, 1, 1], [], []>} : vector<24x32xbf16>, vector<32x32xbf16>, vector<24x32xf32> -> vector<24x32xf32>
    %c0_145 = arith.constant 0 : index
    %c0_146 = arith.constant 0 : index
    %331 = vector.load %arg15[%c0_145, %c0_146] : memref<1x32xf32, #tpu.memory_space<vmem>>, vector<1x32xf32>
    %332 = vector.broadcast %331 : vector<1x32xf32> to vector<24x32xf32>
    %333 = arith.addf %330, %332 : vector<24x32xf32>
    %cst_147 = arith.constant 0.000000e+00 : f32
    %334 = vector.broadcast %cst_147 : f32 to vector<24x32xf32>
    %335 = arith.maximumf %333, %334 : vector<24x32xf32>
    %c0_148 = arith.constant 0 : index
    %c0_149 = arith.constant 0 : index
    %336 = vector.load %arg16[%c0_148, %c0_149] : memref<32x32xbf16, #tpu.memory_space<vmem>>, vector<32x32xbf16>
    %337 = arith.truncf %335 : vector<24x32xf32> to vector<24x32xbf16>
    %cst_150 = arith.constant dense<0.000000e+00> : vector<24x32xf32>
    %338 = tpu.matmul %337, %336, %cst_150 {dimension_numbers = #tpu.dot_dimension_numbers<[1], [0], [0], [1], [0, 0, 1, 1], [], []>} : vector<24x32xbf16>, vector<32x32xbf16>, vector<24x32xf32> -> vector<24x32xf32>
    %c0_151 = arith.constant 0 : index
    %c0_152 = arith.constant 0 : index
    %339 = vector.load %arg17[%c0_151, %c0_152] : memref<1x32xf32, #tpu.memory_space<vmem>>, vector<1x32xf32>
    %340 = vector.broadcast %339 : vector<1x32xf32> to vector<24x32xf32>
    %341 = arith.addf %338, %340 : vector<24x32xf32>
    %342 = vector.shape_cast %341 : vector<24x32xf32> to vector<3x8x32xf32>
    %cst_153 = arith.constant dense<0.000000e+00> : vector<3x32xf32>
    %343 = vector.multi_reduction <add>, %342, %cst_153 [1] : vector<3x8x32xf32> to vector<3x32xf32>
    %cst_154 = arith.constant 8.000000e+00 : f32
    %344 = vector.broadcast %cst_154 : f32 to vector<3x32xf32>
    %345 = arith.divf %343, %344 : vector<3x32xf32>
    %c0_155 = arith.constant 0 : index
    %c0_156 = arith.constant 0 : index
    %346 = vector.load %arg18[%c0_155, %c0_156] : memref<3x32xf32, #tpu.memory_space<vmem>>, vector<3x32xf32>
    tpu.vector_store %arg18[%c0_155, %c0_156], %345 {strides = array<i32>} : memref<3x32xf32, #tpu.memory_space<vmem>>, vector<3x32xf32>,
    return
  }
  func.func @transform_0(%arg0: i32) -> (i32, i32, i32) {
    %c0_i32 = arith.constant 0 : i32
    %c0_i32_0 = arith.constant 0 : i32
    %c0_i32_1 = arith.constant 0 : i32
    return %arg0, %c0_i32, %c0_i32_0 : i32, i32, i32
  }
  func.func @transform_1(%arg0: i32) -> (i32, i32, i32) {
    %c0_i32 = arith.constant 0 : i32
    %c0_i32_0 = arith.constant 0 : i32
    %c0_i32_1 = arith.constant 0 : i32
    %c0_i32_2 = arith.constant 0 : i32
    return %c0_i32, %c0_i32_0, %c0_i32_1 : i32, i32, i32
  }
  func.func @transform_2(%arg0: i32) -> (i32, i32, i32) {
    %c0_i32 = arith.constant 0 : i32
    %c0_i32_0 = arith.constant 0 : i32
    %c0_i32_1 = arith.constant 0 : i32
    %c0_i32_2 = arith.constant 0 : i32
    return %c0_i32, %c0_i32_0, %c0_i32_1 : i32, i32, i32
  }
  func.func @transform_3(%arg0: i32) -> (i32, i32, i32) {
    %c0_i32 = arith.constant 0 : i32
    %c0_i32_0 = arith.constant 0 : i32
    %c0_i32_1 = arith.constant 0 : i32
    %c0_i32_2 = arith.constant 0 : i32
    return %c0_i32, %c0_i32_0, %c0_i32_1 : i32, i32, i32
  }
  func.func @transform_4(%arg0: i32) -> (i32, i32, i32) {
    %c0_i32 = arith.constant 0 : i32
    %c0_i32_0 = arith.constant 0 : i32
    %c0_i32_1 = arith.constant 0 : i32
    %c0_i32_2 = arith.constant 0 : i32
    return %c0_i32, %c0_i32_0, %c0_i32_1 : i32, i32, i32
  }
  func.func @transform_5(%arg0: i32) -> (i32, i32, i32) {
    %c0_i32 = arith.constant 0 : i32
    %c0_i32_0 = arith.constant 0 : i32
    %c0_i32_1 = arith.constant 0 : i32
    %c0_i32_2 = arith.constant 0 : i32
    return %c0_i32, %c0_i32_0, %c0_i32_1 : i32, i32, i32
  }
  func.func @transform_6(%arg0: i32) -> (i32, i32, i32) {
    %c0_i32 = arith.constant 0 : i32
    %c0_i32_0 = arith.constant 0 : i32
    %c0_i32_1 = arith.constant 0 : i32
    %c0_i32_2 = arith.constant 0 : i32
    return %c0_i32, %c0_i32_0, %c0_i32_1 : i32, i32, i32
  }
  func.func @transform_7(%arg0: i32) -> (i32, i32, i32) {
    %c0_i32 = arith.constant 0 : i32
    %c0_i32_0 = arith.constant 0 : i32
    %c0_i32_1 = arith.constant 0 : i32
    %c0_i32_2 = arith.constant 0 : i32
    return %c0_i32, %c0_i32_0, %c0_i32_1 : i32, i32, i32
  }
  func.func @transform_8(%arg0: i32) -> (i32, i32, i32) {
    %c0_i32 = arith.constant 0 : i32
    %c0_i32_0 = arith.constant 0 : i32
    %c0_i32_1 = arith.constant 0 : i32
    %c0_i32_2 = arith.constant 0 : i32
    return %c0_i32, %c0_i32_0, %c0_i32_1 : i32, i32, i32
  }
  func.func @transform_9(%arg0: i32) -> (i32, i32, i32) {
    %c0_i32 = arith.constant 0 : i32
    %c0_i32_0 = arith.constant 0 : i32
    %c0_i32_1 = arith.constant 0 : i32
    %c0_i32_2 = arith.constant 0 : i32
    return %c0_i32, %c0_i32_0, %c0_i32_1 : i32, i32, i32
  }
  func.func @transform_10(%arg0: i32) -> (i32, i32, i32) {
    %c0_i32 = arith.constant 0 : i32
    %c0_i32_0 = arith.constant 0 : i32
    %c0_i32_1 = arith.constant 0 : i32
    %c0_i32_2 = arith.constant 0 : i32
    return %c0_i32, %c0_i32_0, %c0_i32_1 : i32, i32, i32
  }
  func.func @transform_11(%arg0: i32) -> (i32, i32, i32) {
    %c0_i32 = arith.constant 0 : i32
    %c0_i32_0 = arith.constant 0 : i32
    %c0_i32_1 = arith.constant 0 : i32
    %c0_i32_2 = arith.constant 0 : i32
    return %c0_i32, %c0_i32_0, %c0_i32_1 : i32, i32, i32
  }
  func.func @transform_12(%arg0: i32) -> (i32, i32, i32) {
    %c0_i32 = arith.constant 0 : i32
    %c0_i32_0 = arith.constant 0 : i32
    %c0_i32_1 = arith.constant 0 : i32
    %c0_i32_2 = arith.constant 0 : i32
    return %c0_i32, %c0_i32_0, %c0_i32_1 : i32, i32, i32
  }
  func.func @transform_13(%arg0: i32) -> (i32, i32) {
    %c0_i32 = arith.constant 0 : i32
    %c0_i32_0 = arith.constant 0 : i32
    %c0_i32_1 = arith.constant 0 : i32
    return %c0_i32, %c0_i32_0 : i32, i32
  }
  func.func @transform_14(%arg0: i32) -> (i32, i32) {
    %c0_i32 = arith.constant 0 : i32
    %c0_i32_0 = arith.constant 0 : i32
    %c0_i32_1 = arith.constant 0 : i32
    return %c0_i32, %c0_i32_0 : i32, i32
  }
  func.func @transform_15(%arg0: i32) -> (i32, i32) {
    %c0_i32 = arith.constant 0 : i32
    %c0_i32_0 = arith.constant 0 : i32
    %c0_i32_1 = arith.constant 0 : i32
    return %c0_i32, %c0_i32_0 : i32, i32
  }
  func.func @transform_16(%arg0: i32) -> (i32, i32) {
    %c0_i32 = arith.constant 0 : i32
    %c0_i32_0 = arith.constant 0 : i32
    %c0_i32_1 = arith.constant 0 : i32
    return %c0_i32, %c0_i32_0 : i32, i32
  }
  func.func @transform_17(%arg0: i32) -> (i32, i32) {
    %c0_i32 = arith.constant 0 : i32
    %c0_i32_0 = arith.constant 0 : i32
    return %arg0, %c0_i32 : i32, i32
  }
}

</mosaic_0001>

<llo_original>
// kernel: tpu_custom_call.1
$region0: #{tpu_custom_call.1}
  #allocation0 [shape = 'u32[]', space=smem, size = 0x4, offset = 0x4, fixed_abs, tag = 'smem constant byte address 0x4 - core index']
  #allocation1 [shape = 'u32[144,128]{1,0:T(1,128)}', space=vmem, size = 0x12000, scoped, tag = 'internal scratch']
  %s0 = inlined_call_operand.hbm [shape: f32[3,8,32], index: 0, kind: input, shape index: {}]
  %s1 = inlined_call_operand.vmem [shape: bf16[2,32,96], index: 1, kind: input, shape index: {}]
  %s2 = inlined_call_operand.hbm [shape: f32[2,1,96], index: 2, kind: input, shape index: {}]
  %s3 = inlined_call_operand.vmem [shape: bf16[2,32,32], index: 3, kind: input, shape index: {}]
  %s4 = inlined_call_operand.hbm [shape: f32[2,1,32], index: 4, kind: input, shape index: {}]
  %s5 = inlined_call_operand.hbm [shape: f32[2,1,32], index: 5, kind: input, shape index: {}]
  %s6 = inlined_call_operand.hbm [shape: f32[2,1,32], index: 6, kind: input, shape index: {}]
  %s7 = inlined_call_operand.hbm [shape: f32[2,1,32], index: 7, kind: input, shape index: {}]
  %s8 = inlined_call_operand.hbm [shape: f32[2,1,32], index: 8, kind: input, shape index: {}]
  %s9 = inlined_call_operand.vmem [shape: bf16[2,32,64], index: 9, kind: input, shape index: {}]
  %s10 = inlined_call_operand.hbm [shape: f32[2,1,64], index: 10, kind: input, shape index: {}]
  %s11 = inlined_call_operand.vmem [shape: bf16[2,64,32], index: 11, kind: input, shape index: {}]
  %s12 = inlined_call_operand.hbm [shape: f32[2,1,32], index: 12, kind: input, shape index: {}]
  %s13 = inlined_call_operand.vmem [shape: bf16[32,32], index: 13, kind: input, shape index: {}]
  %s14 = inlined_call_operand.vmem [shape: f32[1,32], index: 14, kind: input, shape index: {}]
  %s15 = inlined_call_operand.hbm [shape: bf16[32,32], index: 15, kind: input, shape index: {}]
  %s16 = inlined_call_operand.vmem [shape: f32[1,32], index: 16, kind: input, shape index: {}]
  %s17 = inlined_call_operand.hbm [shape: f32[3,32], index: 17, kind: output, shape index: {}]
  %s18 = sld [smem:[#allocation0]]
  $region118: #{tpu_custom_call.1} parent=0
    _
  %s20 = ssub.s32 1, %s18
  %s21 = scalar_select 0, %s20, %s18
  $region1: #{tpu_custom_call.1} parent=0
    #allocation2 [shape = 'u8[12288]{0}', space=vmem, size = 0x3000, scoped, tag = 'input window, operand 0, single buffered']
    #allocation3 [shape = 's32[1]{0}', space=sflag, size = 0x4, scoped, tag = 'scoped memory for tpu_custom_call.1']
    #allocation4 [shape = 's32[1]{0}', space=sflag, size = 0x4, scoped, tag = 'scoped memory for tpu_custom_call.1']
    #allocation5 [shape = 'u8[1024]{0}', space=vmem, size = 0x400, scoped, tag = 'input window, operand 2, single buffered']
    #allocation6 [shape = 's32[1]{0}', space=sflag, size = 0x4, scoped, tag = 'scoped memory for tpu_custom_call.1']
    #allocation7 [shape = 'u8[1024]{0}', space=vmem, size = 0x400, scoped, tag = 'input window, operand 4, single buffered']
    #allocation8 [shape = 'u8[1024]{0}', space=vmem, size = 0x400, scoped, tag = 'input window, operand 5, single buffered']
    #allocation9 [shape = 's32[1]{0}', space=sflag, size = 0x4, scoped, tag = 'scoped memory for tpu_custom_call.1']
    #allocation10 [shape = 'u8[1024]{0}', space=vmem, size = 0x400, scoped, tag = 'input window, operand 6, single buffered']
    #allocation11 [shape = 'u8[1024]{0}', space=vmem, size = 0x400, scoped, tag = 'input window, operand 7, single buffered']
    #allocation12 [shape = 's32[1]{0}', space=sflag, size = 0x4, scoped, tag = 'scoped memory for tpu_custom_call.1']
    #allocation13 [shape = 'u8[1024]{0}', space=vmem, size = 0x400, scoped, tag = 'input window, operand 8, single buffered']
    #allocation14 [shape = 'u8[1024]{0}', space=vmem, size = 0x400, scoped, tag = 'input window, operand 10, single buffered']
    #allocation15 [shape = 's32[1]{0}', space=sflag, size = 0x4, scoped, tag = 'scoped memory for tpu_custom_call.1']
    #allocation16 [shape = 'u8[1024]{0}', space=vmem, size = 0x400, scoped, tag = 'input window, operand 12, single buffered']
    #allocation17 [shape = 'u8[8192]{0}', space=vmem, size = 0x2000, scoped, tag = 'input window, operand 15, single buffered']
    #allocation18 [shape = 's32[1]{0}', space=sflag, size = 0x4, scoped, tag = 'scoped memory for tpu_custom_call.1']
    #allocation19 [shape = 'u8[2048]{0}', space=vmem, size = 0x800, scoped, tag = 'output window, operand 0, single buffered']
    %22 = vsyncpa [#allocation3], 0
    %23 = vsyncpa [#allocation6], 0
    %24 = vsyncpa [#allocation9], 0
    %25 = vsyncpa [#allocation12], 0
    %26 = vsyncpa [#allocation15], 0
    %27 = vsyncpa [#allocation18], 0
    %28 = vsyncpa [#allocation4], 0
    // Predicated region
    $region2: #{tpu_custom_call.1} parent=1 // pred_check
      _
    $region3: #{tpu_custom_call.1} parent=1 // pred_check_branch
      %30 = sbr.rel (0) target = $region5
    $region4: #{tpu_custom_call.1} parent=1 // pred_region
      %s32 = ssub.s32 384, 384
      %33 = vsyncadd [#allocation3], %s32
      %s34 = sshll.u32 [#allocation2], 4
      %s35 = int_to_ptr.vmem [resolvable:$true] %s34
      %40 = dma.hbm_to_vmem [thread:$0]  %s0, 384, %s35, [#allocation3], 128, 128, 8
    $region5: #{tpu_custom_call.1} parent=1 // pred_fallthru
      _
    // Predicated region
    $region6: #{tpu_custom_call.1} parent=1 // pred_check
      _
    $region7: #{tpu_custom_call.1} parent=1 // pred_check_branch
      %42 = sbr.rel (0) target = $region9
    $region8: #{tpu_custom_call.1} parent=1 // pred_region
      _
    $region9: #{tpu_custom_call.1} parent=1 // pred_fallthru
      _
    // Predicated region
    $region10: #{tpu_custom_call.1} parent=1 // pred_check
      _
    $region11: #{tpu_custom_call.1} parent=1 // pred_check_branch
      %44 = sbr.rel (0) target = $region13
    $region12: #{tpu_custom_call.1} parent=1 // pred_region
      %s46 = ssub.s32 32, 32
      %47 = vsyncadd [#allocation6], %s46
      %s48 = sshll.u32 [#allocation5], 4
      %s49 = int_to_ptr.vmem [resolvable:$true] %s48
      %54 = dma.hbm_to_vmem [thread:$0]  %s2, 32, %s49, [#allocation6], 16, 16, 1
    $region13: #{tpu_custom_call.1} parent=1 // pred_fallthru
      _
    // Predicated region
    $region14: #{tpu_custom_call.1} parent=1 // pred_check
      _
    $region15: #{tpu_custom_call.1} parent=1 // pred_check_branch
      %56 = sbr.rel (0) target = $region17
    $region16: #{tpu_custom_call.1} parent=1 // pred_region
      _
    $region17: #{tpu_custom_call.1} parent=1 // pred_fallthru
      _
    // Predicated region
    $region18: #{tpu_custom_call.1} parent=1 // pred_check
      _
    $region19: #{tpu_custom_call.1} parent=1 // pred_check_branch
      %58 = sbr.rel (0) target = $region21
    $region20: #{tpu_custom_call.1} parent=1 // pred_region
      %s60 = ssub.s32 32, 32
      %61 = vsyncadd [#allocation6], %s60
      %s62 = sshll.u32 [#allocation7], 4
      %s63 = int_to_ptr.vmem [resolvable:$true] %s62
      %68 = dma.hbm_to_vmem [thread:$0]  %s4, 32, %s63, [#allocation6], 16, 16, 1
    $region21: #{tpu_custom_call.1} parent=1 // pred_fallthru
      _
    // Predicated region
    $region22: #{tpu_custom_call.1} parent=1 // pred_check
      _
    $region23: #{tpu_custom_call.1} parent=1 // pred_check_branch
      %70 = sbr.rel (0) target = $region25
    $region24: #{tpu_custom_call.1} parent=1 // pred_region
      %s72 = ssub.s32 32, 32
      %73 = vsyncadd [#allocation9], %s72
      %s74 = sshll.u32 [#allocation8], 4
      %s75 = int_to_ptr.vmem [resolvable:$true] %s74
      %80 = dma.hbm_to_vmem [thread:$0]  %s5, 32, %s75, [#allocation9], 16, 16, 1
    $region25: #{tpu_custom_call.1} parent=1 // pred_fallthru
      _
    // Predicated region
    $region26: #{tpu_custom_call.1} parent=1 // pred_check
      _
    $region27: #{tpu_custom_call.1} parent=1 // pred_check_branch
      %82 = sbr.rel (0) target = $region29
    $region28: #{tpu_custom_call.1} parent=1 // pred_region
      %s84 = ssub.s32 32, 32
      %85 = vsyncadd [#allocation9], %s84
      %s86 = sshll.u32 [#allocation10], 4
      %s87 = int_to_ptr.vmem [resolvable:$true] %s86
      %92 = dma.hbm_to_vmem [thread:$0]  %s6, 32, %s87, [#allocation9], 16, 16, 1
    $region29: #{tpu_custom_call.1} parent=1 // pred_fallthru
      _
    // Predicated region
    $region30: #{tpu_custom_call.1} parent=1 // pred_check
      _
    $region31: #{tpu_custom_call.1} parent=1 // pred_check_branch
      %94 = sbr.rel (0) target = $region33
    $region32: #{tpu_custom_call.1} parent=1 // pred_region
      %s96 = ssub.s32 32, 32
      %97 = vsyncadd [#allocation12], %s96
      %s98 = sshll.u32 [#allocation11], 4
      %s99 = int_to_ptr.vmem [resolvable:$true] %s98
      %104 = dma.hbm_to_vmem [thread:$0]  %s7, 32, %s99, [#allocation12], 16, 16, 1
    $region33: #{tpu_custom_call.1} parent=1 // pred_fallthru
      _
    // Predicated region
    $region34: #{tpu_custom_call.1} parent=1 // pred_check
      _
    $region35: #{tpu_custom_call.1} parent=1 // pred_check_branch
      %106 = sbr.rel (0) target = $region37
    $region36: #{tpu_custom_call.1} parent=1 // pred_region
      %s108 = ssub.s32 32, 32
      %109 = vsyncadd [#allocation12], %s108
      %s110 = sshll.u32 [#allocation13], 4
      %s111 = int_to_ptr.vmem [resolvable:$true] %s110
      %116 = dma.hbm_to_vmem [thread:$0]  %s8, 32, %s111, [#allocation12], 16, 16, 1
    $region37: #{tpu_custom_call.1} parent=1 // pred_fallthru
      _
    // Predicated region
    $region38: #{tpu_custom_call.1} parent=1 // pred_check
      _
    $region39: #{tpu_custom_call.1} parent=1 // pred_check_branch
      %118 = sbr.rel (0) target = $region41
    $region40: #{tpu_custom_call.1} parent=1 // pred_region
      _
    $region41: #{tpu_custom_call.1} parent=1 // pred_fallthru
      _
    // Predicated region
    $region42: #{tpu_custom_call.1} parent=1 // pred_check
      _
    $region43: #{tpu_custom_call.1} parent=1 // pred_check_branch
      %120 = sbr.rel (0) target = $region45
    $region44: #{tpu_custom_call.1} parent=1 // pred_region
      %s122 = ssub.s32 32, 32
      %123 = vsyncadd [#allocation15], %s122
      %s124 = sshll.u32 [#allocation14], 4
      %s125 = int_to_ptr.vmem [resolvable:$true] %s124
      %130 = dma.hbm_to_vmem [thread:$0]  %s10, 32, %s125, [#allocation15], 16, 16, 1
    $region45: #{tpu_custom_call.1} parent=1 // pred_fallthru
      _
    // Predicated region
    $region46: #{tpu_custom_call.1} parent=1 // pred_check
      _
    $region47: #{tpu_custom_call.1} parent=1 // pred_check_branch
      %132 = sbr.rel (0) target = $region49
    $region48: #{tpu_custom_call.1} parent=1 // pred_region
      _
    $region49: #{tpu_custom_call.1} parent=1 // pred_fallthru
      _
    // Predicated region
    $region50: #{tpu_custom_call.1} parent=1 // pred_check
      _
    $region51: #{tpu_custom_call.1} parent=1 // pred_check_branch
      %134 = sbr.rel (0) target = $region53
    $region52: #{tpu_custom_call.1} parent=1 // pred_region
      %s136 = ssub.s32 32, 32
      %137 = vsyncadd [#allocation15], %s136
      %s138 = sshll.u32 [#allocation16], 4
      %s139 = int_to_ptr.vmem [resolvable:$true] %s138
      %144 = dma.hbm_to_vmem [thread:$0]  %s12, 32, %s139, [#allocation15], 16, 16, 1
    $region53: #{tpu_custom_call.1} parent=1 // pred_fallthru
      _
    // Predicated region
    $region54: #{tpu_custom_call.1} parent=1 // pred_check
      _
    $region55: #{tpu_custom_call.1} parent=1 // pred_check_branch
      %146 = sbr.rel (0) target = $region57
    $region56: #{tpu_custom_call.1} parent=1 // pred_region
      _
    $region57: #{tpu_custom_call.1} parent=1 // pred_fallthru
      _
    // Predicated region
    $region58: #{tpu_custom_call.1} parent=1 // pred_check
      _
    $region59: #{tpu_custom_call.1} parent=1 // pred_check_branch
      %148 = sbr.rel (0) target = $region61
    $region60: #{tpu_custom_call.1} parent=1 // pred_region
      _
    $region61: #{tpu_custom_call.1} parent=1 // pred_fallthru
      _
    // Predicated region
    $region62: #{tpu_custom_call.1} parent=1 // pred_check
      _
    $region63: #{tpu_custom_call.1} parent=1 // pred_check_branch
      %150 = sbr.rel (0) target = $region65
    $region64: #{tpu_custom_call.1} parent=1 // pred_region
      %s152 = ssub.s32 256, 256
      %153 = vsyncadd [#allocation18], %s152
      %s154 = sshll.u32 [#allocation17], 4
      %s155 = int_to_ptr.vmem [resolvable:$true] %s154
      %160 = dma.hbm_to_vmem [thread:$0]  %s15, 256, %s155, [#allocation18], 64, 64, 4
    $region65: #{tpu_custom_call.1} parent=1 // pred_fallthru
      _
    // Predicated region
    $region66: #{tpu_custom_call.1} parent=1 // pred_check
      _
    $region67: #{tpu_custom_call.1} parent=1 // pred_check_branch
      %162 = sbr.rel (0) target = $region69
    $region68: #{tpu_custom_call.1} parent=1 // pred_region
      _
    $region69: #{tpu_custom_call.1} parent=1 // pred_fallthru
      _
    // Predicated region
    $region70: #{tpu_custom_call.1} parent=1 // pred_check
      _
    $region71: #{tpu_custom_call.1} parent=1 // pred_check_branch
      %164 = sbr.rel (0) target = $region73
    $region72: #{tpu_custom_call.1} parent=1 // pred_region
      %165 = dma.done [#allocation3], 384
    $region73: #{tpu_custom_call.1} parent=1 // pred_fallthru
      _
    // Predicated region
    $region74: #{tpu_custom_call.1} parent=1 // pred_check
      _
    $region75: #{tpu_custom_call.1} parent=1 // pred_check_branch
      %167 = sbr.rel (0) target = $region77
    $region76: #{tpu_custom_call.1} parent=1 // pred_region
      %168 = dma.done [#allocation6], 32
    $region77: #{tpu_custom_call.1} parent=1 // pred_fallthru
      _
    // Predicated region
    $region78: #{tpu_custom_call.1} parent=1 // pred_check
      _
    $region79: #{tpu_custom_call.1} parent=1 // pred_check_branch
      %170 = sbr.rel (0) target = $region81
    $region80: #{tpu_custom_call.1} parent=1 // pred_region
      %171 = dma.done [#allocation6], 32
    $region81: #{tpu_custom_call.1} parent=1 // pred_fallthru
      _
    // Predicated region
    $region82: #{tpu_custom_call.1} parent=1 // pred_check
      _
    $region83: #{tpu_custom_call.1} parent=1 // pred_check_branch
      %173 = sbr.rel (0) target = $region85
    $region84: #{tpu_custom_call.1} parent=1 // pred_region
      %174 = dma.done [#allocation9], 32
    $region85: #{tpu_custom_call.1} parent=1 // pred_fallthru
      _
    // Predicated region
    $region86: #{tpu_custom_call.1} parent=1 // pred_check
      _
    $region87: #{tpu_custom_call.1} parent=1 // pred_check_branch
      %176 = sbr.rel (0) target = $region89
    $region88: #{tpu_custom_call.1} parent=1 // pred_region
      %177 = dma.done [#allocation9], 32
    $region89: #{tpu_custom_call.1} parent=1 // pred_fallthru
      _
    // Predicated region
    $region90: #{tpu_custom_call.1} parent=1 // pred_check
      _
    $region91: #{tpu_custom_call.1} parent=1 // pred_check_branch
      %179 = sbr.rel (0) target = $region93
    $region92: #{tpu_custom_call.1} parent=1 // pred_region
      %180 = dma.done [#allocation12], 32
    $region93: #{tpu_custom_call.1} parent=1 // pred_fallthru
      _
    // Predicated region
    $region94: #{tpu_custom_call.1} parent=1 // pred_check
      _
    $region95: #{tpu_custom_call.1} parent=1 // pred_check_branch
      %182 = sbr.rel (0) target = $region97
    $region96: #{tpu_custom_call.1} parent=1 // pred_region
      %183 = dma.done [#allocation12], 32
    $region97: #{tpu_custom_call.1} parent=1 // pred_fallthru
      _
    // Predicated region
    $region98: #{tpu_custom_call.1} parent=1 // pred_check
      _
    $region99: #{tpu_custom_call.1} parent=1 // pred_check_branch
      %185 = sbr.rel (0) target = $region101
    $region100: #{tpu_custom_call.1} parent=1 // pred_region
      %186 = dma.done [#allocation15], 32
    $region101: #{tpu_custom_call.1} parent=1 // pred_fallthru
      _
    // Predicated region
    $region102: #{tpu_custom_call.1} parent=1 // pred_check
      _
    $region103: #{tpu_custom_call.1} parent=1 // pred_check_branch
      %188 = sbr.rel (0) target = $region105
    $region104: #{tpu_custom_call.1} parent=1 // pred_region
      %189 = dma.done [#allocation15], 32
    $region105: #{tpu_custom_call.1} parent=1 // pred_fallthru
      _
    // Predicated region
    $region106: #{tpu_custom_call.1} parent=1 // pred_check
      _
    $region107: #{tpu_custom_call.1} parent=1 // pred_check_branch
      %191 = sbr.rel (0) target = $region109
    $region108: #{tpu_custom_call.1} parent=1 // pred_region
      %192 = dma.done [#allocation18], 256
    $region109: #{tpu_custom_call.1} parent=1 // pred_fallthru
      _
    %v194 = vld [vmem:[#allocation2] sm:$0xff]
    %v195 = vld [vmem:[#allocation2 + $0x8] sm:$0xff]
    %v196 = vld [vmem:[#allocation2 + $0x10] sm:$0xff]
    %v197 = vld [vmem:[%s1] sm:$0xf]
    %v198 = vld [vmem:[%s1 + $0x4] sm:$0xf]
    %v199 = vld [vmem:[%s1 + $0x8] sm:$0xf]
    %v200 = vld [vmem:[%s1 + $0xc] sm:$0xf]
    %v201 = vpack.c.bf16 %v195, %v194
    %v202 = vpack.c.bf16 %v196, %v196
    %v203 = vld [vmem:[#allocation5] sm:$0x1]
    %v205 = vlaneseq
    %v206 = vshrl.u32 %v205, 7
    %v207 = vsub.s32 0, %v206
    %v208 = vrot.slane %v203, %v207
    %v214 = vunpack.c.l.b16 %v197
    %v215 = vunpack.c.l.b16 %v198
    %v216 = vunpack.c.l.b16 %v199
    %v217 = vunpack.c.l.b16 %v200
    %v218 = vpack.c.b16 %v215, %v214
    %v219 = vpack.c.b16 %v217, %v216
    %vm222 = vcmask 261120
    %v224 = vsel %vm222, %v201, 0
    %v227 = vsel %vm222, %v202, 0
    %229 = vmatprep.subr.bf16.mxu0 0
    %230 = vmatpush1.bf16.msra.mxu0 %v218
    %231 = vmatprep.subr.bf16.mxu0 0
    %232 = vmatpush1.bf16.msra.mxu0 %v219
    %233 = vmatprep.subr.bf16.mxu0 0
    %234 = vmatpush1.bf16.msra.mxu0 0
    %235 = vmatprep.subr.bf16.mxu0 0
    %236 = vmatpush1.bf16.msra.mxu0 0
    %237 = vmatprep.subr.bf16.mxu0 0
    %238 = vmatpush1.bf16.msra.mxu0 0
    %239 = vmatprep.subr.bf16.mxu0 0
    %240 = vmatpush1.bf16.msra.mxu0 0
    %241 = vmatprep.subr.bf16.mxu0 0
    %242 = vmatpush1.bf16.msra.mxu0 0
    %243 = vmatprep.subr.bf16.mxu0 0
    %244 = vmatpush1.bf16.msra.mxu0 0
    %245 = vmatprep.subr.bf16.mxu0 0
    %246 = vmatpush1.bf16.msra.mxu0 0
    %247 = vmatprep.subr.bf16.mxu0 0
    %248 = vmatpush1.bf16.msra.mxu0 0
    %249 = vmatprep.subr.bf16.mxu0 0
    %250 = vmatpush1.bf16.msra.mxu0 0
    %251 = vmatprep.subr.bf16.mxu0 0
    %252 = vmatpush1.bf16.msra.mxu0 0
    %253 = vmatprep.subr.bf16.mxu0 0
    %254 = vmatpush1.bf16.msra.mxu0 0
    %255 = vmatprep.subr.bf16.mxu0 0
    %256 = vmatpush1.bf16.msra.mxu0 0
    %257 = vmatprep.subr.bf16.mxu0 0
    %258 = vmatpush1.bf16.msra.mxu0 0
    %259 = vmatprep.subr.bf16.mxu0 0
    %260 = vmatpush1.bf16.msra.mxu0 0
    %261 = vmatprep.mubr.bf16.mxu0 0
    %262 = vmatmul.mubr.bf16.gmra.mrb[0].mxu0 %v224
    %v263 = vpop.f32.mrb[0].mxu0
    %v264 = vadd.f32 %v208, %v263
    %v265 = vpop.f32.mrb[0].mxu0
    %v266 = vpop.f32.mrb[0].mxu0
    %v267 = vadd.f32 %v208, %v266
    %v268 = vpop.f32.mrb[0].mxu0
    %269 = vmatprep.mubr.bf16.mxu0 0
    %270 = vmatmul.mubr.bf16.gmra.mrb[0].mxu0 %v227
    %v271 = vpop.f32.mrb[0].mxu0
    %v272 = vadd.f32 %v208, %v271
    %v273 = vpop.f32.mrb[0].mxu0
    %v274 = vpop.f32.mrb[0].mxu0
    %v275 = vpop.f32.mrb[0].mxu0
    %276 = vdwg.mxu0
    %v277 = vpack.c.bf16 %v267, %v264
    %v278 = vpack.c.bf16 %v272, %v272
    %v281 = vunpack.c.l.b16 %v277
    %v282 = vunpack.c.h.b16 %v277
    %v283 = vunpack.c.l.b16 %v278
    %v284 = vpack.c.b16 %v281, %v281
    %v285 = vpack.c.b16 %v282, %v282
    %v286 = vpack.c.b16 %v283, %v283
    %287 = vrot.lane.b32.xlu0 %v284, 96
    %v288 = vpop.permute.xlu0 %287
    %vm289 = vcmask 64512
    %v291 = vsel %vm289, %v284, 0
    %v294 = vsel %vm289, %v288, 0
    %296 = vmatprep.subr.bf16.mxu0 0
    %297 = vmatpush1.bf16.xpose.msra.mxu0 %v294
    %298 = vmatprep.subr.bf16.mxu0 0
    %299 = vmatpush1.bf16.xpose.msra.mxu0 0
    %300 = vmatprep.subr.bf16.mxu0 0
    %301 = vmatpush1.bf16.xpose.msra.mxu0 0
    %302 = vmatprep.subr.bf16.mxu0 0
    %303 = vmatpush1.bf16.xpose.msra.mxu0 0
    %304 = vmatprep.subr.bf16.mxu0 0
    %305 = vmatpush1.bf16.xpose.msra.mxu0 0
    %306 = vmatprep.subr.bf16.mxu0 0
    %307 = vmatpush1.bf16.xpose.msra.mxu0 0
    %308 = vmatprep.subr.bf16.mxu0 0
    %309 = vmatpush1.bf16.xpose.msra.mxu0 0
    %310 = vmatprep.subr.bf16.mxu0 0
    %311 = vmatpush1.bf16.xpose.msra.mxu0 0
    %312 = vmatprep.subr.bf16.mxu0 0
    %313 = vmatpush1.bf16.xpose.msra.mxu0 0
    %314 = vmatprep.subr.bf16.mxu0 0
    %315 = vmatpush1.bf16.xpose.msra.mxu0 0
    %316 = vmatprep.subr.bf16.mxu0 0
    %317 = vmatpush1.bf16.xpose.msra.mxu0 0
    %318 = vmatprep.subr.bf16.mxu0 0
    %319 = vmatpush1.bf16.xpose.msra.mxu0 0
    %320 = vmatprep.subr.bf16.mxu0 0
    %321 = vmatpush1.bf16.xpose.msra.mxu0 0
    %322 = vmatprep.subr.bf16.mxu0 0
    %323 = vmatpush1.bf16.xpose.msra.mxu0 0
    %324 = vmatprep.subr.bf16.mxu0 0
    %325 = vmatpush1.bf16.xpose.msra.mxu0 0
    %326 = vmatprep.subr.bf16.mxu0 0
    %327 = vmatpush1.bf16.xpose.msra.mxu0 0
    %328 = vmatprep.mubr.bf16.mxu0 0
    %329 = vmatmul.mubr.bf16.gmra.mrb[0].mxu0 %v291
    %v330 = vpop.f32.mrb[0].mxu0
    %v331 = vadd.f32 0.0, %v330
    %v332 = vpop.f32.mrb[0].mxu0
    %v333 = vpop.f32.mrb[0].mxu0
    %v334 = vpop.f32.mrb[0].mxu0
    %335 = vdwg.mxu0
    %336 = vrot.lane.b32.xlu0 %v285, 96
    %v337 = vpop.permute.xlu0 %336
    %v339 = vsel %vm289, %v285, 0
    %v342 = vsel %vm289, %v337, 0
    %344 = vmatprep.subr.bf16.mxu0 0
    %345 = vmatpush1.bf16.xpose.msra.mxu0 %v342
    %346 = vmatprep.subr.bf16.mxu0 0
    %347 = vmatpush1.bf16.xpose.msra.mxu0 0
    %348 = vmatprep.subr.bf16.mxu0 0
    %349 = vmatpush1.bf16.xpose.msra.mxu0 0
    %350 = vmatprep.subr.bf16.mxu0 0
    %351 = vmatpush1.bf16.xpose.msra.mxu0 0
    %352 = vmatprep.subr.bf16.mxu0 0
    %353 = vmatpush1.bf16.xpose.msra.mxu0 0
    %354 = vmatprep.subr.bf16.mxu0 0
    %355 = vmatpush1.bf16.xpose.msra.mxu0 0
    %356 = vmatprep.subr.bf16.mxu0 0
    %357 = vmatpush1.bf16.xpose.msra.mxu0 0
    %358 = vmatprep.subr.bf16.mxu0 0
    %359 = vmatpush1.bf16.xpose.msra.mxu0 0
    %360 = vmatprep.subr.bf16.mxu0 0
    %361 = vmatpush1.bf16.xpose.msra.mxu0 0
    %362 = vmatprep.subr.bf16.mxu0 0
    %363 = vmatpush1.bf16.xpose.msra.mxu0 0
    %364 = vmatprep.subr.bf16.mxu0 0
    %365 = vmatpush1.bf16.xpose.msra.mxu0 0
    %366 = vmatprep.subr.bf16.mxu0 0
    %367 = vmatpush1.bf16.xpose.msra.mxu0 0
    %368 = vmatprep.subr.bf16.mxu0 0
    %369 = vmatpush1.bf16.xpose.msra.mxu0 0
    %370 = vmatprep.subr.bf16.mxu0 0
    %371 = vmatpush1.bf16.xpose.msra.mxu0 0
    %372 = vmatprep.subr.bf16.mxu0 0
    %373 = vmatpush1.bf16.xpose.msra.mxu0 0
    %374 = vmatprep.subr.bf16.mxu0 0
    %375 = vmatpush1.bf16.xpose.msra.mxu0 0
    %376 = vmatprep.mubr.bf16.mxu0 0
    %377 = vmatmul.mubr.bf16.gmra.mrb[0].mxu0 %v339
    %v378 = vpop.f32.mrb[0].mxu0
    %v379 = vadd.f32 0.0, %v378
    %v380 = vpop.f32.mrb[0].mxu0
    %v381 = vpop.f32.mrb[0].mxu0
    %v382 = vpop.f32.mrb[0].mxu0
    %383 = vdwg.mxu0
    %384 = vrot.lane.b32.xlu0 %v286, 96
    %v385 = vpop.permute.xlu0 %384
    %v387 = vsel %vm289, %v286, 0
    %v390 = vsel %vm289, %v385, 0
    %392 = vmatprep.subr.bf16.mxu0 0
    %393 = vmatpush1.bf16.xpose.msra.mxu0 %v390
    %394 = vmatprep.subr.bf16.mxu0 0
    %395 = vmatpush1.bf16.xpose.msra.mxu0 0
    %396 = vmatprep.subr.bf16.mxu0 0
    %397 = vmatpush1.bf16.xpose.msra.mxu0 0
    %398 = vmatprep.subr.bf16.mxu0 0
    %399 = vmatpush1.bf16.xpose.msra.mxu0 0
    %400 = vmatprep.subr.bf16.mxu0 0
    %401 = vmatpush1.bf16.xpose.msra.mxu0 0
    %402 = vmatprep.subr.bf16.mxu0 0
    %403 = vmatpush1.bf16.xpose.msra.mxu0 0
    %404 = vmatprep.subr.bf16.mxu0 0
    %405 = vmatpush1.bf16.xpose.msra.mxu0 0
    %406 = vmatprep.subr.bf16.mxu0 0
    %407 = vmatpush1.bf16.xpose.msra.mxu0 0
    %408 = vmatprep.subr.bf16.mxu0 0
    %409 = vmatpush1.bf16.xpose.msra.mxu0 0
    %410 = vmatprep.subr.bf16.mxu0 0
    %411 = vmatpush1.bf16.xpose.msra.mxu0 0
    %412 = vmatprep.subr.bf16.mxu0 0
    %413 = vmatpush1.bf16.xpose.msra.mxu0 0
    %414 = vmatprep.subr.bf16.mxu0 0
    %415 = vmatpush1.bf16.xpose.msra.mxu0 0
    %416 = vmatprep.subr.bf16.mxu0 0
    %417 = vmatpush1.bf16.xpose.msra.mxu0 0
    %418 = vmatprep.subr.bf16.mxu0 0
    %419 = vmatpush1.bf16.xpose.msra.mxu0 0
    %420 = vmatprep.subr.bf16.mxu0 0
    %421 = vmatpush1.bf16.xpose.msra.mxu0 0
    %422 = vmatprep.subr.bf16.mxu0 0
    %423 = vmatpush1.bf16.xpose.msra.mxu0 0
    %424 = vmatprep.mubr.bf16.mxu0 0
    %425 = vmatmul.mubr.bf16.gmra.mrb[0].mxu0 %v387
    %v426 = vpop.f32.mrb[0].mxu0
    %v427 = vadd.f32 0.0, %v426
    %v428 = vpop.f32.mrb[0].mxu0
    %v429 = vpop.f32.mrb[0].mxu0
    %v430 = vpop.f32.mrb[0].mxu0
    %431 = vdwg.mxu0
    %v432 = vsel %vm289, %v331, -inf
    %433 = vmax.xlane.f32.xlu0 %v432
    %v434 = vpop.xlane.xlu0 %433
    %v435 = vsel %vm289, %v379, -inf
    %436 = vmax.xlane.f32.xlu0 %v435
    %v437 = vpop.xlane.xlu0 %436
    %v438 = vsel %vm289, %v427, -inf
    %439 = vmax.xlane.f32.xlu0 %v438
    %v440 = vpop.xlane.xlu0 %439
    %v441 = vsub.f32 %v331, %v434
    %v442 = vsub.f32 %v379, %v437
    %v443 = vsub.f32 %v427, %v440
    %v444 = vmul.f32 %v441, 1.442695
    %v445 = vpow.pop %v444
    %v446 = vmul.f32 %v442, 1.442695
    %v447 = vpow.pop %v446
    %v448 = vmul.f32 %v443, 1.442695
    %v449 = vpow.pop %v448
    %v450 = vsel %vm289, %v445, 0.0
    %451 = vadd.xlane.f32.xlu0 %v450
    %v452 = vpop.xlane.xlu0 %451
    %v453 = vsel %vm289, %v447, 0.0
    %454 = vadd.xlane.f32.xlu0 %v453
    %v455 = vpop.xlane.xlu0 %454
    %v456 = vsel %vm289, %v449, 0.0
    %457 = vadd.xlane.f32.xlu0 %v456
    %v458 = vpop.xlane.xlu0 %457
    %v459 = vrcp.pop %v452
    %v460 = vmul.f32 1.0, %v459
    %v461 = vrcp.pop %v455
    %v462 = vmul.f32 1.0, %v461
    %v463 = vrcp.pop %v458
    %v464 = vmul.f32 1.0, %v463
    %v465 = vpack.c.bf16 %v445, %v445
    %v466 = vpack.c.bf16 %v447, %v447
    %v467 = vpack.c.bf16 %v449, %v449
    %468 = vrot.lane.b32.xlu0 %v284, 64
    %v469 = vpop.permute.xlu0 %468
    %v471 = vsel %vm289, %v465, 0
    %vm473 = vcmask 1043456
    %v475 = vsel %vm473, %v469, 0
    %477 = vmatprep.subr.bf16.mxu0 0
    %478 = vmatpush1.bf16.msra.mxu0 %v475
    %479 = vmatprep.subr.bf16.mxu0 0
    %480 = vmatpush1.bf16.msra.mxu0 0
    %481 = vmatprep.subr.bf16.mxu0 0
    %482 = vmatpush1.bf16.msra.mxu0 0
    %483 = vmatprep.subr.bf16.mxu0 0
    %484 = vmatpush1.bf16.msra.mxu0 0
    %485 = vmatprep.subr.bf16.mxu0 0
    %486 = vmatpush1.bf16.msra.mxu0 0
    %487 = vmatprep.subr.bf16.mxu0 0
    %488 = vmatpush1.bf16.msra.mxu0 0
    %489 = vmatprep.subr.bf16.mxu0 0
    %490 = vmatpush1.bf16.msra.mxu0 0
    %491 = vmatprep.subr.bf16.mxu0 0
    %492 = vmatpush1.bf16.msra.mxu0 0
    %493 = vmatprep.subr.bf16.mxu0 0
    %494 = vmatpush1.bf16.msra.mxu0 0
    %495 = vmatprep.subr.bf16.mxu0 0
    %496 = vmatpush1.bf16.msra.mxu0 0
    %497 = vmatprep.subr.bf16.mxu0 0
    %498 = vmatpush1.bf16.msra.mxu0 0
    %499 = vmatprep.subr.bf16.mxu0 0
    %500 = vmatpush1.bf16.msra.mxu0 0
    %501 = vmatprep.subr.bf16.mxu0 0
    %502 = vmatpush1.bf16.msra.mxu0 0
    %503 = vmatprep.subr.bf16.mxu0 0
    %504 = vmatpush1.bf16.msra.mxu0 0
    %505 = vmatprep.subr.bf16.mxu0 0
    %506 = vmatpush1.bf16.msra.mxu0 0
    %507 = vmatprep.subr.bf16.mxu0 0
    %508 = vmatpush1.bf16.msra.mxu0 0
    %509 = vmatprep.mubr.bf16.mxu0 0
    %510 = vmatmul.mubr.bf16.gmra.mrb[0].mxu0 %v471
    %v511 = vpop.f32.mrb[0].mxu0
    %v512 = vadd.f32 0.0, %v511
    %v513 = vpop.f32.mrb[0].mxu0
    %v514 = vpop.f32.mrb[0].mxu0
    %v515 = vpop.f32.mrb[0].mxu0
    %516 = vdwg.mxu0
    %517 = vrot.lane.b32.xlu0 %v285, 64
    %v518 = vpop.permute.xlu0 %517
    %v520 = vsel %vm289, %v466, 0
    %v523 = vsel %vm473, %v518, 0
    %525 = vmatprep.subr.bf16.mxu0 0
    %526 = vmatpush1.bf16.msra.mxu0 %v523
    %527 = vmatprep.subr.bf16.mxu0 0
    %528 = vmatpush1.bf16.msra.mxu0 0
    %529 = vmatprep.subr.bf16.mxu0 0
    %530 = vmatpush1.bf16.msra.mxu0 0
    %531 = vmatprep.subr.bf16.mxu0 0
    %532 = vmatpush1.bf16.msra.mxu0 0
    %533 = vmatprep.subr.bf16.mxu0 0
    %534 = vmatpush1.bf16.msra.mxu0 0
    %535 = vmatprep.subr.bf16.mxu0 0
    %536 = vmatpush1.bf16.msra.mxu0 0
    %537 = vmatprep.subr.bf16.mxu0 0
    %538 = vmatpush1.bf16.msra.mxu0 0
    %539 = vmatprep.subr.bf16.mxu0 0
    %540 = vmatpush1.bf16.msra.mxu0 0
    %541 = vmatprep.subr.bf16.mxu0 0
    %542 = vmatpush1.bf16.msra.mxu0 0
    %543 = vmatprep.subr.bf16.mxu0 0
    %544 = vmatpush1.bf16.msra.mxu0 0
    %545 = vmatprep.subr.bf16.mxu0 0
    %546 = vmatpush1.bf16.msra.mxu0 0
    %547 = vmatprep.subr.bf16.mxu0 0
    %548 = vmatpush1.bf16.msra.mxu0 0
    %549 = vmatprep.subr.bf16.mxu0 0
    %550 = vmatpush1.bf16.msra.mxu0 0
    %551 = vmatprep.subr.bf16.mxu0 0
    %552 = vmatpush1.bf16.msra.mxu0 0
    %553 = vmatprep.subr.bf16.mxu0 0
    %554 = vmatpush1.bf16.msra.mxu0 0
    %555 = vmatprep.subr.bf16.mxu0 0
    %556 = vmatpush1.bf16.msra.mxu0 0
    %557 = vmatprep.mubr.bf16.mxu0 0
    %558 = vmatmul.mubr.bf16.gmra.mrb[0].mxu0 %v520
    %v559 = vpop.f32.mrb[0].mxu0
    %v560 = vadd.f32 0.0, %v559
    %v561 = vpop.f32.mrb[0].mxu0
    %v562 = vpop.f32.mrb[0].mxu0
    %v563 = vpop.f32.mrb[0].mxu0
    %564 = vdwg.mxu0
    %565 = vrot.lane.b32.xlu0 %v286, 64
    %v566 = vpop.permute.xlu0 %565
    %v568 = vsel %vm289, %v467, 0
    %v571 = vsel %vm473, %v566, 0
    %573 = vmatprep.subr.bf16.mxu0 0
    %574 = vmatpush1.bf16.msra.mxu0 %v571
    %575 = vmatprep.subr.bf16.mxu0 0
    %576 = vmatpush1.bf16.msra.mxu0 0
    %577 = vmatprep.subr.bf16.mxu0 0
    %578 = vmatpush1.bf16.msra.mxu0 0
    %579 = vmatprep.subr.bf16.mxu0 0
    %580 = vmatpush1.bf16.msra.mxu0 0
    %581 = vmatprep.subr.bf16.mxu0 0
    %582 = vmatpush1.bf16.msra.mxu0 0
    %583 = vmatprep.subr.bf16.mxu0 0
    %584 = vmatpush1.bf16.msra.mxu0 0
    %585 = vmatprep.subr.bf16.mxu0 0
    %586 = vmatpush1.bf16.msra.mxu0 0
    %587 = vmatprep.subr.bf16.mxu0 0
    %588 = vmatpush1.bf16.msra.mxu0 0
    %589 = vmatprep.subr.bf16.mxu0 0
    %590 = vmatpush1.bf16.msra.mxu0 0
    %591 = vmatprep.subr.bf16.mxu0 0
    %592 = vmatpush1.bf16.msra.mxu0 0
    %593 = vmatprep.subr.bf16.mxu0 0
    %594 = vmatpush1.bf16.msra.mxu0 0
    %595 = vmatprep.subr.bf16.mxu0 0
    %596 = vmatpush1.bf16.msra.mxu0 0
    %597 = vmatprep.subr.bf16.mxu0 0
    %598 = vmatpush1.bf16.msra.mxu0 0
    %599 = vmatprep.subr.bf16.mxu0 0
    %600 = vmatpush1.bf16.msra.mxu0 0
    %601 = vmatprep.subr.bf16.mxu0 0
    %602 = vmatpush1.bf16.msra.mxu0 0
    %603 = vmatprep.subr.bf16.mxu0 0
    %604 = vmatpush1.bf16.msra.mxu0 0
    %605 = vmatprep.mubr.bf16.mxu0 0
    %606 = vmatmul.mubr.bf16.gmra.mrb[0].mxu0 %v568
    %v607 = vpop.f32.mrb[0].mxu0
    %v608 = vadd.f32 0.0, %v607
    %v609 = vpop.f32.mrb[0].mxu0
    %v610 = vpop.f32.mrb[0].mxu0
    %v611 = vpop.f32.mrb[0].mxu0
    %612 = vdwg.mxu0
    %v613 = vmul.f32 %v512, %v460
    %v614 = vmul.f32 %v560, %v462
    %v615 = vmul.f32 %v608, %v464
    %616 = vrot.lane.b32.xlu0 %v284, 120
    %v617 = vpop.permute.xlu0 %616
    %618 = vrot.lane.b32.xlu0 %v284, 88
    %v619 = vpop.permute.xlu0 %618
    %v621 = vsel %vm289, %v617, 0
    %v624 = vsel %vm289, %v619, 0
    %626 = vmatprep.subr.bf16.mxu0 0
    %627 = vmatpush1.bf16.xpose.msra.mxu0 %v624
    %628 = vmatprep.subr.bf16.mxu0 0
    %629 = vmatpush1.bf16.xpose.msra.mxu0 0
    %630 = vmatprep.subr.bf16.mxu0 0
    %631 = vmatpush1.bf16.xpose.msra.mxu0 0
    %632 = vmatprep.subr.bf16.mxu0 0
    %633 = vmatpush1.bf16.xpose.msra.mxu0 0
    %634 = vmatprep.subr.bf16.mxu0 0
    %635 = vmatpush1.bf16.xpose.msra.mxu0 0
    %636 = vmatprep.subr.bf16.mxu0 0
    %637 = vmatpush1.bf16.xpose.msra.mxu0 0
    %638 = vmatprep.subr.bf16.mxu0 0
    %639 = vmatpush1.bf16.xpose.msra.mxu0 0
    %640 = vmatprep.subr.bf16.mxu0 0
    %641 = vmatpush1.bf16.xpose.msra.mxu0 0
    %642 = vmatprep.subr.bf16.mxu0 0
    %643 = vmatpush1.bf16.xpose.msra.mxu0 0
    %644 = vmatprep.subr.bf16.mxu0 0
    %645 = vmatpush1.bf16.xpose.msra.mxu0 0
    %646 = vmatprep.subr.bf16.mxu0 0
    %647 = vmatpush1.bf16.xpose.msra.mxu0 0
    %648 = vmatprep.subr.bf16.mxu0 0
    %649 = vmatpush1.bf16.xpose.msra.mxu0 0
    %650 = vmatprep.subr.bf16.mxu0 0
    %651 = vmatpush1.bf16.xpose.msra.mxu0 0
    %652 = vmatprep.subr.bf16.mxu0 0
    %653 = vmatpush1.bf16.xpose.msra.mxu0 0
    %654 = vmatprep.subr.bf16.mxu0 0
    %655 = vmatpush1.bf16.xpose.msra.mxu0 0
    %656 = vmatprep.subr.bf16.mxu0 0
    %657 = vmatpush1.bf16.xpose.msra.mxu0 0
    %658 = vmatprep.mubr.bf16.mxu0 0
    %659 = vmatmul.mubr.bf16.gmra.mrb[0].mxu0 %v621
    %v660 = vpop.f32.mrb[0].mxu0
    %v661 = vadd.f32 0.0, %v660
    %v662 = vpop.f32.mrb[0].mxu0
    %v663 = vpop.f32.mrb[0].mxu0
    %v664 = vpop.f32.mrb[0].mxu0
    %665 = vdwg.mxu0
    %666 = vrot.lane.b32.xlu0 %v285, 120
    %v667 = vpop.permute.xlu0 %666
    %668 = vrot.lane.b32.xlu0 %v285, 88
    %v669 = vpop.permute.xlu0 %668
    %v671 = vsel %vm289, %v667, 0
    %v674 = vsel %vm289, %v669, 0
    %676 = vmatprep.subr.bf16.mxu0 0
    %677 = vmatpush1.bf16.xpose.msra.mxu0 %v674
    %678 = vmatprep.subr.bf16.mxu0 0
    %679 = vmatpush1.bf16.xpose.msra.mxu0 0
    %680 = vmatprep.subr.bf16.mxu0 0
    %681 = vmatpush1.bf16.xpose.msra.mxu0 0
    %682 = vmatprep.subr.bf16.mxu0 0
    %683 = vmatpush1.bf16.xpose.msra.mxu0 0
    %684 = vmatprep.subr.bf16.mxu0 0
    %685 = vmatpush1.bf16.xpose.msra.mxu0 0
    %686 = vmatprep.subr.bf16.mxu0 0
    %687 = vmatpush1.bf16.xpose.msra.mxu0 0
    %688 = vmatprep.subr.bf16.mxu0 0
    %689 = vmatpush1.bf16.xpose.msra.mxu0 0
    %690 = vmatprep.subr.bf16.mxu0 0
    %691 = vmatpush1.bf16.xpose.msra.mxu0 0
    %692 = vmatprep.subr.bf16.mxu0 0
    %693 = vmatpush1.bf16.xpose.msra.mxu0 0
    %694 = vmatprep.subr.bf16.mxu0 0
    %695 = vmatpush1.bf16.xpose.msra.mxu0 0
    %696 = vmatprep.subr.bf16.mxu0 0
    %697 = vmatpush1.bf16.xpose.msra.mxu0 0
    %698 = vmatprep.subr.bf16.mxu0 0
    %699 = vmatpush1.bf16.xpose.msra.mxu0 0
    %700 = vmatprep.subr.bf16.mxu0 0
    %701 = vmatpush1.bf16.xpose.msra.mxu0 0
    %702 = vmatprep.subr.bf16.mxu0 0
    %703 = vmatpush1.bf16.xpose.msra.mxu0 0
    %704 = vmatprep.subr.bf16.mxu0 0
    %705 = vmatpush1.bf16.xpose.msra.mxu0 0
    %706 = vmatprep.subr.bf16.mxu0 0
    %707 = vmatpush1.bf16.xpose.msra.mxu0 0
    %708 = vmatprep.mubr.bf16.mxu0 0
    %709 = vmatmul.mubr.bf16.gmra.mrb[0].mxu0 %v671
    %v710 = vpop.f32.mrb[0].mxu0
    %v711 = vadd.f32 0.0, %v710
    %v712 = vpop.f32.mrb[0].mxu0
    %v713 = vpop.f32.mrb[0].mxu0
    %v714 = vpop.f32.mrb[0].mxu0
    %715 = vdwg.mxu0
    %716 = vrot.lane.b32.xlu0 %v286, 120
    %v717 = vpop.permute.xlu0 %716
    %718 = vrot.lane.b32.xlu0 %v286, 88
    %v719 = vpop.permute.xlu0 %718
    %v721 = vsel %vm289, %v717, 0
    %v724 = vsel %vm289, %v719, 0
    %726 = vmatprep.subr.bf16.mxu0 0
    %727 = vmatpush1.bf16.xpose.msra.mxu0 %v724
    %728 = vmatprep.subr.bf16.mxu0 0
    %729 = vmatpush1.bf16.xpose.msra.mxu0 0
    %730 = vmatprep.subr.bf16.mxu0 0
    %731 = vmatpush1.bf16.xpose.msra.mxu0 0
    %732 = vmatprep.subr.bf16.mxu0 0
    %733 = vmatpush1.bf16.xpose.msra.mxu0 0
    %734 = vmatprep.subr.bf16.mxu0 0
    %735 = vmatpush1.bf16.xpose.msra.mxu0 0
    %736 = vmatprep.subr.bf16.mxu0 0
    %737 = vmatpush1.bf16.xpose.msra.mxu0 0
    %738 = vmatprep.subr.bf16.mxu0 0
    %739 = vmatpush1.bf16.xpose.msra.mxu0 0
    %740 = vmatprep.subr.bf16.mxu0 0
    %741 = vmatpush1.bf16.xpose.msra.mxu0 0
    %742 = vmatprep.subr.bf16.mxu0 0
    %743 = vmatpush1.bf16.xpose.msra.mxu0 0
    %744 = vmatprep.subr.bf16.mxu0 0
    %745 = vmatpush1.bf16.xpose.msra.mxu0 0
    %746 = vmatprep.subr.bf16.mxu0 0
    %747 = vmatpush1.bf16.xpose.msra.mxu0 0
    %748 = vmatprep.subr.bf16.mxu0 0
    %749 = vmatpush1.bf16.xpose.msra.mxu0 0
    %750 = vmatprep.subr.bf16.mxu0 0
    %751 = vmatpush1.bf16.xpose.msra.mxu0 0
    %752 = vmatprep.subr.bf16.mxu0 0
    %753 = vmatpush1.bf16.xpose.msra.mxu0 0
    %754 = vmatprep.subr.bf16.mxu0 0
    %755 = vmatpush1.bf16.xpose.msra.mxu0 0
    %756 = vmatprep.subr.bf16.mxu0 0
    %757 = vmatpush1.bf16.xpose.msra.mxu0 0
    %758 = vmatprep.mubr.bf16.mxu0 0
    %759 = vmatmul.mubr.bf16.gmra.mrb[0].mxu0 %v721
    %v760 = vpop.f32.mrb[0].mxu0
    %v761 = vadd.f32 0.0, %v760
    %v762 = vpop.f32.mrb[0].mxu0
    %v763 = vpop.f32.mrb[0].mxu0
    %v764 = vpop.f32.mrb[0].mxu0
    %765 = vdwg.mxu0
    %v766 = vsel %vm289, %v661, -inf
    %767 = vmax.xlane.f32.xlu0 %v766
    %v768 = vpop.xlane.xlu0 %767
    %v769 = vsel %vm289, %v711, -inf
    %770 = vmax.xlane.f32.xlu0 %v769
    %v771 = vpop.xlane.xlu0 %770
    %v772 = vsel %vm289, %v761, -inf
    %773 = vmax.xlane.f32.xlu0 %v772
    %v774 = vpop.xlane.xlu0 %773
    %v775 = vsub.f32 %v661, %v768
    %v776 = vsub.f32 %v711, %v771
    %v777 = vsub.f32 %v761, %v774
    %v778 = vmul.f32 %v775, 1.442695
    %v779 = vpow.pop %v778
    %v780 = vmul.f32 %v776, 1.442695
    %v781 = vpow.pop %v780
    %v782 = vmul.f32 %v777, 1.442695
    %v783 = vpow.pop %v782
    %v784 = vsel %vm289, %v779, 0.0
    %785 = vadd.xlane.f32.xlu0 %v784
    %v786 = vpop.xlane.xlu0 %785
    %v787 = vsel %vm289, %v781, 0.0
    %788 = vadd.xlane.f32.xlu0 %v787
    %v789 = vpop.xlane.xlu0 %788
    %v790 = vsel %vm289, %v783, 0.0
    %791 = vadd.xlane.f32.xlu0 %v790
    %v792 = vpop.xlane.xlu0 %791
    %v793 = vrcp.pop %v786
    %v794 = vmul.f32 1.0, %v793
    %v795 = vrcp.pop %v789
    %v796 = vmul.f32 1.0, %v795
    %v797 = vrcp.pop %v792
    %v798 = vmul.f32 1.0, %v797
    %v799 = vpack.c.bf16 %v779, %v779
    %v800 = vpack.c.bf16 %v781, %v781
    %v801 = vpack.c.bf16 %v783, %v783
    %802 = vrot.lane.b32.xlu0 %v284, 56
    %v803 = vpop.permute.xlu0 %802
    %v805 = vsel %vm289, %v799, 0
    %v808 = vsel %vm473, %v803, 0
    %810 = vmatprep.subr.bf16.mxu0 0
    %811 = vmatpush1.bf16.msra.mxu0 %v808
    %812 = vmatprep.subr.bf16.mxu0 0
    %813 = vmatpush1.bf16.msra.mxu0 0
    %814 = vmatprep.subr.bf16.mxu0 0
    %815 = vmatpush1.bf16.msra.mxu0 0
    %816 = vmatprep.subr.bf16.mxu0 0
    %817 = vmatpush1.bf16.msra.mxu0 0
    %818 = vmatprep.subr.bf16.mxu0 0
    %819 = vmatpush1.bf16.msra.mxu0 0
    %820 = vmatprep.subr.bf16.mxu0 0
    %821 = vmatpush1.bf16.msra.mxu0 0
    %822 = vmatprep.subr.bf16.mxu0 0
    %823 = vmatpush1.bf16.msra.mxu0 0
    %824 = vmatprep.subr.bf16.mxu0 0
    %825 = vmatpush1.bf16.msra.mxu0 0
    %826 = vmatprep.subr.bf16.mxu0 0
    %827 = vmatpush1.bf16.msra.mxu0 0
    %828 = vmatprep.subr.bf16.mxu0 0
    %829 = vmatpush1.bf16.msra.mxu0 0
    %830 = vmatprep.subr.bf16.mxu0 0
    %831 = vmatpush1.bf16.msra.mxu0 0
    %832 = vmatprep.subr.bf16.mxu0 0
    %833 = vmatpush1.bf16.msra.mxu0 0
    %834 = vmatprep.subr.bf16.mxu0 0
    %835 = vmatpush1.bf16.msra.mxu0 0
    %836 = vmatprep.subr.bf16.mxu0 0
    %837 = vmatpush1.bf16.msra.mxu0 0
    %838 = vmatprep.subr.bf16.mxu0 0
    %839 = vmatpush1.bf16.msra.mxu0 0
    %840 = vmatprep.subr.bf16.mxu0 0
    %841 = vmatpush1.bf16.msra.mxu0 0
    %842 = vmatprep.mubr.bf16.mxu0 0
    %843 = vmatmul.mubr.bf16.gmra.mrb[0].mxu0 %v805
    %v844 = vpop.f32.mrb[0].mxu0
    %v845 = vadd.f32 0.0, %v844
    %v846 = vpop.f32.mrb[0].mxu0
    %v847 = vpop.f32.mrb[0].mxu0
    %v848 = vpop.f32.mrb[0].mxu0
    %849 = vdwg.mxu0
    %850 = vrot.lane.b32.xlu0 %v285, 56
    %v851 = vpop.permute.xlu0 %850
    %v853 = vsel %vm289, %v800, 0
    %v856 = vsel %vm473, %v851, 0
    %858 = vmatprep.subr.bf16.mxu0 0
    %859 = vmatpush1.bf16.msra.mxu0 %v856
    %860 = vmatprep.subr.bf16.mxu0 0
    %861 = vmatpush1.bf16.msra.mxu0 0
    %862 = vmatprep.subr.bf16.mxu0 0
    %863 = vmatpush1.bf16.msra.mxu0 0
    %864 = vmatprep.subr.bf16.mxu0 0
    %865 = vmatpush1.bf16.msra.mxu0 0
    %866 = vmatprep.subr.bf16.mxu0 0
    %867 = vmatpush1.bf16.msra.mxu0 0
    %868 = vmatprep.subr.bf16.mxu0 0
    %869 = vmatpush1.bf16.msra.mxu0 0
    %870 = vmatprep.subr.bf16.mxu0 0
    %871 = vmatpush1.bf16.msra.mxu0 0
    %872 = vmatprep.subr.bf16.mxu0 0
    %873 = vmatpush1.bf16.msra.mxu0 0
    %874 = vmatprep.subr.bf16.mxu0 0
    %875 = vmatpush1.bf16.msra.mxu0 0
    %876 = vmatprep.subr.bf16.mxu0 0
    %877 = vmatpush1.bf16.msra.mxu0 0
    %878 = vmatprep.subr.bf16.mxu0 0
    %879 = vmatpush1.bf16.msra.mxu0 0
    %880 = vmatprep.subr.bf16.mxu0 0
    %881 = vmatpush1.bf16.msra.mxu0 0
    %882 = vmatprep.subr.bf16.mxu0 0
    %883 = vmatpush1.bf16.msra.mxu0 0
    %884 = vmatprep.subr.bf16.mxu0 0
    %885 = vmatpush1.bf16.msra.mxu0 0
    %886 = vmatprep.subr.bf16.mxu0 0
    %887 = vmatpush1.bf16.msra.mxu0 0
    %888 = vmatprep.subr.bf16.mxu0 0
    %889 = vmatpush1.bf16.msra.mxu0 0
    %890 = vmatprep.mubr.bf16.mxu0 0
    %891 = vmatmul.mubr.bf16.gmra.mrb[0].mxu0 %v853
    %v892 = vpop.f32.mrb[0].mxu0
    %v893 = vadd.f32 0.0, %v892
    %v894 = vpop.f32.mrb[0].mxu0
    %v895 = vpop.f32.mrb[0].mxu0
    %v896 = vpop.f32.mrb[0].mxu0
    %897 = vdwg.mxu0
    %898 = vrot.lane.b32.xlu0 %v286, 56
    %v899 = vpop.permute.xlu0 %898
    %v901 = vsel %vm289, %v801, 0
    %v904 = vsel %vm473, %v899, 0
    %906 = vmatprep.subr.bf16.mxu0 0
    %907 = vmatpush1.bf16.msra.mxu0 %v904
    %908 = vmatprep.subr.bf16.mxu0 0
    %909 = vmatpush1.bf16.msra.mxu0 0
    %910 = vmatprep.subr.bf16.mxu0 0
    %911 = vmatpush1.bf16.msra.mxu0 0
    %912 = vmatprep.subr.bf16.mxu0 0
    %913 = vmatpush1.bf16.msra.mxu0 0
    %914 = vmatprep.subr.bf16.mxu0 0
    %915 = vmatpush1.bf16.msra.mxu0 0
    %916 = vmatprep.subr.bf16.mxu0 0
    %917 = vmatpush1.bf16.msra.mxu0 0
    %918 = vmatprep.subr.bf16.mxu0 0
    %919 = vmatpush1.bf16.msra.mxu0 0
    %920 = vmatprep.subr.bf16.mxu0 0
    %921 = vmatpush1.bf16.msra.mxu0 0
    %922 = vmatprep.subr.bf16.mxu0 0
    %923 = vmatpush1.bf16.msra.mxu0 0
    %924 = vmatprep.subr.bf16.mxu0 0
    %925 = vmatpush1.bf16.msra.mxu0 0
    %926 = vmatprep.subr.bf16.mxu0 0
    %927 = vmatpush1.bf16.msra.mxu0 0
    %928 = vmatprep.subr.bf16.mxu0 0
    %929 = vmatpush1.bf16.msra.mxu0 0
    %930 = vmatprep.subr.bf16.mxu0 0
    %931 = vmatpush1.bf16.msra.mxu0 0
    %932 = vmatprep.subr.bf16.mxu0 0
    %933 = vmatpush1.bf16.msra.mxu0 0
    %934 = vmatprep.subr.bf16.mxu0 0
    %935 = vmatpush1.bf16.msra.mxu0 0
    %936 = vmatprep.subr.bf16.mxu0 0
    %937 = vmatpush1.bf16.msra.mxu0 0
    %938 = vmatprep.mubr.bf16.mxu0 0
    %939 = vmatmul.mubr.bf16.gmra.mrb[0].mxu0 %v901
    %v940 = vpop.f32.mrb[0].mxu0
    %v941 = vadd.f32 0.0, %v940
    %v942 = vpop.f32.mrb[0].mxu0
    %v943 = vpop.f32.mrb[0].mxu0
    %v944 = vpop.f32.mrb[0].mxu0
    %945 = vdwg.mxu0
    %v946 = vmul.f32 %v845, %v794
    %v947 = vmul.f32 %v893, %v796
    %v948 = vmul.f32 %v941, %v798
    %949 = vrot.lane.b32.xlu0 %v284, 112
    %v950 = vpop.permute.xlu0 %949
    %951 = vrot.lane.b32.xlu0 %v284, 80
    %v952 = vpop.permute.xlu0 %951
    %v954 = vsel %vm289, %v950, 0
    %v957 = vsel %vm289, %v952, 0
    %959 = vmatprep.subr.bf16.mxu0 0
    %960 = vmatpush1.bf16.xpose.msra.mxu0 %v957
    %961 = vmatprep.subr.bf16.mxu0 0
    %962 = vmatpush1.bf16.xpose.msra.mxu0 0
    %963 = vmatprep.subr.bf16.mxu0 0
    %964 = vmatpush1.bf16.xpose.msra.mxu0 0
    %965 = vmatprep.subr.bf16.mxu0 0
    %966 = vmatpush1.bf16.xpose.msra.mxu0 0
    %967 = vmatprep.subr.bf16.mxu0 0
    %968 = vmatpush1.bf16.xpose.msra.mxu0 0
    %969 = vmatprep.subr.bf16.mxu0 0
    %970 = vmatpush1.bf16.xpose.msra.mxu0 0
    %971 = vmatprep.subr.bf16.mxu0 0
    %972 = vmatpush1.bf16.xpose.msra.mxu0 0
    %973 = vmatprep.subr.bf16.mxu0 0
    %974 = vmatpush1.bf16.xpose.msra.mxu0 0
    %975 = vmatprep.subr.bf16.mxu0 0
    %976 = vmatpush1.bf16.xpose.msra.mxu0 0
    %977 = vmatprep.subr.bf16.mxu0 0
    %978 = vmatpush1.bf16.xpose.msra.mxu0 0
    %979 = vmatprep.subr.bf16.mxu0 0
    %980 = vmatpush1.bf16.xpose.msra.mxu0 0
    %981 = vmatprep.subr.bf16.mxu0 0
    %982 = vmatpush1.bf16.xpose.msra.mxu0 0
    %983 = vmatprep.subr.bf16.mxu0 0
    %984 = vmatpush1.bf16.xpose.msra.mxu0 0
    %985 = vmatprep.subr.bf16.mxu0 0
    %986 = vmatpush1.bf16.xpose.msra.mxu0 0
    %987 = vmatprep.subr.bf16.mxu0 0
    %988 = vmatpush1.bf16.xpose.msra.mxu0 0
    %989 = vmatprep.subr.bf16.mxu0 0
    %990 = vmatpush1.bf16.xpose.msra.mxu0 0
    %991 = vmatprep.mubr.bf16.mxu0 0
    %992 = vmatmul.mubr.bf16.gmra.mrb[0].mxu0 %v954
    %v993 = vpop.f32.mrb[0].mxu0
    %v994 = vadd.f32 0.0, %v993
    %v995 = vpop.f32.mrb[0].mxu0
    %v996 = vpop.f32.mrb[0].mxu0
    %v997 = vpop.f32.mrb[0].mxu0
    %998 = vdwg.mxu0
    %999 = vrot.lane.b32.xlu0 %v285, 112
    %v1000 = vpop.permute.xlu0 %999
    %1001 = vrot.lane.b32.xlu0 %v285, 80
    %v1002 = vpop.permute.xlu0 %1001
    %v1004 = vsel %vm289, %v1000, 0
    %v1007 = vsel %vm289, %v1002, 0
    %1009 = vmatprep.subr.bf16.mxu0 0
    %1010 = vmatpush1.bf16.xpose.msra.mxu0 %v1007
    %1011 = vmatprep.subr.bf16.mxu0 0
    %1012 = vmatpush1.bf16.xpose.msra.mxu0 0
    %1013 = vmatprep.subr.bf16.mxu0 0
    %1014 = vmatpush1.bf16.xpose.msra.mxu0 0
    %1015 = vmatprep.subr.bf16.mxu0 0
    %1016 = vmatpush1.bf16.xpose.msra.mxu0 0
    %1017 = vmatprep.subr.bf16.mxu0 0
    %1018 = vmatpush1.bf16.xpose.msra.mxu0 0
    %1019 = vmatprep.subr.bf16.mxu0 0
    %1020 = vmatpush1.bf16.xpose.msra.mxu0 0
    %1021 = vmatprep.subr.bf16.mxu0 0
    %1022 = vmatpush1.bf16.xpose.msra.mxu0 0
    %1023 = vmatprep.subr.bf16.mxu0 0
    %1024 = vmatpush1.bf16.xpose.msra.mxu0 0
    %1025 = vmatprep.subr.bf16.mxu0 0
    %1026 = vmatpush1.bf16.xpose.msra.mxu0 0
    %1027 = vmatprep.subr.bf16.mxu0 0
    %1028 = vmatpush1.bf16.xpose.msra.mxu0 0
    %1029 = vmatprep.subr.bf16.mxu0 0
    %1030 = vmatpush1.bf16.xpose.msra.mxu0 0
    %1031 = vmatprep.subr.bf16.mxu0 0
    %1032 = vmatpush1.bf16.xpose.msra.mxu0 0
    %1033 = vmatprep.subr.bf16.mxu0 0
    %1034 = vmatpush1.bf16.xpose.msra.mxu0 0
    %1035 = vmatprep.subr.bf16.mxu0 0
    %1036 = vmatpush1.bf16.xpose.msra.mxu0 0
    %1037 = vmatprep.subr.bf16.mxu0 0
    %1038 = vmatpush1.bf16.xpose.msra.mxu0 0
    %1039 = vmatprep.subr.bf16.mxu0 0
    %1040 = vmatpush1.bf16.xpose.msra.mxu0 0
    %1041 = vmatprep.mubr.bf16.mxu0 0
    %1042 = vmatmul.mubr.bf16.gmra.mrb[0].mxu0 %v1004
    %v1043 = vpop.f32.mrb[0].mxu0
    %v1044 = vadd.f32 0.0, %v1043
    %v1045 = vpop.f32.mrb[0].mxu0
    %v1046 = vpop.f32.mrb[0].mxu0
    %v1047 = vpop.f32.mrb[0].mxu0
    %1048 = vdwg.mxu0
    %1049 = vrot.lane.b32.xlu0 %v286, 112
    %v1050 = vpop.permute.xlu0 %1049
    %1051 = vrot.lane.b32.xlu0 %v286, 80
    %v1052 = vpop.permute.xlu0 %1051
    %v1054 = vsel %vm289, %v1050, 0
    %v1057 = vsel %vm289, %v1052, 0
    %1059 = vmatprep.subr.bf16.mxu0 0
    %1060 = vmatpush1.bf16.xpose.msra.mxu0 %v1057
    %1061 = vmatprep.subr.bf16.mxu0 0
    %1062 = vmatpush1.bf16.xpose.msra.mxu0 0
    %1063 = vmatprep.subr.bf16.mxu0 0
    %1064 = vmatpush1.bf16.xpose.msra.mxu0 0
    %1065 = vmatprep.subr.bf16.mxu0 0
    %1066 = vmatpush1.bf16.xpose.msra.mxu0 0
    %1067 = vmatprep.subr.bf16.mxu0 0
    %1068 = vmatpush1.bf16.xpose.msra.mxu0 0
    %1069 = vmatprep.subr.bf16.mxu0 0
    %1070 = vmatpush1.bf16.xpose.msra.mxu0 0
    %1071 = vmatprep.subr.bf16.mxu0 0
    %1072 = vmatpush1.bf16.xpose.msra.mxu0 0
    %1073 = vmatprep.subr.bf16.mxu0 0
    %1074 = vmatpush1.bf16.xpose.msra.mxu0 0
    %1075 = vmatprep.subr.bf16.mxu0 0
    %1076 = vmatpush1.bf16.xpose.msra.mxu0 0
    %1077 = vmatprep.subr.bf16.mxu0 0
    %1078 = vmatpush1.bf16.xpose.msra.mxu0 0
    %1079 = vmatprep.subr.bf16.mxu0 0
    %1080 = vmatpush1.bf16.xpose.msra.mxu0 0
    %1081 = vmatprep.subr.bf16.mxu0 0
    %1082 = vmatpush1.bf16.xpose.msra.mxu0 0
    %1083 = vmatprep.subr.bf16.mxu0 0
    %1084 = vmatpush1.bf16.xpose.msra.mxu0 0
    %1085 = vmatprep.subr.bf16.mxu0 0
    %1086 = vmatpush1.bf16.xpose.msra.mxu0 0
    %1087 = vmatprep.subr.bf16.mxu0 0
    %1088 = vmatpush1.bf16.xpose.msra.mxu0 0
    %1089 = vmatprep.subr.bf16.mxu0 0
    %1090 = vmatpush1.bf16.xpose.msra.mxu0 0
    %1091 = vmatprep.mubr.bf16.mxu0 0
    %1092 = vmatmul.mubr.bf16.gmra.mrb[0].mxu0 %v1054
    %v1093 = vpop.f32.mrb[0].mxu0
    %v1094 = vadd.f32 0.0, %v1093
    %v1095 = vpop.f32.mrb[0].mxu0
    %v1096 = vpop.f32.mrb[0].mxu0
    %v1097 = vpop.f32.mrb[0].mxu0
    %1098 = vdwg.mxu0
    %v1099 = vsel %vm289, %v994, -inf
    %1100 = vmax.xlane.f32.xlu0 %v1099
    %v1101 = vpop.xlane.xlu0 %1100
    %v1102 = vsel %vm289, %v1044, -inf
    %1103 = vmax.xlane.f32.xlu0 %v1102
    %v1104 = vpop.xlane.xlu0 %1103
    %v1105 = vsel %vm289, %v1094, -inf
    %1106 = vmax.xlane.f32.xlu0 %v1105
    %v1107 = vpop.xlane.xlu0 %1106
    %v1108 = vsub.f32 %v994, %v1101
    %v1109 = vsub.f32 %v1044, %v1104
    %v1110 = vsub.f32 %v1094, %v1107
    %v1111 = vmul.f32 %v1108, 1.442695
    %v1112 = vpow.pop %v1111
    %v1113 = vmul.f32 %v1109, 1.442695
    %v1114 = vpow.pop %v1113
    %v1115 = vmul.f32 %v1110, 1.442695
    %v1116 = vpow.pop %v1115
    %v1117 = vsel %vm289, %v1112, 0.0
    %1118 = vadd.xlane.f32.xlu0 %v1117
    %v1119 = vpop.xlane.xlu0 %1118
    %v1120 = vsel %vm289, %v1114, 0.0
    %1121 = vadd.xlane.f32.xlu0 %v1120
    %v1122 = vpop.xlane.xlu0 %1121
    %v1123 = vsel %vm289, %v1116, 0.0
    %1124 = vadd.xlane.f32.xlu0 %v1123
    %v1125 = vpop.xlane.xlu0 %1124
    %v1126 = vrcp.pop %v1119
    %v1127 = vmul.f32 1.0, %v1126
    %v1128 = vrcp.pop %v1122
    %v1129 = vmul.f32 1.0, %v1128
    %v1130 = vrcp.pop %v1125
    %v1131 = vmul.f32 1.0, %v1130
    %v1132 = vpack.c.bf16 %v1112, %v1112
    %v1133 = vpack.c.bf16 %v1114, %v1114
    %v1134 = vpack.c.bf16 %v1116, %v1116
    %1135 = vrot.lane.b32.xlu0 %v284, 48
    %v1136 = vpop.permute.xlu0 %1135
    %v1138 = vsel %vm289, %v1132, 0
    %v1141 = vsel %vm473, %v1136, 0
    %1143 = vmatprep.subr.bf16.mxu0 0
    %1144 = vmatpush1.bf16.msra.mxu0 %v1141
    %1145 = vmatprep.subr.bf16.mxu0 0
    %1146 = vmatpush1.bf16.msra.mxu0 0
    %1147 = vmatprep.subr.bf16.mxu0 0
    %1148 = vmatpush1.bf16.msra.mxu0 0
    %1149 = vmatprep.subr.bf16.mxu0 0
    %1150 = vmatpush1.bf16.msra.mxu0 0
    %1151 = vmatprep.subr.bf16.mxu0 0
    %1152 = vmatpush1.bf16.msra.mxu0 0
    %1153 = vmatprep.subr.bf16.mxu0 0
    %1154 = vmatpush1.bf16.msra.mxu0 0
    %1155 = vmatprep.subr.bf16.mxu0 0
    %1156 = vmatpush1.bf16.msra.mxu0 0
    %1157 = vmatprep.subr.bf16.mxu0 0
    %1158 = vmatpush1.bf16.msra.mxu0 0
    %1159 = vmatprep.subr.bf16.mxu0 0
    %1160 = vmatpush1.bf16.msra.mxu0 0
    %1161 = vmatprep.subr.bf16.mxu0 0
    %1162 = vmatpush1.bf16.msra.mxu0 0
    %1163 = vmatprep.subr.bf16.mxu0 0
    %1164 = vmatpush1.bf16.msra.mxu0 0
    %1165 = vmatprep.subr.bf16.mxu0 0
    %1166 = vmatpush1.bf16.msra.mxu0 0
    %1167 = vmatprep.subr.bf16.mxu0 0
    %1168 = vmatpush1.bf16.msra.mxu0 0
    %1169 = vmatprep.subr.bf16.mxu0 0
    %1170 = vmatpush1.bf16.msra.mxu0 0
    %1171 = vmatprep.subr.bf16.mxu0 0
    %1172 = vmatpush1.bf16.msra.mxu0 0
    %1173 = vmatprep.subr.bf16.mxu0 0
    %1174 = vmatpush1.bf16.msra.mxu0 0
    %1175 = vmatprep.mubr.bf16.mxu0 0
    %1176 = vmatmul.mubr.bf16.gmra.mrb[0].mxu0 %v1138
    %v1177 = vpop.f32.mrb[0].mxu0
    %v1178 = vadd.f32 0.0, %v1177
    %v1179 = vpop.f32.mrb[0].mxu0
    %v1180 = vpop.f32.mrb[0].mxu0
    %v1181 = vpop.f32.mrb[0].mxu0
    %1182 = vdwg.mxu0
    %1183 = vrot.lane.b32.xlu0 %v285, 48
    %v1184 = vpop.permute.xlu0 %1183
    %v1186 = vsel %vm289, %v1133, 0
    %v1189 = vsel %vm473, %v1184, 0
    %1191 = vmatprep.subr.bf16.mxu0 0
    %1192 = vmatpush1.bf16.msra.mxu0 %v1189
    %1193 = vmatprep.subr.bf16.mxu0 0
    %1194 = vmatpush1.bf16.msra.mxu0 0
    %1195 = vmatprep.subr.bf16.mxu0 0
    %1196 = vmatpush1.bf16.msra.mxu0 0
    %1197 = vmatprep.subr.bf16.mxu0 0
    %1198 = vmatpush1.bf16.msra.mxu0 0
    %1199 = vmatprep.subr.bf16.mxu0 0
    %1200 = vmatpush1.bf16.msra.mxu0 0
    %1201 = vmatprep.subr.bf16.mxu0 0
    %1202 = vmatpush1.bf16.msra.mxu0 0
    %1203 = vmatprep.subr.bf16.mxu0 0
    %1204 = vmatpush1.bf16.msra.mxu0 0
    %1205 = vmatprep.subr.bf16.mxu0 0
    %1206 = vmatpush1.bf16.msra.mxu0 0
    %1207 = vmatprep.subr.bf16.mxu0 0
    %1208 = vmatpush1.bf16.msra.mxu0 0
    %1209 = vmatprep.subr.bf16.mxu0 0
    %1210 = vmatpush1.bf16.msra.mxu0 0
    %1211 = vmatprep.subr.bf16.mxu0 0
    %1212 = vmatpush1.bf16.msra.mxu0 0
    %1213 = vmatprep.subr.bf16.mxu0 0
    %1214 = vmatpush1.bf16.msra.mxu0 0
    %1215 = vmatprep.subr.bf16.mxu0 0
    %1216 = vmatpush1.bf16.msra.mxu0 0
    %1217 = vmatprep.subr.bf16.mxu0 0
    %1218 = vmatpush1.bf16.msra.mxu0 0
    %1219 = vmatprep.subr.bf16.mxu0 0
    %1220 = vmatpush1.bf16.msra.mxu0 0
    %1221 = vmatprep.subr.bf16.mxu0 0
    %1222 = vmatpush1.bf16.msra.mxu0 0
    %1223 = vmatprep.mubr.bf16.mxu0 0
    %1224 = vmatmul.mubr.bf16.gmra.mrb[0].mxu0 %v1186
    %v1225 = vpop.f32.mrb[0].mxu0
    %v1226 = vadd.f32 0.0, %v1225
    %v1227 = vpop.f32.mrb[0].mxu0
    %v1228 = vpop.f32.mrb[0].mxu0
    %v1229 = vpop.f32.mrb[0].mxu0
    %1230 = vdwg.mxu0
    %1231 = vrot.lane.b32.xlu0 %v286, 48
    %v1232 = vpop.permute.xlu0 %1231
    %v1234 = vsel %vm289, %v1134, 0
    %v1237 = vsel %vm473, %v1232, 0
    %1239 = vmatprep.subr.bf16.mxu0 0
    %1240 = vmatpush1.bf16.msra.mxu0 %v1237
    %1241 = vmatprep.subr.bf16.mxu0 0
    %1242 = vmatpush1.bf16.msra.mxu0 0
    %1243 = vmatprep.subr.bf16.mxu0 0
    %1244 = vmatpush1.bf16.msra.mxu0 0
    %1245 = vmatprep.subr.bf16.mxu0 0
    %1246 = vmatpush1.bf16.msra.mxu0 0
    %1247 = vmatprep.subr.bf16.mxu0 0
    %1248 = vmatpush1.bf16.msra.mxu0 0
    %1249 = vmatprep.subr.bf16.mxu0 0
    %1250 = vmatpush1.bf16.msra.mxu0 0
    %1251 = vmatprep.subr.bf16.mxu0 0
    %1252 = vmatpush1.bf16.msra.mxu0 0
    %1253 = vmatprep.subr.bf16.mxu0 0
    %1254 = vmatpush1.bf16.msra.mxu0 0
    %1255 = vmatprep.subr.bf16.mxu0 0
    %1256 = vmatpush1.bf16.msra.mxu0 0
    %1257 = vmatprep.subr.bf16.mxu0 0
    %1258 = vmatpush1.bf16.msra.mxu0 0
    %1259 = vmatprep.subr.bf16.mxu0 0
    %1260 = vmatpush1.bf16.msra.mxu0 0
    %1261 = vmatprep.subr.bf16.mxu0 0
    %1262 = vmatpush1.bf16.msra.mxu0 0
    %1263 = vmatprep.subr.bf16.mxu0 0
    %1264 = vmatpush1.bf16.msra.mxu0 0
    %1265 = vmatprep.subr.bf16.mxu0 0
    %1266 = vmatpush1.bf16.msra.mxu0 0
    %1267 = vmatprep.subr.bf16.mxu0 0
    %1268 = vmatpush1.bf16.msra.mxu0 0
    %1269 = vmatprep.subr.bf16.mxu0 0
    %1270 = vmatpush1.bf16.msra.mxu0 0
    %1271 = vmatprep.mubr.bf16.mxu0 0
    %1272 = vmatmul.mubr.bf16.gmra.mrb[0].mxu0 %v1234
    %v1273 = vpop.f32.mrb[0].mxu0
    %v1274 = vadd.f32 0.0, %v1273
    %v1275 = vpop.f32.mrb[0].mxu0
    %v1276 = vpop.f32.mrb[0].mxu0
    %v1277 = vpop.f32.mrb[0].mxu0
    %1278 = vdwg.mxu0
    %v1279 = vmul.f32 %v1178, %v1127
    %v1280 = vmul.f32 %v1226, %v1129
    %v1281 = vmul.f32 %v1274, %v1131
    %1282 = vrot.lane.b32.xlu0 %v284, 104
    %v1283 = vpop.permute.xlu0 %1282
    %1284 = vrot.lane.b32.xlu0 %v284, 72
    %v1285 = vpop.permute.xlu0 %1284
    %v1287 = vsel %vm289, %v1283, 0
    %v1290 = vsel %vm289, %v1285, 0
    %1292 = vmatprep.subr.bf16.mxu0 0
    %1293 = vmatpush1.bf16.xpose.msra.mxu0 %v1290
    %1294 = vmatprep.subr.bf16.mxu0 0
    %1295 = vmatpush1.bf16.xpose.msra.mxu0 0
    %1296 = vmatprep.subr.bf16.mxu0 0
    %1297 = vmatpush1.bf16.xpose.msra.mxu0 0
    %1298 = vmatprep.subr.bf16.mxu0 0
    %1299 = vmatpush1.bf16.xpose.msra.mxu0 0
    %1300 = vmatprep.subr.bf16.mxu0 0
    %1301 = vmatpush1.bf16.xpose.msra.mxu0 0
    %1302 = vmatprep.subr.bf16.mxu0 0
    %1303 = vmatpush1.bf16.xpose.msra.mxu0 0
    %1304 = vmatprep.subr.bf16.mxu0 0
    %1305 = vmatpush1.bf16.xpose.msra.mxu0 0
    %1306 = vmatprep.subr.bf16.mxu0 0
    %1307 = vmatpush1.bf16.xpose.msra.mxu0 0
    %1308 = vmatprep.subr.bf16.mxu0 0
    %1309 = vmatpush1.bf16.xpose.msra.mxu0 0
    %1310 = vmatprep.subr.bf16.mxu0 0
    %1311 = vmatpush1.bf16.xpose.msra.mxu0 0
    %1312 = vmatprep.subr.bf16.mxu0 0
    %1313 = vmatpush1.bf16.xpose.msra.mxu0 0
    %1314 = vmatprep.subr.bf16.mxu0 0
    %1315 = vmatpush1.bf16.xpose.msra.mxu0 0
    %1316 = vmatprep.subr.bf16.mxu0 0
    %1317 = vmatpush1.bf16.xpose.msra.mxu0 0
    %1318 = vmatprep.subr.bf16.mxu0 0
    %1319 = vmatpush1.bf16.xpose.msra.mxu0 0
    %1320 = vmatprep.subr.bf16.mxu0 0
    %1321 = vmatpush1.bf16.xpose.msra.mxu0 0
    %1322 = vmatprep.subr.bf16.mxu0 0
    %1323 = vmatpush1.bf16.xpose.msra.mxu0 0
    %1324 = vmatprep.mubr.bf16.mxu0 0
    %1325 = vmatmul.mubr.bf16.gmra.mrb[0].mxu0 %v1287
    %v1326 = vpop.f32.mrb[0].mxu0
    %v1327 = vadd.f32 0.0, %v1326
    %v1328 = vpop.f32.mrb[0].mxu0
    %v1329 = vpop.f32.mrb[0].mxu0
    %v1330 = vpop.f32.mrb[0].mxu0
    %1331 = vdwg.mxu0
    %1332 = vrot.lane.b32.xlu0 %v285, 104
    %v1333 = vpop.permute.xlu0 %1332
    %1334 = vrot.lane.b32.xlu0 %v285, 72
    %v1335 = vpop.permute.xlu0 %1334
    %v1337 = vsel %vm289, %v1333, 0
    %v1340 = vsel %vm289, %v1335, 0
    %1342 = vmatprep.subr.bf16.mxu0 0
    %1343 = vmatpush1.bf16.xpose.msra.mxu0 %v1340
    %1344 = vmatprep.subr.bf16.mxu0 0
    %1345 = vmatpush1.bf16.xpose.msra.mxu0 0
    %1346 = vmatprep.subr.bf16.mxu0 0
    %1347 = vmatpush1.bf16.xpose.msra.mxu0 0
    %1348 = vmatprep.subr.bf16.mxu0 0
    %1349 = vmatpush1.bf16.xpose.msra.mxu0 0
    %1350 = vmatprep.subr.bf16.mxu0 0
    %1351 = vmatpush1.bf16.xpose.msra.mxu0 0
    %1352 = vmatprep.subr.bf16.mxu0 0
    %1353 = vmatpush1.bf16.xpose.msra.mxu0 0
    %1354 = vmatprep.subr.bf16.mxu0 0
    %1355 = vmatpush1.bf16.xpose.msra.mxu0 0
    %1356 = vmatprep.subr.bf16.mxu0 0
    %1357 = vmatpush1.bf16.xpose.msra.mxu0 0
    %1358 = vmatprep.subr.bf16.mxu0 0
    %1359 = vmatpush1.bf16.xpose.msra.mxu0 0
    %1360 = vmatprep.subr.bf16.mxu0 0
    %1361 = vmatpush1.bf16.xpose.msra.mxu0 0
    %1362 = vmatprep.subr.bf16.mxu0 0
    %1363 = vmatpush1.bf16.xpose.msra.mxu0 0
    %1364 = vmatprep.subr.bf16.mxu0 0
    %1365 = vmatpush1.bf16.xpose.msra.mxu0 0
    %1366 = vmatprep.subr.bf16.mxu0 0
    %1367 = vmatpush1.bf16.xpose.msra.mxu0 0
    %1368 = vmatprep.subr.bf16.mxu0 0
    %1369 = vmatpush1.bf16.xpose.msra.mxu0 0
    %1370 = vmatprep.subr.bf16.mxu0 0
    %1371 = vmatpush1.bf16.xpose.msra.mxu0 0
    %1372 = vmatprep.subr.bf16.mxu0 0
    %1373 = vmatpush1.bf16.xpose.msra.mxu0 0
    %1374 = vmatprep.mubr.bf16.mxu0 0
    %1375 = vmatmul.mubr.bf16.gmra.mrb[0].mxu0 %v1337
    %v1376 = vpop.f32.mrb[0].mxu0
    %v1377 = vadd.f32 0.0, %v1376
    %v1378 = vpop.f32.mrb[0].mxu0
    %v1379 = vpop.f32.mrb[0].mxu0
    %v1380 = vpop.f32.mrb[0].mxu0
    %1381 = vdwg.mxu0
    %1382 = vrot.lane.b32.xlu0 %v286, 104
    %v1383 = vpop.permute.xlu0 %1382
    %1384 = vrot.lane.b32.xlu0 %v286, 72
    %v1385 = vpop.permute.xlu0 %1384
    %v1387 = vsel %vm289, %v1383, 0
    %v1390 = vsel %vm289, %v1385, 0
    %1392 = vmatprep.subr.bf16.mxu0 0
    %1393 = vmatpush1.bf16.xpose.msra.mxu0 %v1390
    %1394 = vmatprep.subr.bf16.mxu0 0
    %1395 = vmatpush1.bf16.xpose.msra.mxu0 0
    %1396 = vmatprep.subr.bf16.mxu0 0
    %1397 = vmatpush1.bf16.xpose.msra.mxu0 0
    %1398 = vmatprep.subr.bf16.mxu0 0
    %1399 = vmatpush1.bf16.xpose.msra.mxu0 0
    %1400 = vmatprep.subr.bf16.mxu0 0
    %1401 = vmatpush1.bf16.xpose.msra.mxu0 0
    %1402 = vmatprep.subr.bf16.mxu0 0
    %1403 = vmatpush1.bf16.xpose.msra.mxu0 0
    %1404 = vmatprep.subr.bf16.mxu0 0
    %1405 = vmatpush1.bf16.xpose.msra.mxu0 0
    %1406 = vmatprep.subr.bf16.mxu0 0
    %1407 = vmatpush1.bf16.xpose.msra.mxu0 0
    %1408 = vmatprep.subr.bf16.mxu0 0
    %1409 = vmatpush1.bf16.xpose.msra.mxu0 0
    %1410 = vmatprep.subr.bf16.mxu0 0
    %1411 = vmatpush1.bf16.xpose.msra.mxu0 0
    %1412 = vmatprep.subr.bf16.mxu0 0
    %1413 = vmatpush1.bf16.xpose.msra.mxu0 0
    %1414 = vmatprep.subr.bf16.mxu0 0
    %1415 = vmatpush1.bf16.xpose.msra.mxu0 0
    %1416 = vmatprep.subr.bf16.mxu0 0
    %1417 = vmatpush1.bf16.xpose.msra.mxu0 0
    %1418 = vmatprep.subr.bf16.mxu0 0
    %1419 = vmatpush1.bf16.xpose.msra.mxu0 0
    %1420 = vmatprep.subr.bf16.mxu0 0
    %1421 = vmatpush1.bf16.xpose.msra.mxu0 0
    %1422 = vmatprep.subr.bf16.mxu0 0
    %1423 = vmatpush1.bf16.xpose.msra.mxu0 0
    %1424 = vmatprep.mubr.bf16.mxu0 0
    %1425 = vmatmul.mubr.bf16.gmra.mrb[0].mxu0 %v1387
    %v1426 = vpop.f32.mrb[0].mxu0
    %v1427 = vadd.f32 0.0, %v1426
    %v1428 = vpop.f32.mrb[0].mxu0
    %v1429 = vpop.f32.mrb[0].mxu0
    %v1430 = vpop.f32.mrb[0].mxu0
    %1431 = vdwg.mxu0
    %v1432 = vsel %vm289, %v1327, -inf
    %1433 = vmax.xlane.f32.xlu0 %v1432
    %v1434 = vpop.xlane.xlu0 %1433
    %v1435 = vsel %vm289, %v1377, -inf
    %1436 = vmax.xlane.f32.xlu0 %v1435
    %v1437 = vpop.xlane.xlu0 %1436
    %v1438 = vsel %vm289, %v1427, -inf
    %1439 = vmax.xlane.f32.xlu0 %v1438
    %v1440 = vpop.xlane.xlu0 %1439
    %v1441 = vsub.f32 %v1327, %v1434
    %v1442 = vsub.f32 %v1377, %v1437
    %v1443 = vsub.f32 %v1427, %v1440
    %v1444 = vmul.f32 %v1441, 1.442695
    %v1445 = vpow.pop %v1444
    %v1446 = vmul.f32 %v1442, 1.442695
    %v1447 = vpow.pop %v1446
    %v1448 = vmul.f32 %v1443, 1.442695
    %v1449 = vpow.pop %v1448
    %v1450 = vsel %vm289, %v1445, 0.0
    %1451 = vadd.xlane.f32.xlu0 %v1450
    %v1452 = vpop.xlane.xlu0 %1451
    %v1453 = vsel %vm289, %v1447, 0.0
    %1454 = vadd.xlane.f32.xlu0 %v1453
    %v1455 = vpop.xlane.xlu0 %1454
    %v1456 = vsel %vm289, %v1449, 0.0
    %1457 = vadd.xlane.f32.xlu0 %v1456
    %v1458 = vpop.xlane.xlu0 %1457
    %v1459 = vrcp.pop %v1452
    %v1460 = vmul.f32 1.0, %v1459
    %v1461 = vrcp.pop %v1455
    %v1462 = vmul.f32 1.0, %v1461
    %v1463 = vrcp.pop %v1458
    %v1464 = vmul.f32 1.0, %v1463
    %v1465 = vpack.c.bf16 %v1445, %v1445
    %v1466 = vpack.c.bf16 %v1447, %v1447
    %v1467 = vpack.c.bf16 %v1449, %v1449
    %1468 = vrot.lane.b32.xlu0 %v284, 40
    %v1469 = vpop.permute.xlu0 %1468
    %v1471 = vsel %vm289, %v1465, 0
    %v1474 = vsel %vm473, %v1469, 0
    %1476 = vmatprep.subr.bf16.mxu0 0
    %1477 = vmatpush1.bf16.msra.mxu0 %v1474
    %1478 = vmatprep.subr.bf16.mxu0 0
    %1479 = vmatpush1.bf16.msra.mxu0 0
    %1480 = vmatprep.subr.bf16.mxu0 0
    %1481 = vmatpush1.bf16.msra.mxu0 0
    %1482 = vmatprep.subr.bf16.mxu0 0
    %1483 = vmatpush1.bf16.msra.mxu0 0
    %1484 = vmatprep.subr.bf16.mxu0 0
    %1485 = vmatpush1.bf16.msra.mxu0 0
    %1486 = vmatprep.subr.bf16.mxu0 0
    %1487 = vmatpush1.bf16.msra.mxu0 0
    %1488 = vmatprep.subr.bf16.mxu0 0
    %1489 = vmatpush1.bf16.msra.mxu0 0
    %1490 = vmatprep.subr.bf16.mxu0 0
    %1491 = vmatpush1.bf16.msra.mxu0 0
    %1492 = vmatprep.subr.bf16.mxu0 0
    %1493 = vmatpush1.bf16.msra.mxu0 0
    %1494 = vmatprep.subr.bf16.mxu0 0
    %1495 = vmatpush1.bf16.msra.mxu0 0
    %1496 = vmatprep.subr.bf16.mxu0 0
    %1497 = vmatpush1.bf16.msra.mxu0 0
    %1498 = vmatprep.subr.bf16.mxu0 0
    %1499 = vmatpush1.bf16.msra.mxu0 0
    %1500 = vmatprep.subr.bf16.mxu0 0
    %1501 = vmatpush1.bf16.msra.mxu0 0
    %1502 = vmatprep.subr.bf16.mxu0 0
    %1503 = vmatpush1.bf16.msra.mxu0 0
    %1504 = vmatprep.subr.bf16.mxu0 0
    %1505 = vmatpush1.bf16.msra.mxu0 0
    %1506 = vmatprep.subr.bf16.mxu0 0
    %1507 = vmatpush1.bf16.msra.mxu0 0
    %1508 = vmatprep.mubr.bf16.mxu0 0
    %1509 = vmatmul.mubr.bf16.gmra.mrb[0].mxu0 %v1471
    %v1510 = vpop.f32.mrb[0].mxu0
    %v1511 = vadd.f32 0.0, %v1510
    %v1512 = vpop.f32.mrb[0].mxu0
    %v1513 = vpop.f32.mrb[0].mxu0
    %v1514 = vpop.f32.mrb[0].mxu0
    %1515 = vdwg.mxu0
    %1516 = vrot.lane.b32.xlu0 %v285, 40
    %v1517 = vpop.permute.xlu0 %1516
    %v1519 = vsel %vm289, %v1466, 0
    %v1522 = vsel %vm473, %v1517, 0
    %1524 = vmatprep.subr.bf16.mxu0 0
    %1525 = vmatpush1.bf16.msra.mxu0 %v1522
    %1526 = vmatprep.subr.bf16.mxu0 0
    %1527 = vmatpush1.bf16.msra.mxu0 0
    %1528 = vmatprep.subr.bf16.mxu0 0
    %1529 = vmatpush1.bf16.msra.mxu0 0
    %1530 = vmatprep.subr.bf16.mxu0 0
    %1531 = vmatpush1.bf16.msra.mxu0 0
    %1532 = vmatprep.subr.bf16.mxu0 0
    %1533 = vmatpush1.bf16.msra.mxu0 0
    %1534 = vmatprep.subr.bf16.mxu0 0
    %1535 = vmatpush1.bf16.msra.mxu0 0
    %1536 = vmatprep.subr.bf16.mxu0 0
    %1537 = vmatpush1.bf16.msra.mxu0 0
    %1538 = vmatprep.subr.bf16.mxu0 0
    %1539 = vmatpush1.bf16.msra.mxu0 0
    %1540 = vmatprep.subr.bf16.mxu0 0
    %1541 = vmatpush1.bf16.msra.mxu0 0
    %1542 = vmatprep.subr.bf16.mxu0 0
    %1543 = vmatpush1.bf16.msra.mxu0 0
    %1544 = vmatprep.subr.bf16.mxu0 0
    %1545 = vmatpush1.bf16.msra.mxu0 0
    %1546 = vmatprep.subr.bf16.mxu0 0
    %1547 = vmatpush1.bf16.msra.mxu0 0
    %1548 = vmatprep.subr.bf16.mxu0 0
    %1549 = vmatpush1.bf16.msra.mxu0 0
    %1550 = vmatprep.subr.bf16.mxu0 0
    %1551 = vmatpush1.bf16.msra.mxu0 0
    %1552 = vmatprep.subr.bf16.mxu0 0
    %1553 = vmatpush1.bf16.msra.mxu0 0
    %1554 = vmatprep.subr.bf16.mxu0 0
    %1555 = vmatpush1.bf16.msra.mxu0 0
    %1556 = vmatprep.mubr.bf16.mxu0 0
    %1557 = vmatmul.mubr.bf16.gmra.mrb[0].mxu0 %v1519
    %v1558 = vpop.f32.mrb[0].mxu0
    %v1559 = vadd.f32 0.0, %v1558
    %v1560 = vpop.f32.mrb[0].mxu0
    %v1561 = vpop.f32.mrb[0].mxu0
    %v1562 = vpop.f32.mrb[0].mxu0
    %1563 = vdwg.mxu0
    %1564 = vrot.lane.b32.xlu0 %v286, 40
    %v1565 = vpop.permute.xlu0 %1564
    %v1567 = vsel %vm289, %v1467, 0
    %v1570 = vsel %vm473, %v1565, 0
    %1572 = vmatprep.subr.bf16.mxu0 0
    %1573 = vmatpush1.bf16.msra.mxu0 %v1570
    %1574 = vmatprep.subr.bf16.mxu0 0
    %1575 = vmatpush1.bf16.msra.mxu0 0
    %1576 = vmatprep.subr.bf16.mxu0 0
    %1577 = vmatpush1.bf16.msra.mxu0 0
    %1578 = vmatprep.subr.bf16.mxu0 0
    %1579 = vmatpush1.bf16.msra.mxu0 0
    %1580 = vmatprep.subr.bf16.mxu0 0
    %1581 = vmatpush1.bf16.msra.mxu0 0
    %1582 = vmatprep.subr.bf16.mxu0 0
    %1583 = vmatpush1.bf16.msra.mxu0 0
    %1584 = vmatprep.subr.bf16.mxu0 0
    %1585 = vmatpush1.bf16.msra.mxu0 0
    %1586 = vmatprep.subr.bf16.mxu0 0
    %1587 = vmatpush1.bf16.msra.mxu0 0
    %1588 = vmatprep.subr.bf16.mxu0 0
    %1589 = vmatpush1.bf16.msra.mxu0 0
    %1590 = vmatprep.subr.bf16.mxu0 0
    %1591 = vmatpush1.bf16.msra.mxu0 0
    %1592 = vmatprep.subr.bf16.mxu0 0
    %1593 = vmatpush1.bf16.msra.mxu0 0
    %1594 = vmatprep.subr.bf16.mxu0 0
    %1595 = vmatpush1.bf16.msra.mxu0 0
    %1596 = vmatprep.subr.bf16.mxu0 0
    %1597 = vmatpush1.bf16.msra.mxu0 0
    %1598 = vmatprep.subr.bf16.mxu0 0
    %1599 = vmatpush1.bf16.msra.mxu0 0
    %1600 = vmatprep.subr.bf16.mxu0 0
    %1601 = vmatpush1.bf16.msra.mxu0 0
    %1602 = vmatprep.subr.bf16.mxu0 0
    %1603 = vmatpush1.bf16.msra.mxu0 0
    %1604 = vmatprep.mubr.bf16.mxu0 0
    %1605 = vmatmul.mubr.bf16.gmra.mrb[0].mxu0 %v1567
    %v1606 = vpop.f32.mrb[0].mxu0
    %v1607 = vadd.f32 0.0, %v1606
    %v1608 = vpop.f32.mrb[0].mxu0
    %v1609 = vpop.f32.mrb[0].mxu0
    %v1610 = vpop.f32.mrb[0].mxu0
    %1611 = vdwg.mxu0
    %v1612 = vmul.f32 %v1511, %v1460
    %v1613 = vmul.f32 %v1559, %v1462
    %v1614 = vmul.f32 %v1607, %v1464
    %1618 = vrot.lane.b32.xlu0 %v946, 8
    %v1619 = vpop.permute.xlu0 %1618
    %1620 = vrot.lane.b32.xlu0 %v947, 8
    %v1621 = vpop.permute.xlu0 %1620
    %1622 = vrot.lane.b32.xlu0 %v948, 8
    %v1623 = vpop.permute.xlu0 %1622
    %1630 = vrot.lane.b32.xlu0 %v1279, 16
    %v1631 = vpop.permute.xlu0 %1630
    %1632 = vrot.lane.b32.xlu0 %v1280, 16
    %v1633 = vpop.permute.xlu0 %1632
    %1634 = vrot.lane.b32.xlu0 %v1281, 16
    %v1635 = vpop.permute.xlu0 %1634
    %1642 = vrot.lane.b32.xlu0 %v1612, 24
    %v1643 = vpop.permute.xlu0 %1642
    %1644 = vrot.lane.b32.xlu0 %v1613, 24
    %v1645 = vpop.permute.xlu0 %1644
    %1646 = vrot.lane.b32.xlu0 %v1614, 24
    %v1647 = vpop.permute.xlu0 %1646
    %v1651 = vsel %vm289, %v613, %v1619
    %v1652 = vsel %vm289, %v614, %v1621
    %v1653 = vsel %vm289, %v615, %v1623
    %vm1654 = vcmask 130048
    %v1655 = vsel %vm1654, %v1651, %v1631
    %v1656 = vsel %vm1654, %v1652, %v1633
    %v1657 = vsel %vm1654, %v1653, %v1635
    %vm1658 = vcmask 195584
    %v1659 = vsel %vm1658, %v1655, %v1643
    %v1660 = vsel %vm1658, %v1656, %v1645
    %v1661 = vsel %vm1658, %v1657, %v1647
    %v1662 = vld [vmem:[%s3] sm:$0xf]
    %v1663 = vld [vmem:[%s3 + $0x4] sm:$0xf]
    %v1664 = vld [vmem:[%s3 + $0x8] sm:$0xf]
    %v1665 = vld [vmem:[%s3 + $0xc] sm:$0xf]
    %v1666 = vpack.c.bf16 %v1660, %v1659
    %v1667 = vpack.c.bf16 %v1661, %v1661
    %v1668 = vld [vmem:[#allocation7] sm:$0x1]
    %v1670 = vlaneseq
    %v1671 = vshrl.u32 %v1670, 7
    %v1672 = vsub.s32 0, %v1671
    %v1673 = vrot.slane %v1668, %v1672
    %v1679 = vunpack.c.l.b16 %v1662
    %v1680 = vunpack.c.l.b16 %v1663
    %v1681 = vunpack.c.l.b16 %v1664
    %v1682 = vunpack.c.l.b16 %v1665
    %v1683 = vpack.c.b16 %v1680, %v1679
    %v1684 = vpack.c.b16 %v1682, %v1681
    %v1688 = vsel %vm222, %v1666, 0
    %v1691 = vsel %vm222, %v1667, 0
    %1693 = vmatprep.subr.bf16.mxu0 0
    %1694 = vmatpush1.bf16.msra.mxu0 %v1683
    %1695 = vmatprep.subr.bf16.mxu0 0
    %1696 = vmatpush1.bf16.msra.mxu0 %v1684
    %1697 = vmatprep.subr.bf16.mxu0 0
    %1698 = vmatpush1.bf16.msra.mxu0 0
    %1699 = vmatprep.subr.bf16.mxu0 0
    %1700 = vmatpush1.bf16.msra.mxu0 0
    %1701 = vmatprep.subr.bf16.mxu0 0
    %1702 = vmatpush1.bf16.msra.mxu0 0
    %1703 = vmatprep.subr.bf16.mxu0 0
    %1704 = vmatpush1.bf16.msra.mxu0 0
    %1705 = vmatprep.subr.bf16.mxu0 0
    %1706 = vmatpush1.bf16.msra.mxu0 0
    %1707 = vmatprep.subr.bf16.mxu0 0
    %1708 = vmatpush1.bf16.msra.mxu0 0
    %1709 = vmatprep.subr.bf16.mxu0 0
    %1710 = vmatpush1.bf16.msra.mxu0 0
    %1711 = vmatprep.subr.bf16.mxu0 0
    %1712 = vmatpush1.bf16.msra.mxu0 0
    %1713 = vmatprep.subr.bf16.mxu0 0
    %1714 = vmatpush1.bf16.msra.mxu0 0
    %1715 = vmatprep.subr.bf16.mxu0 0
    %1716 = vmatpush1.bf16.msra.mxu0 0
    %1717 = vmatprep.subr.bf16.mxu0 0
    %1718 = vmatpush1.bf16.msra.mxu0 0
    %1719 = vmatprep.subr.bf16.mxu0 0
    %1720 = vmatpush1.bf16.msra.mxu0 0
    %1721 = vmatprep.subr.bf16.mxu0 0
    %1722 = vmatpush1.bf16.msra.mxu0 0
    %1723 = vmatprep.subr.bf16.mxu0 0
    %1724 = vmatpush1.bf16.msra.mxu0 0
    %1725 = vmatprep.mubr.bf16.mxu0 0
    %1726 = vmatmul.mubr.bf16.gmra.mrb[0].mxu0 %v1688
    %v1727 = vpop.f32.mrb[0].mxu0
    %v1728 = vadd.f32 %v1673, %v1727
    %v1729 = vpop.f32.mrb[0].mxu0
    %v1730 = vpop.f32.mrb[0].mxu0
    %v1731 = vadd.f32 %v1673, %v1730
    %v1732 = vpop.f32.mrb[0].mxu0
    %1733 = vmatprep.mubr.bf16.mxu0 0
    %1734 = vmatmul.mubr.bf16.gmra.mrb[0].mxu0 %v1691
    %v1735 = vpop.f32.mrb[0].mxu0
    %v1736 = vadd.f32 %v1673, %v1735
    %v1737 = vpop.f32.mrb[0].mxu0
    %v1738 = vpop.f32.mrb[0].mxu0
    %v1739 = vpop.f32.mrb[0].mxu0
    %1740 = vdwg.mxu0
    %v1741 = vadd.f32 %v194, %v1728
    %v1742 = vadd.f32 %v195, %v1731
    %v1743 = vadd.f32 %v196, %v1736
    %v1744 = vld [vmem:[#allocation8] sm:$0x1]
    %v1745 = vld [vmem:[#allocation10] sm:$0x1]
    %v1746 = vsel %vm222, %v1741, 0.0
    %1747 = vadd.xlane.f32.xlu0 %v1746
    %v1748 = vpop.xlane.xlu0 %1747
    %v1749 = vsel %vm222, %v1742, 0.0
    %1750 = vadd.xlane.f32.xlu0 %v1749
    %v1751 = vpop.xlane.xlu0 %1750
    %v1752 = vsel %vm222, %v1743, 0.0
    %1753 = vadd.xlane.f32.xlu0 %v1752
    %v1754 = vpop.xlane.xlu0 %1753
    %v1755 = vrcp.pop 32.0
    %v1756 = vmul.f32 %v1748, %v1755
    %v1757 = vmul.f32 %v1751, %v1755
    %v1758 = vmul.f32 %v1754, %v1755
    %v1759 = vsub.f32 %v1741, %v1756
    %v1760 = vsub.f32 %v1742, %v1757
    %v1761 = vsub.f32 %v1743, %v1758
    %v1762 = vmul.f32 %v1759, %v1759
    %v1763 = vmul.f32 %v1760, %v1760
    %v1764 = vmul.f32 %v1761, %v1761
    %v1765 = vsel %vm222, %v1762, 0.0
    %1766 = vadd.xlane.f32.xlu0 %v1765
    %v1767 = vpop.xlane.xlu0 %1766
    %v1768 = vsel %vm222, %v1763, 0.0
    %1769 = vadd.xlane.f32.xlu0 %v1768
    %v1770 = vpop.xlane.xlu0 %1769
    %v1771 = vsel %vm222, %v1764, 0.0
    %1772 = vadd.xlane.f32.xlu0 %v1771
    %v1773 = vpop.xlane.xlu0 %1772
    %v1774 = vmul.f32 %v1767, %v1755
    %v1775 = vmul.f32 %v1770, %v1755
    %v1776 = vmul.f32 %v1773, %v1755
    %v1777 = vadd.f32 %v1774, 1e-05
    %v1778 = vadd.f32 %v1775, 1e-05
    %v1779 = vadd.f32 %v1776, 1e-05
    %v1780 = vrsqrt.pop %v1777
    %v1781 = vrsqrt.pop %v1778
    %v1782 = vrsqrt.pop %v1779
    %v1783 = vmul.f32 %v1759, %v1780
    %v1784 = vmul.f32 %v1760, %v1781
    %v1785 = vmul.f32 %v1761, %v1782
    %v1787 = vlaneseq
    %v1788 = vshrl.u32 %v1787, 7
    %v1789 = vsub.s32 0, %v1788
    %v1790 = vrot.slane %v1744, %v1789
    %v1792 = vmul.f32 %v1783, %v1790
    %v1793 = vmul.f32 %v1784, %v1790
    %v1794 = vmul.f32 %v1785, %v1790
    %v1796 = vlaneseq
    %v1797 = vshrl.u32 %v1796, 7
    %v1798 = vsub.s32 0, %v1797
    %v1799 = vrot.slane %v1745, %v1798
    %v1801 = vadd.f32 %v1792, %v1799
    %v1802 = vadd.f32 %v1793, %v1799
    %v1803 = vadd.f32 %v1794, %v1799
    %v1804 = vld [vmem:[%s9] sm:$0xf]
    %v1805 = vld [vmem:[%s9 + $0x4] sm:$0xf]
    %v1806 = vld [vmem:[%s9 + $0x8] sm:$0xf]
    %v1807 = vld [vmem:[%s9 + $0xc] sm:$0xf]
    %v1808 = vpack.c.bf16 %v1802, %v1801
    %v1809 = vpack.c.bf16 %v1803, %v1803
    %v1810 = vld [vmem:[#allocation14] sm:$0x1]
    %v1812 = vlaneseq
    %v1813 = vshrl.u32 %v1812, 7
    %v1814 = vsub.s32 0, %v1813
    %v1815 = vrot.slane %v1810, %v1814
    %v1821 = vunpack.c.l.b16 %v1804
    %v1822 = vunpack.c.l.b16 %v1805
    %v1823 = vunpack.c.l.b16 %v1806
    %v1824 = vunpack.c.l.b16 %v1807
    %v1825 = vpack.c.b16 %v1822, %v1821
    %v1826 = vpack.c.b16 %v1824, %v1823
    %v1830 = vsel %vm222, %v1808, 0
    %v1833 = vsel %vm222, %v1809, 0
    %1835 = vmatprep.subr.bf16.mxu0 0
    %1836 = vmatpush1.bf16.msra.mxu0 %v1825
    %1837 = vmatprep.subr.bf16.mxu0 0
    %1838 = vmatpush1.bf16.msra.mxu0 %v1826
    %1839 = vmatprep.subr.bf16.mxu0 0
    %1840 = vmatpush1.bf16.msra.mxu0 0
    %1841 = vmatprep.subr.bf16.mxu0 0
    %1842 = vmatpush1.bf16.msra.mxu0 0
    %1843 = vmatprep.subr.bf16.mxu0 0
    %1844 = vmatpush1.bf16.msra.mxu0 0
    %1845 = vmatprep.subr.bf16.mxu0 0
    %1846 = vmatpush1.bf16.msra.mxu0 0
    %1847 = vmatprep.subr.bf16.mxu0 0
    %1848 = vmatpush1.bf16.msra.mxu0 0
    %1849 = vmatprep.subr.bf16.mxu0 0
    %1850 = vmatpush1.bf16.msra.mxu0 0
    %1851 = vmatprep.subr.bf16.mxu0 0
    %1852 = vmatpush1.bf16.msra.mxu0 0
    %1853 = vmatprep.subr.bf16.mxu0 0
    %1854 = vmatpush1.bf16.msra.mxu0 0
    %1855 = vmatprep.subr.bf16.mxu0 0
    %1856 = vmatpush1.bf16.msra.mxu0 0
    %1857 = vmatprep.subr.bf16.mxu0 0
    %1858 = vmatpush1.bf16.msra.mxu0 0
    %1859 = vmatprep.subr.bf16.mxu0 0
    %1860 = vmatpush1.bf16.msra.mxu0 0
    %1861 = vmatprep.subr.bf16.mxu0 0
    %1862 = vmatpush1.bf16.msra.mxu0 0
    %1863 = vmatprep.subr.bf16.mxu0 0
    %1864 = vmatpush1.bf16.msra.mxu0 0
    %1865 = vmatprep.subr.bf16.mxu0 0
    %1866 = vmatpush1.bf16.msra.mxu0 0
    %1867 = vmatprep.mubr.bf16.mxu0 0
    %1868 = vmatmul.mubr.bf16.gmra.mrb[0].mxu0 %v1830
    %v1869 = vpop.f32.mrb[0].mxu0
    %v1870 = vadd.f32 %v1815, %v1869
    %v1871 = vpop.f32.mrb[0].mxu0
    %v1872 = vpop.f32.mrb[0].mxu0
    %v1873 = vadd.f32 %v1815, %v1872
    %v1874 = vpop.f32.mrb[0].mxu0
    %1875 = vmatprep.mubr.bf16.mxu0 0
    %1876 = vmatmul.mubr.bf16.gmra.mrb[0].mxu0 %v1833
    %v1877 = vpop.f32.mrb[0].mxu0
    %v1878 = vadd.f32 %v1815, %v1877
    %v1879 = vpop.f32.mrb[0].mxu0
    %v1880 = vpop.f32.mrb[0].mxu0
    %v1881 = vpop.f32.mrb[0].mxu0
    %1882 = vdwg.mxu0
    %v1883 = vmax.f32 %v1870, 0.0
    %v1884 = vmax.f32 %v1873, 0.0
    %v1885 = vmax.f32 %v1878, 0.0
    %v1886 = vld [vmem:[%s11] sm:$0xf]
    %v1887 = vld [vmem:[%s11 + $0x4] sm:$0xf]
    %v1888 = vld [vmem:[%s11 + $0x8] sm:$0xf]
    %v1889 = vld [vmem:[%s11 + $0xc] sm:$0xf]
    %v1890 = vld [vmem:[%s11 + $0x10] sm:$0xf]
    %v1891 = vld [vmem:[%s11 + $0x14] sm:$0xf]
    %v1892 = vld [vmem:[%s11 + $0x18] sm:$0xf]
    %v1893 = vld [vmem:[%s11 + $0x1c] sm:$0xf]
    %v1894 = vpack.c.bf16 %v1884, %v1883
    %v1895 = vpack.c.bf16 %v1885, %v1885
    %v1896 = vld [vmem:[#allocation16] sm:$0x1]
    %v1898 = vlaneseq
    %v1899 = vshrl.u32 %v1898, 7
    %v1900 = vsub.s32 0, %v1899
    %v1901 = vrot.slane %v1896, %v1900
    %v1911 = vunpack.c.l.b16 %v1886
    %v1912 = vunpack.c.l.b16 %v1887
    %v1913 = vunpack.c.l.b16 %v1888
    %v1914 = vunpack.c.l.b16 %v1889
    %v1915 = vunpack.c.l.b16 %v1890
    %v1916 = vunpack.c.l.b16 %v1891
    %v1917 = vunpack.c.l.b16 %v1892
    %v1918 = vunpack.c.l.b16 %v1893
    %v1919 = vpack.c.b16 %v1912, %v1911
    %v1920 = vpack.c.b16 %v1914, %v1913
    %v1921 = vpack.c.b16 %v1916, %v1915
    %v1922 = vpack.c.b16 %v1918, %v1917
    %vm1927 = vcmask 523264
    %v1929 = vsel %vm1927, %v1894, 0
    %v1932 = vsel %vm1927, %v1895, 0
    %1934 = vmatprep.subr.bf16.mxu0 0
    %1935 = vmatpush1.bf16.msra.mxu0 %v1919
    %1936 = vmatprep.subr.bf16.mxu0 0
    %1937 = vmatpush1.bf16.msra.mxu0 %v1920
    %1938 = vmatprep.subr.bf16.mxu0 0
    %1939 = vmatpush1.bf16.msra.mxu0 %v1921
    %1940 = vmatprep.subr.bf16.mxu0 0
    %1941 = vmatpush1.bf16.msra.mxu0 %v1922
    %1942 = vmatprep.subr.bf16.mxu0 0
    %1943 = vmatpush1.bf16.msra.mxu0 0
    %1944 = vmatprep.subr.bf16.mxu0 0
    %1945 = vmatpush1.bf16.msra.mxu0 0
    %1946 = vmatprep.subr.bf16.mxu0 0
    %1947 = vmatpush1.bf16.msra.mxu0 0
    %1948 = vmatprep.subr.bf16.mxu0 0
    %1949 = vmatpush1.bf16.msra.mxu0 0
    %1950 = vmatprep.subr.bf16.mxu0 0
    %1951 = vmatpush1.bf16.msra.mxu0 0
    %1952 = vmatprep.subr.bf16.mxu0 0
    %1953 = vmatpush1.bf16.msra.mxu0 0
    %1954 = vmatprep.subr.bf16.mxu0 0
    %1955 = vmatpush1.bf16.msra.mxu0 0
    %1956 = vmatprep.subr.bf16.mxu0 0
    %1957 = vmatpush1.bf16.msra.mxu0 0
    %1958 = vmatprep.subr.bf16.mxu0 0
    %1959 = vmatpush1.bf16.msra.mxu0 0
    %1960 = vmatprep.subr.bf16.mxu0 0
    %1961 = vmatpush1.bf16.msra.mxu0 0
    %1962 = vmatprep.subr.bf16.mxu0 0
    %1963 = vmatpush1.bf16.msra.mxu0 0
    %1964 = vmatprep.subr.bf16.mxu0 0
    %1965 = vmatpush1.bf16.msra.mxu0 0
    %1966 = vmatprep.mubr.bf16.mxu0 0
    %1967 = vmatmul.mubr.bf16.gmra.mrb[0].mxu0 %v1929
    %v1968 = vpop.f32.mrb[0].mxu0
    %v1969 = vadd.f32 %v1901, %v1968
    %v1970 = vpop.f32.mrb[0].mxu0
    %v1971 = vpop.f32.mrb[0].mxu0
    %v1972 = vadd.f32 %v1901, %v1971
    %v1973 = vpop.f32.mrb[0].mxu0
    %1974 = vmatprep.mubr.bf16.mxu0 0
    %1975 = vmatmul.mubr.bf16.gmra.mrb[0].mxu0 %v1932
    %v1976 = vpop.f32.mrb[0].mxu0
    %v1977 = vadd.f32 %v1901, %v1976
    %v1978 = vpop.f32.mrb[0].mxu0
    %v1979 = vpop.f32.mrb[0].mxu0
    %v1980 = vpop.f32.mrb[0].mxu0
    %1981 = vdwg.mxu0
    %v1982 = vadd.f32 %v1801, %v1969
    %v1983 = vadd.f32 %v1802, %v1972
    %v1984 = vadd.f32 %v1803, %v1977
    %v1985 = vld [vmem:[#allocation11] sm:$0x1]
    %v1986 = vld [vmem:[#allocation13] sm:$0x1]
    %v1987 = vsel %vm222, %v1982, 0.0
    %1988 = vadd.xlane.f32.xlu0 %v1987
    %v1989 = vpop.xlane.xlu0 %1988
    %v1990 = vsel %vm222, %v1983, 0.0
    %1991 = vadd.xlane.f32.xlu0 %v1990
    %v1992 = vpop.xlane.xlu0 %1991
    %v1993 = vsel %vm222, %v1984, 0.0
    %1994 = vadd.xlane.f32.xlu0 %v1993
    %v1995 = vpop.xlane.xlu0 %1994
    %v1996 = vmul.f32 %v1989, %v1755
    %v1997 = vmul.f32 %v1992, %v1755
    %v1998 = vmul.f32 %v1995, %v1755
    %v1999 = vsub.f32 %v1982, %v1996
    %v2000 = vsub.f32 %v1983, %v1997
    %v2001 = vsub.f32 %v1984, %v1998
    %v2002 = vmul.f32 %v1999, %v1999
    %v2003 = vmul.f32 %v2000, %v2000
    %v2004 = vmul.f32 %v2001, %v2001
    %v2005 = vsel %vm222, %v2002, 0.0
    %2006 = vadd.xlane.f32.xlu0 %v2005
    %v2007 = vpop.xlane.xlu0 %2006
    %v2008 = vsel %vm222, %v2003, 0.0
    %2009 = vadd.xlane.f32.xlu0 %v2008
    %v2010 = vpop.xlane.xlu0 %2009
    %v2011 = vsel %vm222, %v2004, 0.0
    %2012 = vadd.xlane.f32.xlu0 %v2011
    %v2013 = vpop.xlane.xlu0 %2012
    %v2014 = vmul.f32 %v2007, %v1755
    %v2015 = vmul.f32 %v2010, %v1755
    %v2016 = vmul.f32 %v2013, %v1755
    %v2017 = vadd.f32 %v2014, 1e-05
    %v2018 = vadd.f32 %v2015, 1e-05
    %v2019 = vadd.f32 %v2016, 1e-05
    %v2020 = vrsqrt.pop %v2017
    %v2021 = vrsqrt.pop %v2018
    %v2022 = vrsqrt.pop %v2019
    %v2023 = vmul.f32 %v1999, %v2020
    %v2024 = vmul.f32 %v2000, %v2021
    %v2025 = vmul.f32 %v2001, %v2022
    %v2027 = vlaneseq
    %v2028 = vshrl.u32 %v2027, 7
    %v2029 = vsub.s32 0, %v2028
    %v2030 = vrot.slane %v1985, %v2029
    %v2032 = vmul.f32 %v2023, %v2030
    %v2033 = vmul.f32 %v2024, %v2030
    %v2034 = vmul.f32 %v2025, %v2030
    %v2036 = vlaneseq
    %v2037 = vshrl.u32 %v2036, 7
    %v2038 = vsub.s32 0, %v2037
    %v2039 = vrot.slane %v1986, %v2038
    %v2041 = vadd.f32 %v2032, %v2039
    %v2042 = vadd.f32 %v2033, %v2039
    %v2043 = vadd.f32 %v2034, %v2039
    %s2044 = scalar_lea.vmem %s1, 16
    %v2045 = vld [vmem:[%s2044] sm:$0xf]
    %v2046 = vld [vmem:[%s2044 + $0x4] sm:$0xf]
    %v2047 = vld [vmem:[%s2044 + $0x8] sm:$0xf]
    %v2048 = vld [vmem:[%s2044 + $0xc] sm:$0xf]
    %v2049 = vpack.c.bf16 %v2042, %v2041
    %v2050 = vpack.c.bf16 %v2043, %v2043
    %s2051 = scalar_lea.vmem [#allocation5], 1
    %v2052 = vld [vmem:[%s2051] sm:$0x1]
    %v2054 = vlaneseq
    %v2055 = vshrl.u32 %v2054, 7
    %v2056 = vsub.s32 0, %v2055
    %v2057 = vrot.slane %v2052, %v2056
    %v2063 = vunpack.c.l.b16 %v2045
    %v2064 = vunpack.c.l.b16 %v2046
    %v2065 = vunpack.c.l.b16 %v2047
    %v2066 = vunpack.c.l.b16 %v2048
    %v2067 = vpack.c.b16 %v2064, %v2063
    %v2068 = vpack.c.b16 %v2066, %v2065
    %v2072 = vsel %vm222, %v2049, 0
    %v2075 = vsel %vm222, %v2050, 0
    %2077 = vmatprep.subr.bf16.mxu0 0
    %2078 = vmatpush1.bf16.msra.mxu0 %v2067
    %2079 = vmatprep.subr.bf16.mxu0 0
    %2080 = vmatpush1.bf16.msra.mxu0 %v2068
    %2081 = vmatprep.subr.bf16.mxu0 0
    %2082 = vmatpush1.bf16.msra.mxu0 0
    %2083 = vmatprep.subr.bf16.mxu0 0
    %2084 = vmatpush1.bf16.msra.mxu0 0
    %2085 = vmatprep.subr.bf16.mxu0 0
    %2086 = vmatpush1.bf16.msra.mxu0 0
    %2087 = vmatprep.subr.bf16.mxu0 0
    %2088 = vmatpush1.bf16.msra.mxu0 0
    %2089 = vmatprep.subr.bf16.mxu0 0
    %2090 = vmatpush1.bf16.msra.mxu0 0
    %2091 = vmatprep.subr.bf16.mxu0 0
    %2092 = vmatpush1.bf16.msra.mxu0 0
    %2093 = vmatprep.subr.bf16.mxu0 0
    %2094 = vmatpush1.bf16.msra.mxu0 0
    %2095 = vmatprep.subr.bf16.mxu0 0
    %2096 = vmatpush1.bf16.msra.mxu0 0
    %2097 = vmatprep.subr.bf16.mxu0 0
    %2098 = vmatpush1.bf16.msra.mxu0 0
    %2099 = vmatprep.subr.bf16.mxu0 0
    %2100 = vmatpush1.bf16.msra.mxu0 0
    %2101 = vmatprep.subr.bf16.mxu0 0
    %2102 = vmatpush1.bf16.msra.mxu0 0
    %2103 = vmatprep.subr.bf16.mxu0 0
    %2104 = vmatpush1.bf16.msra.mxu0 0
    %2105 = vmatprep.subr.bf16.mxu0 0
    %2106 = vmatpush1.bf16.msra.mxu0 0
    %2107 = vmatprep.subr.bf16.mxu0 0
    %2108 = vmatpush1.bf16.msra.mxu0 0
    %2109 = vmatprep.mubr.bf16.mxu0 0
    %2110 = vmatmul.mubr.bf16.gmra.mrb[0].mxu0 %v2072
    %v2111 = vpop.f32.mrb[0].mxu0
    %v2112 = vadd.f32 %v2057, %v2111
    %v2113 = vpop.f32.mrb[0].mxu0
    %v2114 = vpop.f32.mrb[0].mxu0
    %v2115 = vadd.f32 %v2057, %v2114
    %v2116 = vpop.f32.mrb[0].mxu0
    %2117 = vmatprep.mubr.bf16.mxu0 0
    %2118 = vmatmul.mubr.bf16.gmra.mrb[0].mxu0 %v2075
    %v2119 = vpop.f32.mrb[0].mxu0
    %v2120 = vadd.f32 %v2057, %v2119
    %v2121 = vpop.f32.mrb[0].mxu0
    %v2122 = vpop.f32.mrb[0].mxu0
    %v2123 = vpop.f32.mrb[0].mxu0
    %2124 = vdwg.mxu0
    %v2125 = vpack.c.bf16 %v2115, %v2112
    %v2126 = vpack.c.bf16 %v2120, %v2120
    %v2129 = vunpack.c.l.b16 %v2125
    %v2130 = vunpack.c.h.b16 %v2125
    %v2131 = vunpack.c.l.b16 %v2126
    %v2132 = vpack.c.b16 %v2129, %v2129
    %v2133 = vpack.c.b16 %v2130, %v2130
    %v2134 = vpack.c.b16 %v2131, %v2131
    %2135 = vrot.lane.b32.xlu0 %v2132, 96
    %v2136 = vpop.permute.xlu0 %2135
    %v2138 = vsel %vm289, %v2132, 0
    %v2141 = vsel %vm289, %v2136, 0
    %2143 = vmatprep.subr.bf16.mxu0 0
    %2144 = vmatpush1.bf16.xpose.msra.mxu0 %v2141
    %2145 = vmatprep.subr.bf16.mxu0 0
    %2146 = vmatpush1.bf16.xpose.msra.mxu0 0
    %2147 = vmatprep.subr.bf16.mxu0 0
    %2148 = vmatpush1.bf16.xpose.msra.mxu0 0
    %2149 = vmatprep.subr.bf16.mxu0 0
    %2150 = vmatpush1.bf16.xpose.msra.mxu0 0
    %2151 = vmatprep.subr.bf16.mxu0 0
    %2152 = vmatpush1.bf16.xpose.msra.mxu0 0
    %2153 = vmatprep.subr.bf16.mxu0 0
    %2154 = vmatpush1.bf16.xpose.msra.mxu0 0
    %2155 = vmatprep.subr.bf16.mxu0 0
    %2156 = vmatpush1.bf16.xpose.msra.mxu0 0
    %2157 = vmatprep.subr.bf16.mxu0 0
    %2158 = vmatpush1.bf16.xpose.msra.mxu0 0
    %2159 = vmatprep.subr.bf16.mxu0 0
    %2160 = vmatpush1.bf16.xpose.msra.mxu0 0
    %2161 = vmatprep.subr.bf16.mxu0 0
    %2162 = vmatpush1.bf16.xpose.msra.mxu0 0
    %2163 = vmatprep.subr.bf16.mxu0 0
    %2164 = vmatpush1.bf16.xpose.msra.mxu0 0
    %2165 = vmatprep.subr.bf16.mxu0 0
    %2166 = vmatpush1.bf16.xpose.msra.mxu0 0
    %2167 = vmatprep.subr.bf16.mxu0 0
    %2168 = vmatpush1.bf16.xpose.msra.mxu0 0
    %2169 = vmatprep.subr.bf16.mxu0 0
    %2170 = vmatpush1.bf16.xpose.msra.mxu0 0
    %2171 = vmatprep.subr.bf16.mxu0 0
    %2172 = vmatpush1.bf16.xpose.msra.mxu0 0
    %2173 = vmatprep.subr.bf16.mxu0 0
    %2174 = vmatpush1.bf16.xpose.msra.mxu0 0
    %2175 = vmatprep.mubr.bf16.mxu0 0
    %2176 = vmatmul.mubr.bf16.gmra.mrb[0].mxu0 %v2138
    %v2177 = vpop.f32.mrb[0].mxu0
    %v2178 = vadd.f32 0.0, %v2177
    %v2179 = vpop.f32.mrb[0].mxu0
    %v2180 = vpop.f32.mrb[0].mxu0
    %v2181 = vpop.f32.mrb[0].mxu0
    %2182 = vdwg.mxu0
    %2183 = vrot.lane.b32.xlu0 %v2133, 96
    %v2184 = vpop.permute.xlu0 %2183
    %v2186 = vsel %vm289, %v2133, 0
    %v2189 = vsel %vm289, %v2184, 0
    %2191 = vmatprep.subr.bf16.mxu0 0
    %2192 = vmatpush1.bf16.xpose.msra.mxu0 %v2189
    %2193 = vmatprep.subr.bf16.mxu0 0
    %2194 = vmatpush1.bf16.xpose.msra.mxu0 0
    %2195 = vmatprep.subr.bf16.mxu0 0
    %2196 = vmatpush1.bf16.xpose.msra.mxu0 0
    %2197 = vmatprep.subr.bf16.mxu0 0
    %2198 = vmatpush1.bf16.xpose.msra.mxu0 0
    %2199 = vmatprep.subr.bf16.mxu0 0
    %2200 = vmatpush1.bf16.xpose.msra.mxu0 0
    %2201 = vmatprep.subr.bf16.mxu0 0
    %2202 = vmatpush1.bf16.xpose.msra.mxu0 0
    %2203 = vmatprep.subr.bf16.mxu0 0
    %2204 = vmatpush1.bf16.xpose.msra.mxu0 0
    %2205 = vmatprep.subr.bf16.mxu0 0
    %2206 = vmatpush1.bf16.xpose.msra.mxu0 0
    %2207 = vmatprep.subr.bf16.mxu0 0
    %2208 = vmatpush1.bf16.xpose.msra.mxu0 0
    %2209 = vmatprep.subr.bf16.mxu0 0
    %2210 = vmatpush1.bf16.xpose.msra.mxu0 0
    %2211 = vmatprep.subr.bf16.mxu0 0
    %2212 = vmatpush1.bf16.xpose.msra.mxu0 0
    %2213 = vmatprep.subr.bf16.mxu0 0
    %2214 = vmatpush1.bf16.xpose.msra.mxu0 0
    %2215 = vmatprep.subr.bf16.mxu0 0
    %2216 = vmatpush1.bf16.xpose.msra.mxu0 0
    %2217 = vmatprep.subr.bf16.mxu0 0
    %2218 = vmatpush1.bf16.xpose.msra.mxu0 0
    %2219 = vmatprep.subr.bf16.mxu0 0
    %2220 = vmatpush1.bf16.xpose.msra.mxu0 0
    %2221 = vmatprep.subr.bf16.mxu0 0
    %2222 = vmatpush1.bf16.xpose.msra.mxu0 0
    %2223 = vmatprep.mubr.bf16.mxu0 0
    %2224 = vmatmul.mubr.bf16.gmra.mrb[0].mxu0 %v2186
    %v2225 = vpop.f32.mrb[0].mxu0
    %v2226 = vadd.f32 0.0, %v2225
    %v2227 = vpop.f32.mrb[0].mxu0
    %v2228 = vpop.f32.mrb[0].mxu0
    %v2229 = vpop.f32.mrb[0].mxu0
    %2230 = vdwg.mxu0
    %2231 = vrot.lane.b32.xlu0 %v2134, 96
    %v2232 = vpop.permute.xlu0 %2231
    %v2234 = vsel %vm289, %v2134, 0
    %v2237 = vsel %vm289, %v2232, 0
    %2239 = vmatprep.subr.bf16.mxu0 0
    %2240 = vmatpush1.bf16.xpose.msra.mxu0 %v2237
    %2241 = vmatprep.subr.bf16.mxu0 0
    %2242 = vmatpush1.bf16.xpose.msra.mxu0 0
    %2243 = vmatprep.subr.bf16.mxu0 0
    %2244 = vmatpush1.bf16.xpose.msra.mxu0 0
    %2245 = vmatprep.subr.bf16.mxu0 0
    %2246 = vmatpush1.bf16.xpose.msra.mxu0 0
    %2247 = vmatprep.subr.bf16.mxu0 0
    %2248 = vmatpush1.bf16.xpose.msra.mxu0 0
    %2249 = vmatprep.subr.bf16.mxu0 0
    %2250 = vmatpush1.bf16.xpose.msra.mxu0 0
    %2251 = vmatprep.subr.bf16.mxu0 0
    %2252 = vmatpush1.bf16.xpose.msra.mxu0 0
    %2253 = vmatprep.subr.bf16.mxu0 0
    %2254 = vmatpush1.bf16.xpose.msra.mxu0 0
    %2255 = vmatprep.subr.bf16.mxu0 0
    %2256 = vmatpush1.bf16.xpose.msra.mxu0 0
    %2257 = vmatprep.subr.bf16.mxu0 0
    %2258 = vmatpush1.bf16.xpose.msra.mxu0 0
    %2259 = vmatprep.subr.bf16.mxu0 0
    %2260 = vmatpush1.bf16.xpose.msra.mxu0 0
    %2261 = vmatprep.subr.bf16.mxu0 0
    %2262 = vmatpush1.bf16.xpose.msra.mxu0 0
    %2263 = vmatprep.subr.bf16.mxu0 0
    %2264 = vmatpush1.bf16.xpose.msra.mxu0 0
    %2265 = vmatprep.subr.bf16.mxu0 0
    %2266 = vmatpush1.bf16.xpose.msra.mxu0 0
    %2267 = vmatprep.subr.bf16.mxu0 0
    %2268 = vmatpush1.bf16.xpose.msra.mxu0 0
    %2269 = vmatprep.subr.bf16.mxu0 0
    %2270 = vmatpush1.bf16.xpose.msra.mxu0 0
    %2271 = vmatprep.mubr.bf16.mxu0 0
    %2272 = vmatmul.mubr.bf16.gmra.mrb[0].mxu0 %v2234
    %v2273 = vpop.f32.mrb[0].mxu0
    %v2274 = vadd.f32 0.0, %v2273
    %v2275 = vpop.f32.mrb[0].mxu0
    %v2276 = vpop.f32.mrb[0].mxu0
    %v2277 = vpop.f32.mrb[0].mxu0
    %2278 = vdwg.mxu0
    %v2279 = vsel %vm289, %v2178, -inf
    %2280 = vmax.xlane.f32.xlu0 %v2279
    %v2281 = vpop.xlane.xlu0 %2280
    %v2282 = vsel %vm289, %v2226, -inf
    %2283 = vmax.xlane.f32.xlu0 %v2282
    %v2284 = vpop.xlane.xlu0 %2283
    %v2285 = vsel %vm289, %v2274, -inf
    %2286 = vmax.xlane.f32.xlu0 %v2285
    %v2287 = vpop.xlane.xlu0 %2286
    %v2288 = vsub.f32 %v2178, %v2281
    %v2289 = vsub.f32 %v2226, %v2284
    %v2290 = vsub.f32 %v2274, %v2287
    %v2291 = vmul.f32 %v2288, 1.442695
    %v2292 = vpow.pop %v2291
    %v2293 = vmul.f32 %v2289, 1.442695
    %v2294 = vpow.pop %v2293
    %v2295 = vmul.f32 %v2290, 1.442695
    %v2296 = vpow.pop %v2295
    %v2297 = vsel %vm289, %v2292, 0.0
    %2298 = vadd.xlane.f32.xlu0 %v2297
    %v2299 = vpop.xlane.xlu0 %2298
    %v2300 = vsel %vm289, %v2294, 0.0
    %2301 = vadd.xlane.f32.xlu0 %v2300
    %v2302 = vpop.xlane.xlu0 %2301
    %v2303 = vsel %vm289, %v2296, 0.0
    %2304 = vadd.xlane.f32.xlu0 %v2303
    %v2305 = vpop.xlane.xlu0 %2304
    %v2306 = vrcp.pop %v2299
    %v2307 = vmul.f32 1.0, %v2306
    %v2308 = vrcp.pop %v2302
    %v2309 = vmul.f32 1.0, %v2308
    %v2310 = vrcp.pop %v2305
    %v2311 = vmul.f32 1.0, %v2310
    %v2312 = vpack.c.bf16 %v2292, %v2292
    %v2313 = vpack.c.bf16 %v2294, %v2294
    %v2314 = vpack.c.bf16 %v2296, %v2296
    %2315 = vrot.lane.b32.xlu0 %v2132, 64
    %v2316 = vpop.permute.xlu0 %2315
    %v2318 = vsel %vm289, %v2312, 0
    %v2321 = vsel %vm473, %v2316, 0
    %2323 = vmatprep.subr.bf16.mxu0 0
    %2324 = vmatpush1.bf16.msra.mxu0 %v2321
    %2325 = vmatprep.subr.bf16.mxu0 0
    %2326 = vmatpush1.bf16.msra.mxu0 0
    %2327 = vmatprep.subr.bf16.mxu0 0
    %2328 = vmatpush1.bf16.msra.mxu0 0
    %2329 = vmatprep.subr.bf16.mxu0 0
    %2330 = vmatpush1.bf16.msra.mxu0 0
    %2331 = vmatprep.subr.bf16.mxu0 0
    %2332 = vmatpush1.bf16.msra.mxu0 0
    %2333 = vmatprep.subr.bf16.mxu0 0
    %2334 = vmatpush1.bf16.msra.mxu0 0
    %2335 = vmatprep.subr.bf16.mxu0 0
    %2336 = vmatpush1.bf16.msra.mxu0 0
    %2337 = vmatprep.subr.bf16.mxu0 0
    %2338 = vmatpush1.bf16.msra.mxu0 0
    %2339 = vmatprep.subr.bf16.mxu0 0
    %2340 = vmatpush1.bf16.msra.mxu0 0
    %2341 = vmatprep.subr.bf16.mxu0 0
    %2342 = vmatpush1.bf16.msra.mxu0 0
    %2343 = vmatprep.subr.bf16.mxu0 0
    %2344 = vmatpush1.bf16.msra.mxu0 0
    %2345 = vmatprep.subr.bf16.mxu0 0
    %2346 = vmatpush1.bf16.msra.mxu0 0
    %2347 = vmatprep.subr.bf16.mxu0 0
    %2348 = vmatpush1.bf16.msra.mxu0 0
    %2349 = vmatprep.subr.bf16.mxu0 0
    %2350 = vmatpush1.bf16.msra.mxu0 0
    %2351 = vmatprep.subr.bf16.mxu0 0
    %2352 = vmatpush1.bf16.msra.mxu0 0
    %2353 = vmatprep.subr.bf16.mxu0 0
    %2354 = vmatpush1.bf16.msra.mxu0 0
    %2355 = vmatprep.mubr.bf16.mxu0 0
    %2356 = vmatmul.mubr.bf16.gmra.mrb[0].mxu0 %v2318
    %v2357 = vpop.f32.mrb[0].mxu0
    %v2358 = vadd.f32 0.0, %v2357
    %v2359 = vpop.f32.mrb[0].mxu0
    %v2360 = vpop.f32.mrb[0].mxu0
    %v2361 = vpop.f32.mrb[0].mxu0
    %2362 = vdwg.mxu0
    %2363 = vrot.lane.b32.xlu0 %v2133, 64
    %v2364 = vpop.permute.xlu0 %2363
    %v2366 = vsel %vm289, %v2313, 0
    %v2369 = vsel %vm473, %v2364, 0
    %2371 = vmatprep.subr.bf16.mxu0 0
    %2372 = vmatpush1.bf16.msra.mxu0 %v2369
    %2373 = vmatprep.subr.bf16.mxu0 0
    %2374 = vmatpush1.bf16.msra.mxu0 0
    %2375 = vmatprep.subr.bf16.mxu0 0
    %2376 = vmatpush1.bf16.msra.mxu0 0
    %2377 = vmatprep.subr.bf16.mxu0 0
    %2378 = vmatpush1.bf16.msra.mxu0 0
    %2379 = vmatprep.subr.bf16.mxu0 0
    %2380 = vmatpush1.bf16.msra.mxu0 0
    %2381 = vmatprep.subr.bf16.mxu0 0
    %2382 = vmatpush1.bf16.msra.mxu0 0
    %2383 = vmatprep.subr.bf16.mxu0 0
    %2384 = vmatpush1.bf16.msra.mxu0 0
    %2385 = vmatprep.subr.bf16.mxu0 0
    %2386 = vmatpush1.bf16.msra.mxu0 0
    %2387 = vmatprep.subr.bf16.mxu0 0
    %2388 = vmatpush1.bf16.msra.mxu0 0
    %2389 = vmatprep.subr.bf16.mxu0 0
    %2390 = vmatpush1.bf16.msra.mxu0 0
    %2391 = vmatprep.subr.bf16.mxu0 0
    %2392 = vmatpush1.bf16.msra.mxu0 0
    %2393 = vmatprep.subr.bf16.mxu0 0
    %2394 = vmatpush1.bf16.msra.mxu0 0
    %2395 = vmatprep.subr.bf16.mxu0 0
    %2396 = vmatpush1.bf16.msra.mxu0 0
    %2397 = vmatprep.subr.bf16.mxu0 0
    %2398 = vmatpush1.bf16.msra.mxu0 0
    %2399 = vmatprep.subr.bf16.mxu0 0
    %2400 = vmatpush1.bf16.msra.mxu0 0
    %2401 = vmatprep.subr.bf16.mxu0 0
    %2402 = vmatpush1.bf16.msra.mxu0 0
    %2403 = vmatprep.mubr.bf16.mxu0 0
    %2404 = vmatmul.mubr.bf16.gmra.mrb[0].mxu0 %v2366
    %v2405 = vpop.f32.mrb[0].mxu0
    %v2406 = vadd.f32 0.0, %v2405
    %v2407 = vpop.f32.mrb[0].mxu0
    %v2408 = vpop.f32.mrb[0].mxu0
    %v2409 = vpop.f32.mrb[0].mxu0
    %2410 = vdwg.mxu0
    %2411 = vrot.lane.b32.xlu0 %v2134, 64
    %v2412 = vpop.permute.xlu0 %2411
    %v2414 = vsel %vm289, %v2314, 0
    %v2417 = vsel %vm473, %v2412, 0
    %2419 = vmatprep.subr.bf16.mxu0 0
    %2420 = vmatpush1.bf16.msra.mxu0 %v2417
    %2421 = vmatprep.subr.bf16.mxu0 0
    %2422 = vmatpush1.bf16.msra.mxu0 0
    %2423 = vmatprep.subr.bf16.mxu0 0
    %2424 = vmatpush1.bf16.msra.mxu0 0
    %2425 = vmatprep.subr.bf16.mxu0 0
    %2426 = vmatpush1.bf16.msra.mxu0 0
    %2427 = vmatprep.subr.bf16.mxu0 0
    %2428 = vmatpush1.bf16.msra.mxu0 0
    %2429 = vmatprep.subr.bf16.mxu0 0
    %2430 = vmatpush1.bf16.msra.mxu0 0
    %2431 = vmatprep.subr.bf16.mxu0 0
    %2432 = vmatpush1.bf16.msra.mxu0 0
    %2433 = vmatprep.subr.bf16.mxu0 0
    %2434 = vmatpush1.bf16.msra.mxu0 0
    %2435 = vmatprep.subr.bf16.mxu0 0
    %2436 = vmatpush1.bf16.msra.mxu0 0
    %2437 = vmatprep.subr.bf16.mxu0 0
    %2438 = vmatpush1.bf16.msra.mxu0 0
    %2439 = vmatprep.subr.bf16.mxu0 0
    %2440 = vmatpush1.bf16.msra.mxu0 0
    %2441 = vmatprep.subr.bf16.mxu0 0
    %2442 = vmatpush1.bf16.msra.mxu0 0
    %2443 = vmatprep.subr.bf16.mxu0 0
    %2444 = vmatpush1.bf16.msra.mxu0 0
    %2445 = vmatprep.subr.bf16.mxu0 0
    %2446 = vmatpush1.bf16.msra.mxu0 0
    %2447 = vmatprep.subr.bf16.mxu0 0
    %2448 = vmatpush1.bf16.msra.mxu0 0
    %2449 = vmatprep.subr.bf16.mxu0 0
    %2450 = vmatpush1.bf16.msra.mxu0 0
    %2451 = vmatprep.mubr.bf16.mxu0 0
    %2452 = vmatmul.mubr.bf16.gmra.mrb[0].mxu0 %v2414
    %v2453 = vpop.f32.mrb[0].mxu0
    %v2454 = vadd.f32 0.0, %v2453
    %v2455 = vpop.f32.mrb[0].mxu0
    %v2456 = vpop.f32.mrb[0].mxu0
    %v2457 = vpop.f32.mrb[0].mxu0
    %2458 = vdwg.mxu0
    %v2459 = vmul.f32 %v2358, %v2307
    %v2460 = vmul.f32 %v2406, %v2309
    %v2461 = vmul.f32 %v2454, %v2311
    %2462 = vrot.lane.b32.xlu0 %v2132, 120
    %v2463 = vpop.permute.xlu0 %2462
    %2464 = vrot.lane.b32.xlu0 %v2132, 88
    %v2465 = vpop.permute.xlu0 %2464
    %v2467 = vsel %vm289, %v2463, 0
    %v2470 = vsel %vm289, %v2465, 0
    %2472 = vmatprep.subr.bf16.mxu0 0
    %2473 = vmatpush1.bf16.xpose.msra.mxu0 %v2470
    %2474 = vmatprep.subr.bf16.mxu0 0
    %2475 = vmatpush1.bf16.xpose.msra.mxu0 0
    %2476 = vmatprep.subr.bf16.mxu0 0
    %2477 = vmatpush1.bf16.xpose.msra.mxu0 0
    %2478 = vmatprep.subr.bf16.mxu0 0
    %2479 = vmatpush1.bf16.xpose.msra.mxu0 0
    %2480 = vmatprep.subr.bf16.mxu0 0
    %2481 = vmatpush1.bf16.xpose.msra.mxu0 0
    %2482 = vmatprep.subr.bf16.mxu0 0
    %2483 = vmatpush1.bf16.xpose.msra.mxu0 0
    %2484 = vmatprep.subr.bf16.mxu0 0
    %2485 = vmatpush1.bf16.xpose.msra.mxu0 0
    %2486 = vmatprep.subr.bf16.mxu0 0
    %2487 = vmatpush1.bf16.xpose.msra.mxu0 0
    %2488 = vmatprep.subr.bf16.mxu0 0
    %2489 = vmatpush1.bf16.xpose.msra.mxu0 0
    %2490 = vmatprep.subr.bf16.mxu0 0
    %2491 = vmatpush1.bf16.xpose.msra.mxu0 0
    %2492 = vmatprep.subr.bf16.mxu0 0
    %2493 = vmatpush1.bf16.xpose.msra.mxu0 0
    %2494 = vmatprep.subr.bf16.mxu0 0
    %2495 = vmatpush1.bf16.xpose.msra.mxu0 0
    %2496 = vmatprep.subr.bf16.mxu0 0
    %2497 = vmatpush1.bf16.xpose.msra.mxu0 0
    %2498 = vmatprep.subr.bf16.mxu0 0
    %2499 = vmatpush1.bf16.xpose.msra.mxu0 0
    %2500 = vmatprep.subr.bf16.mxu0 0
    %2501 = vmatpush1.bf16.xpose.msra.mxu0 0
    %2502 = vmatprep.subr.bf16.mxu0 0
    %2503 = vmatpush1.bf16.xpose.msra.mxu0 0
    %2504 = vmatprep.mubr.bf16.mxu0 0
    %2505 = vmatmul.mubr.bf16.gmra.mrb[0].mxu0 %v2467
    %v2506 = vpop.f32.mrb[0].mxu0
    %v2507 = vadd.f32 0.0, %v2506
    %v2508 = vpop.f32.mrb[0].mxu0
    %v2509 = vpop.f32.mrb[0].mxu0
    %v2510 = vpop.f32.mrb[0].mxu0
    %2511 = vdwg.mxu0
    %2512 = vrot.lane.b32.xlu0 %v2133, 120
    %v2513 = vpop.permute.xlu0 %2512
    %2514 = vrot.lane.b32.xlu0 %v2133, 88
    %v2515 = vpop.permute.xlu0 %2514
    %v2517 = vsel %vm289, %v2513, 0
    %v2520 = vsel %vm289, %v2515, 0
    %2522 = vmatprep.subr.bf16.mxu0 0
    %2523 = vmatpush1.bf16.xpose.msra.mxu0 %v2520
    %2524 = vmatprep.subr.bf16.mxu0 0
    %2525 = vmatpush1.bf16.xpose.msra.mxu0 0
    %2526 = vmatprep.subr.bf16.mxu0 0
    %2527 = vmatpush1.bf16.xpose.msra.mxu0 0
    %2528 = vmatprep.subr.bf16.mxu0 0
    %2529 = vmatpush1.bf16.xpose.msra.mxu0 0
    %2530 = vmatprep.subr.bf16.mxu0 0
    %2531 = vmatpush1.bf16.xpose.msra.mxu0 0
    %2532 = vmatprep.subr.bf16.mxu0 0
    %2533 = vmatpush1.bf16.xpose.msra.mxu0 0
    %2534 = vmatprep.subr.bf16.mxu0 0
    %2535 = vmatpush1.bf16.xpose.msra.mxu0 0
    %2536 = vmatprep.subr.bf16.mxu0 0
    %2537 = vmatpush1.bf16.xpose.msra.mxu0 0
    %2538 = vmatprep.subr.bf16.mxu0 0
    %2539 = vmatpush1.bf16.xpose.msra.mxu0 0
    %2540 = vmatprep.subr.bf16.mxu0 0
    %2541 = vmatpush1.bf16.xpose.msra.mxu0 0
    %2542 = vmatprep.subr.bf16.mxu0 0
    %2543 = vmatpush1.bf16.xpose.msra.mxu0 0
    %2544 = vmatprep.subr.bf16.mxu0 0
    %2545 = vmatpush1.bf16.xpose.msra.mxu0 0
    %2546 = vmatprep.subr.bf16.mxu0 0
    %2547 = vmatpush1.bf16.xpose.msra.mxu0 0
    %2548 = vmatprep.subr.bf16.mxu0 0
    %2549 = vmatpush1.bf16.xpose.msra.mxu0 0
    %2550 = vmatprep.subr.bf16.mxu0 0
    %2551 = vmatpush1.bf16.xpose.msra.mxu0 0
    %2552 = vmatprep.subr.bf16.mxu0 0
    %2553 = vmatpush1.bf16.xpose.msra.mxu0 0
    %2554 = vmatprep.mubr.bf16.mxu0 0
    %2555 = vmatmul.mubr.bf16.gmra.mrb[0].mxu0 %v2517
    %v2556 = vpop.f32.mrb[0].mxu0
    %v2557 = vadd.f32 0.0, %v2556
    %v2558 = vpop.f32.mrb[0].mxu0
    %v2559 = vpop.f32.mrb[0].mxu0
    %v2560 = vpop.f32.mrb[0].mxu0
    %2561 = vdwg.mxu0
    %2562 = vrot.lane.b32.xlu0 %v2134, 120
    %v2563 = vpop.permute.xlu0 %2562
    %2564 = vrot.lane.b32.xlu0 %v2134, 88
    %v2565 = vpop.permute.xlu0 %2564
    %v2567 = vsel %vm289, %v2563, 0
    %v2570 = vsel %vm289, %v2565, 0
    %2572 = vmatprep.subr.bf16.mxu0 0
    %2573 = vmatpush1.bf16.xpose.msra.mxu0 %v2570
    %2574 = vmatprep.subr.bf16.mxu0 0
    %2575 = vmatpush1.bf16.xpose.msra.mxu0 0
    %2576 = vmatprep.subr.bf16.mxu0 0
    %2577 = vmatpush1.bf16.xpose.msra.mxu0 0
    %2578 = vmatprep.subr.bf16.mxu0 0
    %2579 = vmatpush1.bf16.xpose.msra.mxu0 0
    %2580 = vmatprep.subr.bf16.mxu0 0
    %2581 = vmatpush1.bf16.xpose.msra.mxu0 0
    %2582 = vmatprep.subr.bf16.mxu0 0
    %2583 = vmatpush1.bf16.xpose.msra.mxu0 0
    %2584 = vmatprep.subr.bf16.mxu0 0
    %2585 = vmatpush1.bf16.xpose.msra.mxu0 0
    %2586 = vmatprep.subr.bf16.mxu0 0
    %2587 = vmatpush1.bf16.xpose.msra.mxu0 0
    %2588 = vmatprep.subr.bf16.mxu0 0
    %2589 = vmatpush1.bf16.xpose.msra.mxu0 0
    %2590 = vmatprep.subr.bf16.mxu0 0
    %2591 = vmatpush1.bf16.xpose.msra.mxu0 0
    %2592 = vmatprep.subr.bf16.mxu0 0
    %2593 = vmatpush1.bf16.xpose.msra.mxu0 0
    %2594 = vmatprep.subr.bf16.mxu0 0
    %2595 = vmatpush1.bf16.xpose.msra.mxu0 0
    %2596 = vmatprep.subr.bf16.mxu0 0
    %2597 = vmatpush1.bf16.xpose.msra.mxu0 0
    %2598 = vmatprep.subr.bf16.mxu0 0
    %2599 = vmatpush1.bf16.xpose.msra.mxu0 0
    %2600 = vmatprep.subr.bf16.mxu0 0
    %2601 = vmatpush1.bf16.xpose.msra.mxu0 0
    %2602 = vmatprep.subr.bf16.mxu0 0
    %2603 = vmatpush1.bf16.xpose.msra.mxu0 0
    %2604 = vmatprep.mubr.bf16.mxu0 0
    %2605 = vmatmul.mubr.bf16.gmra.mrb[0].mxu0 %v2567
    %v2606 = vpop.f32.mrb[0].mxu0
    %v2607 = vadd.f32 0.0, %v2606
    %v2608 = vpop.f32.mrb[0].mxu0
    %v2609 = vpop.f32.mrb[0].mxu0
    %v2610 = vpop.f32.mrb[0].mxu0
    %2611 = vdwg.mxu0
    %v2612 = vsel %vm289, %v2507, -inf
    %2613 = vmax.xlane.f32.xlu0 %v2612
    %v2614 = vpop.xlane.xlu0 %2613
    %v2615 = vsel %vm289, %v2557, -inf
    %2616 = vmax.xlane.f32.xlu0 %v2615
    %v2617 = vpop.xlane.xlu0 %2616
    %v2618 = vsel %vm289, %v2607, -inf
    %2619 = vmax.xlane.f32.xlu0 %v2618
    %v2620 = vpop.xlane.xlu0 %2619
    %v2621 = vsub.f32 %v2507, %v2614
    %v2622 = vsub.f32 %v2557, %v2617
    %v2623 = vsub.f32 %v2607, %v2620
    %v2624 = vmul.f32 %v2621, 1.442695
    %v2625 = vpow.pop %v2624
    %v2626 = vmul.f32 %v2622, 1.442695
    %v2627 = vpow.pop %v2626
    %v2628 = vmul.f32 %v2623, 1.442695
    %v2629 = vpow.pop %v2628
    %v2630 = vsel %vm289, %v2625, 0.0
    %2631 = vadd.xlane.f32.xlu0 %v2630
    %v2632 = vpop.xlane.xlu0 %2631
    %v2633 = vsel %vm289, %v2627, 0.0
    %2634 = vadd.xlane.f32.xlu0 %v2633
    %v2635 = vpop.xlane.xlu0 %2634
    %v2636 = vsel %vm289, %v2629, 0.0
    %2637 = vadd.xlane.f32.xlu0 %v2636
    %v2638 = vpop.xlane.xlu0 %2637
    %v2639 = vrcp.pop %v2632
    %v2640 = vmul.f32 1.0, %v2639
    %v2641 = vrcp.pop %v2635
    %v2642 = vmul.f32 1.0, %v2641
    %v2643 = vrcp.pop %v2638
    %v2644 = vmul.f32 1.0, %v2643
    %v2645 = vpack.c.bf16 %v2625, %v2625
    %v2646 = vpack.c.bf16 %v2627, %v2627
    %v2647 = vpack.c.bf16 %v2629, %v2629
    %2648 = vrot.lane.b32.xlu0 %v2132, 56
    %v2649 = vpop.permute.xlu0 %2648
    %v2651 = vsel %vm289, %v2645, 0
    %v2654 = vsel %vm473, %v2649, 0
    %2656 = vmatprep.subr.bf16.mxu0 0
    %2657 = vmatpush1.bf16.msra.mxu0 %v2654
    %2658 = vmatprep.subr.bf16.mxu0 0
    %2659 = vmatpush1.bf16.msra.mxu0 0
    %2660 = vmatprep.subr.bf16.mxu0 0
    %2661 = vmatpush1.bf16.msra.mxu0 0
    %2662 = vmatprep.subr.bf16.mxu0 0
    %2663 = vmatpush1.bf16.msra.mxu0 0
    %2664 = vmatprep.subr.bf16.mxu0 0
    %2665 = vmatpush1.bf16.msra.mxu0 0
    %2666 = vmatprep.subr.bf16.mxu0 0
    %2667 = vmatpush1.bf16.msra.mxu0 0
    %2668 = vmatprep.subr.bf16.mxu0 0
    %2669 = vmatpush1.bf16.msra.mxu0 0
    %2670 = vmatprep.subr.bf16.mxu0 0
    %2671 = vmatpush1.bf16.msra.mxu0 0
    %2672 = vmatprep.subr.bf16.mxu0 0
    %2673 = vmatpush1.bf16.msra.mxu0 0
    %2674 = vmatprep.subr.bf16.mxu0 0
    %2675 = vmatpush1.bf16.msra.mxu0 0
    %2676 = vmatprep.subr.bf16.mxu0 0
    %2677 = vmatpush1.bf16.msra.mxu0 0
    %2678 = vmatprep.subr.bf16.mxu0 0
    %2679 = vmatpush1.bf16.msra.mxu0 0
    %2680 = vmatprep.subr.bf16.mxu0 0
    %2681 = vmatpush1.bf16.msra.mxu0 0
    %2682 = vmatprep.subr.bf16.mxu0 0
    %2683 = vmatpush1.bf16.msra.mxu0 0
    %2684 = vmatprep.subr.bf16.mxu0 0
    %2685 = vmatpush1.bf16.msra.mxu0 0
    %2686 = vmatprep.subr.bf16.mxu0 0
    %2687 = vmatpush1.bf16.msra.mxu0 0
    %2688 = vmatprep.mubr.bf16.mxu0 0
    %2689 = vmatmul.mubr.bf16.gmra.mrb[0].mxu0 %v2651
    %v2690 = vpop.f32.mrb[0].mxu0
    %v2691 = vadd.f32 0.0, %v2690
    %v2692 = vpop.f32.mrb[0].mxu0
    %v2693 = vpop.f32.mrb[0].mxu0
    %v2694 = vpop.f32.mrb[0].mxu0
    %2695 = vdwg.mxu0
    %2696 = vrot.lane.b32.xlu0 %v2133, 56
    %v2697 = vpop.permute.xlu0 %2696
    %v2699 = vsel %vm289, %v2646, 0
    %v2702 = vsel %vm473, %v2697, 0
    %2704 = vmatprep.subr.bf16.mxu0 0
    %2705 = vmatpush1.bf16.msra.mxu0 %v2702
    %2706 = vmatprep.subr.bf16.mxu0 0
    %2707 = vmatpush1.bf16.msra.mxu0 0
    %2708 = vmatprep.subr.bf16.mxu0 0
    %2709 = vmatpush1.bf16.msra.mxu0 0
    %2710 = vmatprep.subr.bf16.mxu0 0
    %2711 = vmatpush1.bf16.msra.mxu0 0
    %2712 = vmatprep.subr.bf16.mxu0 0
    %2713 = vmatpush1.bf16.msra.mxu0 0
    %2714 = vmatprep.subr.bf16.mxu0 0
    %2715 = vmatpush1.bf16.msra.mxu0 0
    %2716 = vmatprep.subr.bf16.mxu0 0
    %2717 = vmatpush1.bf16.msra.mxu0 0
    %2718 = vmatprep.subr.bf16.mxu0 0
    %2719 = vmatpush1.bf16.msra.mxu0 0
    %2720 = vmatprep.subr.bf16.mxu0 0
    %2721 = vmatpush1.bf16.msra.mxu0 0
    %2722 = vmatprep.subr.bf16.mxu0 0
    %2723 = vmatpush1.bf16.msra.mxu0 0
    %2724 = vmatprep.subr.bf16.mxu0 0
    %2725 = vmatpush1.bf16.msra.mxu0 0
    %2726 = vmatprep.subr.bf16.mxu0 0
    %2727 = vmatpush1.bf16.msra.mxu0 0
    %2728 = vmatprep.subr.bf16.mxu0 0
    %2729 = vmatpush1.bf16.msra.mxu0 0
    %2730 = vmatprep.subr.bf16.mxu0 0
    %2731 = vmatpush1.bf16.msra.mxu0 0
    %2732 = vmatprep.subr.bf16.mxu0 0
    %2733 = vmatpush1.bf16.msra.mxu0 0
    %2734 = vmatprep.subr.bf16.mxu0 0
    %2735 = vmatpush1.bf16.msra.mxu0 0
    %2736 = vmatprep.mubr.bf16.mxu0 0
    %2737 = vmatmul.mubr.bf16.gmra.mrb[0].mxu0 %v2699
    %v2738 = vpop.f32.mrb[0].mxu0
    %v2739 = vadd.f32 0.0, %v2738
    %v2740 = vpop.f32.mrb[0].mxu0
    %v2741 = vpop.f32.mrb[0].mxu0
    %v2742 = vpop.f32.mrb[0].mxu0
    %2743 = vdwg.mxu0
    %2744 = vrot.lane.b32.xlu0 %v2134, 56
    %v2745 = vpop.permute.xlu0 %2744
    %v2747 = vsel %vm289, %v2647, 0
    %v2750 = vsel %vm473, %v2745, 0
    %2752 = vmatprep.subr.bf16.mxu0 0
    %2753 = vmatpush1.bf16.msra.mxu0 %v2750
    %2754 = vmatprep.subr.bf16.mxu0 0
    %2755 = vmatpush1.bf16.msra.mxu0 0
    %2756 = vmatprep.subr.bf16.mxu0 0
    %2757 = vmatpush1.bf16.msra.mxu0 0
    %2758 = vmatprep.subr.bf16.mxu0 0
    %2759 = vmatpush1.bf16.msra.mxu0 0
    %2760 = vmatprep.subr.bf16.mxu0 0
    %2761 = vmatpush1.bf16.msra.mxu0 0
    %2762 = vmatprep.subr.bf16.mxu0 0
    %2763 = vmatpush1.bf16.msra.mxu0 0
    %2764 = vmatprep.subr.bf16.mxu0 0
    %2765 = vmatpush1.bf16.msra.mxu0 0
    %2766 = vmatprep.subr.bf16.mxu0 0
    %2767 = vmatpush1.bf16.msra.mxu0 0
    %2768 = vmatprep.subr.bf16.mxu0 0
    %2769 = vmatpush1.bf16.msra.mxu0 0
    %2770 = vmatprep.subr.bf16.mxu0 0
    %2771 = vmatpush1.bf16.msra.mxu0 0
    %2772 = vmatprep.subr.bf16.mxu0 0
    %2773 = vmatpush1.bf16.msra.mxu0 0
    %2774 = vmatprep.subr.bf16.mxu0 0
    %2775 = vmatpush1.bf16.msra.mxu0 0
    %2776 = vmatprep.subr.bf16.mxu0 0
    %2777 = vmatpush1.bf16.msra.mxu0 0
    %2778 = vmatprep.subr.bf16.mxu0 0
    %2779 = vmatpush1.bf16.msra.mxu0 0
    %2780 = vmatprep.subr.bf16.mxu0 0
    %2781 = vmatpush1.bf16.msra.mxu0 0
    %2782 = vmatprep.subr.bf16.mxu0 0
    %2783 = vmatpush1.bf16.msra.mxu0 0
    %2784 = vmatprep.mubr.bf16.mxu0 0
    %2785 = vmatmul.mubr.bf16.gmra.mrb[0].mxu0 %v2747
    %v2786 = vpop.f32.mrb[0].mxu0
    %v2787 = vadd.f32 0.0, %v2786
    %v2788 = vpop.f32.mrb[0].mxu0
    %v2789 = vpop.f32.mrb[0].mxu0
    %v2790 = vpop.f32.mrb[0].mxu0
    %2791 = vdwg.mxu0
    %v2792 = vmul.f32 %v2691, %v2640
    %v2793 = vmul.f32 %v2739, %v2642
    %v2794 = vmul.f32 %v2787, %v2644
    %2795 = vrot.lane.b32.xlu0 %v2132, 112
    %v2796 = vpop.permute.xlu0 %2795
    %2797 = vrot.lane.b32.xlu0 %v2132, 80
    %v2798 = vpop.permute.xlu0 %2797
    %v2800 = vsel %vm289, %v2796, 0
    %v2803 = vsel %vm289, %v2798, 0
    %2805 = vmatprep.subr.bf16.mxu0 0
    %2806 = vmatpush1.bf16.xpose.msra.mxu0 %v2803
    %2807 = vmatprep.subr.bf16.mxu0 0
    %2808 = vmatpush1.bf16.xpose.msra.mxu0 0
    %2809 = vmatprep.subr.bf16.mxu0 0
    %2810 = vmatpush1.bf16.xpose.msra.mxu0 0
    %2811 = vmatprep.subr.bf16.mxu0 0
    %2812 = vmatpush1.bf16.xpose.msra.mxu0 0
    %2813 = vmatprep.subr.bf16.mxu0 0
    %2814 = vmatpush1.bf16.xpose.msra.mxu0 0
    %2815 = vmatprep.subr.bf16.mxu0 0
    %2816 = vmatpush1.bf16.xpose.msra.mxu0 0
    %2817 = vmatprep.subr.bf16.mxu0 0
    %2818 = vmatpush1.bf16.xpose.msra.mxu0 0
    %2819 = vmatprep.subr.bf16.mxu0 0
    %2820 = vmatpush1.bf16.xpose.msra.mxu0 0
    %2821 = vmatprep.subr.bf16.mxu0 0
    %2822 = vmatpush1.bf16.xpose.msra.mxu0 0
    %2823 = vmatprep.subr.bf16.mxu0 0
    %2824 = vmatpush1.bf16.xpose.msra.mxu0 0
    %2825 = vmatprep.subr.bf16.mxu0 0
    %2826 = vmatpush1.bf16.xpose.msra.mxu0 0
    %2827 = vmatprep.subr.bf16.mxu0 0
    %2828 = vmatpush1.bf16.xpose.msra.mxu0 0
    %2829 = vmatprep.subr.bf16.mxu0 0
    %2830 = vmatpush1.bf16.xpose.msra.mxu0 0
    %2831 = vmatprep.subr.bf16.mxu0 0
    %2832 = vmatpush1.bf16.xpose.msra.mxu0 0
    %2833 = vmatprep.subr.bf16.mxu0 0
    %2834 = vmatpush1.bf16.xpose.msra.mxu0 0
    %2835 = vmatprep.subr.bf16.mxu0 0
    %2836 = vmatpush1.bf16.xpose.msra.mxu0 0
    %2837 = vmatprep.mubr.bf16.mxu0 0
    %2838 = vmatmul.mubr.bf16.gmra.mrb[0].mxu0 %v2800
    %v2839 = vpop.f32.mrb[0].mxu0
    %v2840 = vadd.f32 0.0, %v2839
    %v2841 = vpop.f32.mrb[0].mxu0
    %v2842 = vpop.f32.mrb[0].mxu0
    %v2843 = vpop.f32.mrb[0].mxu0
    %2844 = vdwg.mxu0
    %2845 = vrot.lane.b32.xlu0 %v2133, 112
    %v2846 = vpop.permute.xlu0 %2845
    %2847 = vrot.lane.b32.xlu0 %v2133, 80
    %v2848 = vpop.permute.xlu0 %2847
    %v2850 = vsel %vm289, %v2846, 0
    %v2853 = vsel %vm289, %v2848, 0
    %2855 = vmatprep.subr.bf16.mxu0 0
    %2856 = vmatpush1.bf16.xpose.msra.mxu0 %v2853
    %2857 = vmatprep.subr.bf16.mxu0 0
    %2858 = vmatpush1.bf16.xpose.msra.mxu0 0
    %2859 = vmatprep.subr.bf16.mxu0 0
    %2860 = vmatpush1.bf16.xpose.msra.mxu0 0
    %2861 = vmatprep.subr.bf16.mxu0 0
    %2862 = vmatpush1.bf16.xpose.msra.mxu0 0
    %2863 = vmatprep.subr.bf16.mxu0 0
    %2864 = vmatpush1.bf16.xpose.msra.mxu0 0
    %2865 = vmatprep.subr.bf16.mxu0 0
    %2866 = vmatpush1.bf16.xpose.msra.mxu0 0
    %2867 = vmatprep.subr.bf16.mxu0 0
    %2868 = vmatpush1.bf16.xpose.msra.mxu0 0
    %2869 = vmatprep.subr.bf16.mxu0 0
    %2870 = vmatpush1.bf16.xpose.msra.mxu0 0
    %2871 = vmatprep.subr.bf16.mxu0 0
    %2872 = vmatpush1.bf16.xpose.msra.mxu0 0
    %2873 = vmatprep.subr.bf16.mxu0 0
    %2874 = vmatpush1.bf16.xpose.msra.mxu0 0
    %2875 = vmatprep.subr.bf16.mxu0 0
    %2876 = vmatpush1.bf16.xpose.msra.mxu0 0
    %2877 = vmatprep.subr.bf16.mxu0 0
    %2878 = vmatpush1.bf16.xpose.msra.mxu0 0
    %2879 = vmatprep.subr.bf16.mxu0 0
    %2880 = vmatpush1.bf16.xpose.msra.mxu0 0
    %2881 = vmatprep.subr.bf16.mxu0 0
    %2882 = vmatpush1.bf16.xpose.msra.mxu0 0
    %2883 = vmatprep.subr.bf16.mxu0 0
    %2884 = vmatpush1.bf16.xpose.msra.mxu0 0
    %2885 = vmatprep.subr.bf16.mxu0 0
    %2886 = vmatpush1.bf16.xpose.msra.mxu0 0
    %2887 = vmatprep.mubr.bf16.mxu0 0
    %2888 = vmatmul.mubr.bf16.gmra.mrb[0].mxu0 %v2850
    %v2889 = vpop.f32.mrb[0].mxu0
    %v2890 = vadd.f32 0.0, %v2889
    %v2891 = vpop.f32.mrb[0].mxu0
    %v2892 = vpop.f32.mrb[0].mxu0
    %v2893 = vpop.f32.mrb[0].mxu0
    %2894 = vdwg.mxu0
    %2895 = vrot.lane.b32.xlu0 %v2134, 112
    %v2896 = vpop.permute.xlu0 %2895
    %2897 = vrot.lane.b32.xlu0 %v2134, 80
    %v2898 = vpop.permute.xlu0 %2897
    %v2900 = vsel %vm289, %v2896, 0
    %v2903 = vsel %vm289, %v2898, 0
    %2905 = vmatprep.subr.bf16.mxu0 0
    %2906 = vmatpush1.bf16.xpose.msra.mxu0 %v2903
    %2907 = vmatprep.subr.bf16.mxu0 0
    %2908 = vmatpush1.bf16.xpose.msra.mxu0 0
    %2909 = vmatprep.subr.bf16.mxu0 0
    %2910 = vmatpush1.bf16.xpose.msra.mxu0 0
    %2911 = vmatprep.subr.bf16.mxu0 0
    %2912 = vmatpush1.bf16.xpose.msra.mxu0 0
    %2913 = vmatprep.subr.bf16.mxu0 0
    %2914 = vmatpush1.bf16.xpose.msra.mxu0 0
    %2915 = vmatprep.subr.bf16.mxu0 0
    %2916 = vmatpush1.bf16.xpose.msra.mxu0 0
    %2917 = vmatprep.subr.bf16.mxu0 0
    %2918 = vmatpush1.bf16.xpose.msra.mxu0 0
    %2919 = vmatprep.subr.bf16.mxu0 0
    %2920 = vmatpush1.bf16.xpose.msra.mxu0 0
    %2921 = vmatprep.subr.bf16.mxu0 0
    %2922 = vmatpush1.bf16.xpose.msra.mxu0 0
    %2923 = vmatprep.subr.bf16.mxu0 0
    %2924 = vmatpush1.bf16.xpose.msra.mxu0 0
    %2925 = vmatprep.subr.bf16.mxu0 0
    %2926 = vmatpush1.bf16.xpose.msra.mxu0 0
    %2927 = vmatprep.subr.bf16.mxu0 0
    %2928 = vmatpush1.bf16.xpose.msra.mxu0 0
    %2929 = vmatprep.subr.bf16.mxu0 0
    %2930 = vmatpush1.bf16.xpose.msra.mxu0 0
    %2931 = vmatprep.subr.bf16.mxu0 0
    %2932 = vmatpush1.bf16.xpose.msra.mxu0 0
    %2933 = vmatprep.subr.bf16.mxu0 0
    %2934 = vmatpush1.bf16.xpose.msra.mxu0 0
    %2935 = vmatprep.subr.bf16.mxu0 0
    %2936 = vmatpush1.bf16.xpose.msra.mxu0 0
    %2937 = vmatprep.mubr.bf16.mxu0 0
    %2938 = vmatmul.mubr.bf16.gmra.mrb[0].mxu0 %v2900
    %v2939 = vpop.f32.mrb[0].mxu0
    %v2940 = vadd.f32 0.0, %v2939
    %v2941 = vpop.f32.mrb[0].mxu0
    %v2942 = vpop.f32.mrb[0].mxu0
    %v2943 = vpop.f32.mrb[0].mxu0
    %2944 = vdwg.mxu0
    %v2945 = vsel %vm289, %v2840, -inf
    %2946 = vmax.xlane.f32.xlu0 %v2945
    %v2947 = vpop.xlane.xlu0 %2946
    %v2948 = vsel %vm289, %v2890, -inf
    %2949 = vmax.xlane.f32.xlu0 %v2948
    %v2950 = vpop.xlane.xlu0 %2949
    %v2951 = vsel %vm289, %v2940, -inf
    %2952 = vmax.xlane.f32.xlu0 %v2951
    %v2953 = vpop.xlane.xlu0 %2952
    %v2954 = vsub.f32 %v2840, %v2947
    %v2955 = vsub.f32 %v2890, %v2950
    %v2956 = vsub.f32 %v2940, %v2953
    %v2957 = vmul.f32 %v2954, 1.442695
    %v2958 = vpow.pop %v2957
    %v2959 = vmul.f32 %v2955, 1.442695
    %v2960 = vpow.pop %v2959
    %v2961 = vmul.f32 %v2956, 1.442695
    %v2962 = vpow.pop %v2961
    %v2963 = vsel %vm289, %v2958, 0.0
    %2964 = vadd.xlane.f32.xlu0 %v2963
    %v2965 = vpop.xlane.xlu0 %2964
    %v2966 = vsel %vm289, %v2960, 0.0
    %2967 = vadd.xlane.f32.xlu0 %v2966
    %v2968 = vpop.xlane.xlu0 %2967
    %v2969 = vsel %vm289, %v2962, 0.0
    %2970 = vadd.xlane.f32.xlu0 %v2969
    %v2971 = vpop.xlane.xlu0 %2970
    %v2972 = vrcp.pop %v2965
    %v2973 = vmul.f32 1.0, %v2972
    %v2974 = vrcp.pop %v2968
    %v2975 = vmul.f32 1.0, %v2974
    %v2976 = vrcp.pop %v2971
    %v2977 = vmul.f32 1.0, %v2976
    %v2978 = vpack.c.bf16 %v2958, %v2958
    %v2979 = vpack.c.bf16 %v2960, %v2960
    %v2980 = vpack.c.bf16 %v2962, %v2962
    %2981 = vrot.lane.b32.xlu0 %v2132, 48
    %v2982 = vpop.permute.xlu0 %2981
    %v2984 = vsel %vm289, %v2978, 0
    %v2987 = vsel %vm473, %v2982, 0
    %2989 = vmatprep.subr.bf16.mxu0 0
    %2990 = vmatpush1.bf16.msra.mxu0 %v2987
    %2991 = vmatprep.subr.bf16.mxu0 0
    %2992 = vmatpush1.bf16.msra.mxu0 0
    %2993 = vmatprep.subr.bf16.mxu0 0
    %2994 = vmatpush1.bf16.msra.mxu0 0
    %2995 = vmatprep.subr.bf16.mxu0 0
    %2996 = vmatpush1.bf16.msra.mxu0 0
    %2997 = vmatprep.subr.bf16.mxu0 0
    %2998 = vmatpush1.bf16.msra.mxu0 0
    %2999 = vmatprep.subr.bf16.mxu0 0
    %3000 = vmatpush1.bf16.msra.mxu0 0
    %3001 = vmatprep.subr.bf16.mxu0 0
    %3002 = vmatpush1.bf16.msra.mxu0 0
    %3003 = vmatprep.subr.bf16.mxu0 0
    %3004 = vmatpush1.bf16.msra.mxu0 0
    %3005 = vmatprep.subr.bf16.mxu0 0
    %3006 = vmatpush1.bf16.msra.mxu0 0
    %3007 = vmatprep.subr.bf16.mxu0 0
    %3008 = vmatpush1.bf16.msra.mxu0 0
    %3009 = vmatprep.subr.bf16.mxu0 0
    %3010 = vmatpush1.bf16.msra.mxu0 0
    %3011 = vmatprep.subr.bf16.mxu0 0
    %3012 = vmatpush1.bf16.msra.mxu0 0
    %3013 = vmatprep.subr.bf16.mxu0 0
    %3014 = vmatpush1.bf16.msra.mxu0 0
    %3015 = vmatprep.subr.bf16.mxu0 0
    %3016 = vmatpush1.bf16.msra.mxu0 0
    %3017 = vmatprep.subr.bf16.mxu0 0
    %3018 = vmatpush1.bf16.msra.mxu0 0
    %3019 = vmatprep.subr.bf16.mxu0 0
    %3020 = vmatpush1.bf16.msra.mxu0 0
    %3021 = vmatprep.mubr.bf16.mxu0 0
    %3022 = vmatmul.mubr.bf16.gmra.mrb[0].mxu0 %v2984
    %v3023 = vpop.f32.mrb[0].mxu0
    %v3024 = vadd.f32 0.0, %v3023
    %v3025 = vpop.f32.mrb[0].mxu0
    %v3026 = vpop.f32.mrb[0].mxu0
    %v3027 = vpop.f32.mrb[0].mxu0
    %3028 = vdwg.mxu0
    %3029 = vrot.lane.b32.xlu0 %v2133, 48
    %v3030 = vpop.permute.xlu0 %3029
    %v3032 = vsel %vm289, %v2979, 0
    %v3035 = vsel %vm473, %v3030, 0
    %3037 = vmatprep.subr.bf16.mxu0 0
    %3038 = vmatpush1.bf16.msra.mxu0 %v3035
    %3039 = vmatprep.subr.bf16.mxu0 0
    %3040 = vmatpush1.bf16.msra.mxu0 0
    %3041 = vmatprep.subr.bf16.mxu0 0
    %3042 = vmatpush1.bf16.msra.mxu0 0
    %3043 = vmatprep.subr.bf16.mxu0 0
    %3044 = vmatpush1.bf16.msra.mxu0 0
    %3045 = vmatprep.subr.bf16.mxu0 0
    %3046 = vmatpush1.bf16.msra.mxu0 0
    %3047 = vmatprep.subr.bf16.mxu0 0
    %3048 = vmatpush1.bf16.msra.mxu0 0
    %3049 = vmatprep.subr.bf16.mxu0 0
    %3050 = vmatpush1.bf16.msra.mxu0 0
    %3051 = vmatprep.subr.bf16.mxu0 0
    %3052 = vmatpush1.bf16.msra.mxu0 0
    %3053 = vmatprep.subr.bf16.mxu0 0
    %3054 = vmatpush1.bf16.msra.mxu0 0
    %3055 = vmatprep.subr.bf16.mxu0 0
    %3056 = vmatpush1.bf16.msra.mxu0 0
    %3057 = vmatprep.subr.bf16.mxu0 0
    %3058 = vmatpush1.bf16.msra.mxu0 0
    %3059 = vmatprep.subr.bf16.mxu0 0
    %3060 = vmatpush1.bf16.msra.mxu0 0
    %3061 = vmatprep.subr.bf16.mxu0 0
    %3062 = vmatpush1.bf16.msra.mxu0 0
    %3063 = vmatprep.subr.bf16.mxu0 0
    %3064 = vmatpush1.bf16.msra.mxu0 0
    %3065 = vmatprep.subr.bf16.mxu0 0
    %3066 = vmatpush1.bf16.msra.mxu0 0
    %3067 = vmatprep.subr.bf16.mxu0 0
    %3068 = vmatpush1.bf16.msra.mxu0 0
    %3069 = vmatprep.mubr.bf16.mxu0 0
    %3070 = vmatmul.mubr.bf16.gmra.mrb[0].mxu0 %v3032
    %v3071 = vpop.f32.mrb[0].mxu0
    %v3072 = vadd.f32 0.0, %v3071
    %v3073 = vpop.f32.mrb[0].mxu0
    %v3074 = vpop.f32.mrb[0].mxu0
    %v3075 = vpop.f32.mrb[0].mxu0
    %3076 = vdwg.mxu0
    %3077 = vrot.lane.b32.xlu0 %v2134, 48
    %v3078 = vpop.permute.xlu0 %3077
    %v3080 = vsel %vm289, %v2980, 0
    %v3083 = vsel %vm473, %v3078, 0
    %3085 = vmatprep.subr.bf16.mxu0 0
    %3086 = vmatpush1.bf16.msra.mxu0 %v3083
    %3087 = vmatprep.subr.bf16.mxu0 0
    %3088 = vmatpush1.bf16.msra.mxu0 0
    %3089 = vmatprep.subr.bf16.mxu0 0
    %3090 = vmatpush1.bf16.msra.mxu0 0
    %3091 = vmatprep.subr.bf16.mxu0 0
    %3092 = vmatpush1.bf16.msra.mxu0 0
    %3093 = vmatprep.subr.bf16.mxu0 0
    %3094 = vmatpush1.bf16.msra.mxu0 0
    %3095 = vmatprep.subr.bf16.mxu0 0
    %3096 = vmatpush1.bf16.msra.mxu0 0
    %3097 = vmatprep.subr.bf16.mxu0 0
    %3098 = vmatpush1.bf16.msra.mxu0 0
    %3099 = vmatprep.subr.bf16.mxu0 0
    %3100 = vmatpush1.bf16.msra.mxu0 0
    %3101 = vmatprep.subr.bf16.mxu0 0
    %3102 = vmatpush1.bf16.msra.mxu0 0
    %3103 = vmatprep.subr.bf16.mxu0 0
    %3104 = vmatpush1.bf16.msra.mxu0 0
    %3105 = vmatprep.subr.bf16.mxu0 0
    %3106 = vmatpush1.bf16.msra.mxu0 0
    %3107 = vmatprep.subr.bf16.mxu0 0
    %3108 = vmatpush1.bf16.msra.mxu0 0
    %3109 = vmatprep.subr.bf16.mxu0 0
    %3110 = vmatpush1.bf16.msra.mxu0 0
    %3111 = vmatprep.subr.bf16.mxu0 0
    %3112 = vmatpush1.bf16.msra.mxu0 0
    %3113 = vmatprep.subr.bf16.mxu0 0
    %3114 = vmatpush1.bf16.msra.mxu0 0
    %3115 = vmatprep.subr.bf16.mxu0 0
    %3116 = vmatpush1.bf16.msra.mxu0 0
    %3117 = vmatprep.mubr.bf16.mxu0 0
    %3118 = vmatmul.mubr.bf16.gmra.mrb[0].mxu0 %v3080
    %v3119 = vpop.f32.mrb[0].mxu0
    %v3120 = vadd.f32 0.0, %v3119
    %v3121 = vpop.f32.mrb[0].mxu0
    %v3122 = vpop.f32.mrb[0].mxu0
    %v3123 = vpop.f32.mrb[0].mxu0
    %3124 = vdwg.mxu0
    %v3125 = vmul.f32 %v3024, %v2973
    %v3126 = vmul.f32 %v3072, %v2975
    %v3127 = vmul.f32 %v3120, %v2977
    %3128 = vrot.lane.b32.xlu0 %v2132, 104
    %v3129 = vpop.permute.xlu0 %3128
    %3130 = vrot.lane.b32.xlu0 %v2132, 72
    %v3131 = vpop.permute.xlu0 %3130
    %v3133 = vsel %vm289, %v3129, 0
    %v3136 = vsel %vm289, %v3131, 0
    %3138 = vmatprep.subr.bf16.mxu0 0
    %3139 = vmatpush1.bf16.xpose.msra.mxu0 %v3136
    %3140 = vmatprep.subr.bf16.mxu0 0
    %3141 = vmatpush1.bf16.xpose.msra.mxu0 0
    %3142 = vmatprep.subr.bf16.mxu0 0
    %3143 = vmatpush1.bf16.xpose.msra.mxu0 0
    %3144 = vmatprep.subr.bf16.mxu0 0
    %3145 = vmatpush1.bf16.xpose.msra.mxu0 0
    %3146 = vmatprep.subr.bf16.mxu0 0
    %3147 = vmatpush1.bf16.xpose.msra.mxu0 0
    %3148 = vmatprep.subr.bf16.mxu0 0
    %3149 = vmatpush1.bf16.xpose.msra.mxu0 0
    %3150 = vmatprep.subr.bf16.mxu0 0
    %3151 = vmatpush1.bf16.xpose.msra.mxu0 0
    %3152 = vmatprep.subr.bf16.mxu0 0
    %3153 = vmatpush1.bf16.xpose.msra.mxu0 0
    %3154 = vmatprep.subr.bf16.mxu0 0
    %3155 = vmatpush1.bf16.xpose.msra.mxu0 0
    %3156 = vmatprep.subr.bf16.mxu0 0
    %3157 = vmatpush1.bf16.xpose.msra.mxu0 0
    %3158 = vmatprep.subr.bf16.mxu0 0
    %3159 = vmatpush1.bf16.xpose.msra.mxu0 0
    %3160 = vmatprep.subr.bf16.mxu0 0
    %3161 = vmatpush1.bf16.xpose.msra.mxu0 0
    %3162 = vmatprep.subr.bf16.mxu0 0
    %3163 = vmatpush1.bf16.xpose.msra.mxu0 0
    %3164 = vmatprep.subr.bf16.mxu0 0
    %3165 = vmatpush1.bf16.xpose.msra.mxu0 0
    %3166 = vmatprep.subr.bf16.mxu0 0
    %3167 = vmatpush1.bf16.xpose.msra.mxu0 0
    %3168 = vmatprep.subr.bf16.mxu0 0
    %3169 = vmatpush1.bf16.xpose.msra.mxu0 0
    %3170 = vmatprep.mubr.bf16.mxu0 0
    %3171 = vmatmul.mubr.bf16.gmra.mrb[0].mxu0 %v3133
    %v3172 = vpop.f32.mrb[0].mxu0
    %v3173 = vadd.f32 0.0, %v3172
    %v3174 = vpop.f32.mrb[0].mxu0
    %v3175 = vpop.f32.mrb[0].mxu0
    %v3176 = vpop.f32.mrb[0].mxu0
    %3177 = vdwg.mxu0
    %3178 = vrot.lane.b32.xlu0 %v2133, 104
    %v3179 = vpop.permute.xlu0 %3178
    %3180 = vrot.lane.b32.xlu0 %v2133, 72
    %v3181 = vpop.permute.xlu0 %3180
    %v3183 = vsel %vm289, %v3179, 0
    %v3186 = vsel %vm289, %v3181, 0
    %3188 = vmatprep.subr.bf16.mxu0 0
    %3189 = vmatpush1.bf16.xpose.msra.mxu0 %v3186
    %3190 = vmatprep.subr.bf16.mxu0 0
    %3191 = vmatpush1.bf16.xpose.msra.mxu0 0
    %3192 = vmatprep.subr.bf16.mxu0 0
    %3193 = vmatpush1.bf16.xpose.msra.mxu0 0
    %3194 = vmatprep.subr.bf16.mxu0 0
    %3195 = vmatpush1.bf16.xpose.msra.mxu0 0
    %3196 = vmatprep.subr.bf16.mxu0 0
    %3197 = vmatpush1.bf16.xpose.msra.mxu0 0
    %3198 = vmatprep.subr.bf16.mxu0 0
    %3199 = vmatpush1.bf16.xpose.msra.mxu0 0
    %3200 = vmatprep.subr.bf16.mxu0 0
    %3201 = vmatpush1.bf16.xpose.msra.mxu0 0
    %3202 = vmatprep.subr.bf16.mxu0 0
    %3203 = vmatpush1.bf16.xpose.msra.mxu0 0
    %3204 = vmatprep.subr.bf16.mxu0 0
    %3205 = vmatpush1.bf16.xpose.msra.mxu0 0
    %3206 = vmatprep.subr.bf16.mxu0 0
    %3207 = vmatpush1.bf16.xpose.msra.mxu0 0
    %3208 = vmatprep.subr.bf16.mxu0 0
    %3209 = vmatpush1.bf16.xpose.msra.mxu0 0
    %3210 = vmatprep.subr.bf16.mxu0 0
    %3211 = vmatpush1.bf16.xpose.msra.mxu0 0
    %3212 = vmatprep.subr.bf16.mxu0 0
    %3213 = vmatpush1.bf16.xpose.msra.mxu0 0
    %3214 = vmatprep.subr.bf16.mxu0 0
    %3215 = vmatpush1.bf16.xpose.msra.mxu0 0
    %3216 = vmatprep.subr.bf16.mxu0 0
    %3217 = vmatpush1.bf16.xpose.msra.mxu0 0
    %3218 = vmatprep.subr.bf16.mxu0 0
    %3219 = vmatpush1.bf16.xpose.msra.mxu0 0
    %3220 = vmatprep.mubr.bf16.mxu0 0
    %3221 = vmatmul.mubr.bf16.gmra.mrb[0].mxu0 %v3183
    %v3222 = vpop.f32.mrb[0].mxu0
    %v3223 = vadd.f32 0.0, %v3222
    %v3224 = vpop.f32.mrb[0].mxu0
    %v3225 = vpop.f32.mrb[0].mxu0
    %v3226 = vpop.f32.mrb[0].mxu0
    %3227 = vdwg.mxu0
    %3228 = vrot.lane.b32.xlu0 %v2134, 104
    %v3229 = vpop.permute.xlu0 %3228
    %3230 = vrot.lane.b32.xlu0 %v2134, 72
    %v3231 = vpop.permute.xlu0 %3230
    %v3233 = vsel %vm289, %v3229, 0
    %v3236 = vsel %vm289, %v3231, 0
    %3238 = vmatprep.subr.bf16.mxu0 0
    %3239 = vmatpush1.bf16.xpose.msra.mxu0 %v3236
    %3240 = vmatprep.subr.bf16.mxu0 0
    %3241 = vmatpush1.bf16.xpose.msra.mxu0 0
    %3242 = vmatprep.subr.bf16.mxu0 0
    %3243 = vmatpush1.bf16.xpose.msra.mxu0 0
    %3244 = vmatprep.subr.bf16.mxu0 0
    %3245 = vmatpush1.bf16.xpose.msra.mxu0 0
    %3246 = vmatprep.subr.bf16.mxu0 0
    %3247 = vmatpush1.bf16.xpose.msra.mxu0 0
    %3248 = vmatprep.subr.bf16.mxu0 0
    %3249 = vmatpush1.bf16.xpose.msra.mxu0 0
    %3250 = vmatprep.subr.bf16.mxu0 0
    %3251 = vmatpush1.bf16.xpose.msra.mxu0 0
    %3252 = vmatprep.subr.bf16.mxu0 0
    %3253 = vmatpush1.bf16.xpose.msra.mxu0 0
    %3254 = vmatprep.subr.bf16.mxu0 0
    %3255 = vmatpush1.bf16.xpose.msra.mxu0 0
    %3256 = vmatprep.subr.bf16.mxu0 0
    %3257 = vmatpush1.bf16.xpose.msra.mxu0 0
    %3258 = vmatprep.subr.bf16.mxu0 0
    %3259 = vmatpush1.bf16.xpose.msra.mxu0 0
    %3260 = vmatprep.subr.bf16.mxu0 0
    %3261 = vmatpush1.bf16.xpose.msra.mxu0 0
    %3262 = vmatprep.subr.bf16.mxu0 0
    %3263 = vmatpush1.bf16.xpose.msra.mxu0 0
    %3264 = vmatprep.subr.bf16.mxu0 0
    %3265 = vmatpush1.bf16.xpose.msra.mxu0 0
    %3266 = vmatprep.subr.bf16.mxu0 0
    %3267 = vmatpush1.bf16.xpose.msra.mxu0 0
    %3268 = vmatprep.subr.bf16.mxu0 0
    %3269 = vmatpush1.bf16.xpose.msra.mxu0 0
    %3270 = vmatprep.mubr.bf16.mxu0 0
    %3271 = vmatmul.mubr.bf16.gmra.mrb[0].mxu0 %v3233
    %v3272 = vpop.f32.mrb[0].mxu0
    %v3273 = vadd.f32 0.0, %v3272
    %v3274 = vpop.f32.mrb[0].mxu0
    %v3275 = vpop.f32.mrb[0].mxu0
    %v3276 = vpop.f32.mrb[0].mxu0
    %3277 = vdwg.mxu0
    %v3278 = vsel %vm289, %v3173, -inf
    %3279 = vmax.xlane.f32.xlu0 %v3278
    %v3280 = vpop.xlane.xlu0 %3279
    %v3281 = vsel %vm289, %v3223, -inf
    %3282 = vmax.xlane.f32.xlu0 %v3281
    %v3283 = vpop.xlane.xlu0 %3282
    %v3284 = vsel %vm289, %v3273, -inf
    %3285 = vmax.xlane.f32.xlu0 %v3284
    %v3286 = vpop.xlane.xlu0 %3285
    %v3287 = vsub.f32 %v3173, %v3280
    %v3288 = vsub.f32 %v3223, %v3283
    %v3289 = vsub.f32 %v3273, %v3286
    %v3290 = vmul.f32 %v3287, 1.442695
    %v3291 = vpow.pop %v3290
    %v3292 = vmul.f32 %v3288, 1.442695
    %v3293 = vpow.pop %v3292
    %v3294 = vmul.f32 %v3289, 1.442695
    %v3295 = vpow.pop %v3294
    %v3296 = vsel %vm289, %v3291, 0.0
    %3297 = vadd.xlane.f32.xlu0 %v3296
    %v3298 = vpop.xlane.xlu0 %3297
    %v3299 = vsel %vm289, %v3293, 0.0
    %3300 = vadd.xlane.f32.xlu0 %v3299
    %v3301 = vpop.xlane.xlu0 %3300
    %v3302 = vsel %vm289, %v3295, 0.0
    %3303 = vadd.xlane.f32.xlu0 %v3302
    %v3304 = vpop.xlane.xlu0 %3303
    %v3305 = vrcp.pop %v3298
    %v3306 = vmul.f32 1.0, %v3305
    %v3307 = vrcp.pop %v3301
    %v3308 = vmul.f32 1.0, %v3307
    %v3309 = vrcp.pop %v3304
    %v3310 = vmul.f32 1.0, %v3309
    %v3311 = vpack.c.bf16 %v3291, %v3291
    %v3312 = vpack.c.bf16 %v3293, %v3293
    %v3313 = vpack.c.bf16 %v3295, %v3295
    %3314 = vrot.lane.b32.xlu0 %v2132, 40
    %v3315 = vpop.permute.xlu0 %3314
    %v3317 = vsel %vm289, %v3311, 0
    %v3320 = vsel %vm473, %v3315, 0
    %3322 = vmatprep.subr.bf16.mxu0 0
    %3323 = vmatpush1.bf16.msra.mxu0 %v3320
    %3324 = vmatprep.subr.bf16.mxu0 0
    %3325 = vmatpush1.bf16.msra.mxu0 0
    %3326 = vmatprep.subr.bf16.mxu0 0
    %3327 = vmatpush1.bf16.msra.mxu0 0
    %3328 = vmatprep.subr.bf16.mxu0 0
    %3329 = vmatpush1.bf16.msra.mxu0 0
    %3330 = vmatprep.subr.bf16.mxu0 0
    %3331 = vmatpush1.bf16.msra.mxu0 0
    %3332 = vmatprep.subr.bf16.mxu0 0
    %3333 = vmatpush1.bf16.msra.mxu0 0
    %3334 = vmatprep.subr.bf16.mxu0 0
    %3335 = vmatpush1.bf16.msra.mxu0 0
    %3336 = vmatprep.subr.bf16.mxu0 0
    %3337 = vmatpush1.bf16.msra.mxu0 0
    %3338 = vmatprep.subr.bf16.mxu0 0
    %3339 = vmatpush1.bf16.msra.mxu0 0
    %3340 = vmatprep.subr.bf16.mxu0 0
    %3341 = vmatpush1.bf16.msra.mxu0 0
    %3342 = vmatprep.subr.bf16.mxu0 0
    %3343 = vmatpush1.bf16.msra.mxu0 0
    %3344 = vmatprep.subr.bf16.mxu0 0
    %3345 = vmatpush1.bf16.msra.mxu0 0
    %3346 = vmatprep.subr.bf16.mxu0 0
    %3347 = vmatpush1.bf16.msra.mxu0 0
    %3348 = vmatprep.subr.bf16.mxu0 0
    %3349 = vmatpush1.bf16.msra.mxu0 0
    %3350 = vmatprep.subr.bf16.mxu0 0
    %3351 = vmatpush1.bf16.msra.mxu0 0
    %3352 = vmatprep.subr.bf16.mxu0 0
    %3353 = vmatpush1.bf16.msra.mxu0 0
    %3354 = vmatprep.mubr.bf16.mxu0 0
    %3355 = vmatmul.mubr.bf16.gmra.mrb[0].mxu0 %v3317
    %v3356 = vpop.f32.mrb[0].mxu0
    %v3357 = vadd.f32 0.0, %v3356
    %v3358 = vpop.f32.mrb[0].mxu0
    %v3359 = vpop.f32.mrb[0].mxu0
    %v3360 = vpop.f32.mrb[0].mxu0
    %3361 = vdwg.mxu0
    %3362 = vrot.lane.b32.xlu0 %v2133, 40
    %v3363 = vpop.permute.xlu0 %3362
    %v3365 = vsel %vm289, %v3312, 0
    %v3368 = vsel %vm473, %v3363, 0
    %3370 = vmatprep.subr.bf16.mxu0 0
    %3371 = vmatpush1.bf16.msra.mxu0 %v3368
    %3372 = vmatprep.subr.bf16.mxu0 0
    %3373 = vmatpush1.bf16.msra.mxu0 0
    %3374 = vmatprep.subr.bf16.mxu0 0
    %3375 = vmatpush1.bf16.msra.mxu0 0
    %3376 = vmatprep.subr.bf16.mxu0 0
    %3377 = vmatpush1.bf16.msra.mxu0 0
    %3378 = vmatprep.subr.bf16.mxu0 0
    %3379 = vmatpush1.bf16.msra.mxu0 0
    %3380 = vmatprep.subr.bf16.mxu0 0
    %3381 = vmatpush1.bf16.msra.mxu0 0
    %3382 = vmatprep.subr.bf16.mxu0 0
    %3383 = vmatpush1.bf16.msra.mxu0 0
    %3384 = vmatprep.subr.bf16.mxu0 0
    %3385 = vmatpush1.bf16.msra.mxu0 0
    %3386 = vmatprep.subr.bf16.mxu0 0
    %3387 = vmatpush1.bf16.msra.mxu0 0
    %3388 = vmatprep.subr.bf16.mxu0 0
    %3389 = vmatpush1.bf16.msra.mxu0 0
    %3390 = vmatprep.subr.bf16.mxu0 0
    %3391 = vmatpush1.bf16.msra.mxu0 0
    %3392 = vmatprep.subr.bf16.mxu0 0
    %3393 = vmatpush1.bf16.msra.mxu0 0
    %3394 = vmatprep.subr.bf16.mxu0 0
    %3395 = vmatpush1.bf16.msra.mxu0 0
    %3396 = vmatprep.subr.bf16.mxu0 0
    %3397 = vmatpush1.bf16.msra.mxu0 0
    %3398 = vmatprep.subr.bf16.mxu0 0
    %3399 = vmatpush1.bf16.msra.mxu0 0
    %3400 = vmatprep.subr.bf16.mxu0 0
    %3401 = vmatpush1.bf16.msra.mxu0 0
    %3402 = vmatprep.mubr.bf16.mxu0 0
    %3403 = vmatmul.mubr.bf16.gmra.mrb[0].mxu0 %v3365
    %v3404 = vpop.f32.mrb[0].mxu0
    %v3405 = vadd.f32 0.0, %v3404
    %v3406 = vpop.f32.mrb[0].mxu0
    %v3407 = vpop.f32.mrb[0].mxu0
    %v3408 = vpop.f32.mrb[0].mxu0
    %3409 = vdwg.mxu0
    %3410 = vrot.lane.b32.xlu0 %v2134, 40
    %v3411 = vpop.permute.xlu0 %3410
    %v3413 = vsel %vm289, %v3313, 0
    %v3416 = vsel %vm473, %v3411, 0
    %3418 = vmatprep.subr.bf16.mxu0 0
    %3419 = vmatpush1.bf16.msra.mxu0 %v3416
    %3420 = vmatprep.subr.bf16.mxu0 0
    %3421 = vmatpush1.bf16.msra.mxu0 0
    %3422 = vmatprep.subr.bf16.mxu0 0
    %3423 = vmatpush1.bf16.msra.mxu0 0
    %3424 = vmatprep.subr.bf16.mxu0 0
    %3425 = vmatpush1.bf16.msra.mxu0 0
    %3426 = vmatprep.subr.bf16.mxu0 0
    %3427 = vmatpush1.bf16.msra.mxu0 0
    %3428 = vmatprep.subr.bf16.mxu0 0
    %3429 = vmatpush1.bf16.msra.mxu0 0
    %3430 = vmatprep.subr.bf16.mxu0 0
    %3431 = vmatpush1.bf16.msra.mxu0 0
    %3432 = vmatprep.subr.bf16.mxu0 0
    %3433 = vmatpush1.bf16.msra.mxu0 0
    %3434 = vmatprep.subr.bf16.mxu0 0
    %3435 = vmatpush1.bf16.msra.mxu0 0
    %3436 = vmatprep.subr.bf16.mxu0 0
    %3437 = vmatpush1.bf16.msra.mxu0 0
    %3438 = vmatprep.subr.bf16.mxu0 0
    %3439 = vmatpush1.bf16.msra.mxu0 0
    %3440 = vmatprep.subr.bf16.mxu0 0
    %3441 = vmatpush1.bf16.msra.mxu0 0
    %3442 = vmatprep.subr.bf16.mxu0 0
    %3443 = vmatpush1.bf16.msra.mxu0 0
    %3444 = vmatprep.subr.bf16.mxu0 0
    %3445 = vmatpush1.bf16.msra.mxu0 0
    %3446 = vmatprep.subr.bf16.mxu0 0
    %3447 = vmatpush1.bf16.msra.mxu0 0
    %3448 = vmatprep.subr.bf16.mxu0 0
    %3449 = vmatpush1.bf16.msra.mxu0 0
    %3450 = vmatprep.mubr.bf16.mxu0 0
    %3451 = vmatmul.mubr.bf16.gmra.mrb[0].mxu0 %v3413
    %v3452 = vpop.f32.mrb[0].mxu0
    %v3453 = vadd.f32 0.0, %v3452
    %v3454 = vpop.f32.mrb[0].mxu0
    %v3455 = vpop.f32.mrb[0].mxu0
    %v3456 = vpop.f32.mrb[0].mxu0
    %3457 = vdwg.mxu0
    %v3458 = vmul.f32 %v3357, %v3306
    %v3459 = vmul.f32 %v3405, %v3308
    %v3460 = vmul.f32 %v3453, %v3310
    %3464 = vrot.lane.b32.xlu0 %v2792, 8
    %v3465 = vpop.permute.xlu0 %3464
    %3466 = vrot.lane.b32.xlu0 %v2793, 8
    %v3467 = vpop.permute.xlu0 %3466
    %3468 = vrot.lane.b32.xlu0 %v2794, 8
    %v3469 = vpop.permute.xlu0 %3468
    %3476 = vrot.lane.b32.xlu0 %v3125, 16
    %v3477 = vpop.permute.xlu0 %3476
    %3478 = vrot.lane.b32.xlu0 %v3126, 16
    %v3479 = vpop.permute.xlu0 %3478
    %3480 = vrot.lane.b32.xlu0 %v3127, 16
    %v3481 = vpop.permute.xlu0 %3480
    %3488 = vrot.lane.b32.xlu0 %v3458, 24
    %v3489 = vpop.permute.xlu0 %3488
    %3490 = vrot.lane.b32.xlu0 %v3459, 24
    %v3491 = vpop.permute.xlu0 %3490
    %3492 = vrot.lane.b32.xlu0 %v3460, 24
    %v3493 = vpop.permute.xlu0 %3492
    %v3497 = vsel %vm289, %v2459, %v3465
    %v3498 = vsel %vm289, %v2460, %v3467
    %v3499 = vsel %vm289, %v2461, %v3469
    %v3500 = vsel %vm1654, %v3497, %v3477
    %v3501 = vsel %vm1654, %v3498, %v3479
    %v3502 = vsel %vm1654, %v3499, %v3481
    %v3503 = vsel %vm1658, %v3500, %v3489
    %v3504 = vsel %vm1658, %v3501, %v3491
    %v3505 = vsel %vm1658, %v3502, %v3493
    %s3506 = scalar_lea.vmem %s3, 16
    %v3507 = vld [vmem:[%s3506] sm:$0xf]
    %v3508 = vld [vmem:[%s3506 + $0x4] sm:$0xf]
    %v3509 = vld [vmem:[%s3506 + $0x8] sm:$0xf]
    %v3510 = vld [vmem:[%s3506 + $0xc] sm:$0xf]
    %v3511 = vpack.c.bf16 %v3504, %v3503
    %v3512 = vpack.c.bf16 %v3505, %v3505
    %s3513 = scalar_lea.vmem [#allocation7], 1
    %v3514 = vld [vmem:[%s3513] sm:$0x1]
    %v3516 = vlaneseq
    %v3517 = vshrl.u32 %v3516, 7
    %v3518 = vsub.s32 0, %v3517
    %v3519 = vrot.slane %v3514, %v3518
    %v3525 = vunpack.c.l.b16 %v3507
    %v3526 = vunpack.c.l.b16 %v3508
    %v3527 = vunpack.c.l.b16 %v3509
    %v3528 = vunpack.c.l.b16 %v3510
    %v3529 = vpack.c.b16 %v3526, %v3525
    %v3530 = vpack.c.b16 %v3528, %v3527
    %v3534 = vsel %vm222, %v3511, 0
    %v3537 = vsel %vm222, %v3512, 0
    %3539 = vmatprep.subr.bf16.mxu0 0
    %3540 = vmatpush1.bf16.msra.mxu0 %v3529
    %3541 = vmatprep.subr.bf16.mxu0 0
    %3542 = vmatpush1.bf16.msra.mxu0 %v3530
    %3543 = vmatprep.subr.bf16.mxu0 0
    %3544 = vmatpush1.bf16.msra.mxu0 0
    %3545 = vmatprep.subr.bf16.mxu0 0
    %3546 = vmatpush1.bf16.msra.mxu0 0
    %3547 = vmatprep.subr.bf16.mxu0 0
    %3548 = vmatpush1.bf16.msra.mxu0 0
    %3549 = vmatprep.subr.bf16.mxu0 0
    %3550 = vmatpush1.bf16.msra.mxu0 0
    %3551 = vmatprep.subr.bf16.mxu0 0
    %3552 = vmatpush1.bf16.msra.mxu0 0
    %3553 = vmatprep.subr.bf16.mxu0 0
    %3554 = vmatpush1.bf16.msra.mxu0 0
    %3555 = vmatprep.subr.bf16.mxu0 0
    %3556 = vmatpush1.bf16.msra.mxu0 0
    %3557 = vmatprep.subr.bf16.mxu0 0
    %3558 = vmatpush1.bf16.msra.mxu0 0
    %3559 = vmatprep.subr.bf16.mxu0 0
    %3560 = vmatpush1.bf16.msra.mxu0 0
    %3561 = vmatprep.subr.bf16.mxu0 0
    %3562 = vmatpush1.bf16.msra.mxu0 0
    %3563 = vmatprep.subr.bf16.mxu0 0
    %3564 = vmatpush1.bf16.msra.mxu0 0
    %3565 = vmatprep.subr.bf16.mxu0 0
    %3566 = vmatpush1.bf16.msra.mxu0 0
    %3567 = vmatprep.subr.bf16.mxu0 0
    %3568 = vmatpush1.bf16.msra.mxu0 0
    %3569 = vmatprep.subr.bf16.mxu0 0
    %3570 = vmatpush1.bf16.msra.mxu0 0
    %3571 = vmatprep.mubr.bf16.mxu0 0
    %3572 = vmatmul.mubr.bf16.gmra.mrb[0].mxu0 %v3534
    %v3573 = vpop.f32.mrb[0].mxu0
    %v3574 = vadd.f32 %v3519, %v3573
    %v3575 = vpop.f32.mrb[0].mxu0
    %v3576 = vpop.f32.mrb[0].mxu0
    %v3577 = vadd.f32 %v3519, %v3576
    %v3578 = vpop.f32.mrb[0].mxu0
    %3579 = vmatprep.mubr.bf16.mxu0 0
    %3580 = vmatmul.mubr.bf16.gmra.mrb[0].mxu0 %v3537
    %v3581 = vpop.f32.mrb[0].mxu0
    %v3582 = vadd.f32 %v3519, %v3581
    %v3583 = vpop.f32.mrb[0].mxu0
    %v3584 = vpop.f32.mrb[0].mxu0
    %v3585 = vpop.f32.mrb[0].mxu0
    %3586 = vdwg.mxu0
    %v3587 = vadd.f32 %v2041, %v3574
    %v3588 = vadd.f32 %v2042, %v3577
    %v3589 = vadd.f32 %v2043, %v3582
    %s3590 = scalar_lea.vmem [#allocation8], 1
    %v3591 = vld [vmem:[%s3590] sm:$0x1]
    %s3592 = scalar_lea.vmem [#allocation10], 1
    %v3593 = vld [vmem:[%s3592] sm:$0x1]
    %v3594 = vsel %vm222, %v3587, 0.0
    %3595 = vadd.xlane.f32.xlu0 %v3594
    %v3596 = vpop.xlane.xlu0 %3595
    %v3597 = vsel %vm222, %v3588, 0.0
    %3598 = vadd.xlane.f32.xlu0 %v3597
    %v3599 = vpop.xlane.xlu0 %3598
    %v3600 = vsel %vm222, %v3589, 0.0
    %3601 = vadd.xlane.f32.xlu0 %v3600
    %v3602 = vpop.xlane.xlu0 %3601
    %v3603 = vmul.f32 %v3596, %v1755
    %v3604 = vmul.f32 %v3599, %v1755
    %v3605 = vmul.f32 %v3602, %v1755
    %v3606 = vsub.f32 %v3587, %v3603
    %v3607 = vsub.f32 %v3588, %v3604
    %v3608 = vsub.f32 %v3589, %v3605
    %v3609 = vmul.f32 %v3606, %v3606
    %v3610 = vmul.f32 %v3607, %v3607
    %v3611 = vmul.f32 %v3608, %v3608
    %v3612 = vsel %vm222, %v3609, 0.0
    %3613 = vadd.xlane.f32.xlu0 %v3612
    %v3614 = vpop.xlane.xlu0 %3613
    %v3615 = vsel %vm222, %v3610, 0.0
    %3616 = vadd.xlane.f32.xlu0 %v3615
    %v3617 = vpop.xlane.xlu0 %3616
    %v3618 = vsel %vm222, %v3611, 0.0
    %3619 = vadd.xlane.f32.xlu0 %v3618
    %v3620 = vpop.xlane.xlu0 %3619
    %v3621 = vmul.f32 %v3614, %v1755
    %v3622 = vmul.f32 %v3617, %v1755
    %v3623 = vmul.f32 %v3620, %v1755
    %v3624 = vadd.f32 %v3621, 1e-05
    %v3625 = vadd.f32 %v3622, 1e-05
    %v3626 = vadd.f32 %v3623, 1e-05
    %v3627 = vrsqrt.pop %v3624
    %v3628 = vrsqrt.pop %v3625
    %v3629 = vrsqrt.pop %v3626
    %v3630 = vmul.f32 %v3606, %v3627
    %v3631 = vmul.f32 %v3607, %v3628
    %v3632 = vmul.f32 %v3608, %v3629
    %v3634 = vlaneseq
    %v3635 = vshrl.u32 %v3634, 7
    %v3636 = vsub.s32 0, %v3635
    %v3637 = vrot.slane %v3591, %v3636
    %v3639 = vmul.f32 %v3630, %v3637
    %v3640 = vmul.f32 %v3631, %v3637
    %v3641 = vmul.f32 %v3632, %v3637
    %v3643 = vlaneseq
    %v3644 = vshrl.u32 %v3643, 7
    %v3645 = vsub.s32 0, %v3644
    %v3646 = vrot.slane %v3593, %v3645
    %v3648 = vadd.f32 %v3639, %v3646
    %v3649 = vadd.f32 %v3640, %v3646
    %v3650 = vadd.f32 %v3641, %v3646
    %s3651 = scalar_lea.vmem %s9, 16
    %v3652 = vld [vmem:[%s3651] sm:$0xf]
    %v3653 = vld [vmem:[%s3651 + $0x4] sm:$0xf]
    %v3654 = vld [vmem:[%s3651 + $0x8] sm:$0xf]
    %v3655 = vld [vmem:[%s3651 + $0xc] sm:$0xf]
    %v3656 = vpack.c.bf16 %v3649, %v3648
    %v3657 = vpack.c.bf16 %v3650, %v3650
    %s3658 = scalar_lea.vmem [#allocation14], 1
    %v3659 = vld [vmem:[%s3658] sm:$0x1]
    %v3661 = vlaneseq
    %v3662 = vshrl.u32 %v3661, 7
    %v3663 = vsub.s32 0, %v3662
    %v3664 = vrot.slane %v3659, %v3663
    %v3670 = vunpack.c.l.b16 %v3652
    %v3671 = vunpack.c.l.b16 %v3653
    %v3672 = vunpack.c.l.b16 %v3654
    %v3673 = vunpack.c.l.b16 %v3655
    %v3674 = vpack.c.b16 %v3671, %v3670
    %v3675 = vpack.c.b16 %v3673, %v3672
    %v3679 = vsel %vm222, %v3656, 0
    %v3682 = vsel %vm222, %v3657, 0
    %3684 = vmatprep.subr.bf16.mxu0 0
    %3685 = vmatpush1.bf16.msra.mxu0 %v3674
    %3686 = vmatprep.subr.bf16.mxu0 0
    %3687 = vmatpush1.bf16.msra.mxu0 %v3675
    %3688 = vmatprep.subr.bf16.mxu0 0
    %3689 = vmatpush1.bf16.msra.mxu0 0
    %3690 = vmatprep.subr.bf16.mxu0 0
    %3691 = vmatpush1.bf16.msra.mxu0 0
    %3692 = vmatprep.subr.bf16.mxu0 0
    %3693 = vmatpush1.bf16.msra.mxu0 0
    %3694 = vmatprep.subr.bf16.mxu0 0
    %3695 = vmatpush1.bf16.msra.mxu0 0
    %3696 = vmatprep.subr.bf16.mxu0 0
    %3697 = vmatpush1.bf16.msra.mxu0 0
    %3698 = vmatprep.subr.bf16.mxu0 0
    %3699 = vmatpush1.bf16.msra.mxu0 0
    %3700 = vmatprep.subr.bf16.mxu0 0
    %3701 = vmatpush1.bf16.msra.mxu0 0
    %3702 = vmatprep.subr.bf16.mxu0 0
    %3703 = vmatpush1.bf16.msra.mxu0 0
    %3704 = vmatprep.subr.bf16.mxu0 0
    %3705 = vmatpush1.bf16.msra.mxu0 0
    %3706 = vmatprep.subr.bf16.mxu0 0
    %3707 = vmatpush1.bf16.msra.mxu0 0
    %3708 = vmatprep.subr.bf16.mxu0 0
    %3709 = vmatpush1.bf16.msra.mxu0 0
    %3710 = vmatprep.subr.bf16.mxu0 0
    %3711 = vmatpush1.bf16.msra.mxu0 0
    %3712 = vmatprep.subr.bf16.mxu0 0
    %3713 = vmatpush1.bf16.msra.mxu0 0
    %3714 = vmatprep.subr.bf16.mxu0 0
    %3715 = vmatpush1.bf16.msra.mxu0 0
    %3716 = vmatprep.mubr.bf16.mxu0 0
    %3717 = vmatmul.mubr.bf16.gmra.mrb[0].mxu0 %v3679
    %v3718 = vpop.f32.mrb[0].mxu0
    %v3719 = vadd.f32 %v3664, %v3718
    %v3720 = vpop.f32.mrb[0].mxu0
    %v3721 = vpop.f32.mrb[0].mxu0
    %v3722 = vadd.f32 %v3664, %v3721
    %v3723 = vpop.f32.mrb[0].mxu0
    %3724 = vmatprep.mubr.bf16.mxu0 0
    %3725 = vmatmul.mubr.bf16.gmra.mrb[0].mxu0 %v3682
    %v3726 = vpop.f32.mrb[0].mxu0
    %v3727 = vadd.f32 %v3664, %v3726
    %v3728 = vpop.f32.mrb[0].mxu0
    %v3729 = vpop.f32.mrb[0].mxu0
    %v3730 = vpop.f32.mrb[0].mxu0
    %3731 = vdwg.mxu0
    %v3732 = vmax.f32 %v3719, 0.0
    %v3733 = vmax.f32 %v3722, 0.0
    %v3734 = vmax.f32 %v3727, 0.0
    %s3735 = scalar_lea.vmem %s11, 32
    %v3736 = vld [vmem:[%s3735] sm:$0xf]
    %v3737 = vld [vmem:[%s3735 + $0x4] sm:$0xf]
    %v3738 = vld [vmem:[%s3735 + $0x8] sm:$0xf]
    %v3739 = vld [vmem:[%s3735 + $0xc] sm:$0xf]
    %v3740 = vld [vmem:[%s3735 + $0x10] sm:$0xf]
    %v3741 = vld [vmem:[%s3735 + $0x14] sm:$0xf]
    %v3742 = vld [vmem:[%s3735 + $0x18] sm:$0xf]
    %v3743 = vld [vmem:[%s3735 + $0x1c] sm:$0xf]
    %v3744 = vpack.c.bf16 %v3733, %v3732
    %v3745 = vpack.c.bf16 %v3734, %v3734
    %s3746 = scalar_lea.vmem [#allocation16], 1
    %v3747 = vld [vmem:[%s3746] sm:$0x1]
    %v3749 = vlaneseq
    %v3750 = vshrl.u32 %v3749, 7
    %v3751 = vsub.s32 0, %v3750
    %v3752 = vrot.slane %v3747, %v3751
    %v3762 = vunpack.c.l.b16 %v3736
    %v3763 = vunpack.c.l.b16 %v3737
    %v3764 = vunpack.c.l.b16 %v3738
    %v3765 = vunpack.c.l.b16 %v3739
    %v3766 = vunpack.c.l.b16 %v3740
    %v3767 = vunpack.c.l.b16 %v3741
    %v3768 = vunpack.c.l.b16 %v3742
    %v3769 = vunpack.c.l.b16 %v3743
    %v3770 = vpack.c.b16 %v3763, %v3762
    %v3771 = vpack.c.b16 %v3765, %v3764
    %v3772 = vpack.c.b16 %v3767, %v3766
    %v3773 = vpack.c.b16 %v3769, %v3768
    %v3779 = vsel %vm1927, %v3744, 0
    %v3782 = vsel %vm1927, %v3745, 0
    %3784 = vmatprep.subr.bf16.mxu0 0
    %3785 = vmatpush1.bf16.msra.mxu0 %v3770
    %3786 = vmatprep.subr.bf16.mxu0 0
    %3787 = vmatpush1.bf16.msra.mxu0 %v3771
    %3788 = vmatprep.subr.bf16.mxu0 0
    %3789 = vmatpush1.bf16.msra.mxu0 %v3772
    %3790 = vmatprep.subr.bf16.mxu0 0
    %3791 = vmatpush1.bf16.msra.mxu0 %v3773
    %3792 = vmatprep.subr.bf16.mxu0 0
    %3793 = vmatpush1.bf16.msra.mxu0 0
    %3794 = vmatprep.subr.bf16.mxu0 0
    %3795 = vmatpush1.bf16.msra.mxu0 0
    %3796 = vmatprep.subr.bf16.mxu0 0
    %3797 = vmatpush1.bf16.msra.mxu0 0
    %3798 = vmatprep.subr.bf16.mxu0 0
    %3799 = vmatpush1.bf16.msra.mxu0 0
    %3800 = vmatprep.subr.bf16.mxu0 0
    %3801 = vmatpush1.bf16.msra.mxu0 0
    %3802 = vmatprep.subr.bf16.mxu0 0
    %3803 = vmatpush1.bf16.msra.mxu0 0
    %3804 = vmatprep.subr.bf16.mxu0 0
    %3805 = vmatpush1.bf16.msra.mxu0 0
    %3806 = vmatprep.subr.bf16.mxu0 0
    %3807 = vmatpush1.bf16.msra.mxu0 0
    %3808 = vmatprep.subr.bf16.mxu0 0
    %3809 = vmatpush1.bf16.msra.mxu0 0
    %3810 = vmatprep.subr.bf16.mxu0 0
    %3811 = vmatpush1.bf16.msra.mxu0 0
    %3812 = vmatprep.subr.bf16.mxu0 0
    %3813 = vmatpush1.bf16.msra.mxu0 0
    %3814 = vmatprep.subr.bf16.mxu0 0
    %3815 = vmatpush1.bf16.msra.mxu0 0
    %3816 = vmatprep.mubr.bf16.mxu0 0
    %3817 = vmatmul.mubr.bf16.gmra.mrb[0].mxu0 %v3779
    %v3818 = vpop.f32.mrb[0].mxu0
    %v3819 = vadd.f32 %v3752, %v3818
    %v3820 = vpop.f32.mrb[0].mxu0
    %v3821 = vpop.f32.mrb[0].mxu0
    %v3822 = vadd.f32 %v3752, %v3821
    %v3823 = vpop.f32.mrb[0].mxu0
    %3824 = vmatprep.mubr.bf16.mxu0 0
    %3825 = vmatmul.mubr.bf16.gmra.mrb[0].mxu0 %v3782
    %v3826 = vpop.f32.mrb[0].mxu0
    %v3827 = vadd.f32 %v3752, %v3826
    %v3828 = vpop.f32.mrb[0].mxu0
    %v3829 = vpop.f32.mrb[0].mxu0
    %v3830 = vpop.f32.mrb[0].mxu0
    %3831 = vdwg.mxu0
    %v3832 = vadd.f32 %v3648, %v3819
    %v3833 = vadd.f32 %v3649, %v3822
    %v3834 = vadd.f32 %v3650, %v3827
    %s3835 = scalar_lea.vmem [#allocation11], 1
    %v3836 = vld [vmem:[%s3835] sm:$0x1]
    %s3837 = scalar_lea.vmem [#allocation13], 1
    %v3838 = vld [vmem:[%s3837] sm:$0x1]
    %v3839 = vsel %vm222, %v3832, 0.0
    %3840 = vadd.xlane.f32.xlu0 %v3839
    %v3841 = vpop.xlane.xlu0 %3840
    %v3842 = vsel %vm222, %v3833, 0.0
    %3843 = vadd.xlane.f32.xlu0 %v3842
    %v3844 = vpop.xlane.xlu0 %3843
    %v3845 = vsel %vm222, %v3834, 0.0
    %3846 = vadd.xlane.f32.xlu0 %v3845
    %v3847 = vpop.xlane.xlu0 %3846
    %v3848 = vmul.f32 %v3841, %v1755
    %v3849 = vmul.f32 %v3844, %v1755
    %v3850 = vmul.f32 %v3847, %v1755
    %v3851 = vsub.f32 %v3832, %v3848
    %v3852 = vsub.f32 %v3833, %v3849
    %v3853 = vsub.f32 %v3834, %v3850
    %v3854 = vmul.f32 %v3851, %v3851
    %v3855 = vmul.f32 %v3852, %v3852
    %v3856 = vmul.f32 %v3853, %v3853
    %v3857 = vsel %vm222, %v3854, 0.0
    %3858 = vadd.xlane.f32.xlu0 %v3857
    %v3859 = vpop.xlane.xlu0 %3858
    %v3860 = vsel %vm222, %v3855, 0.0
    %3861 = vadd.xlane.f32.xlu0 %v3860
    %v3862 = vpop.xlane.xlu0 %3861
    %v3863 = vsel %vm222, %v3856, 0.0
    %3864 = vadd.xlane.f32.xlu0 %v3863
    %v3865 = vpop.xlane.xlu0 %3864
    %v3866 = vmul.f32 %v3859, %v1755
    %v3867 = vmul.f32 %v3862, %v1755
    %v3868 = vmul.f32 %v3865, %v1755
    %v3869 = vadd.f32 %v3866, 1e-05
    %v3870 = vadd.f32 %v3867, 1e-05
    %v3871 = vadd.f32 %v3868, 1e-05
    %v3872 = vrsqrt.pop %v3869
    %v3873 = vrsqrt.pop %v3870
    %v3874 = vrsqrt.pop %v3871
    %v3875 = vmul.f32 %v3851, %v3872
    %v3876 = vmul.f32 %v3852, %v3873
    %v3877 = vmul.f32 %v3853, %v3874
    %v3879 = vlaneseq
    %v3880 = vshrl.u32 %v3879, 7
    %v3881 = vsub.s32 0, %v3880
    %v3882 = vrot.slane %v3836, %v3881
    %v3884 = vmul.f32 %v3875, %v3882
    %v3885 = vmul.f32 %v3876, %v3882
    %v3886 = vmul.f32 %v3877, %v3882
    %v3888 = vlaneseq
    %v3889 = vshrl.u32 %v3888, 7
    %v3890 = vsub.s32 0, %v3889
    %v3891 = vrot.slane %v3838, %v3890
    %v3893 = vadd.f32 %v3884, %v3891
    %v3894 = vadd.f32 %v3885, %v3891
    %v3895 = vadd.f32 %v3886, %v3891
    %v3896 = vld [vmem:[%s13] sm:$0xf]
    %v3897 = vld [vmem:[%s13 + $0x4] sm:$0xf]
    %v3898 = vld [vmem:[%s13 + $0x8] sm:$0xf]
    %v3899 = vld [vmem:[%s13 + $0xc] sm:$0xf]
    %v3900 = vpack.c.bf16 %v3894, %v3893
    %v3901 = vpack.c.bf16 %v3895, %v3895
    %v3902 = vld [vmem:[%s14] sm:$0x1]
    %v3904 = vlaneseq
    %v3905 = vshrl.u32 %v3904, 7
    %v3906 = vsub.s32 0, %v3905
    %v3907 = vrot.slane %v3902, %v3906
    %v3913 = vunpack.c.l.b16 %v3896
    %v3914 = vunpack.c.l.b16 %v3897
    %v3915 = vunpack.c.l.b16 %v3898
    %v3916 = vunpack.c.l.b16 %v3899
    %v3917 = vpack.c.b16 %v3914, %v3913
    %v3918 = vpack.c.b16 %v3916, %v3915
    %v3922 = vsel %vm222, %v3900, 0
    %v3925 = vsel %vm222, %v3901, 0
    %3927 = vmatprep.subr.bf16.mxu0 0
    %3928 = vmatpush1.bf16.msra.mxu0 %v3917
    %3929 = vmatprep.subr.bf16.mxu0 0
    %3930 = vmatpush1.bf16.msra.mxu0 %v3918
    %3931 = vmatprep.subr.bf16.mxu0 0
    %3932 = vmatpush1.bf16.msra.mxu0 0
    %3933 = vmatprep.subr.bf16.mxu0 0
    %3934 = vmatpush1.bf16.msra.mxu0 0
    %3935 = vmatprep.subr.bf16.mxu0 0
    %3936 = vmatpush1.bf16.msra.mxu0 0
    %3937 = vmatprep.subr.bf16.mxu0 0
    %3938 = vmatpush1.bf16.msra.mxu0 0
    %3939 = vmatprep.subr.bf16.mxu0 0
    %3940 = vmatpush1.bf16.msra.mxu0 0
    %3941 = vmatprep.subr.bf16.mxu0 0
    %3942 = vmatpush1.bf16.msra.mxu0 0
    %3943 = vmatprep.subr.bf16.mxu0 0
    %3944 = vmatpush1.bf16.msra.mxu0 0
    %3945 = vmatprep.subr.bf16.mxu0 0
    %3946 = vmatpush1.bf16.msra.mxu0 0
    %3947 = vmatprep.subr.bf16.mxu0 0
    %3948 = vmatpush1.bf16.msra.mxu0 0
    %3949 = vmatprep.subr.bf16.mxu0 0
    %3950 = vmatpush1.bf16.msra.mxu0 0
    %3951 = vmatprep.subr.bf16.mxu0 0
    %3952 = vmatpush1.bf16.msra.mxu0 0
    %3953 = vmatprep.subr.bf16.mxu0 0
    %3954 = vmatpush1.bf16.msra.mxu0 0
    %3955 = vmatprep.subr.bf16.mxu0 0
    %3956 = vmatpush1.bf16.msra.mxu0 0
    %3957 = vmatprep.subr.bf16.mxu0 0
    %3958 = vmatpush1.bf16.msra.mxu0 0
    %3959 = vmatprep.mubr.bf16.mxu0 0
    %3960 = vmatmul.mubr.bf16.gmra.mrb[0].mxu0 %v3922
    %v3961 = vpop.f32.mrb[0].mxu0
    %v3962 = vadd.f32 %v3907, %v3961
    %v3963 = vpop.f32.mrb[0].mxu0
    %v3964 = vpop.f32.mrb[0].mxu0
    %v3965 = vadd.f32 %v3907, %v3964
    %v3966 = vpop.f32.mrb[0].mxu0
    %3967 = vmatprep.mubr.bf16.mxu0 0
    %3968 = vmatmul.mubr.bf16.gmra.mrb[0].mxu0 %v3925
    %v3969 = vpop.f32.mrb[0].mxu0
    %v3970 = vadd.f32 %v3907, %v3969
    %v3971 = vpop.f32.mrb[0].mxu0
    %v3972 = vpop.f32.mrb[0].mxu0
    %v3973 = vpop.f32.mrb[0].mxu0
    %3974 = vdwg.mxu0
    %v3975 = vmax.f32 %v3962, 0.0
    %v3976 = vmax.f32 %v3965, 0.0
    %v3977 = vmax.f32 %v3970, 0.0
    %v3978 = vld [vmem:[#allocation17] sm:$0xf]
    %v3979 = vld [vmem:[#allocation17 + $0x4] sm:$0xf]
    %v3980 = vld [vmem:[#allocation17 + $0x8] sm:$0xf]
    %v3981 = vld [vmem:[#allocation17 + $0xc] sm:$0xf]
    %v3982 = vpack.c.bf16 %v3976, %v3975
    %v3983 = vpack.c.bf16 %v3977, %v3977
    %v3984 = vld [vmem:[%s16] sm:$0x1]
    %v3986 = vlaneseq
    %v3987 = vshrl.u32 %v3986, 7
    %v3988 = vsub.s32 0, %v3987
    %v3989 = vrot.slane %v3984, %v3988
    %v3995 = vunpack.c.l.b16 %v3978
    %v3996 = vunpack.c.l.b16 %v3979
    %v3997 = vunpack.c.l.b16 %v3980
    %v3998 = vunpack.c.l.b16 %v3981
    %v3999 = vpack.c.b16 %v3996, %v3995
    %v4000 = vpack.c.b16 %v3998, %v3997
    %v4004 = vsel %vm222, %v3982, 0
    %v4007 = vsel %vm222, %v3983, 0
    %4009 = vmatprep.subr.bf16.mxu0 0
    %4010 = vmatpush1.bf16.msra.mxu0 %v3999
    %4011 = vmatprep.subr.bf16.mxu0 0
    %4012 = vmatpush1.bf16.msra.mxu0 %v4000
    %4013 = vmatprep.subr.bf16.mxu0 0
    %4014 = vmatpush1.bf16.msra.mxu0 0
    %4015 = vmatprep.subr.bf16.mxu0 0
    %4016 = vmatpush1.bf16.msra.mxu0 0
    %4017 = vmatprep.subr.bf16.mxu0 0
    %4018 = vmatpush1.bf16.msra.mxu0 0
    %4019 = vmatprep.subr.bf16.mxu0 0
    %4020 = vmatpush1.bf16.msra.mxu0 0
    %4021 = vmatprep.subr.bf16.mxu0 0
    %4022 = vmatpush1.bf16.msra.mxu0 0
    %4023 = vmatprep.subr.bf16.mxu0 0
    %4024 = vmatpush1.bf16.msra.mxu0 0
    %4025 = vmatprep.subr.bf16.mxu0 0
    %4026 = vmatpush1.bf16.msra.mxu0 0
    %4027 = vmatprep.subr.bf16.mxu0 0
    %4028 = vmatpush1.bf16.msra.mxu0 0
    %4029 = vmatprep.subr.bf16.mxu0 0
    %4030 = vmatpush1.bf16.msra.mxu0 0
    %4031 = vmatprep.subr.bf16.mxu0 0
    %4032 = vmatpush1.bf16.msra.mxu0 0
    %4033 = vmatprep.subr.bf16.mxu0 0
    %4034 = vmatpush1.bf16.msra.mxu0 0
    %4035 = vmatprep.subr.bf16.mxu0 0
    %4036 = vmatpush1.bf16.msra.mxu0 0
    %4037 = vmatprep.subr.bf16.mxu0 0
    %4038 = vmatpush1.bf16.msra.mxu0 0
    %4039 = vmatprep.subr.bf16.mxu0 0
    %4040 = vmatpush1.bf16.msra.mxu0 0
    %4041 = vmatprep.mubr.bf16.mxu0 0
    %4042 = vmatmul.mubr.bf16.gmra.mrb[0].mxu0 %v4004
    %v4043 = vpop.f32.mrb[0].mxu0
    %v4044 = vadd.f32 %v3989, %v4043
    %v4045 = vpop.f32.mrb[0].mxu0
    %v4046 = vpop.f32.mrb[0].mxu0
    %v4047 = vadd.f32 %v3989, %v4046
    %v4048 = vpop.f32.mrb[0].mxu0
    %4049 = vmatprep.mubr.bf16.mxu0 0
    %4050 = vmatmul.mubr.bf16.gmra.mrb[0].mxu0 %v4007
    %v4051 = vpop.f32.mrb[0].mxu0
    %v4052 = vadd.f32 %v3989, %v4051
    %v4053 = vpop.f32.mrb[0].mxu0
    %v4054 = vpop.f32.mrb[0].mxu0
    %v4055 = vpop.f32.mrb[0].mxu0
    %4056 = vdwg.mxu0
    %v4057 = vsel %vm222, %v4044, 0.0
    %v4058 = vrot.slane %v4057, 4
    %v4059 = vadd.f32 %v4057, %v4058
    %v4060 = vrot.slane %v4059, 2
    %v4061 = vadd.f32 %v4059, %v4060
    %v4062 = vrot.slane %v4061, 1
    %v4063 = vadd.f32 %v4061, %v4062
    %v4064 = vsel %vm222, %v4047, 0.0
    %v4065 = vrot.slane %v4064, 4
    %v4066 = vadd.f32 %v4064, %v4065
    %v4067 = vrot.slane %v4066, 2
    %v4068 = vadd.f32 %v4066, %v4067
    %v4069 = vrot.slane %v4068, 1
    %v4070 = vadd.f32 %v4068, %v4069
    %v4071 = vsel %vm222, %v4052, 0.0
    %v4072 = vrot.slane %v4071, 4
    %v4073 = vadd.f32 %v4071, %v4072
    %v4074 = vrot.slane %v4073, 2
    %v4075 = vadd.f32 %v4073, %v4074
    %v4076 = vrot.slane %v4075, 1
    %v4077 = vadd.f32 %v4075, %v4076
    %v4078 = vrcp.pop 8.0
    %v4079 = vmul.f32 %v4063, %v4078
    %v4080 = vmul.f32 %v4070, %v4078
    %v4081 = vmul.f32 %v4077, %v4078
    %vm4085 = vcmask 1041409
    %v4086 = vsel %vm4085, %v4080, %v4079
    %vm4087 = vcmask 1042434
    %v4088 = vsel %vm4087, %v4081, %v4086
    %vm4090 = vcmask 256000
    %4091 = vst.msk [vmem:[#allocation19] sm:$0x7] %vm4090, %v4088
    // Predicated region
    $region110: #{tpu_custom_call.1} parent=1 // pred_check
      _
    $region111: #{tpu_custom_call.1} parent=1 // pred_check_branch
      %4093 = sbr.rel (0) target = $region113
    $region112: #{tpu_custom_call.1} parent=1 // pred_region
      %s4095 = ssub.s32 64, 64
      %4096 = vsyncadd [#allocation4], %s4095
      %s4098 = sshll.u32 [#allocation19], 4
      %s4099 = int_to_ptr.vmem [resolvable:$true] %s4098
      %4101 = dma.vmem_to_hbm [thread:$0]  %s4099, 64, %s17, [#allocation4]
    $region113: #{tpu_custom_call.1} parent=1 // pred_fallthru
      _
    // Predicated region
    $region114: #{tpu_custom_call.1} parent=1 // pred_check
      _
    $region115: #{tpu_custom_call.1} parent=1 // pred_check_branch
      %4103 = sbr.rel (0) target = $region117
    $region116: #{tpu_custom_call.1} parent=1 // pred_region
      %4104 = dma.done [#allocation4], 64
    $region117: #{tpu_custom_call.1} parent=1 // pred_fallthru
      _
    %4105 = vsyncpa [#allocation3], 1
    %4106 = vsyncpa [#allocation6], 1
    %4107 = vsyncpa [#allocation9], 1
    %4108 = vsyncpa [#allocation12], 1
    %4109 = vsyncpa [#allocation15], 1
    %4110 = vsyncpa [#allocation18], 1
    %4111 = vsyncpa [#allocation4], 1

// kernel: tpu_custom_call.1
$region0: #{tpu_custom_call.1}
  #allocation0 [shape = 'u32[]', space=smem, size = 0x4, offset = 0x4, fixed_abs, tag = 'smem constant byte address 0x4 - core index']
  #allocation1 [shape = 'u32[144,128]{1,0:T(1,128)}', space=vmem, size = 0x12000, scoped, tag = 'internal scratch']
  %s0 = inlined_call_operand.hbm [shape: f32[3,8,32], index: 0, kind: input, shape index: {}]
  %s1 = inlined_call_operand.vmem [shape: bf16[2,32,96], index: 1, kind: input, shape index: {}]
  %s2 = inlined_call_operand.hbm [shape: f32[2,1,96], index: 2, kind: input, shape index: {}]
  %s3 = inlined_call_operand.vmem [shape: bf16[2,32,32], index: 3, kind: input, shape index: {}]
  %s4 = inlined_call_operand.hbm [shape: f32[2,1,32], index: 4, kind: input, shape index: {}]
  %s5 = inlined_call_operand.hbm [shape: f32[2,1,32], index: 5, kind: input, shape index: {}]
  %s6 = inlined_call_operand.hbm [shape: f32[2,1,32], index: 6, kind: input, shape index: {}]
  %s7 = inlined_call_operand.hbm [shape: f32[2,1,32], index: 7, kind: input, shape index: {}]
  %s8 = inlined_call_operand.hbm [shape: f32[2,1,32], index: 8, kind: input, shape index: {}]
  %s9 = inlined_call_operand.vmem [shape: bf16[2,32,64], index: 9, kind: input, shape index: {}]
  %s10 = inlined_call_operand.hbm [shape: f32[2,1,64], index: 10, kind: input, shape index: {}]
  %s11 = inlined_call_operand.vmem [shape: bf16[2,64,32], index: 11, kind: input, shape index: {}]
  %s12 = inlined_call_operand.hbm [shape: f32[2,1,32], index: 12, kind: input, shape index: {}]
  %s13 = inlined_call_operand.vmem [shape: bf16[32,32], index: 13, kind: input, shape index: {}]
  %s14 = inlined_call_operand.vmem [shape: f32[1,32], index: 14, kind: input, shape index: {}]
  %s15 = inlined_call_operand.hbm [shape: bf16[32,32], index: 15, kind: input, shape index: {}]
  %s16 = inlined_call_operand.vmem [shape: f32[1,32], index: 16, kind: input, shape index: {}]
  %s17 = inlined_call_operand.hbm [shape: f32[3,32], index: 17, kind: output, shape index: {}]
  %s18 = sld [smem:[#allocation0]]
  $region118: #{tpu_custom_call.1} parent=0
    _
  %s20 = ssub.s32 1, %s18
  %s21 = scalar_select 0, %s20, %s18
  $region1: #{tpu_custom_call.1} parent=0
    #allocation2 [shape = 'u8[12288]{0}', space=vmem, size = 0x3000, scoped, tag = 'input window, operand 0, single buffered']
    #allocation3 [shape = 's32[1]{0}', space=sflag, size = 0x4, scoped, tag = 'scoped memory for tpu_custom_call.1']
    #allocation4 [shape = 's32[1]{0}', space=sflag, size = 0x4, scoped, tag = 'scoped memory for tpu_custom_call.1']
    #allocation5 [shape = 'u8[1024]{0}', space=vmem, size = 0x400, scoped, tag = 'input window, operand 2, single buffered']
    #allocation6 [shape = 's32[1]{0}', space=sflag, size = 0x4, scoped, tag = 'scoped memory for tpu_custom_call.1']
    #allocation7 [shape = 'u8[1024]{0}', space=vmem, size = 0x400, scoped, tag = 'input window, operand 4, single buffered']
    #allocation8 [shape = 'u8[1024]{0}', space=vmem, size = 0x400, scoped, tag = 'input window, operand 5, single buffered']
    #allocation9 [shape = 's32[1]{0}', space=sflag, size = 0x4, scoped, tag = 'scoped memory for tpu_custom_call.1']
    #allocation10 [shape = 'u8[1024]{0}', space=vmem, size = 0x400, scoped, tag = 'input window, operand 6, single buffered']
    #allocation11 [shape = 'u8[1024]{0}', space=vmem, size = 0x400, scoped, tag = 'input window, operand 7, single buffered']
    #allocation12 [shape = 's32[1]{0}', space=sflag, size = 0x4, scoped, tag = 'scoped memory for tpu_custom_call.1']
    #allocation13 [shape = 'u8[1024]{0}', space=vmem, size = 0x400, scoped, tag = 'input window, operand 8, single buffered']
    #allocation14 [shape = 'u8[1024]{0}', space=vmem, size = 0x400, scoped, tag = 'input window, operand 10, single buffered']
    #allocation15 [shape = 's32[1]{0}', space=sflag, size = 0x4, scoped, tag = 'scoped memory for tpu_custom_call.1']
    #allocation16 [shape = 'u8[1024]{0}', space=vmem, size = 0x400, scoped, tag = 'input window, operand 12, single buffered']
    #allocation17 [shape = 'u8[8192]{0}', space=vmem, size = 0x2000, scoped, tag = 'input window, operand 15, single buffered']
    #allocation18 [shape = 's32[1]{0}', space=sflag, size = 0x4, scoped, tag = 'scoped memory for tpu_custom_call.1']
    #allocation19 [shape = 'u8[2048]{0}', space=vmem, size = 0x800, scoped, tag = 'output window, operand 0, single buffered']
    %22 = vsyncpa [#allocation3], 0
    %23 = vsyncpa [#allocation6], 0
    %24 = vsyncpa [#allocation9], 0
    %25 = vsyncpa [#allocation12], 0
    %26 = vsyncpa [#allocation15], 0
    %27 = vsyncpa [#allocation18], 0
    %28 = vsyncpa [#allocation4], 0
    // Predicated region
    $region2: #{tpu_custom_call.1} parent=1 // pred_check
      _
    $region3: #{tpu_custom_call.1} parent=1 // pred_check_branch
      %30 = sbr.rel (0) target = $region5
    $region4: #{tpu_custom_call.1} parent=1 // pred_region
      %s32 = ssub.s32 384, 384
      %33 = vsyncadd [#allocation3], %s32
      %s34 = sshll.u32 [#allocation2], 4
      %s35 = int_to_ptr.vmem [resolvable:$true] %s34
      %40 = dma.hbm_to_vmem [thread:$0]  %s0, 384, %s35, [#allocation3], 128, 128, 8
    $region5: #{tpu_custom_call.1} parent=1 // pred_fallthru
      _
    // Predicated region
    $region6: #{tpu_custom_call.1} parent=1 // pred_check
      _
    $region7: #{tpu_custom_call.1} parent=1 // pred_check_branch
      %42 = sbr.rel (0) target = $region9
    $region8: #{tpu_custom_call.1} parent=1 // pred_region
      _
    $region9: #{tpu_custom_call.1} parent=1 // pred_fallthru
      _
    // Predicated region
    $region10: #{tpu_custom_call.1} parent=1 // pred_check
      _
    $region11: #{tpu_custom_call.1} parent=1 // pred_check_branch
      %44 = sbr.rel (0) target = $region13
    $region12: #{tpu_custom_call.1} parent=1 // pred_region
      %s46 = ssub.s32 32, 32
      %47 = vsyncadd [#allocation6], %s46
      %s48 = sshll.u32 [#allocation5], 4
      %s49 = int_to_ptr.vmem [resolvable:$true] %s48
      %54 = dma.hbm_to_vmem [thread:$0]  %s2, 32, %s49, [#allocation6], 16, 16, 1
    $region13: #{tpu_custom_call.1} parent=1 // pred_fallthru
      _
    // Predicated region
    $region14: #{tpu_custom_call.1} parent=1 // pred_check
      _
    $region15: #{tpu_custom_call.1} parent=1 // pred_check_branch
      %56 = sbr.rel (0) target = $region17
    $region16: #{tpu_custom_call.1} parent=1 // pred_region
      _
    $region17: #{tpu_custom_call.1} parent=1 // pred_fallthru
      _
    // Predicated region
    $region18: #{tpu_custom_call.1} parent=1 // pred_check
      _
    $region19: #{tpu_custom_call.1} parent=1 // pred_check_branch
      %58 = sbr.rel (0) target = $region21
    $region20: #{tpu_custom_call.1} parent=1 // pred_region
      %s60 = ssub.s32 32, 32
      %61 = vsyncadd [#allocation6], %s60
      %s62 = sshll.u32 [#allocation7], 4
      %s63 = int_to_ptr.vmem [resolvable:$true] %s62
      %68 = dma.hbm_to_vmem [thread:$0]  %s4, 32, %s63, [#allocation6], 16, 16, 1
    $region21: #{tpu_custom_call.1} parent=1 // pred_fallthru
      _
    // Predicated region
    $region22: #{tpu_custom_call.1} parent=1 // pred_check
      _
    $region23: #{tpu_custom_call.1} parent=1 // pred_check_branch
      %70 = sbr.rel (0) target = $region25
    $region24: #{tpu_custom_call.1} parent=1 // pred_region
      %s72 = ssub.s32 32, 32
      %73 = vsyncadd [#allocation9], %s72
      %s74 = sshll.u32 [#allocation8], 4
      %s75 = int_to_ptr.vmem [resolvable:$true] %s74
      %80 = dma.hbm_to_vmem [thread:$0]  %s5, 32, %s75, [#allocation9], 16, 16, 1
    $region25: #{tpu_custom_call.1} parent=1 // pred_fallthru
      _
    // Predicated region
    $region26: #{tpu_custom_call.1} parent=1 // pred_check
      _
    $region27: #{tpu_custom_call.1} parent=1 // pred_check_branch
      %82 = sbr.rel (0) target = $region29
    $region28: #{tpu_custom_call.1} parent=1 // pred_region
      %s84 = ssub.s32 32, 32
      %85 = vsyncadd [#allocation9], %s84
      %s86 = sshll.u32 [#allocation10], 4
      %s87 = int_to_ptr.vmem [resolvable:$true] %s86
      %92 = dma.hbm_to_vmem [thread:$0]  %s6, 32, %s87, [#allocation9], 16, 16, 1
    $region29: #{tpu_custom_call.1} parent=1 // pred_fallthru
      _
    // Predicated region
    $region30: #{tpu_custom_call.1} parent=1 // pred_check
      _
    $region31: #{tpu_custom_call.1} parent=1 // pred_check_branch
      %94 = sbr.rel (0) target = $region33
    $region32: #{tpu_custom_call.1} parent=1 // pred_region
      %s96 = ssub.s32 32, 32
      %97 = vsyncadd [#allocation12], %s96
      %s98 = sshll.u32 [#allocation11], 4
      %s99 = int_to_ptr.vmem [resolvable:$true] %s98
      %104 = dma.hbm_to_vmem [thread:$0]  %s7, 32, %s99, [#allocation12], 16, 16, 1
    $region33: #{tpu_custom_call.1} parent=1 // pred_fallthru
      _
    // Predicated region
    $region34: #{tpu_custom_call.1} parent=1 // pred_check
      _
    $region35: #{tpu_custom_call.1} parent=1 // pred_check_branch
      %106 = sbr.rel (0) target = $region37
    $region36: #{tpu_custom_call.1} parent=1 // pred_region
      %s108 = ssub.s32 32, 32
      %109 = vsyncadd [#allocation12], %s108
      %s110 = sshll.u32 [#allocation13], 4
      %s111 = int_to_ptr.vmem [resolvable:$true] %s110
      %116 = dma.hbm_to_vmem [thread:$0]  %s8, 32, %s111, [#allocation12], 16, 16, 1
    $region37: #{tpu_custom_call.1} parent=1 // pred_fallthru
      _
    // Predicated region
    $region38: #{tpu_custom_call.1} parent=1 // pred_check
      _
    $region39: #{tpu_custom_call.1} parent=1 // pred_check_branch
      %118 = sbr.rel (0) target = $region41
    $region40: #{tpu_custom_call.1} parent=1 // pred_region
      _
    $region41: #{tpu_custom_call.1} parent=1 // pred_fallthru
      _
    // Predicated region
    $region42: #{tpu_custom_call.1} parent=1 // pred_check
      _
    $region43: #{tpu_custom_call.1} parent=1 // pred_check_branch
      %120 = sbr.rel (0) target = $region45
    $region44: #{tpu_custom_call.1} parent=1 // pred_region
      %s122 = ssub.s32 32, 32
      %123 = vsyncadd [#allocation15], %s122
      %s124 = sshll.u32 [#allocation14], 4
      %s125 = int_to_ptr.vmem [resolvable:$true] %s124
      %130 = dma.hbm_to_vmem [thread:$0]  %s10, 32, %s125, [#allocation15], 16, 16, 1
    $region45: #{tpu_custom_call.1} parent=1 // pred_fallthru
      _
    // Predicated region
    $region46: #{tpu_custom_call.1} parent=1 // pred_check
      _
    $region47: #{tpu_custom_call.1} parent=1 // pred_check_branch
      %132 = sbr.rel (0) target = $region49
    $region48: #{tpu_custom_call.1} parent=1 // pred_region
      _
    $region49: #{tpu_custom_call.1} parent=1 // pred_fallthru
      _
    // Predicated region
    $region50: #{tpu_custom_call.1} parent=1 // pred_check
      _
    $region51: #{tpu_custom_call.1} parent=1 // pred_check_branch
      %134 = sbr.rel (0) target = $region53
    $region52: #{tpu_custom_call.1} parent=1 // pred_region
      %s136 = ssub.s32 32, 32
      %137 = vsyncadd [#allocation15], %s136
      %s138 = sshll.u32 [#allocation16], 4
      %s139 = int_to_ptr.vmem [resolvable:$true] %s138
      %144 = dma.hbm_to_vmem [thread:$0]  %s12, 32, %s139, [#allocation15], 16, 16, 1
    $region53: #{tpu_custom_call.1} parent=1 // pred_fallthru
      _
    // Predicated region
    $region54: #{tpu_custom_call.1} parent=1 // pred_check
      _
    $region55: #{tpu_custom_call.1} parent=1 // pred_check_branch
      %146 = sbr.rel (0) target = $region57
    $region56: #{tpu_custom_call.1} parent=1 // pred_region
      _
    $region57: #{tpu_custom_call.1} parent=1 // pred_fallthru
      _
    // Predicated region
    $region58: #{tpu_custom_call.1} parent=1 // pred_check
      _
    $region59: #{tpu_custom_call.1} parent=1 // pred_check_branch
      %148 = sbr.rel (0) target = $region61
    $region60: #{tpu_custom_call.1} parent=1 // pred_region
      _
    $region61: #{tpu_custom_call.1} parent=1 // pred_fallthru
      _
    // Predicated region
    $region62: #{tpu_custom_call.1} parent=1 // pred_check
      _
    $region63: #{tpu_custom_call.1} parent=1 // pred_check_branch
      %150 = sbr.rel (0) target = $region65
    $region64: #{tpu_custom_call.1} parent=1 // pred_region
      %s152 = ssub.s32 256, 256
      %153 = vsyncadd [#allocation18], %s152
      %s154 = sshll.u32 [#allocation17], 4
      %s155 = int_to_ptr.vmem [resolvable:$true] %s154
      %160 = dma.hbm_to_vmem [thread:$0]  %s15, 256, %s155, [#allocation18], 64, 64, 4
    $region65: #{tpu_custom_call.1} parent=1 // pred_fallthru
      _
    // Predicated region
    $region66: #{tpu_custom_call.1} parent=1 // pred_check
      _
    $region67: #{tpu_custom_call.1} parent=1 // pred_check_branch
      %162 = sbr.rel (0) target = $region69
    $region68: #{tpu_custom_call.1} parent=1 // pred_region
      _
    $region69: #{tpu_custom_call.1} parent=1 // pred_fallthru
      _
    // Predicated region
    $region70: #{tpu_custom_call.1} parent=1 // pred_check
      _
    $region71: #{tpu_custom_call.1} parent=1 // pred_check_branch
      %164 = sbr.rel (0) target = $region73
    $region72: #{tpu_custom_call.1} parent=1 // pred_region
      %165 = dma.done [#allocation3], 384
    $region73: #{tpu_custom_call.1} parent=1 // pred_fallthru
      _
    // Predicated region
    $region74: #{tpu_custom_call.1} parent=1 // pred_check
      _
    $region75: #{tpu_custom_call.1} parent=1 // pred_check_branch
      %167 = sbr.rel (0) target = $region77
    $region76: #{tpu_custom_call.1} parent=1 // pred_region
      %168 = dma.done [#allocation6], 32
    $region77: #{tpu_custom_call.1} parent=1 // pred_fallthru
      _
    // Predicated region
    $region78: #{tpu_custom_call.1} parent=1 // pred_check
      _
    $region79: #{tpu_custom_call.1} parent=1 // pred_check_branch
      %170 = sbr.rel (0) target = $region81
    $region80: #{tpu_custom_call.1} parent=1 // pred_region
      %171 = dma.done [#allocation6], 32
    $region81: #{tpu_custom_call.1} parent=1 // pred_fallthru
      _
    // Predicated region
    $region82: #{tpu_custom_call.1} parent=1 // pred_check
      _
    $region83: #{tpu_custom_call.1} parent=1 // pred_check_branch
      %173 = sbr.rel (0) target = $region85
    $region84: #{tpu_custom_call.1} parent=1 // pred_region
      %174 = dma.done [#allocation9], 32
    $region85: #{tpu_custom_call.1} parent=1 // pred_fallthru
      _
    // Predicated region
    $region86: #{tpu_custom_call.1} parent=1 // pred_check
      _
    $region87: #{tpu_custom_call.1} parent=1 // pred_check_branch
      %176 = sbr.rel (0) target = $region89
    $region88: #{tpu_custom_call.1} parent=1 // pred_region
      %177 = dma.done [#allocation9], 32
    $region89: #{tpu_custom_call.1} parent=1 // pred_fallthru
      _
    // Predicated region
    $region90: #{tpu_custom_call.1} parent=1 // pred_check
      _
    $region91: #{tpu_custom_call.1} parent=1 // pred_check_branch
      %179 = sbr.rel (0) target = $region93
    $region92: #{tpu_custom_call.1} parent=1 // pred_region
      %180 = dma.done [#allocation12], 32
    $region93: #{tpu_custom_call.1} parent=1 // pred_fallthru
      _
    // Predicated region
    $region94: #{tpu_custom_call.1} parent=1 // pred_check
      _
    $region95: #{tpu_custom_call.1} parent=1 // pred_check_branch
      %182 = sbr.rel (0) target = $region97
    $region96: #{tpu_custom_call.1} parent=1 // pred_region
      %183 = dma.done [#allocation12], 32
    $region97: #{tpu_custom_call.1} parent=1 // pred_fallthru
      _
    // Predicated region
    $region98: #{tpu_custom_call.1} parent=1 // pred_check
      _
    $region99: #{tpu_custom_call.1} parent=1 // pred_check_branch
      %185 = sbr.rel (0) target = $region101
    $region100: #{tpu_custom_call.1} parent=1 // pred_region
      %186 = dma.done [#allocation15], 32
    $region101: #{tpu_custom_call.1} parent=1 // pred_fallthru
      _
    // Predicated region
    $region102: #{tpu_custom_call.1} parent=1 // pred_check
      _
    $region103: #{tpu_custom_call.1} parent=1 // pred_check_branch
      %188 = sbr.rel (0) target = $region105
    $region104: #{tpu_custom_call.1} parent=1 // pred_region
      %189 = dma.done [#allocation15], 32
    $region105: #{tpu_custom_call.1} parent=1 // pred_fallthru
      _
    // Predicated region
    $region106: #{tpu_custom_call.1} parent=1 // pred_check
      _
    $region107: #{tpu_custom_call.1} parent=1 // pred_check_branch
      %191 = sbr.rel (0) target = $region109
    $region108: #{tpu_custom_call.1} parent=1 // pred_region
      %192 = dma.done [#allocation18], 256
    $region109: #{tpu_custom_call.1} parent=1 // pred_fallthru
      _
    %v194 = vld [vmem:[#allocation2] sm:$0xff]
    %v195 = vld [vmem:[#allocation2 + $0x8] sm:$0xff]
    %v196 = vld [vmem:[#allocation2 + $0x10] sm:$0xff]
    %v197 = vld [vmem:[%s1] sm:$0xf]
    %v198 = vld [vmem:[%s1 + $0x4] sm:$0xf]
    %v199 = vld [vmem:[%s1 + $0x8] sm:$0xf]
    %v200 = vld [vmem:[%s1 + $0xc] sm:$0xf]
    %v201 = vpack.c.bf16 %v195, %v194
    %v202 = vpack.c.bf16 %v196, %v196
    %v203 = vld [vmem:[#allocation5] sm:$0x1]
    %v205 = vlaneseq
    %v206 = vshrl.u32 %v205, 7
    %v207 = vsub.s32 0, %v206
    %v208 = vrot.slane %v203, %v207
    %v214 = vunpack.c.l.b16 %v197
    %v215 = vunpack.c.l.b16 %v198
    %v216 = vunpack.c.l.b16 %v199
    %v217 = vunpack.c.l.b16 %v200
    %v218 = vpack.c.b16 %v215, %v214
    %v219 = vpack.c.b16 %v217, %v216
    %vm222 = vcmask 261120
    %v224 = vsel %vm222, %v201, 0
    %v227 = vsel %vm222, %v202, 0
    %229 = vmatprep.subr.bf16.mxu0 0
    %230 = vmatpush1.bf16.msra.mxu0 %v218
    %231 = vmatprep.subr.bf16.mxu0 0
    %232 = vmatpush1.bf16.msra.mxu0 %v219
    %233 = vmatprep.subr.bf16.mxu0 0
    %234 = vmatpush1.bf16.msra.mxu0 0
    %235 = vmatprep.subr.bf16.mxu0 0
    %236 = vmatpush1.bf16.msra.mxu0 0
    %237 = vmatprep.subr.bf16.mxu0 0
    %238 = vmatpush1.bf16.msra.mxu0 0
    %239 = vmatprep.subr.bf16.mxu0 0
    %240 = vmatpush1.bf16.msra.mxu0 0
    %241 = vmatprep.subr.bf16.mxu0 0
    %242 = vmatpush1.bf16.msra.mxu0 0
    %243 = vmatprep.subr.bf16.mxu0 0
    %244 = vmatpush1.bf16.msra.mxu0 0
    %245 = vmatprep.subr.bf16.mxu0 0
    %246 = vmatpush1.bf16.msra.mxu0 0
    %247 = vmatprep.subr.bf16.mxu0 0
    %248 = vmatpush1.bf16.msra.mxu0 0
    %249 = vmatprep.subr.bf16.mxu0 0
    %250 = vmatpush1.bf16.msra.mxu0 0
    %251 = vmatprep.subr.bf16.mxu0 0
    %252 = vmatpush1.bf16.msra.mxu0 0
    %253 = vmatprep.subr.bf16.mxu0 0
    %254 = vmatpush1.bf16.msra.mxu0 0
    %255 = vmatprep.subr.bf16.mxu0 0
    %256 = vmatpush1.bf16.msra.mxu0 0
    %257 = vmatprep.subr.bf16.mxu0 0
    %258 = vmatpush1.bf16.msra.mxu0 0
    %259 = vmatprep.subr.bf16.mxu0 0
    %260 = vmatpush1.bf16.msra.mxu0 0
    %261 = vmatprep.mubr.bf16.mxu0 0
    %262 = vmatmul.mubr.bf16.gmra.mrb[0].mxu0 %v224
    %v263 = vpop.f32.mrb[0].mxu0
    %v264 = vadd.f32 %v208, %v263
    %v265 = vpop.f32.mrb[0].mxu0
    %v266 = vpop.f32.mrb[0].mxu0
    %v267 = vadd.f32 %v208, %v266
    %v268 = vpop.f32.mrb[0].mxu0
    %269 = vmatprep.mubr.bf16.mxu0 0
    %270 = vmatmul.mubr.bf16.gmra.mrb[0].mxu0 %v227
    %v271 = vpop.f32.mrb[0].mxu0
    %v272 = vadd.f32 %v208, %v271
    %v273 = vpop.f32.mrb[0].mxu0
    %v274 = vpop.f32.mrb[0].mxu0
    %v275 = vpop.f32.mrb[0].mxu0
    %276 = vdwg.mxu0
    %v277 = vpack.c.bf16 %v267, %v264
    %v278 = vpack.c.bf16 %v272, %v272
    %v281 = vunpack.c.l.b16 %v277
    %v282 = vunpack.c.h.b16 %v277
    %v283 = vunpack.c.l.b16 %v278
    %v284 = vpack.c.b16 %v281, %v281
    %v285 = vpack.c.b16 %v282, %v282
    %v286 = vpack.c.b16 %v283, %v283
    %287 = vrot.lane.b32.xlu0 %v284, 96
    %v288 = vpop.permute.xlu0 %287
    %vm289 = vcmask 64512
    %v291 = vsel %vm289, %v284, 0
    %v294 = vsel %vm289, %v288, 0
    %296 = vmatprep.subr.bf16.mxu0 0
    %297 = vmatpush1.bf16.xpose.msra.mxu0 %v294
    %298 = vmatprep.subr.bf16.mxu0 0
    %299 = vmatpush1.bf16.xpose.msra.mxu0 0
    %300 = vmatprep.subr.bf16.mxu0 0
    %301 = vmatpush1.bf16.xpose.msra.mxu0 0
    %302 = vmatprep.subr.bf16.mxu0 0
    %303 = vmatpush1.bf16.xpose.msra.mxu0 0
    %304 = vmatprep.subr.bf16.mxu0 0
    %305 = vmatpush1.bf16.xpose.msra.mxu0 0
    %306 = vmatprep.subr.bf16.mxu0 0
    %307 = vmatpush1.bf16.xpose.msra.mxu0 0
    %308 = vmatprep.subr.bf16.mxu0 0
    %309 = vmatpush1.bf16.xpose.msra.mxu0 0
    %310 = vmatprep.subr.bf16.mxu0 0
    %311 = vmatpush1.bf16.xpose.msra.mxu0 0
    %312 = vmatprep.subr.bf16.mxu0 0
    %313 = vmatpush1.bf16.xpose.msra.mxu0 0
    %314 = vmatprep.subr.bf16.mxu0 0
    %315 = vmatpush1.bf16.xpose.msra.mxu0 0
    %316 = vmatprep.subr.bf16.mxu0 0
    %317 = vmatpush1.bf16.xpose.msra.mxu0 0
    %318 = vmatprep.subr.bf16.mxu0 0
    %319 = vmatpush1.bf16.xpose.msra.mxu0 0
    %320 = vmatprep.subr.bf16.mxu0 0
    %321 = vmatpush1.bf16.xpose.msra.mxu0 0
    %322 = vmatprep.subr.bf16.mxu0 0
    %323 = vmatpush1.bf16.xpose.msra.mxu0 0
    %324 = vmatprep.subr.bf16.mxu0 0
    %325 = vmatpush1.bf16.xpose.msra.mxu0 0
    %326 = vmatprep.subr.bf16.mxu0 0
    %327 = vmatpush1.bf16.xpose.msra.mxu0 0
    %328 = vmatprep.mubr.bf16.mxu0 0
    %329 = vmatmul.mubr.bf16.gmra.mrb[0].mxu0 %v291
    %v330 = vpop.f32.mrb[0].mxu0
    %v331 = vadd.f32 0.0, %v330
    %v332 = vpop.f32.mrb[0].mxu0
    %v333 = vpop.f32.mrb[0].mxu0
    %v334 = vpop.f32.mrb[0].mxu0
    %335 = vdwg.mxu0
    %336 = vrot.lane.b32.xlu0 %v285, 96
    %v337 = vpop.permute.xlu0 %336
    %v339 = vsel %vm289, %v285, 0
    %v342 = vsel %vm289, %v337, 0
    %344 = vmatprep.subr.bf16.mxu0 0
    %345 = vmatpush1.bf16.xpose.msra.mxu0 %v342
    %346 = vmatprep.subr.bf16.mxu0 0
    %347 = vmatpush1.bf16.xpose.msra.mxu0 0
    %348 = vmatprep.subr.bf16.mxu0 0
    %349 = vmatpush1.bf16.xpose.msra.mxu0 0
    %350 = vmatprep.subr.bf16.mxu0 0
    %351 = vmatpush1.bf16.xpose.msra.mxu0 0
    %352 = vmatprep.subr.bf16.mxu0 0
    %353 = vmatpush1.bf16.xpose.msra.mxu0 0
    %354 = vmatprep.subr.bf16.mxu0 0
    %355 = vmatpush1.bf16.xpose.msra.mxu0 0
    %356 = vmatprep.subr.bf16.mxu0 0
    %357 = vmatpush1.bf16.xpose.msra.mxu0 0
    %358 = vmatprep.subr.bf16.mxu0 0
    %359 = vmatpush1.bf16.xpose.msra.mxu0 0
    %360 = vmatprep.subr.bf16.mxu0 0
    %361 = vmatpush1.bf16.xpose.msra.mxu0 0
    %362 = vmatprep.subr.bf16.mxu0 0
    %363 = vmatpush1.bf16.xpose.msra.mxu0 0
    %364 = vmatprep.subr.bf16.mxu0 0
    %365 = vmatpush1.bf16.xpose.msra.mxu0 0
    %366 = vmatprep.subr.bf16.mxu0 0
    %367 = vmatpush1.bf16.xpose.msra.mxu0 0
    %368 = vmatprep.subr.bf16.mxu0 0
    %369 = vmatpush1.bf16.xpose.msra.mxu0 0
    %370 = vmatprep.subr.bf16.mxu0 0
    %371 = vmatpush1.bf16.xpose.msra.mxu0 0
    %372 = vmatprep.subr.bf16.mxu0 0
    %373 = vmatpush1.bf16.xpose.msra.mxu0 0
    %374 = vmatprep.subr.bf16.mxu0 0
    %375 = vmatpush1.bf16.xpose.msra.mxu0 0
    %376 = vmatprep.mubr.bf16.mxu0 0
    %377 = vmatmul.mubr.bf16.gmra.mrb[0].mxu0 %v339
    %v378 = vpop.f32.mrb[0].mxu0
    %v379 = vadd.f32 0.0, %v378
    %v380 = vpop.f32.mrb[0].mxu0
    %v381 = vpop.f32.mrb[0].mxu0
    %v382 = vpop.f32.mrb[0].mxu0
    %383 = vdwg.mxu0
    %384 = vrot.lane.b32.xlu0 %v286, 96
    %v385 = vpop.permute.xlu0 %384
    %v387 = vsel %vm289, %v286, 0
    %v390 = vsel %vm289, %v385, 0
    %392 = vmatprep.subr.bf16.mxu0 0
    %393 = vmatpush1.bf16.xpose.msra.mxu0 %v390
    %394 = vmatprep.subr.bf16.mxu0 0
    %395 = vmatpush1.bf16.xpose.msra.mxu0 0
    %396 = vmatprep.subr.bf16.mxu0 0
    %397 = vmatpush1.bf16.xpose.msra.mxu0 0
    %398 = vmatprep.subr.bf16.mxu0 0
    %399 = vmatpush1.bf16.xpose.msra.mxu0 0
    %400 = vmatprep.subr.bf16.mxu0 0
    %401 = vmatpush1.bf16.xpose.msra.mxu0 0
    %402 = vmatprep.subr.bf16.mxu0 0
    %403 = vmatpush1.bf16.xpose.msra.mxu0 0
    %404 = vmatprep.subr.bf16.mxu0 0
    %405 = vmatpush1.bf16.xpose.msra.mxu0 0
    %406 = vmatprep.subr.bf16.mxu0 0
    %407 = vmatpush1.bf16.xpose.msra.mxu0 0
    %408 = vmatprep.subr.bf16.mxu0 0
    %409 = vmatpush1.bf16.xpose.msra.mxu0 0
    %410 = vmatprep.subr.bf16.mxu0 0
    %411 = vmatpush1.bf16.xpose.msra.mxu0 0
    %412 = vmatprep.subr.bf16.mxu0 0
    %413 = vmatpush1.bf16.xpose.msra.mxu0 0
    %414 = vmatprep.subr.bf16.mxu0 0
    %415 = vmatpush1.bf16.xpose.msra.mxu0 0
    %416 = vmatprep.subr.bf16.mxu0 0
    %417 = vmatpush1.bf16.xpose.msra.mxu0 0
    %418 = vmatprep.subr.bf16.mxu0 0
    %419 = vmatpush1.bf16.xpose.msra.mxu0 0
    %420 = vmatprep.subr.bf16.mxu0 0
    %421 = vmatpush1.bf16.xpose.msra.mxu0 0
    %422 = vmatprep.subr.bf16.mxu0 0
    %423 = vmatpush1.bf16.xpose.msra.mxu0 0
    %424 = vmatprep.mubr.bf16.mxu0 0
    %425 = vmatmul.mubr.bf16.gmra.mrb[0].mxu0 %v387
    %v426 = vpop.f32.mrb[0].mxu0
    %v427 = vadd.f32 0.0, %v426
    %v428 = vpop.f32.mrb[0].mxu0
    %v429 = vpop.f32.mrb[0].mxu0
    %v430 = vpop.f32.mrb[0].mxu0
    %431 = vdwg.mxu0
    %v432 = vsel %vm289, %v331, -inf
    %433 = vmax.xlane.f32.xlu0 %v432
    %v434 = vpop.xlane.xlu0 %433
    %v435 = vsel %vm289, %v379, -inf
    %436 = vmax.xlane.f32.xlu0 %v435
    %v437 = vpop.xlane.xlu0 %436
    %v438 = vsel %vm289, %v427, -inf
    %439 = vmax.xlane.f32.xlu0 %v438
    %v440 = vpop.xlane.xlu0 %439
    %v441 = vsub.f32 %v331, %v434
    %v442 = vsub.f32 %v379, %v437
    %v443 = vsub.f32 %v427, %v440
    %v444 = vmul.f32 %v441, 1.442695
    %v445 = vpow.pop %v444
    %v446 = vmul.f32 %v442, 1.442695
    %v447 = vpow.pop %v446
    %v448 = vmul.f32 %v443, 1.442695
    %v449 = vpow.pop %v448
    %v450 = vsel %vm289, %v445, 0.0
    %451 = vadd.xlane.f32.xlu0 %v450
    %v452 = vpop.xlane.xlu0 %451
    %v453 = vsel %vm289, %v447, 0.0
    %454 = vadd.xlane.f32.xlu0 %v453
    %v455 = vpop.xlane.xlu0 %454
    %v456 = vsel %vm289, %v449, 0.0
    %457 = vadd.xlane.f32.xlu0 %v456
    %v458 = vpop.xlane.xlu0 %457
    %v459 = vrcp.pop %v452
    %v460 = vmul.f32 1.0, %v459
    %v461 = vrcp.pop %v455
    %v462 = vmul.f32 1.0, %v461
    %v463 = vrcp.pop %v458
    %v464 = vmul.f32 1.0, %v463
    %v465 = vpack.c.bf16 %v445, %v445
    %v466 = vpack.c.bf16 %v447, %v447
    %v467 = vpack.c.bf16 %v449, %v449
    %468 = vrot.lane.b32.xlu0 %v284, 64
    %v469 = vpop.permute.xlu0 %468
    %v471 = vsel %vm289, %v465, 0
    %vm473 = vcmask 1043456
    %v475 = vsel %vm473, %v469, 0
    %477 = vmatprep.subr.bf16.mxu0 0
    %478 = vmatpush1.bf16.msra.mxu0 %v475
    %479 = vmatprep.subr.bf16.mxu0 0
    %480 = vmatpush1.bf16.msra.mxu0 0
    %481 = vmatprep.subr.bf16.mxu0 0
    %482 = vmatpush1.bf16.msra.mxu0 0
    %483 = vmatprep.subr.bf16.mxu0 0
    %484 = vmatpush1.bf16.msra.mxu0 0
    %485 = vmatprep.subr.bf16.mxu0 0
    %486 = vmatpush1.bf16.msra.mxu0 0
    %487 = vmatprep.subr.bf16.mxu0 0
    %488 = vmatpush1.bf16.msra.mxu0 0
    %489 = vmatprep.subr.bf16.mxu0 0
    %490 = vmatpush1.bf16.msra.mxu0 0
    %491 = vmatprep.subr.bf16.mxu0 0
    %492 = vmatpush1.bf16.msra.mxu0 0
    %493 = vmatprep.subr.bf16.mxu0 0
    %494 = vmatpush1.bf16.msra.mxu0 0
    %495 = vmatprep.subr.bf16.mxu0 0
    %496 = vmatpush1.bf16.msra.mxu0 0
    %497 = vmatprep.subr.bf16.mxu0 0
    %498 = vmatpush1.bf16.msra.mxu0 0
    %499 = vmatprep.subr.bf16.mxu0 0
    %500 = vmatpush1.bf16.msra.mxu0 0
    %501 = vmatprep.subr.bf16.mxu0 0
    %502 = vmatpush1.bf16.msra.mxu0 0
    %503 = vmatprep.subr.bf16.mxu0 0
    %504 = vmatpush1.bf16.msra.mxu0 0
    %505 = vmatprep.subr.bf16.mxu0 0
    %506 = vmatpush1.bf16.msra.mxu0 0
    %507 = vmatprep.subr.bf16.mxu0 0
    %508 = vmatpush1.bf16.msra.mxu0 0
    %509 = vmatprep.mubr.bf16.mxu0 0
    %510 = vmatmul.mubr.bf16.gmra.mrb[0].mxu0 %v471
    %v511 = vpop.f32.mrb[0].mxu0
    %v512 = vadd.f32 0.0, %v511
    %v513 = vpop.f32.mrb[0].mxu0
    %v514 = vpop.f32.mrb[0].mxu0
    %v515 = vpop.f32.mrb[0].mxu0
    %516 = vdwg.mxu0
    %517 = vrot.lane.b32.xlu0 %v285, 64
    %v518 = vpop.permute.xlu0 %517
    %v520 = vsel %vm289, %v466, 0
    %v523 = vsel %vm473, %v518, 0
    %525 = vmatprep.subr.bf16.mxu0 0
    %526 = vmatpush1.bf16.msra.mxu0 %v523
    %527 = vmatprep.subr.bf16.mxu0 0
    %528 = vmatpush1.bf16.msra.mxu0 0
    %529 = vmatprep.subr.bf16.mxu0 0
    %530 = vmatpush1.bf16.msra.mxu0 0
    %531 = vmatprep.subr.bf16.mxu0 0
    %532 = vmatpush1.bf16.msra.mxu0 0
    %533 = vmatprep.subr.bf16.mxu0 0
    %534 = vmatpush1.bf16.msra.mxu0 0
    %535 = vmatprep.subr.bf16.mxu0 0
    %536 = vmatpush1.bf16.msra.mxu0 0
    %537 = vmatprep.subr.bf16.mxu0 0
    %538 = vmatpush1.bf16.msra.mxu0 0
    %539 = vmatprep.subr.bf16.mxu0 0
    %540 = vmatpush1.bf16.msra.mxu0 0
    %541 = vmatprep.subr.bf16.mxu0 0
    %542 = vmatpush1.bf16.msra.mxu0 0
    %543 = vmatprep.subr.bf16.mxu0 0
    %544 = vmatpush1.bf16.msra.mxu0 0
    %545 = vmatprep.subr.bf16.mxu0 0
    %546 = vmatpush1.bf16.msra.mxu0 0
    %547 = vmatprep.subr.bf16.mxu0 0
    %548 = vmatpush1.bf16.msra.mxu0 0
    %549 = vmatprep.subr.bf16.mxu0 0
    %550 = vmatpush1.bf16.msra.mxu0 0
    %551 = vmatprep.subr.bf16.mxu0 0
    %552 = vmatpush1.bf16.msra.mxu0 0
    %553 = vmatprep.subr.bf16.mxu0 0
    %554 = vmatpush1.bf16.msra.mxu0 0
    %555 = vmatprep.subr.bf16.mxu0 0
    %556 = vmatpush1.bf16.msra.mxu0 0
    %557 = vmatprep.mubr.bf16.mxu0 0
    %558 = vmatmul.mubr.bf16.gmra.mrb[0].mxu0 %v520
    %v559 = vpop.f32.mrb[0].mxu0
    %v560 = vadd.f32 0.0, %v559
    %v561 = vpop.f32.mrb[0].mxu0
    %v562 = vpop.f32.mrb[0].mxu0
    %v563 = vpop.f32.mrb[0].mxu0
    %564 = vdwg.mxu0
    %565 = vrot.lane.b32.xlu0 %v286, 64
    %v566 = vpop.permute.xlu0 %565
    %v568 = vsel %vm289, %v467, 0
    %v571 = vsel %vm473, %v566, 0
    %573 = vmatprep.subr.bf16.mxu0 0
    %574 = vmatpush1.bf16.msra.mxu0 %v571
    %575 = vmatprep.subr.bf16.mxu0 0
    %576 = vmatpush1.bf16.msra.mxu0 0
    %577 = vmatprep.subr.bf16.mxu0 0
    %578 = vmatpush1.bf16.msra.mxu0 0
    %579 = vmatprep.subr.bf16.mxu0 0
    %580 = vmatpush1.bf16.msra.mxu0 0
    %581 = vmatprep.subr.bf16.mxu0 0
    %582 = vmatpush1.bf16.msra.mxu0 0
    %583 = vmatprep.subr.bf16.mxu0 0
    %584 = vmatpush1.bf16.msra.mxu0 0
    %585 = vmatprep.subr.bf16.mxu0 0
    %586 = vmatpush1.bf16.msra.mxu0 0
    %587 = vmatprep.subr.bf16.mxu0 0
    %588 = vmatpush1.bf16.msra.mxu0 0
    %589 = vmatprep.subr.bf16.mxu0 0
    %590 = vmatpush1.bf16.msra.mxu0 0
    %591 = vmatprep.subr.bf16.mxu0 0
    %592 = vmatpush1.bf16.msra.mxu0 0
    %593 = vmatprep.subr.bf16.mxu0 0
    %594 = vmatpush1.bf16.msra.mxu0 0
    %595 = vmatprep.subr.bf16.mxu0 0
    %596 = vmatpush1.bf16.msra.mxu0 0
    %597 = vmatprep.subr.bf16.mxu0 0
    %598 = vmatpush1.bf16.msra.mxu0 0
    %599 = vmatprep.subr.bf16.mxu0 0
    %600 = vmatpush1.bf16.msra.mxu0 0
    %601 = vmatprep.subr.bf16.mxu0 0
    %602 = vmatpush1.bf16.msra.mxu0 0
    %603 = vmatprep.subr.bf16.mxu0 0
    %604 = vmatpush1.bf16.msra.mxu0 0
    %605 = vmatprep.mubr.bf16.mxu0 0
    %606 = vmatmul.mubr.bf16.gmra.mrb[0].mxu0 %v568
    %v607 = vpop.f32.mrb[0].mxu0
    %v608 = vadd.f32 0.0, %v607
    %v609 = vpop.f32.mrb[0].mxu0
    %v610 = vpop.f32.mrb[0].mxu0
    %v611 = vpop.f32.mrb[0].mxu0
    %612 = vdwg.mxu0
    %v613 = vmul.f32 %v512, %v460
    %v614 = vmul.f32 %v560, %v462
    %v615 = vmul.f32 %v608, %v464
    %616 = vrot.lane.b32.xlu0 %v284, 120
    %v617 = vpop.permute.xlu0 %616
    %618 = vrot.lane.b32.xlu0 %v284, 88
    %v619 = vpop.permute.xlu0 %618
    %v621 = vsel %vm289, %v617, 0
    %v624 = vsel %vm289, %v619, 0
    %626 = vmatprep.subr.bf16.mxu0 0
    %627 = vmatpush1.bf16.xpose.msra.mxu0 %v624
    %628 = vmatprep.subr.bf16.mxu0 0
    %629 = vmatpush1.bf16.xpose.msra.mxu0 0
    %630 = vmatprep.subr.bf16.mxu0 0
    %631 = vmatpush1.bf16.xpose.msra.mxu0 0
    %632 = vmatprep.subr.bf16.mxu0 0
    %633 = vmatpush1.bf16.xpose.msra.mxu0 0
    %634 = vmatprep.subr.bf16.mxu0 0
    %635 = vmatpush1.bf16.xpose.msra.mxu0 0
    %636 = vmatprep.subr.bf16.mxu0 0
    %637 = vmatpush1.bf16.xpose.msra.mxu0 0
    %638 = vmatprep.subr.bf16.mxu0 0
    %639 = vmatpush1.bf16.xpose.msra.mxu0 0
    %640 = vmatprep.subr.bf16.mxu0 0
    %641 = vmatpush1.bf16.xpose.msra.mxu0 0
    %642 = vmatprep.subr.bf16.mxu0 0
    %643 = vmatpush1.bf16.xpose.msra.mxu0 0
    %644 = vmatprep.subr.bf16.mxu0 0
    %645 = vmatpush1.bf16.xpose.msra.mxu0 0
    %646 = vmatprep.subr.bf16.mxu0 0
    %647 = vmatpush1.bf16.xpose.msra.mxu0 0
    %648 = vmatprep.subr.bf16.mxu0 0
    %649 = vmatpush1.bf16.xpose.msra.mxu0 0
    %650 = vmatprep.subr.bf16.mxu0 0
    %651 = vmatpush1.bf16.xpose.msra.mxu0 0
    %652 = vmatprep.subr.bf16.mxu0 0
    %653 = vmatpush1.bf16.xpose.msra.mxu0 0
    %654 = vmatprep.subr.bf16.mxu0 0
    %655 = vmatpush1.bf16.xpose.msra.mxu0 0
    %656 = vmatprep.subr.bf16.mxu0 0
    %657 = vmatpush1.bf16.xpose.msra.mxu0 0
    %658 = vmatprep.mubr.bf16.mxu0 0
    %659 = vmatmul.mubr.bf16.gmra.mrb[0].mxu0 %v621
    %v660 = vpop.f32.mrb[0].mxu0
    %v661 = vadd.f32 0.0, %v660
    %v662 = vpop.f32.mrb[0].mxu0
    %v663 = vpop.f32.mrb[0].mxu0
    %v664 = vpop.f32.mrb[0].mxu0
    %665 = vdwg.mxu0
    %666 = vrot.lane.b32.xlu0 %v285, 120
    %v667 = vpop.permute.xlu0 %666
    %668 = vrot.lane.b32.xlu0 %v285, 88
    %v669 = vpop.permute.xlu0 %668
    %v671 = vsel %vm289, %v667, 0
    %v674 = vsel %vm289, %v669, 0
    %676 = vmatprep.subr.bf16.mxu0 0
    %677 = vmatpush1.bf16.xpose.msra.mxu0 %v674
    %678 = vmatprep.subr.bf16.mxu0 0
    %679 = vmatpush1.bf16.xpose.msra.mxu0 0
    %680 = vmatprep.subr.bf16.mxu0 0
    %681 = vmatpush1.bf16.xpose.msra.mxu0 0
    %682 = vmatprep.subr.bf16.mxu0 0
    %683 = vmatpush1.bf16.xpose.msra.mxu0 0
    %684 = vmatprep.subr.bf16.mxu0 0
    %685 = vmatpush1.bf16.xpose.msra.mxu0 0
    %686 = vmatprep.subr.bf16.mxu0 0
    %687 = vmatpush1.bf16.xpose.msra.mxu0 0
    %688 = vmatprep.subr.bf16.mxu0 0
    %689 = vmatpush1.bf16.xpose.msra.mxu0 0
    %690 = vmatprep.subr.bf16.mxu0 0
    %691 = vmatpush1.bf16.xpose.msra.mxu0 0
    %692 = vmatprep.subr.bf16.mxu0 0
    %693 = vmatpush1.bf16.xpose.msra.mxu0 0
    %694 = vmatprep.subr.bf16.mxu0 0
    %695 = vmatpush1.bf16.xpose.msra.mxu0 0
    %696 = vmatprep.subr.bf16.mxu0 0
    %697 = vmatpush1.bf16.xpose.msra.mxu0 0
    %698 = vmatprep.subr.bf16.mxu0 0
    %699 = vmatpush1.bf16.xpose.msra.mxu0 0
    %700 = vmatprep.subr.bf16.mxu0 0
    %701 = vmatpush1.bf16.xpose.msra.mxu0 0
    %702 = vmatprep.subr.bf16.mxu0 0
    %703 = vmatpush1.bf16.xpose.msra.mxu0 0
    %704 = vmatprep.subr.bf16.mxu0 0
    %705 = vmatpush1.bf16.xpose.msra.mxu0 0
    %706 = vmatprep.subr.bf16.mxu0 0
    %707 = vmatpush1.bf16.xpose.msra.mxu0 0
    %708 = vmatprep.mubr.bf16.mxu0 0
    %709 = vmatmul.mubr.bf16.gmra.mrb[0].mxu0 %v671
    %v710 = vpop.f32.mrb[0].mxu0
    %v711 = vadd.f32 0.0, %v710
    %v712 = vpop.f32.mrb[0].mxu0
    %v713 = vpop.f32.mrb[0].mxu0
    %v714 = vpop.f32.mrb[0].mxu0
    %715 = vdwg.mxu0
    %716 = vrot.lane.b32.xlu0 %v286, 120
    %v717 = vpop.permute.xlu0 %716
    %718 = vrot.lane.b32.xlu0 %v286, 88
    %v719 = vpop.permute.xlu0 %718
    %v721 = vsel %vm289, %v717, 0
    %v724 = vsel %vm289, %v719, 0
    %726 = vmatprep.subr.bf16.mxu0 0
    %727 = vmatpush1.bf16.xpose.msra.mxu0 %v724
    %728 = vmatprep.subr.bf16.mxu0 0
    %729 = vmatpush1.bf16.xpose.msra.mxu0 0
    %730 = vmatprep.subr.bf16.mxu0 0
    %731 = vmatpush1.bf16.xpose.msra.mxu0 0
    %732 = vmatprep.subr.bf16.mxu0 0
    %733 = vmatpush1.bf16.xpose.msra.mxu0 0
    %734 = vmatprep.subr.bf16.mxu0 0
    %735 = vmatpush1.bf16.xpose.msra.mxu0 0
    %736 = vmatprep.subr.bf16.mxu0 0
    %737 = vmatpush1.bf16.xpose.msra.mxu0 0
    %738 = vmatprep.subr.bf16.mxu0 0
    %739 = vmatpush1.bf16.xpose.msra.mxu0 0
    %740 = vmatprep.subr.bf16.mxu0 0
    %741 = vmatpush1.bf16.xpose.msra.mxu0 0
    %742 = vmatprep.subr.bf16.mxu0 0
    %743 = vmatpush1.bf16.xpose.msra.mxu0 0
    %744 = vmatprep.subr.bf16.mxu0 0
    %745 = vmatpush1.bf16.xpose.msra.mxu0 0
    %746 = vmatprep.subr.bf16.mxu0 0
    %747 = vmatpush1.bf16.xpose.msra.mxu0 0
    %748 = vmatprep.subr.bf16.mxu0 0
    %749 = vmatpush1.bf16.xpose.msra.mxu0 0
    %750 = vmatprep.subr.bf16.mxu0 0
    %751 = vmatpush1.bf16.xpose.msra.mxu0 0
    %752 = vmatprep.subr.bf16.mxu0 0
    %753 = vmatpush1.bf16.xpose.msra.mxu0 0
    %754 = vmatprep.subr.bf16.mxu0 0
    %755 = vmatpush1.bf16.xpose.msra.mxu0 0
    %756 = vmatprep.subr.bf16.mxu0 0
    %757 = vmatpush1.bf16.xpose.msra.mxu0 0
    %758 = vmatprep.mubr.bf16.mxu0 0
    %759 = vmatmul.mubr.bf16.gmra.mrb[0].mxu0 %v721
    %v760 = vpop.f32.mrb[0].mxu0
    %v761 = vadd.f32 0.0, %v760
    %v762 = vpop.f32.mrb[0].mxu0
    %v763 = vpop.f32.mrb[0].mxu0
    %v764 = vpop.f32.mrb[0].mxu0
    %765 = vdwg.mxu0
    %v766 = vsel %vm289, %v661, -inf
    %767 = vmax.xlane.f32.xlu0 %v766
    %v768 = vpop.xlane.xlu0 %767
    %v769 = vsel %vm289, %v711, -inf
    %770 = vmax.xlane.f32.xlu0 %v769
    %v771 = vpop.xlane.xlu0 %770
    %v772 = vsel %vm289, %v761, -inf
    %773 = vmax.xlane.f32.xlu0 %v772
    %v774 = vpop.xlane.xlu0 %773
    %v775 = vsub.f32 %v661, %v768
    %v776 = vsub.f32 %v711, %v771
    %v777 = vsub.f32 %v761, %v774
    %v778 = vmul.f32 %v775, 1.442695
    %v779 = vpow.pop %v778
    %v780 = vmul.f32 %v776, 1.442695
    %v781 = vpow.pop %v780
    %v782 = vmul.f32 %v777, 1.442695
    %v783 = vpow.pop %v782
    %v784 = vsel %vm289, %v779, 0.0
    %785 = vadd.xlane.f32.xlu0 %v784
    %v786 = vpop.xlane.xlu0 %785
    %v787 = vsel %vm289, %v781, 0.0
    %788 = vadd.xlane.f32.xlu0 %v787
    %v789 = vpop.xlane.xlu0 %788
    %v790 = vsel %vm289, %v783, 0.0
    %791 = vadd.xlane.f32.xlu0 %v790
    %v792 = vpop.xlane.xlu0 %791
    %v793 = vrcp.pop %v786
    %v794 = vmul.f32 1.0, %v793
    %v795 = vrcp.pop %v789
    %v796 = vmul.f32 1.0, %v795
    %v797 = vrcp.pop %v792
    %v798 = vmul.f32 1.0, %v797
    %v799 = vpack.c.bf16 %v779, %v779
    %v800 = vpack.c.bf16 %v781, %v781
    %v801 = vpack.c.bf16 %v783, %v783
    %802 = vrot.lane.b32.xlu0 %v284, 56
    %v803 = vpop.permute.xlu0 %802
    %v805 = vsel %vm289, %v799, 0
    %v808 = vsel %vm473, %v803, 0
    %810 = vmatprep.subr.bf16.mxu0 0
    %811 = vmatpush1.bf16.msra.mxu0 %v808
    %812 = vmatprep.subr.bf16.mxu0 0
    %813 = vmatpush1.bf16.msra.mxu0 0
    %814 = vmatprep.subr.bf16.mxu0 0
    %815 = vmatpush1.bf16.msra.mxu0 0
    %816 = vmatprep.subr.bf16.mxu0 0
    %817 = vmatpush1.bf16.msra.mxu0 0
    %818 = vmatprep.subr.bf16.mxu0 0
    %819 = vmatpush1.bf16.msra.mxu0 0
    %820 = vmatprep.subr.bf16.mxu0 0
    %821 = vmatpush1.bf16.msra.mxu0 0
    %822 = vmatprep.subr.bf16.mxu0 0
    %823 = vmatpush1.bf16.msra.mxu0 0
    %824 = vmatprep.subr.bf16.mxu0 0
    %825 = vmatpush1.bf16.msra.mxu0 0
    %826 = vmatprep.subr.bf16.mxu0 0
    %827 = vmatpush1.bf16.msra.mxu0 0
    %828 = vmatprep.subr.bf16.mxu0 0
    %829 = vmatpush1.bf16.msra.mxu0 0
    %830 = vmatprep.subr.bf16.mxu0 0
    %831 = vmatpush1.bf16.msra.mxu0 0
    %832 = vmatprep.subr.bf16.mxu0 0
    %833 = vmatpush1.bf16.msra.mxu0 0
    %834 = vmatprep.subr.bf16.mxu0 0
    %835 = vmatpush1.bf16.msra.mxu0 0
    %836 = vmatprep.subr.bf16.mxu0 0
    %837 = vmatpush1.bf16.msra.mxu0 0
    %838 = vmatprep.subr.bf16.mxu0 0
    %839 = vmatpush1.bf16.msra.mxu0 0
    %840 = vmatprep.subr.bf16.mxu0 0
    %841 = vmatpush1.bf16.msra.mxu0 0
    %842 = vmatprep.mubr.bf16.mxu0 0
    %843 = vmatmul.mubr.bf16.gmra.mrb[0].mxu0 %v805
    %v844 = vpop.f32.mrb[0].mxu0
    %v845 = vadd.f32 0.0, %v844
    %v846 = vpop.f32.mrb[0].mxu0
    %v847 = vpop.f32.mrb[0].mxu0
    %v848 = vpop.f32.mrb[0].mxu0
    %849 = vdwg.mxu0
    %850 = vrot.lane.b32.xlu0 %v285, 56
    %v851 = vpop.permute.xlu0 %850
    %v853 = vsel %vm289, %v800, 0
    %v856 = vsel %vm473, %v851, 0
    %858 = vmatprep.subr.bf16.mxu0 0
    %859 = vmatpush1.bf16.msra.mxu0 %v856
    %860 = vmatprep.subr.bf16.mxu0 0
    %861 = vmatpush1.bf16.msra.mxu0 0
    %862 = vmatprep.subr.bf16.mxu0 0
    %863 = vmatpush1.bf16.msra.mxu0 0
    %864 = vmatprep.subr.bf16.mxu0 0
    %865 = vmatpush1.bf16.msra.mxu0 0
    %866 = vmatprep.subr.bf16.mxu0 0
    %867 = vmatpush1.bf16.msra.mxu0 0
    %868 = vmatprep.subr.bf16.mxu0 0
    %869 = vmatpush1.bf16.msra.mxu0 0
    %870 = vmatprep.subr.bf16.mxu0 0
    %871 = vmatpush1.bf16.msra.mxu0 0
    %872 = vmatprep.subr.bf16.mxu0 0
    %873 = vmatpush1.bf16.msra.mxu0 0
    %874 = vmatprep.subr.bf16.mxu0 0
    %875 = vmatpush1.bf16.msra.mxu0 0
    %876 = vmatprep.subr.bf16.mxu0 0
    %877 = vmatpush1.bf16.msra.mxu0 0
    %878 = vmatprep.subr.bf16.mxu0 0
    %879 = vmatpush1.bf16.msra.mxu0 0
    %880 = vmatprep.subr.bf16.mxu0 0
    %881 = vmatpush1.bf16.msra.mxu0 0
    %882 = vmatprep.subr.bf16.mxu0 0
    %883 = vmatpush1.bf16.msra.mxu0 0
    %884 = vmatprep.subr.bf16.mxu0 0
    %885 = vmatpush1.bf16.msra.mxu0 0
    %886 = vmatprep.subr.bf16.mxu0 0
    %887 = vmatpush1.bf16.msra.mxu0 0
    %888 = vmatprep.subr.bf16.mxu0 0
    %889 = vmatpush1.bf16.msra.mxu0 0
    %890 = vmatprep.mubr.bf16.mxu0 0
    %891 = vmatmul.mubr.bf16.gmra.mrb[0].mxu0 %v853
    %v892 = vpop.f32.mrb[0].mxu0
    %v893 = vadd.f32 0.0, %v892
    %v894 = vpop.f32.mrb[0].mxu0
    %v895 = vpop.f32.mrb[0].mxu0
    %v896 = vpop.f32.mrb[0].mxu0
    %897 = vdwg.mxu0
    %898 = vrot.lane.b32.xlu0 %v286, 56
    %v899 = vpop.permute.xlu0 %898
    %v901 = vsel %vm289, %v801, 0
    %v904 = vsel %vm473, %v899, 0
    %906 = vmatprep.subr.bf16.mxu0 0
    %907 = vmatpush1.bf16.msra.mxu0 %v904
    %908 = vmatprep.subr.bf16.mxu0 0
    %909 = vmatpush1.bf16.msra.mxu0 0
    %910 = vmatprep.subr.bf16.mxu0 0
    %911 = vmatpush1.bf16.msra.mxu0 0
    %912 = vmatprep.subr.bf16.mxu0 0
    %913 = vmatpush1.bf16.msra.mxu0 0
    %914 = vmatprep.subr.bf16.mxu0 0
    %915 = vmatpush1.bf16.msra.mxu0 0
    %916 = vmatprep.subr.bf16.mxu0 0
    %917 = vmatpush1.bf16.msra.mxu0 0
    %918 = vmatprep.subr.bf16.mxu0 0
    %919 = vmatpush1.bf16.msra.mxu0 0
    %920 = vmatprep.subr.bf16.mxu0 0
    %921 = vmatpush1.bf16.msra.mxu0 0
    %922 = vmatprep.subr.bf16.mxu0 0
    %923 = vmatpush1.bf16.msra.mxu0 0
    %924 = vmatprep.subr.bf16.mxu0 0
    %925 = vmatpush1.bf16.msra.mxu0 0
    %926 = vmatprep.subr.bf16.mxu0 0
    %927 = vmatpush1.bf16.msra.mxu0 0
    %928 = vmatprep.subr.bf16.mxu0 0
    %929 = vmatpush1.bf16.msra.mxu0 0
    %930 = vmatprep.subr.bf16.mxu0 0
    %931 = vmatpush1.bf16.msra.mxu0 0
    %932 = vmatprep.subr.bf16.mxu0 0
    %933 = vmatpush1.bf16.msra.mxu0 0
    %934 = vmatprep.subr.bf16.mxu0 0
    %935 = vmatpush1.bf16.msra.mxu0 0
    %936 = vmatprep.subr.bf16.mxu0 0
    %937 = vmatpush1.bf16.msra.mxu0 0
    %938 = vmatprep.mubr.bf16.mxu0 0
    %939 = vmatmul.mubr.bf16.gmra.mrb[0].mxu0 %v901
    %v940 = vpop.f32.mrb[0].mxu0
    %v941 = vadd.f32 0.0, %v940
    %v942 = vpop.f32.mrb[0].mxu0
    %v943 = vpop.f32.mrb[0].mxu0
    %v944 = vpop.f32.mrb[0].mxu0
    %945 = vdwg.mxu0
    %v946 = vmul.f32 %v845, %v794
    %v947 = vmul.f32 %v893, %v796
    %v948 = vmul.f32 %v941, %v798
    %949 = vrot.lane.b32.xlu0 %v284, 112
    %v950 = vpop.permute.xlu0 %949
    %951 = vrot.lane.b32.xlu0 %v284, 80
    %v952 = vpop.permute.xlu0 %951
    %v954 = vsel %vm289, %v950, 0
    %v957 = vsel %vm289, %v952, 0
    %959 = vmatprep.subr.bf16.mxu0 0
    %960 = vmatpush1.bf16.xpose.msra.mxu0 %v957
    %961 = vmatprep.subr.bf16.mxu0 0
    %962 = vmatpush1.bf16.xpose.msra.mxu0 0
    %963 = vmatprep.subr.bf16.mxu0 0
    %964 = vmatpush1.bf16.xpose.msra.mxu0 0
    %965 = vmatprep.subr.bf16.mxu0 0
    %966 = vmatpush1.bf16.xpose.msra.mxu0 0
    %967 = vmatprep.subr.bf16.mxu0 0
    %968 = vmatpush1.bf16.xpose.msra.mxu0 0
    %969 = vmatprep.subr.bf16.mxu0 0
    %970 = vmatpush1.bf16.xpose.msra.mxu0 0
    %971 = vmatprep.subr.bf16.mxu0 0
    %972 = vmatpush1.bf16.xpose.msra.mxu0 0
    %973 = vmatprep.subr.bf16.mxu0 0
    %974 = vmatpush1.bf16.xpose.msra.mxu0 0
    %975 = vmatprep.subr.bf16.mxu0 0
    %976 = vmatpush1.bf16.xpose.msra.mxu0 0
    %977 = vmatprep.subr.bf16.mxu0 0
    %978 = vmatpush1.bf16.xpose.msra.mxu0 0
    %979 = vmatprep.subr.bf16.mxu0 0
    %980 = vmatpush1.bf16.xpose.msra.mxu0 0
    %981 = vmatprep.subr.bf16.mxu0 0
    %982 = vmatpush1.bf16.xpose.msra.mxu0 0
    %983 = vmatprep.subr.bf16.mxu0 0
    %984 = vmatpush1.bf16.xpose.msra.mxu0 0
    %985 = vmatprep.subr.bf16.mxu0 0
    %986 = vmatpush1.bf16.xpose.msra.mxu0 0
    %987 = vmatprep.subr.bf16.mxu0 0
    %988 = vmatpush1.bf16.xpose.msra.mxu0 0
    %989 = vmatprep.subr.bf16.mxu0 0
    %990 = vmatpush1.bf16.xpose.msra.mxu0 0
    %991 = vmatprep.mubr.bf16.mxu0 0
    %992 = vmatmul.mubr.bf16.gmra.mrb[0].mxu0 %v954
    %v993 = vpop.f32.mrb[0].mxu0
    %v994 = vadd.f32 0.0, %v993
    %v995 = vpop.f32.mrb[0].mxu0
    %v996 = vpop.f32.mrb[0].mxu0
    %v997 = vpop.f32.mrb[0].mxu0
    %998 = vdwg.mxu0
    %999 = vrot.lane.b32.xlu0 %v285, 112
    %v1000 = vpop.permute.xlu0 %999
    %1001 = vrot.lane.b32.xlu0 %v285, 80
    %v1002 = vpop.permute.xlu0 %1001
    %v1004 = vsel %vm289, %v1000, 0
    %v1007 = vsel %vm289, %v1002, 0
    %1009 = vmatprep.subr.bf16.mxu0 0
    %1010 = vmatpush1.bf16.xpose.msra.mxu0 %v1007
    %1011 = vmatprep.subr.bf16.mxu0 0
    %1012 = vmatpush1.bf16.xpose.msra.mxu0 0
    %1013 = vmatprep.subr.bf16.mxu0 0
    %1014 = vmatpush1.bf16.xpose.msra.mxu0 0
    %1015 = vmatprep.subr.bf16.mxu0 0
    %1016 = vmatpush1.bf16.xpose.msra.mxu0 0
    %1017 = vmatprep.subr.bf16.mxu0 0
    %1018 = vmatpush1.bf16.xpose.msra.mxu0 0
    %1019 = vmatprep.subr.bf16.mxu0 0
    %1020 = vmatpush1.bf16.xpose.msra.mxu0 0
    %1021 = vmatprep.subr.bf16.mxu0 0
    %1022 = vmatpush1.bf16.xpose.msra.mxu0 0
    %1023 = vmatprep.subr.bf16.mxu0 0
    %1024 = vmatpush1.bf16.xpose.msra.mxu0 0
    %1025 = vmatprep.subr.bf16.mxu0 0
    %1026 = vmatpush1.bf16.xpose.msra.mxu0 0
    %1027 = vmatprep.subr.bf16.mxu0 0
    %1028 = vmatpush1.bf16.xpose.msra.mxu0 0
    %1029 = vmatprep.subr.bf16.mxu0 0
    %1030 = vmatpush1.bf16.xpose.msra.mxu0 0
    %1031 = vmatprep.subr.bf16.mxu0 0
    %1032 = vmatpush1.bf16.xpose.msra.mxu0 0
    %1033 = vmatprep.subr.bf16.mxu0 0
    %1034 = vmatpush1.bf16.xpose.msra.mxu0 0
    %1035 = vmatprep.subr.bf16.mxu0 0
    %1036 = vmatpush1.bf16.xpose.msra.mxu0 0
    %1037 = vmatprep.subr.bf16.mxu0 0
    %1038 = vmatpush1.bf16.xpose.msra.mxu0 0
    %1039 = vmatprep.subr.bf16.mxu0 0
    %1040 = vmatpush1.bf16.xpose.msra.mxu0 0
    %1041 = vmatprep.mubr.bf16.mxu0 0
    %1042 = vmatmul.mubr.bf16.gmra.mrb[0].mxu0 %v1004
    %v1043 = vpop.f32.mrb[0].mxu0
    %v1044 = vadd.f32 0.0, %v1043
    %v1045 = vpop.f32.mrb[0].mxu0
    %v1046 = vpop.f32.mrb[0].mxu0
    %v1047 = vpop.f32.mrb[0].mxu0
    %1048 = vdwg.mxu0
    %1049 = vrot.lane.b32.xlu0 %v286, 112
    %v1050 = vpop.permute.xlu0 %1049
    %1051 = vrot.lane.b32.xlu0 %v286, 80
    %v1052 = vpop.permute.xlu0 %1051
    %v1054 = vsel %vm289, %v1050, 0
    %v1057 = vsel %vm289, %v1052, 0
    %1059 = vmatprep.subr.bf16.mxu0 0
    %1060 = vmatpush1.bf16.xpose.msra.mxu0 %v1057
    %1061 = vmatprep.subr.bf16.mxu0 0
    %1062 = vmatpush1.bf16.xpose.msra.mxu0 0
    %1063 = vmatprep.subr.bf16.mxu0 0
    %1064 = vmatpush1.bf16.xpose.msra.mxu0 0
    %1065 = vmatprep.subr.bf16.mxu0 0
    %1066 = vmatpush1.bf16.xpose.msra.mxu0 0
    %1067 = vmatprep.subr.bf16.mxu0 0
    %1068 = vmatpush1.bf16.xpose.msra.mxu0 0
    %1069 = vmatprep.subr.bf16.mxu0 0
    %1070 = vmatpush1.bf16.xpose.msra.mxu0 0
    %1071 = vmatprep.subr.bf16.mxu0 0
    %1072 = vmatpush1.bf16.xpose.msra.mxu0 0
    %1073 = vmatprep.subr.bf16.mxu0 0
    %1074 = vmatpush1.bf16.xpose.msra.mxu0 0
    %1075 = vmatprep.subr.bf16.mxu0 0
    %1076 = vmatpush1.bf16.xpose.msra.mxu0 0
    %1077 = vmatprep.subr.bf16.mxu0 0
    %1078 = vmatpush1.bf16.xpose.msra.mxu0 0
    %1079 = vmatprep.subr.bf16.mxu0 0
    %1080 = vmatpush1.bf16.xpose.msra.mxu0 0
    %1081 = vmatprep.subr.bf16.mxu0 0
    %1082 = vmatpush1.bf16.xpose.msra.mxu0 0
    %1083 = vmatprep.subr.bf16.mxu0 0
    %1084 = vmatpush1.bf16.xpose.msra.mxu0 0
    %1085 = vmatprep.subr.bf16.mxu0 0
    %1086 = vmatpush1.bf16.xpose.msra.mxu0 0
    %1087 = vmatprep.subr.bf16.mxu0 0
    %1088 = vmatpush1.bf16.xpose.msra.mxu0 0
    %1089 = vmatprep.subr.bf16.mxu0 0
    %1090 = vmatpush1.bf16.xpose.msra.mxu0 0
    %1091 = vmatprep.mubr.bf16.mxu0 0
    %1092 = vmatmul.mubr.bf16.gmra.mrb[0].mxu0 %v1054
    %v1093 = vpop.f32.mrb[0].mxu0
    %v1094 = vadd.f32 0.0, %v1093
    %v1095 = vpop.f32.mrb[0].mxu0
    %v1096 = vpop.f32.mrb[0].mxu0
    %v1097 = vpop.f32.mrb[0].mxu0
    %1098 = vdwg.mxu0
    %v1099 = vsel %vm289, %v994, -inf
    %1100 = vmax.xlane.f32.xlu0 %v1099
    %v1101 = vpop.xlane.xlu0 %1100
    %v1102 = vsel %vm289, %v1044, -inf
    %1103 = vmax.xlane.f32.xlu0 %v1102
    %v1104 = vpop.xlane.xlu0 %1103
    %v1105 = vsel %vm289, %v1094, -inf
    %1106 = vmax.xlane.f32.xlu0 %v1105
    %v1107 = vpop.xlane.xlu0 %1106
    %v1108 = vsub.f32 %v994, %v1101
    %v1109 = vsub.f32 %v1044, %v1104
    %v1110 = vsub.f32 %v1094, %v1107
    %v1111 = vmul.f32 %v1108, 1.442695
    %v1112 = vpow.pop %v1111
    %v1113 = vmul.f32 %v1109, 1.442695
    %v1114 = vpow.pop %v1113
    %v1115 = vmul.f32 %v1110, 1.442695
    %v1116 = vpow.pop %v1115
    %v1117 = vsel %vm289, %v1112, 0.0
    %1118 = vadd.xlane.f32.xlu0 %v1117
    %v1119 = vpop.xlane.xlu0 %1118
    %v1120 = vsel %vm289, %v1114, 0.0
    %1121 = vadd.xlane.f32.xlu0 %v1120
    %v1122 = vpop.xlane.xlu0 %1121
    %v1123 = vsel %vm289, %v1116, 0.0
    %1124 = vadd.xlane.f32.xlu0 %v1123
    %v1125 = vpop.xlane.xlu0 %1124
    %v1126 = vrcp.pop %v1119
    %v1127 = vmul.f32 1.0, %v1126
    %v1128 = vrcp.pop %v1122
    %v1129 = vmul.f32 1.0, %v1128
    %v1130 = vrcp.pop %v1125
    %v1131 = vmul.f32 1.0, %v1130
    %v1132 = vpack.c.bf16 %v1112, %v1112
    %v1133 = vpack.c.bf16 %v1114, %v1114
    %v1134 = vpack.c.bf16 %v1116, %v1116
    %1135 = vrot.lane.b32.xlu0 %v284, 48
    %v1136 = vpop.permute.xlu0 %1135
    %v1138 = vsel %vm289, %v1132, 0
    %v1141 = vsel %vm473, %v1136, 0
    %1143 = vmatprep.subr.bf16.mxu0 0
    %1144 = vmatpush1.bf16.msra.mxu0 %v1141
    %1145 = vmatprep.subr.bf16.mxu0 0
    %1146 = vmatpush1.bf16.msra.mxu0 0
    %1147 = vmatprep.subr.bf16.mxu0 0
    %1148 = vmatpush1.bf16.msra.mxu0 0
    %1149 = vmatprep.subr.bf16.mxu0 0
    %1150 = vmatpush1.bf16.msra.mxu0 0
    %1151 = vmatprep.subr.bf16.mxu0 0
    %1152 = vmatpush1.bf16.msra.mxu0 0
    %1153 = vmatprep.subr.bf16.mxu0 0
    %1154 = vmatpush1.bf16.msra.mxu0 0
    %1155 = vmatprep.subr.bf16.mxu0 0
    %1156 = vmatpush1.bf16.msra.mxu0 0
    %1157 = vmatprep.subr.bf16.mxu0 0
    %1158 = vmatpush1.bf16.msra.mxu0 0
    %1159 = vmatprep.subr.bf16.mxu0 0
    %1160 = vmatpush1.bf16.msra.mxu0 0
    %1161 = vmatprep.subr.bf16.mxu0 0
    %1162 = vmatpush1.bf16.msra.mxu0 0
    %1163 = vmatprep.subr.bf16.mxu0 0
    %1164 = vmatpush1.bf16.msra.mxu0 0
    %1165 = vmatprep.subr.bf16.mxu0 0
    %1166 = vmatpush1.bf16.msra.mxu0 0
    %1167 = vmatprep.subr.bf16.mxu0 0
    %1168 = vmatpush1.bf16.msra.mxu0 0
    %1169 = vmatprep.subr.bf16.mxu0 0
    %1170 = vmatpush1.bf16.msra.mxu0 0
    %1171 = vmatprep.subr.bf16.mxu0 0
    %1172 = vmatpush1.bf16.msra.mxu0 0
    %1173 = vmatprep.subr.bf16.mxu0 0
    %1174 = vmatpush1.bf16.msra.mxu0 0
    %1175 = vmatprep.mubr.bf16.mxu0 0
    %1176 = vmatmul.mubr.bf16.gmra.mrb[0].mxu0 %v1138
    %v1177 = vpop.f32.mrb[0].mxu0
    %v1178 = vadd.f32 0.0, %v1177
    %v1179 = vpop.f32.mrb[0].mxu0
    %v1180 = vpop.f32.mrb[0].mxu0
    %v1181 = vpop.f32.mrb[0].mxu0
    %1182 = vdwg.mxu0
    %1183 = vrot.lane.b32.xlu0 %v285, 48
    %v1184 = vpop.permute.xlu0 %1183
    %v1186 = vsel %vm289, %v1133, 0
    %v1189 = vsel %vm473, %v1184, 0
    %1191 = vmatprep.subr.bf16.mxu0 0
    %1192 = vmatpush1.bf16.msra.mxu0 %v1189
    %1193 = vmatprep.subr.bf16.mxu0 0
    %1194 = vmatpush1.bf16.msra.mxu0 0
    %1195 = vmatprep.subr.bf16.mxu0 0
    %1196 = vmatpush1.bf16.msra.mxu0 0
    %1197 = vmatprep.subr.bf16.mxu0 0
    %1198 = vmatpush1.bf16.msra.mxu0 0
    %1199 = vmatprep.subr.bf16.mxu0 0
    %1200 = vmatpush1.bf16.msra.mxu0 0
    %1201 = vmatprep.subr.bf16.mxu0 0
    %1202 = vmatpush1.bf16.msra.mxu0 0
    %1203 = vmatprep.subr.bf16.mxu0 0
    %1204 = vmatpush1.bf16.msra.mxu0 0
    %1205 = vmatprep.subr.bf16.mxu0 0
    %1206 = vmatpush1.bf16.msra.mxu0 0
    %1207 = vmatprep.subr.bf16.mxu0 0
    %1208 = vmatpush1.bf16.msra.mxu0 0
    %1209 = vmatprep.subr.bf16.mxu0 0
    %1210 = vmatpush1.bf16.msra.mxu0 0
    %1211 = vmatprep.subr.bf16.mxu0 0
    %1212 = vmatpush1.bf16.msra.mxu0 0
    %1213 = vmatprep.subr.bf16.mxu0 0
    %1214 = vmatpush1.bf16.msra.mxu0 0
    %1215 = vmatprep.subr.bf16.mxu0 0
    %1216 = vmatpush1.bf16.msra.mxu0 0
    %1217 = vmatprep.subr.bf16.mxu0 0
    %1218 = vmatpush1.bf16.msra.mxu0 0
    %1219 = vmatprep.subr.bf16.mxu0 0
    %1220 = vmatpush1.bf16.msra.mxu0 0
    %1221 = vmatprep.subr.bf16.mxu0 0
    %1222 = vmatpush1.bf16.msra.mxu0 0
    %1223 = vmatprep.mubr.bf16.mxu0 0
    %1224 = vmatmul.mubr.bf16.gmra.mrb[0].mxu0 %v1186
    %v1225 = vpop.f32.mrb[0].mxu0
    %v1226 = vadd.f32 0.0, %v1225
    %v1227 = vpop.f32.mrb[0].mxu0
    %v1228 = vpop.f32.mrb[0].mxu0
    %v1229 = vpop.f32.mrb[0].mxu0
    %1230 = vdwg.mxu0
    %1231 = vrot.lane.b32.xlu0 %v286, 48
    %v1232 = vpop.permute.xlu0 %1231
    %v1234 = vsel %vm289, %v1134, 0
    %v1237 = vsel %vm473, %v1232, 0
    %1239 = vmatprep.subr.bf16.mxu0 0
    %1240 = vmatpush1.bf16.msra.mxu0 %v1237
    %1241 = vmatprep.subr.bf16.mxu0 0
    %1242 = vmatpush1.bf16.msra.mxu0 0
    %1243 = vmatprep.subr.bf16.mxu0 0
    %1244 = vmatpush1.bf16.msra.mxu0 0
    %1245 = vmatprep.subr.bf16.mxu0 0
    %1246 = vmatpush1.bf16.msra.mxu0 0
    %1247 = vmatprep.subr.bf16.mxu0 0
    %1248 = vmatpush1.bf16.msra.mxu0 0
    %1249 = vmatprep.subr.bf16.mxu0 0
    %1250 = vmatpush1.bf16.msra.mxu0 0
    %1251 = vmatprep.subr.bf16.mxu0 0
    %1252 = vmatpush1.bf16.msra.mxu0 0
    %1253 = vmatprep.subr.bf16.mxu0 0
    %1254 = vmatpush1.bf16.msra.mxu0 0
    %1255 = vmatprep.subr.bf16.mxu0 0
    %1256 = vmatpush1.bf16.msra.mxu0 0
    %1257 = vmatprep.subr.bf16.mxu0 0
    %1258 = vmatpush1.bf16.msra.mxu0 0
    %1259 = vmatprep.subr.bf16.mxu0 0
    %1260 = vmatpush1.bf16.msra.mxu0 0
    %1261 = vmatprep.subr.bf16.mxu0 0
    %1262 = vmatpush1.bf16.msra.mxu0 0
    %1263 = vmatprep.subr.bf16.mxu0 0
    %1264 = vmatpush1.bf16.msra.mxu0 0
    %1265 = vmatprep.subr.bf16.mxu0 0
    %1266 = vmatpush1.bf16.msra.mxu0 0
    %1267 = vmatprep.subr.bf16.mxu0 0
    %1268 = vmatpush1.bf16.msra.mxu0 0
    %1269 = vmatprep.subr.bf16.mxu0 0
    %1270 = vmatpush1.bf16.msra.mxu0 0
    %1271 = vmatprep.mubr.bf16.mxu0 0
    %1272 = vmatmul.mubr.bf16.gmra.mrb[0].mxu0 %v1234
    %v1273 = vpop.f32.mrb[0].mxu0
    %v1274 = vadd.f32 0.0, %v1273
    %v1275 = vpop.f32.mrb[0].mxu0
    %v1276 = vpop.f32.mrb[0].mxu0
    %v1277 = vpop.f32.mrb[0].mxu0
    %1278 = vdwg.mxu0
    %v1279 = vmul.f32 %v1178, %v1127
    %v1280 = vmul.f32 %v1226, %v1129
    %v1281 = vmul.f32 %v1274, %v1131
    %1282 = vrot.lane.b32.xlu0 %v284, 104
    %v1283 = vpop.permute.xlu0 %1282
    %1284 = vrot.lane.b32.xlu0 %v284, 72
    %v1285 = vpop.permute.xlu0 %1284
    %v1287 = vsel %vm289, %v1283, 0
    %v1290 = vsel %vm289, %v1285, 0
    %1292 = vmatprep.subr.bf16.mxu0 0
    %1293 = vmatpush1.bf16.xpose.msra.mxu0 %v1290
    %1294 = vmatprep.subr.bf16.mxu0 0
    %1295 = vmatpush1.bf16.xpose.msra.mxu0 0
    %1296 = vmatprep.subr.bf16.mxu0 0
    %1297 = vmatpush1.bf16.xpose.msra.mxu0 0
    %1298 = vmatprep.subr.bf16.mxu0 0
    %1299 = vmatpush1.bf16.xpose.msra.mxu0 0
    %1300 = vmatprep.subr.bf16.mxu0 0
    %1301 = vmatpush1.bf16.xpose.msra.mxu0 0
    %1302 = vmatprep.subr.bf16.mxu0 0
    %1303 = vmatpush1.bf16.xpose.msra.mxu0 0
    %1304 = vmatprep.subr.bf16.mxu0 0
    %1305 = vmatpush1.bf16.xpose.msra.mxu0 0
    %1306 = vmatprep.subr.bf16.mxu0 0
    %1307 = vmatpush1.bf16.xpose.msra.mxu0 0
    %1308 = vmatprep.subr.bf16.mxu0 0
    %1309 = vmatpush1.bf16.xpose.msra.mxu0 0
    %1310 = vmatprep.subr.bf16.mxu0 0
    %1311 = vmatpush1.bf16.xpose.msra.mxu0 0
    %1312 = vmatprep.subr.bf16.mxu0 0
    %1313 = vmatpush1.bf16.xpose.msra.mxu0 0
    %1314 = vmatprep.subr.bf16.mxu0 0
    %1315 = vmatpush1.bf16.xpose.msra.mxu0 0
    %1316 = vmatprep.subr.bf16.mxu0 0
    %1317 = vmatpush1.bf16.xpose.msra.mxu0 0
    %1318 = vmatprep.subr.bf16.mxu0 0
    %1319 = vmatpush1.bf16.xpose.msra.mxu0 0
    %1320 = vmatprep.subr.bf16.mxu0 0
    %1321 = vmatpush1.bf16.xpose.msra.mxu0 0
    %1322 = vmatprep.subr.bf16.mxu0 0
    %1323 = vmatpush1.bf16.xpose.msra.mxu0 0
    %1324 = vmatprep.mubr.bf16.mxu0 0
    %1325 = vmatmul.mubr.bf16.gmra.mrb[0].mxu0 %v1287
    %v1326 = vpop.f32.mrb[0].mxu0
    %v1327 = vadd.f32 0.0, %v1326
    %v1328 = vpop.f32.mrb[0].mxu0
    %v1329 = vpop.f32.mrb[0].mxu0
    %v1330 = vpop.f32.mrb[0].mxu0
    %1331 = vdwg.mxu0
    %1332 = vrot.lane.b32.xlu0 %v285, 104
    %v1333 = vpop.permute.xlu0 %1332
    %1334 = vrot.lane.b32.xlu0 %v285, 72
    %v1335 = vpop.permute.xlu0 %1334
    %v1337 = vsel %vm289, %v1333, 0
    %v1340 = vsel %vm289, %v1335, 0
    %1342 = vmatprep.subr.bf16.mxu0 0
    %1343 = vmatpush1.bf16.xpose.msra.mxu0 %v1340
    %1344 = vmatprep.subr.bf16.mxu0 0
    %1345 = vmatpush1.bf16.xpose.msra.mxu0 0
    %1346 = vmatprep.subr.bf16.mxu0 0
    %1347 = vmatpush1.bf16.xpose.msra.mxu0 0
    %1348 = vmatprep.subr.bf16.mxu0 0
    %1349 = vmatpush1.bf16.xpose.msra.mxu0 0
    %1350 = vmatprep.subr.bf16.mxu0 0
    %1351 = vmatpush1.bf16.xpose.msra.mxu0 0
    %1352 = vmatprep.subr.bf16.mxu0 0
    %1353 = vmatpush1.bf16.xpose.msra.mxu0 0
    %1354 = vmatprep.subr.bf16.mxu0 0
    %1355 = vmatpush1.bf16.xpose.msra.mxu0 0
    %1356 = vmatprep.subr.bf16.mxu0 0
    %1357 = vmatpush1.bf16.xpose.msra.mxu0 0
    %1358 = vmatprep.subr.bf16.mxu0 0
    %1359 = vmatpush1.bf16.xpose.msra.mxu0 0
    %1360 = vmatprep.subr.bf16.mxu0 0
    %1361 = vmatpush1.bf16.xpose.msra.mxu0 0
    %1362 = vmatprep.subr.bf16.mxu0 0
    %1363 = vmatpush1.bf16.xpose.msra.mxu0 0
    %1364 = vmatprep.subr.bf16.mxu0 0
    %1365 = vmatpush1.bf16.xpose.msra.mxu0 0
    %1366 = vmatprep.subr.bf16.mxu0 0
    %1367 = vmatpush1.bf16.xpose.msra.mxu0 0
    %1368 = vmatprep.subr.bf16.mxu0 0
    %1369 = vmatpush1.bf16.xpose.msra.mxu0 0
    %1370 = vmatprep.subr.bf16.mxu0 0
    %1371 = vmatpush1.bf16.xpose.msra.mxu0 0
    %1372 = vmatprep.subr.bf16.mxu0 0
    %1373 = vmatpush1.bf16.xpose.msra.mxu0 0
    %1374 = vmatprep.mubr.bf16.mxu0 0
    %1375 = vmatmul.mubr.bf16.gmra.mrb[0].mxu0 %v1337
    %v1376 = vpop.f32.mrb[0].mxu0
    %v1377 = vadd.f32 0.0, %v1376
    %v1378 = vpop.f32.mrb[0].mxu0
    %v1379 = vpop.f32.mrb[0].mxu0
    %v1380 = vpop.f32.mrb[0].mxu0
    %1381 = vdwg.mxu0
    %1382 = vrot.lane.b32.xlu0 %v286, 104
    %v1383 = vpop.permute.xlu0 %1382
    %1384 = vrot.lane.b32.xlu0 %v286, 72
    %v1385 = vpop.permute.xlu0 %1384
    %v1387 = vsel %vm289, %v1383, 0
    %v1390 = vsel %vm289, %v1385, 0
    %1392 = vmatprep.subr.bf16.mxu0 0
    %1393 = vmatpush1.bf16.xpose.msra.mxu0 %v1390
    %1394 = vmatprep.subr.bf16.mxu0 0
    %1395 = vmatpush1.bf16.xpose.msra.mxu0 0
    %1396 = vmatprep.subr.bf16.mxu0 0
    %1397 = vmatpush1.bf16.xpose.msra.mxu0 0
    %1398 = vmatprep.subr.bf16.mxu0 0
    %1399 = vmatpush1.bf16.xpose.msra.mxu0 0
    %1400 = vmatprep.subr.bf16.mxu0 0
    %1401 = vmatpush1.bf16.xpose.msra.mxu0 0
    %1402 = vmatprep.subr.bf16.mxu0 0
    %1403 = vmatpush1.bf16.xpose.msra.mxu0 0
    %1404 = vmatprep.subr.bf16.mxu0 0
    %1405 = vmatpush1.bf16.xpose.msra.mxu0 0
    %1406 = vmatprep.subr.bf16.mxu0 0
    %1407 = vmatpush1.bf16.xpose.msra.mxu0 0
    %1408 = vmatprep.subr.bf16.mxu0 0
    %1409 = vmatpush1.bf16.xpose.msra.mxu0 0
    %1410 = vmatprep.subr.bf16.mxu0 0
    %1411 = vmatpush1.bf16.xpose.msra.mxu0 0
    %1412 = vmatprep.subr.bf16.mxu0 0
    %1413 = vmatpush1.bf16.xpose.msra.mxu0 0
    %1414 = vmatprep.subr.bf16.mxu0 0
    %1415 = vmatpush1.bf16.xpose.msra.mxu0 0
    %1416 = vmatprep.subr.bf16.mxu0 0
    %1417 = vmatpush1.bf16.xpose.msra.mxu0 0
    %1418 = vmatprep.subr.bf16.mxu0 0
    %1419 = vmatpush1.bf16.xpose.msra.mxu0 0
    %1420 = vmatprep.subr.bf16.mxu0 0
    %1421 = vmatpush1.bf16.xpose.msra.mxu0 0
    %1422 = vmatprep.subr.bf16.mxu0 0
    %1423 = vmatpush1.bf16.xpose.msra.mxu0 0
    %1424 = vmatprep.mubr.bf16.mxu0 0
    %1425 = vmatmul.mubr.bf16.gmra.mrb[0].mxu0 %v1387
    %v1426 = vpop.f32.mrb[0].mxu0
    %v1427 = vadd.f32 0.0, %v1426
    %v1428 = vpop.f32.mrb[0].mxu0
    %v1429 = vpop.f32.mrb[0].mxu0
    %v1430 = vpop.f32.mrb[0].mxu0
    %1431 = vdwg.mxu0
    %v1432 = vsel %vm289, %v1327, -inf
    %1433 = vmax.xlane.f32.xlu0 %v1432
    %v1434 = vpop.xlane.xlu0 %1433
    %v1435 = vsel %vm289, %v1377, -inf
    %1436 = vmax.xlane.f32.xlu0 %v1435
    %v1437 = vpop.xlane.xlu0 %1436
    %v1438 = vsel %vm289, %v1427, -inf
    %1439 = vmax.xlane.f32.xlu0 %v1438
    %v1440 = vpop.xlane.xlu0 %1439
    %v1441 = vsub.f32 %v1327, %v1434
    %v1442 = vsub.f32 %v1377, %v1437
    %v1443 = vsub.f32 %v1427, %v1440
    %v1444 = vmul.f32 %v1441, 1.442695
    %v1445 = vpow.pop %v1444
    %v1446 = vmul.f32 %v1442, 1.442695
    %v1447 = vpow.pop %v1446
    %v1448 = vmul.f32 %v1443, 1.442695
    %v1449 = vpow.pop %v1448
    %v1450 = vsel %vm289, %v1445, 0.0
    %1451 = vadd.xlane.f32.xlu0 %v1450
    %v1452 = vpop.xlane.xlu0 %1451
    %v1453 = vsel %vm289, %v1447, 0.0
    %1454 = vadd.xlane.f32.xlu0 %v1453
    %v1455 = vpop.xlane.xlu0 %1454
    %v1456 = vsel %vm289, %v1449, 0.0
    %1457 = vadd.xlane.f32.xlu0 %v1456
    %v1458 = vpop.xlane.xlu0 %1457
    %v1459 = vrcp.pop %v1452
    %v1460 = vmul.f32 1.0, %v1459
    %v1461 = vrcp.pop %v1455
    %v1462 = vmul.f32 1.0, %v1461
    %v1463 = vrcp.pop %v1458
    %v1464 = vmul.f32 1.0, %v1463
    %v1465 = vpack.c.bf16 %v1445, %v1445
    %v1466 = vpack.c.bf16 %v1447, %v1447
    %v1467 = vpack.c.bf16 %v1449, %v1449
    %1468 = vrot.lane.b32.xlu0 %v284, 40
    %v1469 = vpop.permute.xlu0 %1468
    %v1471 = vsel %vm289, %v1465, 0
    %v1474 = vsel %vm473, %v1469, 0
    %1476 = vmatprep.subr.bf16.mxu0 0
    %1477 = vmatpush1.bf16.msra.mxu0 %v1474
    %1478 = vmatprep.subr.bf16.mxu0 0
    %1479 = vmatpush1.bf16.msra.mxu0 0
    %1480 = vmatprep.subr.bf16.mxu0 0
    %1481 = vmatpush1.bf16.msra.mxu0 0
    %1482 = vmatprep.subr.bf16.mxu0 0
    %1483 = vmatpush1.bf16.msra.mxu0 0
    %1484 = vmatprep.subr.bf16.mxu0 0
    %1485 = vmatpush1.bf16.msra.mxu0 0
    %1486 = vmatprep.subr.bf16.mxu0 0
    %1487 = vmatpush1.bf16.msra.mxu0 0
    %1488 = vmatprep.subr.bf16.mxu0 0
    %1489 = vmatpush1.bf16.msra.mxu0 0
    %1490 = vmatprep.subr.bf16.mxu0 0
    %1491 = vmatpush1.bf16.msra.mxu0 0
    %1492 = vmatprep.subr.bf16.mxu0 0
    %1493 = vmatpush1.bf16.msra.mxu0 0
    %1494 = vmatprep.subr.bf16.mxu0 0
    %1495 = vmatpush1.bf16.msra.mxu0 0
    %1496 = vmatprep.subr.bf16.mxu0 0
    %1497 = vmatpush1.bf16.msra.mxu0 0
    %1498 = vmatprep.subr.bf16.mxu0 0
    %1499 = vmatpush1.bf16.msra.mxu0 0
    %1500 = vmatprep.subr.bf16.mxu0 0
    %1501 = vmatpush1.bf16.msra.mxu0 0
    %1502 = vmatprep.subr.bf16.mxu0 0
    %1503 = vmatpush1.bf16.msra.mxu0 0
    %1504 = vmatprep.subr.bf16.mxu0 0
    %1505 = vmatpush1.bf16.msra.mxu0 0
    %1506 = vmatprep.subr.bf16.mxu0 0
    %1507 = vmatpush1.bf16.msra.mxu0 0
    %1508 = vmatprep.mubr.bf16.mxu0 0
    %1509 = vmatmul.mubr.bf16.gmra.mrb[0].mxu0 %v1471
    %v1510 = vpop.f32.mrb[0].mxu0
    %v1511 = vadd.f32 0.0, %v1510
    %v1512 = vpop.f32.mrb[0].mxu0
    %v1513 = vpop.f32.mrb[0].mxu0
    %v1514 = vpop.f32.mrb[0].mxu0
    %1515 = vdwg.mxu0
    %1516 = vrot.lane.b32.xlu0 %v285, 40
    %v1517 = vpop.permute.xlu0 %1516
    %v1519 = vsel %vm289, %v1466, 0
    %v1522 = vsel %vm473, %v1517, 0
    %1524 = vmatprep.subr.bf16.mxu0 0
    %1525 = vmatpush1.bf16.msra.mxu0 %v1522
    %1526 = vmatprep.subr.bf16.mxu0 0
    %1527 = vmatpush1.bf16.msra.mxu0 0
    %1528 = vmatprep.subr.bf16.mxu0 0
    %1529 = vmatpush1.bf16.msra.mxu0 0
    %1530 = vmatprep.subr.bf16.mxu0 0
    %1531 = vmatpush1.bf16.msra.mxu0 0
    %1532 = vmatprep.subr.bf16.mxu0 0
    %1533 = vmatpush1.bf16.msra.mxu0 0
    %1534 = vmatprep.subr.bf16.mxu0 0
    %1535 = vmatpush1.bf16.msra.mxu0 0
    %1536 = vmatprep.subr.bf16.mxu0 0
    %1537 = vmatpush1.bf16.msra.mxu0 0
    %1538 = vmatprep.subr.bf16.mxu0 0
    %1539 = vmatpush1.bf16.msra.mxu0 0
    %1540 = vmatprep.subr.bf16.mxu0 0
    %1541 = vmatpush1.bf16.msra.mxu0 0
    %1542 = vmatprep.subr.bf16.mxu0 0
    %1543 = vmatpush1.bf16.msra.mxu0 0
    %1544 = vmatprep.subr.bf16.mxu0 0
    %1545 = vmatpush1.bf16.msra.mxu0 0
    %1546 = vmatprep.subr.bf16.mxu0 0
    %1547 = vmatpush1.bf16.msra.mxu0 0
    %1548 = vmatprep.subr.bf16.mxu0 0
    %1549 = vmatpush1.bf16.msra.mxu0 0
    %1550 = vmatprep.subr.bf16.mxu0 0
    %1551 = vmatpush1.bf16.msra.mxu0 0
    %1552 = vmatprep.subr.bf16.mxu0 0
    %1553 = vmatpush1.bf16.msra.mxu0 0
    %1554 = vmatprep.subr.bf16.mxu0 0
    %1555 = vmatpush1.bf16.msra.mxu0 0
    %1556 = vmatprep.mubr.bf16.mxu0 0
    %1557 = vmatmul.mubr.bf16.gmra.mrb[0].mxu0 %v1519
    %v1558 = vpop.f32.mrb[0].mxu0
    %v1559 = vadd.f32 0.0, %v1558
    %v1560 = vpop.f32.mrb[0].mxu0
    %v1561 = vpop.f32.mrb[0].mxu0
    %v1562 = vpop.f32.mrb[0].mxu0
    %1563 = vdwg.mxu0
    %1564 = vrot.lane.b32.xlu0 %v286, 40
    %v1565 = vpop.permute.xlu0 %1564
    %v1567 = vsel %vm289, %v1467, 0
    %v1570 = vsel %vm473, %v1565, 0
    %1572 = vmatprep.subr.bf16.mxu0 0
    %1573 = vmatpush1.bf16.msra.mxu0 %v1570
    %1574 = vmatprep.subr.bf16.mxu0 0
    %1575 = vmatpush1.bf16.msra.mxu0 0
    %1576 = vmatprep.subr.bf16.mxu0 0
    %1577 = vmatpush1.bf16.msra.mxu0 0
    %1578 = vmatprep.subr.bf16.mxu0 0
    %1579 = vmatpush1.bf16.msra.mxu0 0
    %1580 = vmatprep.subr.bf16.mxu0 0
    %1581 = vmatpush1.bf16.msra.mxu0 0
    %1582 = vmatprep.subr.bf16.mxu0 0
    %1583 = vmatpush1.bf16.msra.mxu0 0
    %1584 = vmatprep.subr.bf16.mxu0 0
    %1585 = vmatpush1.bf16.msra.mxu0 0
    %1586 = vmatprep.subr.bf16.mxu0 0
    %1587 = vmatpush1.bf16.msra.mxu0 0
    %1588 = vmatprep.subr.bf16.mxu0 0
    %1589 = vmatpush1.bf16.msra.mxu0 0
    %1590 = vmatprep.subr.bf16.mxu0 0
    %1591 = vmatpush1.bf16.msra.mxu0 0
    %1592 = vmatprep.subr.bf16.mxu0 0
    %1593 = vmatpush1.bf16.msra.mxu0 0
    %1594 = vmatprep.subr.bf16.mxu0 0
    %1595 = vmatpush1.bf16.msra.mxu0 0
    %1596 = vmatprep.subr.bf16.mxu0 0
    %1597 = vmatpush1.bf16.msra.mxu0 0
    %1598 = vmatprep.subr.bf16.mxu0 0
    %1599 = vmatpush1.bf16.msra.mxu0 0
    %1600 = vmatprep.subr.bf16.mxu0 0
    %1601 = vmatpush1.bf16.msra.mxu0 0
    %1602 = vmatprep.subr.bf16.mxu0 0
    %1603 = vmatpush1.bf16.msra.mxu0 0
    %1604 = vmatprep.mubr.bf16.mxu0 0
    %1605 = vmatmul.mubr.bf16.gmra.mrb[0].mxu0 %v1567
    %v1606 = vpop.f32.mrb[0].mxu0
    %v1607 = vadd.f32 0.0, %v1606
    %v1608 = vpop.f32.mrb[0].mxu0
    %v1609 = vpop.f32.mrb[0].mxu0
    %v1610 = vpop.f32.mrb[0].mxu0
    %1611 = vdwg.mxu0
    %v1612 = vmul.f32 %v1511, %v1460
    %v1613 = vmul.f32 %v1559, %v1462
    %v1614 = vmul.f32 %v1607, %v1464
    %1618 = vrot.lane.b32.xlu0 %v946, 8
    %v1619 = vpop.permute.xlu0 %1618
    %1620 = vrot.lane.b32.xlu0 %v947, 8
    %v1621 = vpop.permute.xlu0 %1620
    %1622 = vrot.lane.b32.xlu0 %v948, 8
    %v1623 = vpop.permute.xlu0 %1622
    %1630 = vrot.lane.b32.xlu0 %v1279, 16
    %v1631 = vpop.permute.xlu0 %1630
    %1632 = vrot.lane.b32.xlu0 %v1280, 16
    %v1633 = vpop.permute.xlu0 %1632
    %1634 = vrot.lane.b32.xlu0 %v1281, 16
    %v1635 = vpop.permute.xlu0 %1634
    %1642 = vrot.lane.b32.xlu0 %v1612, 24
    %v1643 = vpop.permute.xlu0 %1642
    %1644 = vrot.lane.b32.xlu0 %v1613, 24
    %v1645 = vpop.permute.xlu0 %1644
    %1646 = vrot.lane.b32.xlu0 %v1614, 24
    %v1647 = vpop.permute.xlu0 %1646
    %v1651 = vsel %vm289, %v613, %v1619
    %v1652 = vsel %vm289, %v614, %v1621
    %v1653 = vsel %vm289, %v615, %v1623
    %vm1654 = vcmask 130048
    %v1655 = vsel %vm1654, %v1651, %v1631
    %v1656 = vsel %vm1654, %v1652, %v1633
    %v1657 = vsel %vm1654, %v1653, %v1635
    %vm1658 = vcmask 195584
    %v1659 = vsel %vm1658, %v1655, %v1643
    %v1660 = vsel %vm1658, %v1656, %v1645
    %v1661 = vsel %vm1658, %v1657, %v1647
    %v1662 = vld [vmem:[%s3] sm:$0xf]
    %v1663 = vld [vmem:[%s3 + $0x4] sm:$0xf]
    %v1664 = vld [vmem:[%s3 + $0x8] sm:$0xf]
    %v1665 = vld [vmem:[%s3 + $0xc] sm:$0xf]
    %v1666 = vpack.c.bf16 %v1660, %v1659
    %v1667 = vpack.c.bf16 %v1661, %v1661
    %v1668 = vld [vmem:[#allocation7] sm:$0x1]
    %v1670 = vlaneseq
    %v1671 = vshrl.u32 %v1670, 7
    %v1672 = vsub.s32 0, %v1671
    %v1673 = vrot.slane %v1668, %v1672
    %v1679 = vunpack.c.l.b16 %v1662
    %v1680 = vunpack.c.l.b16 %v1663
    %v1681 = vunpack.c.l.b16 %v1664
    %v1682 = vunpack.c.l.b16 %v1665
    %v1683 = vpack.c.b16 %v1680, %v1679
    %v1684 = vpack.c.b16 %v1682, %v1681
    %v1688 = vsel %vm222, %v1666, 0
    %v1691 = vsel %vm222, %v1667, 0
    %1693 = vmatprep.subr.bf16.mxu0 0
    %1694 = vmatpush1.bf16.msra.mxu0 %v1683
    %1695 = vmatprep.subr.bf16.mxu0 0
    %1696 = vmatpush1.bf16.msra.mxu0 %v1684
    %1697 = vmatprep.subr.bf16.mxu0 0
    %1698 = vmatpush1.bf16.msra.mxu0 0
    %1699 = vmatprep.subr.bf16.mxu0 0
    %1700 = vmatpush1.bf16.msra.mxu0 0
    %1701 = vmatprep.subr.bf16.mxu0 0
    %1702 = vmatpush1.bf16.msra.mxu0 0
    %1703 = vmatprep.subr.bf16.mxu0 0
    %1704 = vmatpush1.bf16.msra.mxu0 0
    %1705 = vmatprep.subr.bf16.mxu0 0
    %1706 = vmatpush1.bf16.msra.mxu0 0
    %1707 = vmatprep.subr.bf16.mxu0 0
    %1708 = vmatpush1.bf16.msra.mxu0 0
    %1709 = vmatprep.subr.bf16.mxu0 0
    %1710 = vmatpush1.bf16.msra.mxu0 0
    %1711 = vmatprep.subr.bf16.mxu0 0
    %1712 = vmatpush1.bf16.msra.mxu0 0
    %1713 = vmatprep.subr.bf16.mxu0 0
    %1714 = vmatpush1.bf16.msra.mxu0 0
    %1715 = vmatprep.subr.bf16.mxu0 0
    %1716 = vmatpush1.bf16.msra.mxu0 0
    %1717 = vmatprep.subr.bf16.mxu0 0
    %1718 = vmatpush1.bf16.msra.mxu0 0
    %1719 = vmatprep.subr.bf16.mxu0 0
    %1720 = vmatpush1.bf16.msra.mxu0 0
    %1721 = vmatprep.subr.bf16.mxu0 0
    %1722 = vmatpush1.bf16.msra.mxu0 0
    %1723 = vmatprep.subr.bf16.mxu0 0
    %1724 = vmatpush1.bf16.msra.mxu0 0
    %1725 = vmatprep.mubr.bf16.mxu0 0
    %1726 = vmatmul.mubr.bf16.gmra.mrb[0].mxu0 %v1688
    %v1727 = vpop.f32.mrb[0].mxu0
    %v1728 = vadd.f32 %v1673, %v1727
    %v1729 = vpop.f32.mrb[0].mxu0
    %v1730 = vpop.f32.mrb[0].mxu0
    %v1731 = vadd.f32 %v1673, %v1730
    %v1732 = vpop.f32.mrb[0].mxu0
    %1733 = vmatprep.mubr.bf16.mxu0 0
    %1734 = vmatmul.mubr.bf16.gmra.mrb[0].mxu0 %v1691
    %v1735 = vpop.f32.mrb[0].mxu0
    %v1736 = vadd.f32 %v1673, %v1735
    %v1737 = vpop.f32.mrb[0].mxu0
    %v1738 = vpop.f32.mrb[0].mxu0
    %v1739 = vpop.f32.mrb[0].mxu0
    %1740 = vdwg.mxu0
    %v1741 = vadd.f32 %v194, %v1728
    %v1742 = vadd.f32 %v195, %v1731
    %v1743 = vadd.f32 %v196, %v1736
    %v1744 = vld [vmem:[#allocation8] sm:$0x1]
    %v1745 = vld [vmem:[#allocation10] sm:$0x1]
    %v1746 = vsel %vm222, %v1741, 0.0
    %1747 = vadd.xlane.f32.xlu0 %v1746
    %v1748 = vpop.xlane.xlu0 %1747
    %v1749 = vsel %vm222, %v1742, 0.0
    %1750 = vadd.xlane.f32.xlu0 %v1749
    %v1751 = vpop.xlane.xlu0 %1750
    %v1752 = vsel %vm222, %v1743, 0.0
    %1753 = vadd.xlane.f32.xlu0 %v1752
    %v1754 = vpop.xlane.xlu0 %1753
    %v1755 = vrcp.pop 32.0
    %v1756 = vmul.f32 %v1748, %v1755
    %v1757 = vmul.f32 %v1751, %v1755
    %v1758 = vmul.f32 %v1754, %v1755
    %v1759 = vsub.f32 %v1741, %v1756
    %v1760 = vsub.f32 %v1742, %v1757
    %v1761 = vsub.f32 %v1743, %v1758
    %v1762 = vmul.f32 %v1759, %v1759
    %v1763 = vmul.f32 %v1760, %v1760
    %v1764 = vmul.f32 %v1761, %v1761
    %v1765 = vsel %vm222, %v1762, 0.0
    %1766 = vadd.xlane.f32.xlu0 %v1765
    %v1767 = vpop.xlane.xlu0 %1766
    %v1768 = vsel %vm222, %v1763, 0.0
    %1769 = vadd.xlane.f32.xlu0 %v1768
    %v1770 = vpop.xlane.xlu0 %1769
    %v1771 = vsel %vm222, %v1764, 0.0
    %1772 = vadd.xlane.f32.xlu0 %v1771
    %v1773 = vpop.xlane.xlu0 %1772
    %v1774 = vmul.f32 %v1767, %v1755
    %v1775 = vmul.f32 %v1770, %v1755
    %v1776 = vmul.f32 %v1773, %v1755
    %v1777 = vadd.f32 %v1774, 1e-05
    %v1778 = vadd.f32 %v1775, 1e-05
    %v1779 = vadd.f32 %v1776, 1e-05
    %v1780 = vrsqrt.pop %v1777
    %v1781 = vrsqrt.pop %v1778
    %v1782 = vrsqrt.pop %v1779
    %v1783 = vmul.f32 %v1759, %v1780
    %v1784 = vmul.f32 %v1760, %v1781
    %v1785 = vmul.f32 %v1761, %v1782
    %v1787 = vlaneseq
    %v1788 = vshrl.u32 %v1787, 7
    %v1789 = vsub.s32 0, %v1788
    %v1790 = vrot.slane %v1744, %v1789
    %v1792 = vmul.f32 %v1783, %v1790
    %v1793 = vmul.f32 %v1784, %v1790
    %v1794 = vmul.f32 %v1785, %v1790
    %v1796 = vlaneseq
    %v1797 = vshrl.u32 %v1796, 7
    %v1798 = vsub.s32 0, %v1797
    %v1799 = vrot.slane %v1745, %v1798
    %v1801 = vadd.f32 %v1792, %v1799
    %v1802 = vadd.f32 %v1793, %v1799
    %v1803 = vadd.f32 %v1794, %v1799
    %v1804 = vld [vmem:[%s9] sm:$0xf]
    %v1805 = vld [vmem:[%s9 + $0x4] sm:$0xf]
    %v1806 = vld [vmem:[%s9 + $0x8] sm:$0xf]
    %v1807 = vld [vmem:[%s9 + $0xc] sm:$0xf]
    %v1808 = vpack.c.bf16 %v1802, %v1801
    %v1809 = vpack.c.bf16 %v1803, %v1803
    %v1810 = vld [vmem:[#allocation14] sm:$0x1]
    %v1812 = vlaneseq
    %v1813 = vshrl.u32 %v1812, 7
    %v1814 = vsub.s32 0, %v1813
    %v1815 = vrot.slane %v1810, %v1814
    %v1821 = vunpack.c.l.b16 %v1804
    %v1822 = vunpack.c.l.b16 %v1805
    %v1823 = vunpack.c.l.b16 %v1806
    %v1824 = vunpack.c.l.b16 %v1807
    %v1825 = vpack.c.b16 %v1822, %v1821
    %v1826 = vpack.c.b16 %v1824, %v1823
    %v1830 = vsel %vm222, %v1808, 0
    %v1833 = vsel %vm222, %v1809, 0
    %1835 = vmatprep.subr.bf16.mxu0 0
    %1836 = vmatpush1.bf16.msra.mxu0 %v1825
    %1837 = vmatprep.subr.bf16.mxu0 0
    %1838 = vmatpush1.bf16.msra.mxu0 %v1826
    %1839 = vmatprep.subr.bf16.mxu0 0
    %1840 = vmatpush1.bf16.msra.mxu0 0
    %1841 = vmatprep.subr.bf16.mxu0 0
    %1842 = vmatpush1.bf16.msra.mxu0 0
    %1843 = vmatprep.subr.bf16.mxu0 0
    %1844 = vmatpush1.bf16.msra.mxu0 0
    %1845 = vmatprep.subr.bf16.mxu0 0
    %1846 = vmatpush1.bf16.msra.mxu0 0
    %1847 = vmatprep.subr.bf16.mxu0 0
    %1848 = vmatpush1.bf16.msra.mxu0 0
    %1849 = vmatprep.subr.bf16.mxu0 0
    %1850 = vmatpush1.bf16.msra.mxu0 0
    %1851 = vmatprep.subr.bf16.mxu0 0
    %1852 = vmatpush1.bf16.msra.mxu0 0
    %1853 = vmatprep.subr.bf16.mxu0 0
    %1854 = vmatpush1.bf16.msra.mxu0 0
    %1855 = vmatprep.subr.bf16.mxu0 0
    %1856 = vmatpush1.bf16.msra.mxu0 0
    %1857 = vmatprep.subr.bf16.mxu0 0
    %1858 = vmatpush1.bf16.msra.mxu0 0
    %1859 = vmatprep.subr.bf16.mxu0 0
    %1860 = vmatpush1.bf16.msra.mxu0 0
    %1861 = vmatprep.subr.bf16.mxu0 0
    %1862 = vmatpush1.bf16.msra.mxu0 0
    %1863 = vmatprep.subr.bf16.mxu0 0
    %1864 = vmatpush1.bf16.msra.mxu0 0
    %1865 = vmatprep.subr.bf16.mxu0 0
    %1866 = vmatpush1.bf16.msra.mxu0 0
    %1867 = vmatprep.mubr.bf16.mxu0 0
    %1868 = vmatmul.mubr.bf16.gmra.mrb[0].mxu0 %v1830
    %v1869 = vpop.f32.mrb[0].mxu0
    %v1870 = vadd.f32 %v1815, %v1869
    %v1871 = vpop.f32.mrb[0].mxu0
    %v1872 = vpop.f32.mrb[0].mxu0
    %v1873 = vadd.f32 %v1815, %v1872
    %v1874 = vpop.f32.mrb[0].mxu0
    %1875 = vmatprep.mubr.bf16.mxu0 0
    %1876 = vmatmul.mubr.bf16.gmra.mrb[0].mxu0 %v1833
    %v1877 = vpop.f32.mrb[0].mxu0
    %v1878 = vadd.f32 %v1815, %v1877
    %v1879 = vpop.f32.mrb[0].mxu0
    %v1880 = vpop.f32.mrb[0].mxu0
    %v1881 = vpop.f32.mrb[0].mxu0
    %1882 = vdwg.mxu0
    %v1883 = vmax.f32 %v1870, 0.0
    %v1884 = vmax.f32 %v1873, 0.0
    %v1885 = vmax.f32 %v1878, 0.0
    %v1886 = vld [vmem:[%s11] sm:$0xf]
    %v1887 = vld [vmem:[%s11 + $0x4] sm:$0xf]
    %v1888 = vld [vmem:[%s11 + $0x8] sm:$0xf]
    %v1889 = vld [vmem:[%s11 + $0xc] sm:$0xf]
    %v1890 = vld [vmem:[%s11 + $0x10] sm:$0xf]
    %v1891 = vld [vmem:[%s11 + $0x14] sm:$0xf]
    %v1892 = vld [vmem:[%s11 + $0x18] sm:$0xf]
    %v1893 = vld [vmem:[%s11 + $0x1c] sm:$0xf]
    %v1894 = vpack.c.bf16 %v1884, %v1883
    %v1895 = vpack.c.bf16 %v1885, %v1885
    %v1896 = vld [vmem:[#allocation16] sm:$0x1]
    %v1898 = vlaneseq
    %v1899 = vshrl.u32 %v1898, 7
    %v1900 = vsub.s32 0, %v1899
    %v1901 = vrot.slane %v1896, %v1900
    %v1911 = vunpack.c.l.b16 %v1886
    %v1912 = vunpack.c.l.b16 %v1887
    %v1913 = vunpack.c.l.b16 %v1888
    %v1914 = vunpack.c.l.b16 %v1889
    %v1915 = vunpack.c.l.b16 %v1890
    %v1916 = vunpack.c.l.b16 %v1891
    %v1917 = vunpack.c.l.b16 %v1892
    %v1918 = vunpack.c.l.b16 %v1893
    %v1919 = vpack.c.b16 %v1912, %v1911
    %v1920 = vpack.c.b16 %v1914, %v1913
    %v1921 = vpack.c.b16 %v1916, %v1915
    %v1922 = vpack.c.b16 %v1918, %v1917
    %vm1927 = vcmask 523264
    %v1929 = vsel %vm1927, %v1894, 0
    %v1932 = vsel %vm1927, %v1895, 0
    %1934 = vmatprep.subr.bf16.mxu0 0
    %1935 = vmatpush1.bf16.msra.mxu0 %v1919
    %1936 = vmatprep.subr.bf16.mxu0 0
    %1937 = vmatpush1.bf16.msra.mxu0 %v1920
    %1938 = vmatprep.subr.bf16.mxu0 0
    %1939 = vmatpush1.bf16.msra.mxu0 %v1921
    %1940 = vmatprep.subr.bf16.mxu0 0
    %1941 = vmatpush1.bf16.msra.mxu0 %v1922
    %1942 = vmatprep.subr.bf16.mxu0 0
    %1943 = vmatpush1.bf16.msra.mxu0 0
    %1944 = vmatprep.subr.bf16.mxu0 0
    %1945 = vmatpush1.bf16.msra.mxu0 0
    %1946 = vmatprep.subr.bf16.mxu0 0
    %1947 = vmatpush1.bf16.msra.mxu0 0
    %1948 = vmatprep.subr.bf16.mxu0 0
    %1949 = vmatpush1.bf16.msra.mxu0 0
    %1950 = vmatprep.subr.bf16.mxu0 0
    %1951 = vmatpush1.bf16.msra.mxu0 0
    %1952 = vmatprep.subr.bf16.mxu0 0
    %1953 = vmatpush1.bf16.msra.mxu0 0
    %1954 = vmatprep.subr.bf16.mxu0 0
    %1955 = vmatpush1.bf16.msra.mxu0 0
    %1956 = vmatprep.subr.bf16.mxu0 0
    %1957 = vmatpush1.bf16.msra.mxu0 0
    %1958 = vmatprep.subr.bf16.mxu0 0
    %1959 = vmatpush1.bf16.msra.mxu0 0
    %1960 = vmatprep.subr.bf16.mxu0 0
    %1961 = vmatpush1.bf16.msra.mxu0 0
    %1962 = vmatprep.subr.bf16.mxu0 0
    %1963 = vmatpush1.bf16.msra.mxu0 0
    %1964 = vmatprep.subr.bf16.mxu0 0
    %1965 = vmatpush1.bf16.msra.mxu0 0
    %1966 = vmatprep.mubr.bf16.mxu0 0
    %1967 = vmatmul.mubr.bf16.gmra.mrb[0].mxu0 %v1929
    %v1968 = vpop.f32.mrb[0].mxu0
    %v1969 = vadd.f32 %v1901, %v1968
    %v1970 = vpop.f32.mrb[0].mxu0
    %v1971 = vpop.f32.mrb[0].mxu0
    %v1972 = vadd.f32 %v1901, %v1971
    %v1973 = vpop.f32.mrb[0].mxu0
    %1974 = vmatprep.mubr.bf16.mxu0 0
    %1975 = vmatmul.mubr.bf16.gmra.mrb[0].mxu0 %v1932
    %v1976 = vpop.f32.mrb[0].mxu0
    %v1977 = vadd.f32 %v1901, %v1976
    %v1978 = vpop.f32.mrb[0].mxu0
    %v1979 = vpop.f32.mrb[0].mxu0
    %v1980 = vpop.f32.mrb[0].mxu0
    %1981 = vdwg.mxu0
    %v1982 = vadd.f32 %v1801, %v1969
    %v1983 = vadd.f32 %v1802, %v1972
    %v1984 = vadd.f32 %v1803, %v1977
    %v1985 = vld [vmem:[#allocation11] sm:$0x1]
    %v1986 = vld [vmem:[#allocation13] sm:$0x1]
    %v1987 = vsel %vm222, %v1982, 0.0
    %1988 = vadd.xlane.f32.xlu0 %v1987
    %v1989 = vpop.xlane.xlu0 %1988
    %v1990 = vsel %vm222, %v1983, 0.0
    %1991 = vadd.xlane.f32.xlu0 %v1990
    %v1992 = vpop.xlane.xlu0 %1991
    %v1993 = vsel %vm222, %v1984, 0.0
    %1994 = vadd.xlane.f32.xlu0 %v1993
    %v1995 = vpop.xlane.xlu0 %1994
    %v1996 = vmul.f32 %v1989, %v1755
    %v1997 = vmul.f32 %v1992, %v1755
    %v1998 = vmul.f32 %v1995, %v1755
    %v1999 = vsub.f32 %v1982, %v1996
    %v2000 = vsub.f32 %v1983, %v1997
    %v2001 = vsub.f32 %v1984, %v1998
    %v2002 = vmul.f32 %v1999, %v1999
    %v2003 = vmul.f32 %v2000, %v2000
    %v2004 = vmul.f32 %v2001, %v2001
    %v2005 = vsel %vm222, %v2002, 0.0
    %2006 = vadd.xlane.f32.xlu0 %v2005
    %v2007 = vpop.xlane.xlu0 %2006
    %v2008 = vsel %vm222, %v2003, 0.0
    %2009 = vadd.xlane.f32.xlu0 %v2008
    %v2010 = vpop.xlane.xlu0 %2009
    %v2011 = vsel %vm222, %v2004, 0.0
    %2012 = vadd.xlane.f32.xlu0 %v2011
    %v2013 = vpop.xlane.xlu0 %2012
    %v2014 = vmul.f32 %v2007, %v1755
    %v2015 = vmul.f32 %v2010, %v1755
    %v2016 = vmul.f32 %v2013, %v1755
    %v2017 = vadd.f32 %v2014, 1e-05
    %v2018 = vadd.f32 %v2015, 1e-05
    %v2019 = vadd.f32 %v2016, 1e-05
    %v2020 = vrsqrt.pop %v2017
    %v2021 = vrsqrt.pop %v2018
    %v2022 = vrsqrt.pop %v2019
    %v2023 = vmul.f32 %v1999, %v2020
    %v2024 = vmul.f32 %v2000, %v2021
    %v2025 = vmul.f32 %v2001, %v2022
    %v2027 = vlaneseq
    %v2028 = vshrl.u32 %v2027, 7
    %v2029 = vsub.s32 0, %v2028
    %v2030 = vrot.slane %v1985, %v2029
    %v2032 = vmul.f32 %v2023, %v2030
    %v2033 = vmul.f32 %v2024, %v2030
    %v2034 = vmul.f32 %v2025, %v2030
    %v2036 = vlaneseq
    %v2037 = vshrl.u32 %v2036, 7
    %v2038 = vsub.s32 0, %v2037
    %v2039 = vrot.slane %v1986, %v2038
    %v2041 = vadd.f32 %v2032, %v2039
    %v2042 = vadd.f32 %v2033, %v2039
    %v2043 = vadd.f32 %v2034, %v2039
    %s2044 = scalar_lea.vmem %s1, 16
    %v2045 = vld [vmem:[%s2044] sm:$0xf]
    %v2046 = vld [vmem:[%s2044 + $0x4] sm:$0xf]
    %v2047 = vld [vmem:[%s2044 + $0x8] sm:$0xf]
    %v2048 = vld [vmem:[%s2044 + $0xc] sm:$0xf]
    %v2049 = vpack.c.bf16 %v2042, %v2041
    %v2050 = vpack.c.bf16 %v2043, %v2043
    %s2051 = scalar_lea.vmem [#allocation5], 1
    %v2052 = vld [vmem:[%s2051] sm:$0x1]
    %v2054 = vlaneseq
    %v2055 = vshrl.u32 %v2054, 7
    %v2056 = vsub.s32 0, %v2055
    %v2057 = vrot.slane %v2052, %v2056
    %v2063 = vunpack.c.l.b16 %v2045
    %v2064 = vunpack.c.l.b16 %v2046
    %v2065 = vunpack.c.l.b16 %v2047
    %v2066 = vunpack.c.l.b16 %v2048
    %v2067 = vpack.c.b16 %v2064, %v2063
    %v2068 = vpack.c.b16 %v2066, %v2065
    %v2072 = vsel %vm222, %v2049, 0
    %v2075 = vsel %vm222, %v2050, 0
    %2077 = vmatprep.subr.bf16.mxu0 0
    %2078 = vmatpush1.bf16.msra.mxu0 %v2067
    %2079 = vmatprep.subr.bf16.mxu0 0
    %2080 = vmatpush1.bf16.msra.mxu0 %v2068
    %2081 = vmatprep.subr.bf16.mxu0 0
    %2082 = vmatpush1.bf16.msra.mxu0 0
    %2083 = vmatprep.subr.bf16.mxu0 0
    %2084 = vmatpush1.bf16.msra.mxu0 0
    %2085 = vmatprep.subr.bf16.mxu0 0
    %2086 = vmatpush1.bf16.msra.mxu0 0
    %2087 = vmatprep.subr.bf16.mxu0 0
    %2088 = vmatpush1.bf16.msra.mxu0 0
    %2089 = vmatprep.subr.bf16.mxu0 0
    %2090 = vmatpush1.bf16.msra.mxu0 0
    %2091 = vmatprep.subr.bf16.mxu0 0
    %2092 = vmatpush1.bf16.msra.mxu0 0
    %2093 = vmatprep.subr.bf16.mxu0 0
    %2094 = vmatpush1.bf16.msra.mxu0 0
    %2095 = vmatprep.subr.bf16.mxu0 0
    %2096 = vmatpush1.bf16.msra.mxu0 0
    %2097 = vmatprep.subr.bf16.mxu0 0
    %2098 = vmatpush1.bf16.msra.mxu0 0
    %2099 = vmatprep.subr.bf16.mxu0 0
    %2100 = vmatpush1.bf16.msra.mxu0 0
    %2101 = vmatprep.subr.bf16.mxu0 0
    %2102 = vmatpush1.bf16.msra.mxu0 0
    %2103 = vmatprep.subr.bf16.mxu0 0
    %2104 = vmatpush1.bf16.msra.mxu0 0
    %2105 = vmatprep.subr.bf16.mxu0 0
    %2106 = vmatpush1.bf16.msra.mxu0 0
    %2107 = vmatprep.subr.bf16.mxu0 0
    %2108 = vmatpush1.bf16.msra.mxu0 0
    %2109 = vmatprep.mubr.bf16.mxu0 0
    %2110 = vmatmul.mubr.bf16.gmra.mrb[0].mxu0 %v2072
    %v2111 = vpop.f32.mrb[0].mxu0
    %v2112 = vadd.f32 %v2057, %v2111
    %v2113 = vpop.f32.mrb[0].mxu0
    %v2114 = vpop.f32.mrb[0].mxu0
    %v2115 = vadd.f32 %v2057, %v2114
    %v2116 = vpop.f32.mrb[0].mxu0
    %2117 = vmatprep.mubr.bf16.mxu0 0
    %2118 = vmatmul.mubr.bf16.gmra.mrb[0].mxu0 %v2075
    %v2119 = vpop.f32.mrb[0].mxu0
    %v2120 = vadd.f32 %v2057, %v2119
    %v2121 = vpop.f32.mrb[0].mxu0
    %v2122 = vpop.f32.mrb[0].mxu0
    %v2123 = vpop.f32.mrb[0].mxu0
    %2124 = vdwg.mxu0
    %v2125 = vpack.c.bf16 %v2115, %v2112
    %v2126 = vpack.c.bf16 %v2120, %v2120
    %v2129 = vunpack.c.l.b16 %v2125
    %v2130 = vunpack.c.h.b16 %v2125
    %v2131 = vunpack.c.l.b16 %v2126
    %v2132 = vpack.c.b16 %v2129, %v2129
    %v2133 = vpack.c.b16 %v2130, %v2130
    %v2134 = vpack.c.b16 %v2131, %v2131
    %2135 = vrot.lane.b32.xlu0 %v2132, 96
    %v2136 = vpop.permute.xlu0 %2135
    %v2138 = vsel %vm289, %v2132, 0
    %v2141 = vsel %vm289, %v2136, 0
    %2143 = vmatprep.subr.bf16.mxu0 0
    %2144 = vmatpush1.bf16.xpose.msra.mxu0 %v2141
    %2145 = vmatprep.subr.bf16.mxu0 0
    %2146 = vmatpush1.bf16.xpose.msra.mxu0 0
    %2147 = vmatprep.subr.bf16.mxu0 0
    %2148 = vmatpush1.bf16.xpose.msra.mxu0 0
    %2149 = vmatprep.subr.bf16.mxu0 0
    %2150 = vmatpush1.bf16.xpose.msra.mxu0 0
    %2151 = vmatprep.subr.bf16.mxu0 0
    %2152 = vmatpush1.bf16.xpose.msra.mxu0 0
    %2153 = vmatprep.subr.bf16.mxu0 0
    %2154 = vmatpush1.bf16.xpose.msra.mxu0 0
    %2155 = vmatprep.subr.bf16.mxu0 0
    %2156 = vmatpush1.bf16.xpose.msra.mxu0 0
    %2157 = vmatprep.subr.bf16.mxu0 0
    %2158 = vmatpush1.bf16.xpose.msra.mxu0 0
    %2159 = vmatprep.subr.bf16.mxu0 0
    %2160 = vmatpush1.bf16.xpose.msra.mxu0 0
    %2161 = vmatprep.subr.bf16.mxu0 0
    %2162 = vmatpush1.bf16.xpose.msra.mxu0 0
    %2163 = vmatprep.subr.bf16.mxu0 0
    %2164 = vmatpush1.bf16.xpose.msra.mxu0 0
    %2165 = vmatprep.subr.bf16.mxu0 0
    %2166 = vmatpush1.bf16.xpose.msra.mxu0 0
    %2167 = vmatprep.subr.bf16.mxu0 0
    %2168 = vmatpush1.bf16.xpose.msra.mxu0 0
    %2169 = vmatprep.subr.bf16.mxu0 0
    %2170 = vmatpush1.bf16.xpose.msra.mxu0 0
    %2171 = vmatprep.subr.bf16.mxu0 0
    %2172 = vmatpush1.bf16.xpose.msra.mxu0 0
    %2173 = vmatprep.subr.bf16.mxu0 0
    %2174 = vmatpush1.bf16.xpose.msra.mxu0 0
    %2175 = vmatprep.mubr.bf16.mxu0 0
    %2176 = vmatmul.mubr.bf16.gmra.mrb[0].mxu0 %v2138
    %v2177 = vpop.f32.mrb[0].mxu0
    %v2178 = vadd.f32 0.0, %v2177
    %v2179 = vpop.f32.mrb[0].mxu0
    %v2180 = vpop.f32.mrb[0].mxu0
    %v2181 = vpop.f32.mrb[0].mxu0
    %2182 = vdwg.mxu0
    %2183 = vrot.lane.b32.xlu0 %v2133, 96
    %v2184 = vpop.permute.xlu0 %2183
    %v2186 = vsel %vm289, %v2133, 0
    %v2189 = vsel %vm289, %v2184, 0
    %2191 = vmatprep.subr.bf16.mxu0 0
    %2192 = vmatpush1.bf16.xpose.msra.mxu0 %v2189
    %2193 = vmatprep.subr.bf16.mxu0 0
    %2194 = vmatpush1.bf16.xpose.msra.mxu0 0
    %2195 = vmatprep.subr.bf16.mxu0 0
    %2196 = vmatpush1.bf16.xpose.msra.mxu0 0
    %2197 = vmatprep.subr.bf16.mxu0 0
    %2198 = vmatpush1.bf16.xpose.msra.mxu0 0
    %2199 = vmatprep.subr.bf16.mxu0 0
    %2200 = vmatpush1.bf16.xpose.msra.mxu0 0
    %2201 = vmatprep.subr.bf16.mxu0 0
    %2202 = vmatpush1.bf16.xpose.msra.mxu0 0
    %2203 = vmatprep.subr.bf16.mxu0 0
    %2204 = vmatpush1.bf16.xpose.msra.mxu0 0
    %2205 = vmatprep.subr.bf16.mxu0 0
    %2206 = vmatpush1.bf16.xpose.msra.mxu0 0
    %2207 = vmatprep.subr.bf16.mxu0 0
    %2208 = vmatpush1.bf16.xpose.msra.mxu0 0
    %2209 = vmatprep.subr.bf16.mxu0 0
    %2210 = vmatpush1.bf16.xpose.msra.mxu0 0
    %2211 = vmatprep.subr.bf16.mxu0 0
    %2212 = vmatpush1.bf16.xpose.msra.mxu0 0
    %2213 = vmatprep.subr.bf16.mxu0 0
    %2214 = vmatpush1.bf16.xpose.msra.mxu0 0
    %2215 = vmatprep.subr.bf16.mxu0 0
    %2216 = vmatpush1.bf16.xpose.msra.mxu0 0
    %2217 = vmatprep.subr.bf16.mxu0 0
    %2218 = vmatpush1.bf16.xpose.msra.mxu0 0
    %2219 = vmatprep.subr.bf16.mxu0 0
    %2220 = vmatpush1.bf16.xpose.msra.mxu0 0
    %2221 = vmatprep.subr.bf16.mxu0 0
    %2222 = vmatpush1.bf16.xpose.msra.mxu0 0
    %2223 = vmatprep.mubr.bf16.mxu0 0
    %2224 = vmatmul.mubr.bf16.gmra.mrb[0].mxu0 %v2186
    %v2225 = vpop.f32.mrb[0].mxu0
    %v2226 = vadd.f32 0.0, %v2225
    %v2227 = vpop.f32.mrb[0].mxu0
    %v2228 = vpop.f32.mrb[0].mxu0
    %v2229 = vpop.f32.mrb[0].mxu0
    %2230 = vdwg.mxu0
    %2231 = vrot.lane.b32.xlu0 %v2134, 96
    %v2232 = vpop.permute.xlu0 %2231
    %v2234 = vsel %vm289, %v2134, 0
    %v2237 = vsel %vm289, %v2232, 0
    %2239 = vmatprep.subr.bf16.mxu0 0
    %2240 = vmatpush1.bf16.xpose.msra.mxu0 %v2237
    %2241 = vmatprep.subr.bf16.mxu0 0
    %2242 = vmatpush1.bf16.xpose.msra.mxu0 0
    %2243 = vmatprep.subr.bf16.mxu0 0
    %2244 = vmatpush1.bf16.xpose.msra.mxu0 0
    %2245 = vmatprep.subr.bf16.mxu0 0
    %2246 = vmatpush1.bf16.xpose.msra.mxu0 0
    %2247 = vmatprep.subr.bf16.mxu0 0
    %2248 = vmatpush1.bf16.xpose.msra.mxu0 0
    %2249 = vmatprep.subr.bf16.mxu0 0
    %2250 = vmatpush1.bf16.xpose.msra.mxu0 0
    %2251 = vmatprep.subr.bf16.mxu0 0
    %2252 = vmatpush1.bf16.xpose.msra.mxu0 0
    %2253 = vmatprep.subr.bf16.mxu0 0
    %2254 = vmatpush1.bf16.xpose.msra.mxu0 0
    %2255 = vmatprep.subr.bf16.mxu0 0
    %2256 = vmatpush1.bf16.xpose.msra.mxu0 0
    %2257 = vmatprep.subr.bf16.mxu0 0
    %2258 = vmatpush1.bf16.xpose.msra.mxu0 0
    %2259 = vmatprep.subr.bf16.mxu0 0
    %2260 = vmatpush1.bf16.xpose.msra.mxu0 0
    %2261 = vmatprep.subr.bf16.mxu0 0
    %2262 = vmatpush1.bf16.xpose.msra.mxu0 0
    %2263 = vmatprep.subr.bf16.mxu0 0
    %2264 = vmatpush1.bf16.xpose.msra.mxu0 0
    %2265 = vmatprep.subr.bf16.mxu0 0
    %2266 = vmatpush1.bf16.xpose.msra.mxu0 0
    %2267 = vmatprep.subr.bf16.mxu0 0
    %2268 = vmatpush1.bf16.xpose.msra.mxu0 0
    %2269 = vmatprep.subr.bf16.mxu0 0
    %2270 = vmatpush1.bf16.xpose.msra.mxu0 0
    %2271 = vmatprep.mubr.bf16.mxu0 0
    %2272 = vmatmul.mubr.bf16.gmra.mrb[0].mxu0 %v2234
    %v2273 = vpop.f32.mrb[0].mxu0
    %v2274 = vadd.f32 0.0, %v2273
    %v2275 = vpop.f32.mrb[0].mxu0
    %v2276 = vpop.f32.mrb[0].mxu0
    %v2277 = vpop.f32.mrb[0].mxu0
    %2278 = vdwg.mxu0
    %v2279 = vsel %vm289, %v2178, -inf
    %2280 = vmax.xlane.f32.xlu0 %v2279
    %v2281 = vpop.xlane.xlu0 %2280
    %v2282 = vsel %vm289, %v2226, -inf
    %2283 = vmax.xlane.f32.xlu0 %v2282
    %v2284 = vpop.xlane.xlu0 %2283
    %v2285 = vsel %vm289, %v2274, -inf
    %2286 = vmax.xlane.f32.xlu0 %v2285
    %v2287 = vpop.xlane.xlu0 %2286
    %v2288 = vsub.f32 %v2178, %v2281
    %v2289 = vsub.f32 %v2226, %v2284
    %v2290 = vsub.f32 %v2274, %v2287
    %v2291 = vmul.f32 %v2288, 1.442695
    %v2292 = vpow.pop %v2291
    %v2293 = vmul.f32 %v2289, 1.442695
    %v2294 = vpow.pop %v2293
    %v2295 = vmul.f32 %v2290, 1.442695
    %v2296 = vpow.pop %v2295
    %v2297 = vsel %vm289, %v2292, 0.0
    %2298 = vadd.xlane.f32.xlu0 %v2297
    %v2299 = vpop.xlane.xlu0 %2298
    %v2300 = vsel %vm289, %v2294, 0.0
    %2301 = vadd.xlane.f32.xlu0 %v2300
    %v2302 = vpop.xlane.xlu0 %2301
    %v2303 = vsel %vm289, %v2296, 0.0
    %2304 = vadd.xlane.f32.xlu0 %v2303
    %v2305 = vpop.xlane.xlu0 %2304
    %v2306 = vrcp.pop %v2299
    %v2307 = vmul.f32 1.0, %v2306
    %v2308 = vrcp.pop %v2302
    %v2309 = vmul.f32 1.0, %v2308
    %v2310 = vrcp.pop %v2305
    %v2311 = vmul.f32 1.0, %v2310
    %v2312 = vpack.c.bf16 %v2292, %v2292
    %v2313 = vpack.c.bf16 %v2294, %v2294
    %v2314 = vpack.c.bf16 %v2296, %v2296
    %2315 = vrot.lane.b32.xlu0 %v2132, 64
    %v2316 = vpop.permute.xlu0 %2315
    %v2318 = vsel %vm289, %v2312, 0
    %v2321 = vsel %vm473, %v2316, 0
    %2323 = vmatprep.subr.bf16.mxu0 0
    %2324 = vmatpush1.bf16.msra.mxu0 %v2321
    %2325 = vmatprep.subr.bf16.mxu0 0
    %2326 = vmatpush1.bf16.msra.mxu0 0
    %2327 = vmatprep.subr.bf16.mxu0 0
    %2328 = vmatpush1.bf16.msra.mxu0 0
    %2329 = vmatprep.subr.bf16.mxu0 0
    %2330 = vmatpush1.bf16.msra.mxu0 0
    %2331 = vmatprep.subr.bf16.mxu0 0
    %2332 = vmatpush1.bf16.msra.mxu0 0
    %2333 = vmatprep.subr.bf16.mxu0 0
    %2334 = vmatpush1.bf16.msra.mxu0 0
    %2335 = vmatprep.subr.bf16.mxu0 0
    %2336 = vmatpush1.bf16.msra.mxu0 0
    %2337 = vmatprep.subr.bf16.mxu0 0
    %2338 = vmatpush1.bf16.msra.mxu0 0
    %2339 = vmatprep.subr.bf16.mxu0 0
    %2340 = vmatpush1.bf16.msra.mxu0 0
    %2341 = vmatprep.subr.bf16.mxu0 0
    %2342 = vmatpush1.bf16.msra.mxu0 0
    %2343 = vmatprep.subr.bf16.mxu0 0
    %2344 = vmatpush1.bf16.msra.mxu0 0
    %2345 = vmatprep.subr.bf16.mxu0 0
    %2346 = vmatpush1.bf16.msra.mxu0 0
    %2347 = vmatprep.subr.bf16.mxu0 0
    %2348 = vmatpush1.bf16.msra.mxu0 0
    %2349 = vmatprep.subr.bf16.mxu0 0
    %2350 = vmatpush1.bf16.msra.mxu0 0
    %2351 = vmatprep.subr.bf16.mxu0 0
    %2352 = vmatpush1.bf16.msra.mxu0 0
    %2353 = vmatprep.subr.bf16.mxu0 0
    %2354 = vmatpush1.bf16.msra.mxu0 0
    %2355 = vmatprep.mubr.bf16.mxu0 0
    %2356 = vmatmul.mubr.bf16.gmra.mrb[0].mxu0 %v2318
    %v2357 = vpop.f32.mrb[0].mxu0
    %v2358 = vadd.f32 0.0, %v2357
    %v2359 = vpop.f32.mrb[0].mxu0
    %v2360 = vpop.f32.mrb[0].mxu0
    %v2361 = vpop.f32.mrb[0].mxu0
    %2362 = vdwg.mxu0
    %2363 = vrot.lane.b32.xlu0 %v2133, 64
    %v2364 = vpop.permute.xlu0 %2363
    %v2366 = vsel %vm289, %v2313, 0
    %v2369 = vsel %vm473, %v2364, 0
    %2371 = vmatprep.subr.bf16.mxu0 0
    %2372 = vmatpush1.bf16.msra.mxu0 %v2369
    %2373 = vmatprep.subr.bf16.mxu0 0
    %2374 = vmatpush1.bf16.msra.mxu0 0
    %2375 = vmatprep.subr.bf16.mxu0 0
    %2376 = vmatpush1.bf16.msra.mxu0 0
    %2377 = vmatprep.subr.bf16.mxu0 0
    %2378 = vmatpush1.bf16.msra.mxu0 0
    %2379 = vmatprep.subr.bf16.mxu0 0
    %2380 = vmatpush1.bf16.msra.mxu0 0
    %2381 = vmatprep.subr.bf16.mxu0 0
    %2382 = vmatpush1.bf16.msra.mxu0 0
    %2383 = vmatprep.subr.bf16.mxu0 0
    %2384 = vmatpush1.bf16.msra.mxu0 0
    %2385 = vmatprep.subr.bf16.mxu0 0
    %2386 = vmatpush1.bf16.msra.mxu0 0
    %2387 = vmatprep.subr.bf16.mxu0 0
    %2388 = vmatpush1.bf16.msra.mxu0 0
    %2389 = vmatprep.subr.bf16.mxu0 0
    %2390 = vmatpush1.bf16.msra.mxu0 0
    %2391 = vmatprep.subr.bf16.mxu0 0
    %2392 = vmatpush1.bf16.msra.mxu0 0
    %2393 = vmatprep.subr.bf16.mxu0 0
    %2394 = vmatpush1.bf16.msra.mxu0 0
    %2395 = vmatprep.subr.bf16.mxu0 0
    %2396 = vmatpush1.bf16.msra.mxu0 0
    %2397 = vmatprep.subr.bf16.mxu0 0
    %2398 = vmatpush1.bf16.msra.mxu0 0
    %2399 = vmatprep.subr.bf16.mxu0 0
    %2400 = vmatpush1.bf16.msra.mxu0 0
    %2401 = vmatprep.subr.bf16.mxu0 0
    %2402 = vmatpush1.bf16.msra.mxu0 0
    %2403 = vmatprep.mubr.bf16.mxu0 0
    %2404 = vmatmul.mubr.bf16.gmra.mrb[0].mxu0 %v2366
    %v2405 = vpop.f32.mrb[0].mxu0
    %v2406 = vadd.f32 0.0, %v2405
    %v2407 = vpop.f32.mrb[0].mxu0
    %v2408 = vpop.f32.mrb[0].mxu0
    %v2409 = vpop.f32.mrb[0].mxu0
    %2410 = vdwg.mxu0
    %2411 = vrot.lane.b32.xlu0 %v2134, 64
    %v2412 = vpop.permute.xlu0 %2411
    %v2414 = vsel %vm289, %v2314, 0
    %v2417 = vsel %vm473, %v2412, 0
    %2419 = vmatprep.subr.bf16.mxu0 0
    %2420 = vmatpush1.bf16.msra.mxu0 %v2417
    %2421 = vmatprep.subr.bf16.mxu0 0
    %2422 = vmatpush1.bf16.msra.mxu0 0
    %2423 = vmatprep.subr.bf16.mxu0 0
    %2424 = vmatpush1.bf16.msra.mxu0 0
    %2425 = vmatprep.subr.bf16.mxu0 0
    %2426 = vmatpush1.bf16.msra.mxu0 0
    %2427 = vmatprep.subr.bf16.mxu0 0
    %2428 = vmatpush1.bf16.msra.mxu0 0
    %2429 = vmatprep.subr.bf16.mxu0 0
    %2430 = vmatpush1.bf16.msra.mxu0 0
    %2431 = vmatprep.subr.bf16.mxu0 0
    %2432 = vmatpush1.bf16.msra.mxu0 0
    %2433 = vmatprep.subr.bf16.mxu0 0
    %2434 = vmatpush1.bf16.msra.mxu0 0
    %2435 = vmatprep.subr.bf16.mxu0 0
    %2436 = vmatpush1.bf16.msra.mxu0 0
    %2437 = vmatprep.subr.bf16.mxu0 0
    %2438 = vmatpush1.bf16.msra.mxu0 0
    %2439 = vmatprep.subr.bf16.mxu0 0
    %2440 = vmatpush1.bf16.msra.mxu0 0
    %2441 = vmatprep.subr.bf16.mxu0 0
    %2442 = vmatpush1.bf16.msra.mxu0 0
    %2443 = vmatprep.subr.bf16.mxu0 0
    %2444 = vmatpush1.bf16.msra.mxu0 0
    %2445 = vmatprep.subr.bf16.mxu0 0
    %2446 = vmatpush1.bf16.msra.mxu0 0
    %2447 = vmatprep.subr.bf16.mxu0 0
    %2448 = vmatpush1.bf16.msra.mxu0 0
    %2449 = vmatprep.subr.bf16.mxu0 0
    %2450 = vmatpush1.bf16.msra.mxu0 0
    %2451 = vmatprep.mubr.bf16.mxu0 0
    %2452 = vmatmul.mubr.bf16.gmra.mrb[0].mxu0 %v2414
    %v2453 = vpop.f32.mrb[0].mxu0
    %v2454 = vadd.f32 0.0, %v2453
    %v2455 = vpop.f32.mrb[0].mxu0
    %v2456 = vpop.f32.mrb[0].mxu0
    %v2457 = vpop.f32.mrb[0].mxu0
    %2458 = vdwg.mxu0
    %v2459 = vmul.f32 %v2358, %v2307
    %v2460 = vmul.f32 %v2406, %v2309
    %v2461 = vmul.f32 %v2454, %v2311
    %2462 = vrot.lane.b32.xlu0 %v2132, 120
    %v2463 = vpop.permute.xlu0 %2462
    %2464 = vrot.lane.b32.xlu0 %v2132, 88
    %v2465 = vpop.permute.xlu0 %2464
    %v2467 = vsel %vm289, %v2463, 0
    %v2470 = vsel %vm289, %v2465, 0
    %2472 = vmatprep.subr.bf16.mxu0 0
    %2473 = vmatpush1.bf16.xpose.msra.mxu0 %v2470
    %2474 = vmatprep.subr.bf16.mxu0 0
    %2475 = vmatpush1.bf16.xpose.msra.mxu0 0
    %2476 = vmatprep.subr.bf16.mxu0 0
    %2477 = vmatpush1.bf16.xpose.msra.mxu0 0
    %2478 = vmatprep.subr.bf16.mxu0 0
    %2479 = vmatpush1.bf16.xpose.msra.mxu0 0
    %2480 = vmatprep.subr.bf16.mxu0 0
    %2481 = vmatpush1.bf16.xpose.msra.mxu0 0
    %2482 = vmatprep.subr.bf16.mxu0 0
    %2483 = vmatpush1.bf16.xpose.msra.mxu0 0
    %2484 = vmatprep.subr.bf16.mxu0 0
    %2485 = vmatpush1.bf16.xpose.msra.mxu0 0
    %2486 = vmatprep.subr.bf16.mxu0 0
    %2487 = vmatpush1.bf16.xpose.msra.mxu0 0
    %2488 = vmatprep.subr.bf16.mxu0 0
    %2489 = vmatpush1.bf16.xpose.msra.mxu0 0
    %2490 = vmatprep.subr.bf16.mxu0 0
    %2491 = vmatpush1.bf16.xpose.msra.mxu0 0
    %2492 = vmatprep.subr.bf16.mxu0 0
    %2493 = vmatpush1.bf16.xpose.msra.mxu0 0
    %2494 = vmatprep.subr.bf16.mxu0 0
    %2495 = vmatpush1.bf16.xpose.msra.mxu0 0
    %2496 = vmatprep.subr.bf16.mxu0 0
    %2497 = vmatpush1.bf16.xpose.msra.mxu0 0
    %2498 = vmatprep.subr.bf16.mxu0 0
    %2499 = vmatpush1.bf16.xpose.msra.mxu0 0
    %2500 = vmatprep.subr.bf16.mxu0 0
    %2501 = vmatpush1.bf16.xpose.msra.mxu0 0
    %2502 = vmatprep.subr.bf16.mxu0 0
    %2503 = vmatpush1.bf16.xpose.msra.mxu0 0
    %2504 = vmatprep.mubr.bf16.mxu0 0
    %2505 = vmatmul.mubr.bf16.gmra.mrb[0].mxu0 %v2467
    %v2506 = vpop.f32.mrb[0].mxu0
    %v2507 = vadd.f32 0.0, %v2506
    %v2508 = vpop.f32.mrb[0].mxu0
    %v2509 = vpop.f32.mrb[0].mxu0
    %v2510 = vpop.f32.mrb[0].mxu0
    %2511 = vdwg.mxu0
    %2512 = vrot.lane.b32.xlu0 %v2133, 120
    %v2513 = vpop.permute.xlu0 %2512
    %2514 = vrot.lane.b32.xlu0 %v2133, 88
    %v2515 = vpop.permute.xlu0 %2514
    %v2517 = vsel %vm289, %v2513, 0
    %v2520 = vsel %vm289, %v2515, 0
    %2522 = vmatprep.subr.bf16.mxu0 0
    %2523 = vmatpush1.bf16.xpose.msra.mxu0 %v2520
    %2524 = vmatprep.subr.bf16.mxu0 0
    %2525 = vmatpush1.bf16.xpose.msra.mxu0 0
    %2526 = vmatprep.subr.bf16.mxu0 0
    %2527 = vmatpush1.bf16.xpose.msra.mxu0 0
    %2528 = vmatprep.subr.bf16.mxu0 0
    %2529 = vmatpush1.bf16.xpose.msra.mxu0 0
    %2530 = vmatprep.subr.bf16.mxu0 0
    %2531 = vmatpush1.bf16.xpose.msra.mxu0 0
    %2532 = vmatprep.subr.bf16.mxu0 0
    %2533 = vmatpush1.bf16.xpose.msra.mxu0 0
    %2534 = vmatprep.subr.bf16.mxu0 0
    %2535 = vmatpush1.bf16.xpose.msra.mxu0 0
    %2536 = vmatprep.subr.bf16.mxu0 0
    %2537 = vmatpush1.bf16.xpose.msra.mxu0 0
    %2538 = vmatprep.subr.bf16.mxu0 0
    %2539 = vmatpush1.bf16.xpose.msra.mxu0 0
    %2540 = vmatprep.subr.bf16.mxu0 0
    %2541 = vmatpush1.bf16.xpose.msra.mxu0 0
    %2542 = vmatprep.subr.bf16.mxu0 0
    %2543 = vmatpush1.bf16.xpose.msra.mxu0 0
    %2544 = vmatprep.subr.bf16.mxu0 0
    %2545 = vmatpush1.bf16.xpose.msra.mxu0 0
    %2546 = vmatprep.subr.bf16.mxu0 0
    %2547 = vmatpush1.bf16.xpose.msra.mxu0 0
    %2548 = vmatprep.subr.bf16.mxu0 0
    %2549 = vmatpush1.bf16.xpose.msra.mxu0 0
    %2550 = vmatprep.subr.bf16.mxu0 0
    %2551 = vmatpush1.bf16.xpose.msra.mxu0 0
    %2552 = vmatprep.subr.bf16.mxu0 0
    %2553 = vmatpush1.bf16.xpose.msra.mxu0 0
    %2554 = vmatprep.mubr.bf16.mxu0 0
    %2555 = vmatmul.mubr.bf16.gmra.mrb[0].mxu0 %v2517
    %v2556 = vpop.f32.mrb[0].mxu0
    %v2557 = vadd.f32 0.0, %v2556
    %v2558 = vpop.f32.mrb[0].mxu0
    %v2559 = vpop.f32.mrb[0].mxu0
    %v2560 = vpop.f32.mrb[0].mxu0
    %2561 = vdwg.mxu0
    %2562 = vrot.lane.b32.xlu0 %v2134, 120
    %v2563 = vpop.permute.xlu0 %2562
    %2564 = vrot.lane.b32.xlu0 %v2134, 88
    %v2565 = vpop.permute.xlu0 %2564
    %v2567 = vsel %vm289, %v2563, 0
    %v2570 = vsel %vm289, %v2565, 0
    %2572 = vmatprep.subr.bf16.mxu0 0
    %2573 = vmatpush1.bf16.xpose.msra.mxu0 %v2570
    %2574 = vmatprep.subr.bf16.mxu0 0
    %2575 = vmatpush1.bf16.xpose.msra.mxu0 0
    %2576 = vmatprep.subr.bf16.mxu0 0
    %2577 = vmatpush1.bf16.xpose.msra.mxu0 0
    %2578 = vmatprep.subr.bf16.mxu0 0
    %2579 = vmatpush1.bf16.xpose.msra.mxu0 0
    %2580 = vmatprep.subr.bf16.mxu0 0
    %2581 = vmatpush1.bf16.xpose.msra.mxu0 0
    %2582 = vmatprep.subr.bf16.mxu0 0
    %2583 = vmatpush1.bf16.xpose.msra.mxu0 0
    %2584 = vmatprep.subr.bf16.mxu0 0
    %2585 = vmatpush1.bf16.xpose.msra.mxu0 0
    %2586 = vmatprep.subr.bf16.mxu0 0
    %2587 = vmatpush1.bf16.xpose.msra.mxu0 0
    %2588 = vmatprep.subr.bf16.mxu0 0
    %2589 = vmatpush1.bf16.xpose.msra.mxu0 0
    %2590 = vmatprep.subr.bf16.mxu0 0
    %2591 = vmatpush1.bf16.xpose.msra.mxu0 0
    %2592 = vmatprep.subr.bf16.mxu0 0
    %2593 = vmatpush1.bf16.xpose.msra.mxu0 0
    %2594 = vmatprep.subr.bf16.mxu0 0
    %2595 = vmatpush1.bf16.xpose.msra.mxu0 0
    %2596 = vmatprep.subr.bf16.mxu0 0
    %2597 = vmatpush1.bf16.xpose.msra.mxu0 0
    %2598 = vmatprep.subr.bf16.mxu0 0
    %2599 = vmatpush1.bf16.xpose.msra.mxu0 0
    %2600 = vmatprep.subr.bf16.mxu0 0
    %2601 = vmatpush1.bf16.xpose.msra.mxu0 0
    %2602 = vmatprep.subr.bf16.mxu0 0
    %2603 = vmatpush1.bf16.xpose.msra.mxu0 0
    %2604 = vmatprep.mubr.bf16.mxu0 0
    %2605 = vmatmul.mubr.bf16.gmra.mrb[0].mxu0 %v2567
    %v2606 = vpop.f32.mrb[0].mxu0
    %v2607 = vadd.f32 0.0, %v2606
    %v2608 = vpop.f32.mrb[0].mxu0
    %v2609 = vpop.f32.mrb[0].mxu0
    %v2610 = vpop.f32.mrb[0].mxu0
    %2611 = vdwg.mxu0
    %v2612 = vsel %vm289, %v2507, -inf
    %2613 = vmax.xlane.f32.xlu0 %v2612
    %v2614 = vpop.xlane.xlu0 %2613
    %v2615 = vsel %vm289, %v2557, -inf
    %2616 = vmax.xlane.f32.xlu0 %v2615
    %v2617 = vpop.xlane.xlu0 %2616
    %v2618 = vsel %vm289, %v2607, -inf
    %2619 = vmax.xlane.f32.xlu0 %v2618
    %v2620 = vpop.xlane.xlu0 %2619
    %v2621 = vsub.f32 %v2507, %v2614
    %v2622 = vsub.f32 %v2557, %v2617
    %v2623 = vsub.f32 %v2607, %v2620
    %v2624 = vmul.f32 %v2621, 1.442695
    %v2625 = vpow.pop %v2624
    %v2626 = vmul.f32 %v2622, 1.442695
    %v2627 = vpow.pop %v2626
    %v2628 = vmul.f32 %v2623, 1.442695
    %v2629 = vpow.pop %v2628
    %v2630 = vsel %vm289, %v2625, 0.0
    %2631 = vadd.xlane.f32.xlu0 %v2630
    %v2632 = vpop.xlane.xlu0 %2631
    %v2633 = vsel %vm289, %v2627, 0.0
    %2634 = vadd.xlane.f32.xlu0 %v2633
    %v2635 = vpop.xlane.xlu0 %2634
    %v2636 = vsel %vm289, %v2629, 0.0
    %2637 = vadd.xlane.f32.xlu0 %v2636
    %v2638 = vpop.xlane.xlu0 %2637
    %v2639 = vrcp.pop %v2632
    %v2640 = vmul.f32 1.0, %v2639
    %v2641 = vrcp.pop %v2635
    %v2642 = vmul.f32 1.0, %v2641
    %v2643 = vrcp.pop %v2638
    %v2644 = vmul.f32 1.0, %v2643
    %v2645 = vpack.c.bf16 %v2625, %v2625
    %v2646 = vpack.c.bf16 %v2627, %v2627
    %v2647 = vpack.c.bf16 %v2629, %v2629
    %2648 = vrot.lane.b32.xlu0 %v2132, 56
    %v2649 = vpop.permute.xlu0 %2648
    %v2651 = vsel %vm289, %v2645, 0
    %v2654 = vsel %vm473, %v2649, 0
    %2656 = vmatprep.subr.bf16.mxu0 0
    %2657 = vmatpush1.bf16.msra.mxu0 %v2654
    %2658 = vmatprep.subr.bf16.mxu0 0
    %2659 = vmatpush1.bf16.msra.mxu0 0
    %2660 = vmatprep.subr.bf16.mxu0 0
    %2661 = vmatpush1.bf16.msra.mxu0 0
    %2662 = vmatprep.subr.bf16.mxu0 0
    %2663 = vmatpush1.bf16.msra.mxu0 0
    %2664 = vmatprep.subr.bf16.mxu0 0
    %2665 = vmatpush1.bf16.msra.mxu0 0
    %2666 = vmatprep.subr.bf16.mxu0 0
    %2667 = vmatpush1.bf16.msra.mxu0 0
    %2668 = vmatprep.subr.bf16.mxu0 0
    %2669 = vmatpush1.bf16.msra.mxu0 0
    %2670 = vmatprep.subr.bf16.mxu0 0
    %2671 = vmatpush1.bf16.msra.mxu0 0
    %2672 = vmatprep.subr.bf16.mxu0 0
    %2673 = vmatpush1.bf16.msra.mxu0 0
    %2674 = vmatprep.subr.bf16.mxu0 0
    %2675 = vmatpush1.bf16.msra.mxu0 0
    %2676 = vmatprep.subr.bf16.mxu0 0
    %2677 = vmatpush1.bf16.msra.mxu0 0
    %2678 = vmatprep.subr.bf16.mxu0 0
    %2679 = vmatpush1.bf16.msra.mxu0 0
    %2680 = vmatprep.subr.bf16.mxu0 0
    %2681 = vmatpush1.bf16.msra.mxu0 0
    %2682 = vmatprep.subr.bf16.mxu0 0
    %2683 = vmatpush1.bf16.msra.mxu0 0
    %2684 = vmatprep.subr.bf16.mxu0 0
    %2685 = vmatpush1.bf16.msra.mxu0 0
    %2686 = vmatprep.subr.bf16.mxu0 0
    %2687 = vmatpush1.bf16.msra.mxu0 0
    %2688 = vmatprep.mubr.bf16.mxu0 0
    %2689 = vmatmul.mubr.bf16.gmra.mrb[0].mxu0 %v2651
    %v2690 = vpop.f32.mrb[0].mxu0
    %v2691 = vadd.f32 0.0, %v2690
    %v2692 = vpop.f32.mrb[0].mxu0
    %v2693 = vpop.f32.mrb[0].mxu0
    %v2694 = vpop.f32.mrb[0].mxu0
    %2695 = vdwg.mxu0
    %2696 = vrot.lane.b32.xlu0 %v2133, 56
    %v2697 = vpop.permute.xlu0 %2696
    %v2699 = vsel %vm289, %v2646, 0
    %v2702 = vsel %vm473, %v2697, 0
    %2704 = vmatprep.subr.bf16.mxu0 0
    %2705 = vmatpush1.bf16.msra.mxu0 %v2702
    %2706 = vmatprep.subr.bf16.mxu0 0
    %2707 = vmatpush1.bf16.msra.mxu0 0
    %2708 = vmatprep.subr.bf16.mxu0 0
    %2709 = vmatpush1.bf16.msra.mxu0 0
    %2710 = vmatprep.subr.bf16.mxu0 0
    %2711 = vmatpush1.bf16.msra.mxu0 0
    %2712 = vmatprep.subr.bf16.mxu0 0
    %2713 = vmatpush1.bf16.msra.mxu0 0
    %2714 = vmatprep.subr.bf16.mxu0 0
    %2715 = vmatpush1.bf16.msra.mxu0 0
    %2716 = vmatprep.subr.bf16.mxu0 0
    %2717 = vmatpush1.bf16.msra.mxu0 0
    %2718 = vmatprep.subr.bf16.mxu0 0
    %2719 = vmatpush1.bf16.msra.mxu0 0
    %2720 = vmatprep.subr.bf16.mxu0 0
    %2721 = vmatpush1.bf16.msra.mxu0 0
    %2722 = vmatprep.subr.bf16.mxu0 0
    %2723 = vmatpush1.bf16.msra.mxu0 0
    %2724 = vmatprep.subr.bf16.mxu0 0
    %2725 = vmatpush1.bf16.msra.mxu0 0
    %2726 = vmatprep.subr.bf16.mxu0 0
    %2727 = vmatpush1.bf16.msra.mxu0 0
    %2728 = vmatprep.subr.bf16.mxu0 0
    %2729 = vmatpush1.bf16.msra.mxu0 0
    %2730 = vmatprep.subr.bf16.mxu0 0
    %2731 = vmatpush1.bf16.msra.mxu0 0
    %2732 = vmatprep.subr.bf16.mxu0 0
    %2733 = vmatpush1.bf16.msra.mxu0 0
    %2734 = vmatprep.subr.bf16.mxu0 0
    %2735 = vmatpush1.bf16.msra.mxu0 0
    %2736 = vmatprep.mubr.bf16.mxu0 0
    %2737 = vmatmul.mubr.bf16.gmra.mrb[0].mxu0 %v2699
    %v2738 = vpop.f32.mrb[0].mxu0
    %v2739 = vadd.f32 0.0, %v2738
    %v2740 = vpop.f32.mrb[0].mxu0
    %v2741 = vpop.f32.mrb[0].mxu0
    %v2742 = vpop.f32.mrb[0].mxu0
    %2743 = vdwg.mxu0
    %2744 = vrot.lane.b32.xlu0 %v2134, 56
    %v2745 = vpop.permute.xlu0 %2744
    %v2747 = vsel %vm289, %v2647, 0
    %v2750 = vsel %vm473, %v2745, 0
    %2752 = vmatprep.subr.bf16.mxu0 0
    %2753 = vmatpush1.bf16.msra.mxu0 %v2750
    %2754 = vmatprep.subr.bf16.mxu0 0
    %2755 = vmatpush1.bf16.msra.mxu0 0
    %2756 = vmatprep.subr.bf16.mxu0 0
    %2757 = vmatpush1.bf16.msra.mxu0 0
    %2758 = vmatprep.subr.bf16.mxu0 0
    %2759 = vmatpush1.bf16.msra.mxu0 0
    %2760 = vmatprep.subr.bf16.mxu0 0
    %2761 = vmatpush1.bf16.msra.mxu0 0
    %2762 = vmatprep.subr.bf16.mxu0 0
    %2763 = vmatpush1.bf16.msra.mxu0 0
    %2764 = vmatprep.subr.bf16.mxu0 0
    %2765 = vmatpush1.bf16.msra.mxu0 0
    %2766 = vmatprep.subr.bf16.mxu0 0
    %2767 = vmatpush1.bf16.msra.mxu0 0
    %2768 = vmatprep.subr.bf16.mxu0 0
    %2769 = vmatpush1.bf16.msra.mxu0 0
    %2770 = vmatprep.subr.bf16.mxu0 0
    %2771 = vmatpush1.bf16.msra.mxu0 0
    %2772 = vmatprep.subr.bf16.mxu0 0
    %2773 = vmatpush1.bf16.msra.mxu0 0
    %2774 = vmatprep.subr.bf16.mxu0 0
    %2775 = vmatpush1.bf16.msra.mxu0 0
    %2776 = vmatprep.subr.bf16.mxu0 0
    %2777 = vmatpush1.bf16.msra.mxu0 0
    %2778 = vmatprep.subr.bf16.mxu0 0
    %2779 = vmatpush1.bf16.msra.mxu0 0
    %2780 = vmatprep.subr.bf16.mxu0 0
    %2781 = vmatpush1.bf16.msra.mxu0 0
    %2782 = vmatprep.subr.bf16.mxu0 0
    %2783 = vmatpush1.bf16.msra.mxu0 0
    %2784 = vmatprep.mubr.bf16.mxu0 0
    %2785 = vmatmul.mubr.bf16.gmra.mrb[0].mxu0 %v2747
    %v2786 = vpop.f32.mrb[0].mxu0
    %v2787 = vadd.f32 0.0, %v2786
    %v2788 = vpop.f32.mrb[0].mxu0
    %v2789 = vpop.f32.mrb[0].mxu0
    %v2790 = vpop.f32.mrb[0].mxu0
    %2791 = vdwg.mxu0
    %v2792 = vmul.f32 %v2691, %v2640
    %v2793 = vmul.f32 %v2739, %v2642
    %v2794 = vmul.f32 %v2787, %v2644
    %2795 = vrot.lane.b32.xlu0 %v2132, 112
    %v2796 = vpop.permute.xlu0 %2795
    %2797 = vrot.lane.b32.xlu0 %v2132, 80
    %v2798 = vpop.permute.xlu0 %2797
    %v2800 = vsel %vm289, %v2796, 0
    %v2803 = vsel %vm289, %v2798, 0
    %2805 = vmatprep.subr.bf16.mxu0 0
    %2806 = vmatpush1.bf16.xpose.msra.mxu0 %v2803
    %2807 = vmatprep.subr.bf16.mxu0 0
    %2808 = vmatpush1.bf16.xpose.msra.mxu0 0
    %2809 = vmatprep.subr.bf16.mxu0 0
    %2810 = vmatpush1.bf16.xpose.msra.mxu0 0
    %2811 = vmatprep.subr.bf16.mxu0 0
    %2812 = vmatpush1.bf16.xpose.msra.mxu0 0
    %2813 = vmatprep.subr.bf16.mxu0 0
    %2814 = vmatpush1.bf16.xpose.msra.mxu0 0
    %2815 = vmatprep.subr.bf16.mxu0 0
    %2816 = vmatpush1.bf16.xpose.msra.mxu0 0
    %2817 = vmatprep.subr.bf16.mxu0 0
    %2818 = vmatpush1.bf16.xpose.msra.mxu0 0
    %2819 = vmatprep.subr.bf16.mxu0 0
    %2820 = vmatpush1.bf16.xpose.msra.mxu0 0
    %2821 = vmatprep.subr.bf16.mxu0 0
    %2822 = vmatpush1.bf16.xpose.msra.mxu0 0
    %2823 = vmatprep.subr.bf16.mxu0 0
    %2824 = vmatpush1.bf16.xpose.msra.mxu0 0
    %2825 = vmatprep.subr.bf16.mxu0 0
    %2826 = vmatpush1.bf16.xpose.msra.mxu0 0
    %2827 = vmatprep.subr.bf16.mxu0 0
    %2828 = vmatpush1.bf16.xpose.msra.mxu0 0
    %2829 = vmatprep.subr.bf16.mxu0 0
    %2830 = vmatpush1.bf16.xpose.msra.mxu0 0
    %2831 = vmatprep.subr.bf16.mxu0 0
    %2832 = vmatpush1.bf16.xpose.msra.mxu0 0
    %2833 = vmatprep.subr.bf16.mxu0 0
    %2834 = vmatpush1.bf16.xpose.msra.mxu0 0
    %2835 = vmatprep.subr.bf16.mxu0 0
    %2836 = vmatpush1.bf16.xpose.msra.mxu0 0
    %2837 = vmatprep.mubr.bf16.mxu0 0
    %2838 = vmatmul.mubr.bf16.gmra.mrb[0].mxu0 %v2800
    %v2839 = vpop.f32.mrb[0].mxu0
    %v2840 = vadd.f32 0.0, %v2839
    %v2841 = vpop.f32.mrb[0].mxu0
    %v2842 = vpop.f32.mrb[0].mxu0
    %v2843 = vpop.f32.mrb[0].mxu0
    %2844 = vdwg.mxu0
    %2845 = vrot.lane.b32.xlu0 %v2133, 112
    %v2846 = vpop.permute.xlu0 %2845
    %2847 = vrot.lane.b32.xlu0 %v2133, 80
    %v2848 = vpop.permute.xlu0 %2847
    %v2850 = vsel %vm289, %v2846, 0
    %v2853 = vsel %vm289, %v2848, 0
    %2855 = vmatprep.subr.bf16.mxu0 0
    %2856 = vmatpush1.bf16.xpose.msra.mxu0 %v2853
    %2857 = vmatprep.subr.bf16.mxu0 0
    %2858 = vmatpush1.bf16.xpose.msra.mxu0 0
    %2859 = vmatprep.subr.bf16.mxu0 0
    %2860 = vmatpush1.bf16.xpose.msra.mxu0 0
    %2861 = vmatprep.subr.bf16.mxu0 0
    %2862 = vmatpush1.bf16.xpose.msra.mxu0 0
    %2863 = vmatprep.subr.bf16.mxu0 0
    %2864 = vmatpush1.bf16.xpose.msra.mxu0 0
    %2865 = vmatprep.subr.bf16.mxu0 0
    %2866 = vmatpush1.bf16.xpose.msra.mxu0 0
    %2867 = vmatprep.subr.bf16.mxu0 0
    %2868 = vmatpush1.bf16.xpose.msra.mxu0 0
    %2869 = vmatprep.subr.bf16.mxu0 0
    %2870 = vmatpush1.bf16.xpose.msra.mxu0 0
    %2871 = vmatprep.subr.bf16.mxu0 0
    %2872 = vmatpush1.bf16.xpose.msra.mxu0 0
    %2873 = vmatprep.subr.bf16.mxu0 0
    %2874 = vmatpush1.bf16.xpose.msra.mxu0 0
    %2875 = vmatprep.subr.bf16.mxu0 0
    %2876 = vmatpush1.bf16.xpose.msra.mxu0 0
    %2877 = vmatprep.subr.bf16.mxu0 0
    %2878 = vmatpush1.bf16.xpose.msra.mxu0 0
    %2879 = vmatprep.subr.bf16.mxu0 0
    %2880 = vmatpush1.bf16.xpose.msra.mxu0 0
    %2881 = vmatprep.subr.bf16.mxu0 0
    %2882 = vmatpush1.bf16.xpose.msra.mxu0 0
    %2883 = vmatprep.subr.bf16.mxu0 0
    %2884 = vmatpush1.bf16.xpose.msra.mxu0 0
    %2885 = vmatprep.subr.bf16.mxu0 0
    %2886 = vmatpush1.bf16.xpose.msra.mxu0 0
    %2887 = vmatprep.mubr.bf16.mxu0 0
    %2888 = vmatmul.mubr.bf16.gmra.mrb[0].mxu0 %v2850
    %v2889 = vpop.f32.mrb[0].mxu0
    %v2890 = vadd.f32 0.0, %v2889
    %v2891 = vpop.f32.mrb[0].mxu0
    %v2892 = vpop.f32.mrb[0].mxu0
    %v2893 = vpop.f32.mrb[0].mxu0
    %2894 = vdwg.mxu0
    %2895 = vrot.lane.b32.xlu0 %v2134, 112
    %v2896 = vpop.permute.xlu0 %2895
    %2897 = vrot.lane.b32.xlu0 %v2134, 80
    %v2898 = vpop.permute.xlu0 %2897
    %v2900 = vsel %vm289, %v2896, 0
    %v2903 = vsel %vm289, %v2898, 0
    %2905 = vmatprep.subr.bf16.mxu0 0
    %2906 = vmatpush1.bf16.xpose.msra.mxu0 %v2903
    %2907 = vmatprep.subr.bf16.mxu0 0
    %2908 = vmatpush1.bf16.xpose.msra.mxu0 0
    %2909 = vmatprep.subr.bf16.mxu0 0
    %2910 = vmatpush1.bf16.xpose.msra.mxu0 0
    %2911 = vmatprep.subr.bf16.mxu0 0
    %2912 = vmatpush1.bf16.xpose.msra.mxu0 0
    %2913 = vmatprep.subr.bf16.mxu0 0
    %2914 = vmatpush1.bf16.xpose.msra.mxu0 0
    %2915 = vmatprep.subr.bf16.mxu0 0
    %2916 = vmatpush1.bf16.xpose.msra.mxu0 0
    %2917 = vmatprep.subr.bf16.mxu0 0
    %2918 = vmatpush1.bf16.xpose.msra.mxu0 0
    %2919 = vmatprep.subr.bf16.mxu0 0
    %2920 = vmatpush1.bf16.xpose.msra.mxu0 0
    %2921 = vmatprep.subr.bf16.mxu0 0
    %2922 = vmatpush1.bf16.xpose.msra.mxu0 0
    %2923 = vmatprep.subr.bf16.mxu0 0
    %2924 = vmatpush1.bf16.xpose.msra.mxu0 0
    %2925 = vmatprep.subr.bf16.mxu0 0
    %2926 = vmatpush1.bf16.xpose.msra.mxu0 0
    %2927 = vmatprep.subr.bf16.mxu0 0
    %2928 = vmatpush1.bf16.xpose.msra.mxu0 0
    %2929 = vmatprep.subr.bf16.mxu0 0
    %2930 = vmatpush1.bf16.xpose.msra.mxu0 0
    %2931 = vmatprep.subr.bf16.mxu0 0
    %2932 = vmatpush1.bf16.xpose.msra.mxu0 0
    %2933 = vmatprep.subr.bf16.mxu0 0
    %2934 = vmatpush1.bf16.xpose.msra.mxu0 0
    %2935 = vmatprep.subr.bf16.mxu0 0
    %2936 = vmatpush1.bf16.xpose.msra.mxu0 0
    %2937 = vmatprep.mubr.bf16.mxu0 0
    %2938 = vmatmul.mubr.bf16.gmra.mrb[0].mxu0 %v2900
    %v2939 = vpop.f32.mrb[0].mxu0
    %v2940 = vadd.f32 0.0, %v2939
    %v2941 = vpop.f32.mrb[0].mxu0
    %v2942 = vpop.f32.mrb[0].mxu0
    %v2943 = vpop.f32.mrb[0].mxu0
    %2944 = vdwg.mxu0
    %v2945 = vsel %vm289, %v2840, -inf
    %2946 = vmax.xlane.f32.xlu0 %v2945
    %v2947 = vpop.xlane.xlu0 %2946
    %v2948 = vsel %vm289, %v2890, -inf
    %2949 = vmax.xlane.f32.xlu0 %v2948
    %v2950 = vpop.xlane.xlu0 %2949
    %v2951 = vsel %vm289, %v2940, -inf
    %2952 = vmax.xlane.f32.xlu0 %v2951
    %v2953 = vpop.xlane.xlu0 %2952
    %v2954 = vsub.f32 %v2840, %v2947
    %v2955 = vsub.f32 %v2890, %v2950
    %v2956 = vsub.f32 %v2940, %v2953
    %v2957 = vmul.f32 %v2954, 1.442695
    %v2958 = vpow.pop %v2957
    %v2959 = vmul.f32 %v2955, 1.442695
    %v2960 = vpow.pop %v2959
    %v2961 = vmul.f32 %v2956, 1.442695
    %v2962 = vpow.pop %v2961
    %v2963 = vsel %vm289, %v2958, 0.0
    %2964 = vadd.xlane.f32.xlu0 %v2963
    %v2965 = vpop.xlane.xlu0 %2964
    %v2966 = vsel %vm289, %v2960, 0.0
    %2967 = vadd.xlane.f32.xlu0 %v2966
    %v2968 = vpop.xlane.xlu0 %2967
    %v2969 = vsel %vm289, %v2962, 0.0
    %2970 = vadd.xlane.f32.xlu0 %v2969
    %v2971 = vpop.xlane.xlu0 %2970
    %v2972 = vrcp.pop %v2965
    %v2973 = vmul.f32 1.0, %v2972
    %v2974 = vrcp.pop %v2968
    %v2975 = vmul.f32 1.0, %v2974
    %v2976 = vrcp.pop %v2971
    %v2977 = vmul.f32 1.0, %v2976
    %v2978 = vpack.c.bf16 %v2958, %v2958
    %v2979 = vpack.c.bf16 %v2960, %v2960
    %v2980 = vpack.c.bf16 %v2962, %v2962
    %2981 = vrot.lane.b32.xlu0 %v2132, 48
    %v2982 = vpop.permute.xlu0 %2981
    %v2984 = vsel %vm289, %v2978, 0
    %v2987 = vsel %vm473, %v2982, 0
    %2989 = vmatprep.subr.bf16.mxu0 0
    %2990 = vmatpush1.bf16.msra.mxu0 %v2987
    %2991 = vmatprep.subr.bf16.mxu0 0
    %2992 = vmatpush1.bf16.msra.mxu0 0
    %2993 = vmatprep.subr.bf16.mxu0 0
    %2994 = vmatpush1.bf16.msra.mxu0 0
    %2995 = vmatprep.subr.bf16.mxu0 0
    %2996 = vmatpush1.bf16.msra.mxu0 0
    %2997 = vmatprep.subr.bf16.mxu0 0
    %2998 = vmatpush1.bf16.msra.mxu0 0
    %2999 = vmatprep.subr.bf16.mxu0 0
    %3000 = vmatpush1.bf16.msra.mxu0 0
    %3001 = vmatprep.subr.bf16.mxu0 0
    %3002 = vmatpush1.bf16.msra.mxu0 0
    %3003 = vmatprep.subr.bf16.mxu0 0
    %3004 = vmatpush1.bf16.msra.mxu0 0
    %3005 = vmatprep.subr.bf16.mxu0 0
    %3006 = vmatpush1.bf16.msra.mxu0 0
    %3007 = vmatprep.subr.bf16.mxu0 0
    %3008 = vmatpush1.bf16.msra.mxu0 0
    %3009 = vmatprep.subr.bf16.mxu0 0
    %3010 = vmatpush1.bf16.msra.mxu0 0
    %3011 = vmatprep.subr.bf16.mxu0 0
    %3012 = vmatpush1.bf16.msra.mxu0 0
    %3013 = vmatprep.subr.bf16.mxu0 0
    %3014 = vmatpush1.bf16.msra.mxu0 0
    %3015 = vmatprep.subr.bf16.mxu0 0
    %3016 = vmatpush1.bf16.msra.mxu0 0
    %3017 = vmatprep.subr.bf16.mxu0 0
    %3018 = vmatpush1.bf16.msra.mxu0 0
    %3019 = vmatprep.subr.bf16.mxu0 0
    %3020 = vmatpush1.bf16.msra.mxu0 0
    %3021 = vmatprep.mubr.bf16.mxu0 0
    %3022 = vmatmul.mubr.bf16.gmra.mrb[0].mxu0 %v2984
    %v3023 = vpop.f32.mrb[0].mxu0
    %v3024 = vadd.f32 0.0, %v3023
    %v3025 = vpop.f32.mrb[0].mxu0
    %v3026 = vpop.f32.mrb[0].mxu0
    %v3027 = vpop.f32.mrb[0].mxu0
    %3028 = vdwg.mxu0
    %3029 = vrot.lane.b32.xlu0 %v2133, 48
    %v3030 = vpop.permute.xlu0 %3029
    %v3032 = vsel %vm289, %v2979, 0
    %v3035 = vsel %vm473, %v3030, 0
    %3037 = vmatprep.subr.bf16.mxu0 0
    %3038 = vmatpush1.bf16.msra.mxu0 %v3035
    %3039 = vmatprep.subr.bf16.mxu0 0
    %3040 = vmatpush1.bf16.msra.mxu0 0
    %3041 = vmatprep.subr.bf16.mxu0 0
    %3042 = vmatpush1.bf16.msra.mxu0 0
    %3043 = vmatprep.subr.bf16.mxu0 0
    %3044 = vmatpush1.bf16.msra.mxu0 0
    %3045 = vmatprep.subr.bf16.mxu0 0
    %3046 = vmatpush1.bf16.msra.mxu0 0
    %3047 = vmatprep.subr.bf16.mxu0 0
    %3048 = vmatpush1.bf16.msra.mxu0 0
    %3049 = vmatprep.subr.bf16.mxu0 0
    %3050 = vmatpush1.bf16.msra.mxu0 0
    %3051 = vmatprep.subr.bf16.mxu0 0
    %3052 = vmatpush1.bf16.msra.mxu0 0
    %3053 = vmatprep.subr.bf16.mxu0 0
    %3054 = vmatpush1.bf16.msra.mxu0 0
    %3055 = vmatprep.subr.bf16.mxu0 0
    %3056 = vmatpush1.bf16.msra.mxu0 0
    %3057 = vmatprep.subr.bf16.mxu0 0
    %3058 = vmatpush1.bf16.msra.mxu0 0
    %3059 = vmatprep.subr.bf16.mxu0 0
    %3060 = vmatpush1.bf16.msra.mxu0 0
    %3061 = vmatprep.subr.bf16.mxu0 0
    %3062 = vmatpush1.bf16.msra.mxu0 0
    %3063 = vmatprep.subr.bf16.mxu0 0
    %3064 = vmatpush1.bf16.msra.mxu0 0
    %3065 = vmatprep.subr.bf16.mxu0 0
    %3066 = vmatpush1.bf16.msra.mxu0 0
    %3067 = vmatprep.subr.bf16.mxu0 0
    %3068 = vmatpush1.bf16.msra.mxu0 0
    %3069 = vmatprep.mubr.bf16.mxu0 0
    %3070 = vmatmul.mubr.bf16.gmra.mrb[0].mxu0 %v3032
    %v3071 = vpop.f32.mrb[0].mxu0
    %v3072 = vadd.f32 0.0, %v3071
    %v3073 = vpop.f32.mrb[0].mxu0
    %v3074 = vpop.f32.mrb[0].mxu0
    %v3075 = vpop.f32.mrb[0].mxu0
    %3076 = vdwg.mxu0
    %3077 = vrot.lane.b32.xlu0 %v2134, 48
    %v3078 = vpop.permute.xlu0 %3077
    %v3080 = vsel %vm289, %v2980, 0
    %v3083 = vsel %vm473, %v3078, 0
    %3085 = vmatprep.subr.bf16.mxu0 0
    %3086 = vmatpush1.bf16.msra.mxu0 %v3083
    %3087 = vmatprep.subr.bf16.mxu0 0
    %3088 = vmatpush1.bf16.msra.mxu0 0
    %3089 = vmatprep.subr.bf16.mxu0 0
    %3090 = vmatpush1.bf16.msra.mxu0 0
    %3091 = vmatprep.subr.bf16.mxu0 0
    %3092 = vmatpush1.bf16.msra.mxu0 0
    %3093 = vmatprep.subr.bf16.mxu0 0
    %3094 = vmatpush1.bf16.msra.mxu0 0
    %3095 = vmatprep.subr.bf16.mxu0 0
    %3096 = vmatpush1.bf16.msra.mxu0 0
    %3097 = vmatprep.subr.bf16.mxu0 0
    %3098 = vmatpush1.bf16.msra.mxu0 0
    %3099 = vmatprep.subr.bf16.mxu0 0
    %3100 = vmatpush1.bf16.msra.mxu0 0
    %3101 = vmatprep.subr.bf16.mxu0 0
    %3102 = vmatpush1.bf16.msra.mxu0 0
    %3103 = vmatprep.subr.bf16.mxu0 0
    %3104 = vmatpush1.bf16.msra.mxu0 0
    %3105 = vmatprep.subr.bf16.mxu0 0
    %3106 = vmatpush1.bf16.msra.mxu0 0
    %3107 = vmatprep.subr.bf16.mxu0 0
    %3108 = vmatpush1.bf16.msra.mxu0 0
    %3109 = vmatprep.subr.bf16.mxu0 0
    %3110 = vmatpush1.bf16.msra.mxu0 0
    %3111 = vmatprep.subr.bf16.mxu0 0
    %3112 = vmatpush1.bf16.msra.mxu0 0
    %3113 = vmatprep.subr.bf16.mxu0 0
    %3114 = vmatpush1.bf16.msra.mxu0 0
    %3115 = vmatprep.subr.bf16.mxu0 0
    %3116 = vmatpush1.bf16.msra.mxu0 0
    %3117 = vmatprep.mubr.bf16.mxu0 0
    %3118 = vmatmul.mubr.bf16.gmra.mrb[0].mxu0 %v3080
    %v3119 = vpop.f32.mrb[0].mxu0
    %v3120 = vadd.f32 0.0, %v3119
    %v3121 = vpop.f32.mrb[0].mxu0
    %v3122 = vpop.f32.mrb[0].mxu0
    %v3123 = vpop.f32.mrb[0].mxu0
    %3124 = vdwg.mxu0
    %v3125 = vmul.f32 %v3024, %v2973
    %v3126 = vmul.f32 %v3072, %v2975
    %v3127 = vmul.f32 %v3120, %v2977
    %3128 = vrot.lane.b32.xlu0 %v2132, 104
    %v3129 = vpop.permute.xlu0 %3128
    %3130 = vrot.lane.b32.xlu0 %v2132, 72
    %v3131 = vpop.permute.xlu0 %3130
    %v3133 = vsel %vm289, %v3129, 0
    %v3136 = vsel %vm289, %v3131, 0
    %3138 = vmatprep.subr.bf16.mxu0 0
    %3139 = vmatpush1.bf16.xpose.msra.mxu0 %v3136
    %3140 = vmatprep.subr.bf16.mxu0 0
    %3141 = vmatpush1.bf16.xpose.msra.mxu0 0
    %3142 = vmatprep.subr.bf16.mxu0 0
    %3143 = vmatpush1.bf16.xpose.msra.mxu0 0
    %3144 = vmatprep.subr.bf16.mxu0 0
    %3145 = vmatpush1.bf16.xpose.msra.mxu0 0
    %3146 = vmatprep.subr.bf16.mxu0 0
    %3147 = vmatpush1.bf16.xpose.msra.mxu0 0
    %3148 = vmatprep.subr.bf16.mxu0 0
    %3149 = vmatpush1.bf16.xpose.msra.mxu0 0
    %3150 = vmatprep.subr.bf16.mxu0 0
    %3151 = vmatpush1.bf16.xpose.msra.mxu0 0
    %3152 = vmatprep.subr.bf16.mxu0 0
    %3153 = vmatpush1.bf16.xpose.msra.mxu0 0
    %3154 = vmatprep.subr.bf16.mxu0 0
    %3155 = vmatpush1.bf16.xpose.msra.mxu0 0
    %3156 = vmatprep.subr.bf16.mxu0 0
    %3157 = vmatpush1.bf16.xpose.msra.mxu0 0
    %3158 = vmatprep.subr.bf16.mxu0 0
    %3159 = vmatpush1.bf16.xpose.msra.mxu0 0
    %3160 = vmatprep.subr.bf16.mxu0 0
    %3161 = vmatpush1.bf16.xpose.msra.mxu0 0
    %3162 = vmatprep.subr.bf16.mxu0 0
    %3163 = vmatpush1.bf16.xpose.msra.mxu0 0
    %3164 = vmatprep.subr.bf16.mxu0 0
    %3165 = vmatpush1.bf16.xpose.msra.mxu0 0
    %3166 = vmatprep.subr.bf16.mxu0 0
    %3167 = vmatpush1.bf16.xpose.msra.mxu0 0
    %3168 = vmatprep.subr.bf16.mxu0 0
    %3169 = vmatpush1.bf16.xpose.msra.mxu0 0
    %3170 = vmatprep.mubr.bf16.mxu0 0
    %3171 = vmatmul.mubr.bf16.gmra.mrb[0].mxu0 %v3133
    %v3172 = vpop.f32.mrb[0].mxu0
    %v3173 = vadd.f32 0.0, %v3172
    %v3174 = vpop.f32.mrb[0].mxu0
    %v3175 = vpop.f32.mrb[0].mxu0
    %v3176 = vpop.f32.mrb[0].mxu0
    %3177 = vdwg.mxu0
    %3178 = vrot.lane.b32.xlu0 %v2133, 104
    %v3179 = vpop.permute.xlu0 %3178
    %3180 = vrot.lane.b32.xlu0 %v2133, 72
    %v3181 = vpop.permute.xlu0 %3180
    %v3183 = vsel %vm289, %v3179, 0
    %v3186 = vsel %vm289, %v3181, 0
    %3188 = vmatprep.subr.bf16.mxu0 0
    %3189 = vmatpush1.bf16.xpose.msra.mxu0 %v3186
    %3190 = vmatprep.subr.bf16.mxu0 0
    %3191 = vmatpush1.bf16.xpose.msra.mxu0 0
    %3192 = vmatprep.subr.bf16.mxu0 0
    %3193 = vmatpush1.bf16.xpose.msra.mxu0 0
    %3194 = vmatprep.subr.bf16.mxu0 0
    %3195 = vmatpush1.bf16.xpose.msra.mxu0 0
    %3196 = vmatprep.subr.bf16.mxu0 0
    %3197 = vmatpush1.bf16.xpose.msra.mxu0 0
    %3198 = vmatprep.subr.bf16.mxu0 0
    %3199 = vmatpush1.bf16.xpose.msra.mxu0 0
    %3200 = vmatprep.subr.bf16.mxu0 0
    %3201 = vmatpush1.bf16.xpose.msra.mxu0 0
    %3202 = vmatprep.subr.bf16.mxu0 0
    %3203 = vmatpush1.bf16.xpose.msra.mxu0 0
    %3204 = vmatprep.subr.bf16.mxu0 0
    %3205 = vmatpush1.bf16.xpose.msra.mxu0 0
    %3206 = vmatprep.subr.bf16.mxu0 0
    %3207 = vmatpush1.bf16.xpose.msra.mxu0 0
    %3208 = vmatprep.subr.bf16.mxu0 0
    %3209 = vmatpush1.bf16.xpose.msra.mxu0 0
    %3210 = vmatprep.subr.bf16.mxu0 0
    %3211 = vmatpush1.bf16.xpose.msra.mxu0 0
    %3212 = vmatprep.subr.bf16.mxu0 0
    %3213 = vmatpush1.bf16.xpose.msra.mxu0 0
    %3214 = vmatprep.subr.bf16.mxu0 0
    %3215 = vmatpush1.bf16.xpose.msra.mxu0 0
    %3216 = vmatprep.subr.bf16.mxu0 0
    %3217 = vmatpush1.bf16.xpose.msra.mxu0 0
    %3218 = vmatprep.subr.bf16.mxu0 0
    %3219 = vmatpush1.bf16.xpose.msra.mxu0 0
    %3220 = vmatprep.mubr.bf16.mxu0 0
    %3221 = vmatmul.mubr.bf16.gmra.mrb[0].mxu0 %v3183
    %v3222 = vpop.f32.mrb[0].mxu0
    %v3223 = vadd.f32 0.0, %v3222
    %v3224 = vpop.f32.mrb[0].mxu0
    %v3225 = vpop.f32.mrb[0].mxu0
    %v3226 = vpop.f32.mrb[0].mxu0
    %3227 = vdwg.mxu0
    %3228 = vrot.lane.b32.xlu0 %v2134, 104
    %v3229 = vpop.permute.xlu0 %3228
    %3230 = vrot.lane.b32.xlu0 %v2134, 72
    %v3231 = vpop.permute.xlu0 %3230
    %v3233 = vsel %vm289, %v3229, 0
    %v3236 = vsel %vm289, %v3231, 0
    %3238 = vmatprep.subr.bf16.mxu0 0
    %3239 = vmatpush1.bf16.xpose.msra.mxu0 %v3236
    %3240 = vmatprep.subr.bf16.mxu0 0
    %3241 = vmatpush1.bf16.xpose.msra.mxu0 0
    %3242 = vmatprep.subr.bf16.mxu0 0
    %3243 = vmatpush1.bf16.xpose.msra.mxu0 0
    %3244 = vmatprep.subr.bf16.mxu0 0
    %3245 = vmatpush1.bf16.xpose.msra.mxu0 0
    %3246 = vmatprep.subr.bf16.mxu0 0
    %3247 = vmatpush1.bf16.xpose.msra.mxu0 0
    %3248 = vmatprep.subr.bf16.mxu0 0
    %3249 = vmatpush1.bf16.xpose.msra.mxu0 0
    %3250 = vmatprep.subr.bf16.mxu0 0
    %3251 = vmatpush1.bf16.xpose.msra.mxu0 0
    %3252 = vmatprep.subr.bf16.mxu0 0
    %3253 = vmatpush1.bf16.xpose.msra.mxu0 0
    %3254 = vmatprep.subr.bf16.mxu0 0
    %3255 = vmatpush1.bf16.xpose.msra.mxu0 0
    %3256 = vmatprep.subr.bf16.mxu0 0
    %3257 = vmatpush1.bf16.xpose.msra.mxu0 0
    %3258 = vmatprep.subr.bf16.mxu0 0
    %3259 = vmatpush1.bf16.xpose.msra.mxu0 0
    %3260 = vmatprep.subr.bf16.mxu0 0
    %3261 = vmatpush1.bf16.xpose.msra.mxu0 0
    %3262 = vmatprep.subr.bf16.mxu0 0
    %3263 = vmatpush1.bf16.xpose.msra.mxu0 0
    %3264 = vmatprep.subr.bf16.mxu0 0
    %3265 = vmatpush1.bf16.xpose.msra.mxu0 0
    %3266 = vmatprep.subr.bf16.mxu0 0
    %3267 = vmatpush1.bf16.xpose.msra.mxu0 0
    %3268 = vmatprep.subr.bf16.mxu0 0
    %3269 = vmatpush1.bf16.xpose.msra.mxu0 0
    %3270 = vmatprep.mubr.bf16.mxu0 0
    %3271 = vmatmul.mubr.bf16.gmra.mrb[0].mxu0 %v3233
    %v3272 = vpop.f32.mrb[0].mxu0
    %v3273 = vadd.f32 0.0, %v3272
    %v3274 = vpop.f32.mrb[0].mxu0
    %v3275 = vpop.f32.mrb[0].mxu0
    %v3276 = vpop.f32.mrb[0].mxu0
    %3277 = vdwg.mxu0
    %v3278 = vsel %vm289, %v3173, -inf
    %3279 = vmax.xlane.f32.xlu0 %v3278
    %v3280 = vpop.xlane.xlu0 %3279
    %v3281 = vsel %vm289, %v3223, -inf
    %3282 = vmax.xlane.f32.xlu0 %v3281
    %v3283 = vpop.xlane.xlu0 %3282
    %v3284 = vsel %vm289, %v3273, -inf
    %3285 = vmax.xlane.f32.xlu0 %v3284
    %v3286 = vpop.xlane.xlu0 %3285
    %v3287 = vsub.f32 %v3173, %v3280
    %v3288 = vsub.f32 %v3223, %v3283
    %v3289 = vsub.f32 %v3273, %v3286
    %v3290 = vmul.f32 %v3287, 1.442695
    %v3291 = vpow.pop %v3290
    %v3292 = vmul.f32 %v3288, 1.442695
    %v3293 = vpow.pop %v3292
    %v3294 = vmul.f32 %v3289, 1.442695
    %v3295 = vpow.pop %v3294
    %v3296 = vsel %vm289, %v3291, 0.0
    %3297 = vadd.xlane.f32.xlu0 %v3296
    %v3298 = vpop.xlane.xlu0 %3297
    %v3299 = vsel %vm289, %v3293, 0.0
    %3300 = vadd.xlane.f32.xlu0 %v3299
    %v3301 = vpop.xlane.xlu0 %3300
    %v3302 = vsel %vm289, %v3295, 0.0
    %3303 = vadd.xlane.f32.xlu0 %v3302
    %v3304 = vpop.xlane.xlu0 %3303
    %v3305 = vrcp.pop %v3298
    %v3306 = vmul.f32 1.0, %v3305
    %v3307 = vrcp.pop %v3301
    %v3308 = vmul.f32 1.0, %v3307
    %v3309 = vrcp.pop %v3304
    %v3310 = vmul.f32 1.0, %v3309
    %v3311 = vpack.c.bf16 %v3291, %v3291
    %v3312 = vpack.c.bf16 %v3293, %v3293
    %v3313 = vpack.c.bf16 %v3295, %v3295
    %3314 = vrot.lane.b32.xlu0 %v2132, 40
    %v3315 = vpop.permute.xlu0 %3314
    %v3317 = vsel %vm289, %v3311, 0
    %v3320 = vsel %vm473, %v3315, 0
    %3322 = vmatprep.subr.bf16.mxu0 0
    %3323 = vmatpush1.bf16.msra.mxu0 %v3320
    %3324 = vmatprep.subr.bf16.mxu0 0
    %3325 = vmatpush1.bf16.msra.mxu0 0
    %3326 = vmatprep.subr.bf16.mxu0 0
    %3327 = vmatpush1.bf16.msra.mxu0 0
    %3328 = vmatprep.subr.bf16.mxu0 0
    %3329 = vmatpush1.bf16.msra.mxu0 0
    %3330 = vmatprep.subr.bf16.mxu0 0
    %3331 = vmatpush1.bf16.msra.mxu0 0
    %3332 = vmatprep.subr.bf16.mxu0 0
    %3333 = vmatpush1.bf16.msra.mxu0 0
    %3334 = vmatprep.subr.bf16.mxu0 0
    %3335 = vmatpush1.bf16.msra.mxu0 0
    %3336 = vmatprep.subr.bf16.mxu0 0
    %3337 = vmatpush1.bf16.msra.mxu0 0
    %3338 = vmatprep.subr.bf16.mxu0 0
    %3339 = vmatpush1.bf16.msra.mxu0 0
    %3340 = vmatprep.subr.bf16.mxu0 0
    %3341 = vmatpush1.bf16.msra.mxu0 0
    %3342 = vmatprep.subr.bf16.mxu0 0
    %3343 = vmatpush1.bf16.msra.mxu0 0
    %3344 = vmatprep.subr.bf16.mxu0 0
    %3345 = vmatpush1.bf16.msra.mxu0 0
    %3346 = vmatprep.subr.bf16.mxu0 0
    %3347 = vmatpush1.bf16.msra.mxu0 0
    %3348 = vmatprep.subr.bf16.mxu0 0
    %3349 = vmatpush1.bf16.msra.mxu0 0
    %3350 = vmatprep.subr.bf16.mxu0 0
    %3351 = vmatpush1.bf16.msra.mxu0 0
    %3352 = vmatprep.subr.bf16.mxu0 0
    %3353 = vmatpush1.bf16.msra.mxu0 0
    %3354 = vmatprep.mubr.bf16.mxu0 0
    %3355 = vmatmul.mubr.bf16.gmra.mrb[0].mxu0 %v3317
    %v3356 = vpop.f32.mrb[0].mxu0
    %v3357 = vadd.f32 0.0, %v3356
    %v3358 = vpop.f32.mrb[0].mxu0
    %v3359 = vpop.f32.mrb[0].mxu0
    %v3360 = vpop.f32.mrb[0].mxu0
    %3361 = vdwg.mxu0
    %3362 = vrot.lane.b32.xlu0 %v2133, 40
    %v3363 = vpop.permute.xlu0 %3362
    %v3365 = vsel %vm289, %v3312, 0
    %v3368 = vsel %vm473, %v3363, 0
    %3370 = vmatprep.subr.bf16.mxu0 0
    %3371 = vmatpush1.bf16.msra.mxu0 %v3368
    %3372 = vmatprep.subr.bf16.mxu0 0
    %3373 = vmatpush1.bf16.msra.mxu0 0
    %3374 = vmatprep.subr.bf16.mxu0 0
    %3375 = vmatpush1.bf16.msra.mxu0 0
    %3376 = vmatprep.subr.bf16.mxu0 0
    %3377 = vmatpush1.bf16.msra.mxu0 0
    %3378 = vmatprep.subr.bf16.mxu0 0
    %3379 = vmatpush1.bf16.msra.mxu0 0
    %3380 = vmatprep.subr.bf16.mxu0 0
    %3381 = vmatpush1.bf16.msra.mxu0 0
    %3382 = vmatprep.subr.bf16.mxu0 0
    %3383 = vmatpush1.bf16.msra.mxu0 0
    %3384 = vmatprep.subr.bf16.mxu0 0
    %3385 = vmatpush1.bf16.msra.mxu0 0
    %3386 = vmatprep.subr.bf16.mxu0 0
    %3387 = vmatpush1.bf16.msra.mxu0 0
    %3388 = vmatprep.subr.bf16.mxu0 0
    %3389 = vmatpush1.bf16.msra.mxu0 0
    %3390 = vmatprep.subr.bf16.mxu0 0
    %3391 = vmatpush1.bf16.msra.mxu0 0
    %3392 = vmatprep.subr.bf16.mxu0 0
    %3393 = vmatpush1.bf16.msra.mxu0 0
    %3394 = vmatprep.subr.bf16.mxu0 0
    %3395 = vmatpush1.bf16.msra.mxu0 0
    %3396 = vmatprep.subr.bf16.mxu0 0
    %3397 = vmatpush1.bf16.msra.mxu0 0
    %3398 = vmatprep.subr.bf16.mxu0 0
    %3399 = vmatpush1.bf16.msra.mxu0 0
    %3400 = vmatprep.subr.bf16.mxu0 0
    %3401 = vmatpush1.bf16.msra.mxu0 0
    %3402 = vmatprep.mubr.bf16.mxu0 0
    %3403 = vmatmul.mubr.bf16.gmra.mrb[0].mxu0 %v3365
    %v3404 = vpop.f32.mrb[0].mxu0
    %v3405 = vadd.f32 0.0, %v3404
    %v3406 = vpop.f32.mrb[0].mxu0
    %v3407 = vpop.f32.mrb[0].mxu0
    %v3408 = vpop.f32.mrb[0].mxu0
    %3409 = vdwg.mxu0
    %3410 = vrot.lane.b32.xlu0 %v2134, 40
    %v3411 = vpop.permute.xlu0 %3410
    %v3413 = vsel %vm289, %v3313, 0
    %v3416 = vsel %vm473, %v3411, 0
    %3418 = vmatprep.subr.bf16.mxu0 0
    %3419 = vmatpush1.bf16.msra.mxu0 %v3416
    %3420 = vmatprep.subr.bf16.mxu0 0
    %3421 = vmatpush1.bf16.msra.mxu0 0
    %3422 = vmatprep.subr.bf16.mxu0 0
    %3423 = vmatpush1.bf16.msra.mxu0 0
    %3424 = vmatprep.subr.bf16.mxu0 0
    %3425 = vmatpush1.bf16.msra.mxu0 0
    %3426 = vmatprep.subr.bf16.mxu0 0
    %3427 = vmatpush1.bf16.msra.mxu0 0
    %3428 = vmatprep.subr.bf16.mxu0 0
    %3429 = vmatpush1.bf16.msra.mxu0 0
    %3430 = vmatprep.subr.bf16.mxu0 0
    %3431 = vmatpush1.bf16.msra.mxu0 0
    %3432 = vmatprep.subr.bf16.mxu0 0
    %3433 = vmatpush1.bf16.msra.mxu0 0
    %3434 = vmatprep.subr.bf16.mxu0 0
    %3435 = vmatpush1.bf16.msra.mxu0 0
    %3436 = vmatprep.subr.bf16.mxu0 0
    %3437 = vmatpush1.bf16.msra.mxu0 0
    %3438 = vmatprep.subr.bf16.mxu0 0
    %3439 = vmatpush1.bf16.msra.mxu0 0
    %3440 = vmatprep.subr.bf16.mxu0 0
    %3441 = vmatpush1.bf16.msra.mxu0 0
    %3442 = vmatprep.subr.bf16.mxu0 0
    %3443 = vmatpush1.bf16.msra.mxu0 0
    %3444 = vmatprep.subr.bf16.mxu0 0
    %3445 = vmatpush1.bf16.msra.mxu0 0
    %3446 = vmatprep.subr.bf16.mxu0 0
    %3447 = vmatpush1.bf16.msra.mxu0 0
    %3448 = vmatprep.subr.bf16.mxu0 0
    %3449 = vmatpush1.bf16.msra.mxu0 0
    %3450 = vmatprep.mubr.bf16.mxu0 0
    %3451 = vmatmul.mubr.bf16.gmra.mrb[0].mxu0 %v3413
    %v3452 = vpop.f32.mrb[0].mxu0
    %v3453 = vadd.f32 0.0, %v3452
    %v3454 = vpop.f32.mrb[0].mxu0
    %v3455 = vpop.f32.mrb[0].mxu0
    %v3456 = vpop.f32.mrb[0].mxu0
    %3457 = vdwg.mxu0
    %v3458 = vmul.f32 %v3357, %v3306
    %v3459 = vmul.f32 %v3405, %v3308
    %v3460 = vmul.f32 %v3453, %v3310
    %3464 = vrot.lane.b32.xlu0 %v2792, 8
    %v3465 = vpop.permute.xlu0 %3464
    %3466 = vrot.lane.b32.xlu0 %v2793, 8
    %v3467 = vpop.permute.xlu0 %3466
    %3468 = vrot.lane.b32.xlu0 %v2794, 8
    %v3469 = vpop.permute.xlu0 %3468
    %3476 = vrot.lane.b32.xlu0 %v3125, 16
    %v3477 = vpop.permute.xlu0 %3476
    %3478 = vrot.lane.b32.xlu0 %v3126, 16
    %v3479 = vpop.permute.xlu0 %3478
    %3480 = vrot.lane.b32.xlu0 %v3127, 16
    %v3481 = vpop.permute.xlu0 %3480
    %3488 = vrot.lane.b32.xlu0 %v3458, 24
    %v3489 = vpop.permute.xlu0 %3488
    %3490 = vrot.lane.b32.xlu0 %v3459, 24
    %v3491 = vpop.permute.xlu0 %3490
    %3492 = vrot.lane.b32.xlu0 %v3460, 24
    %v3493 = vpop.permute.xlu0 %3492
    %v3497 = vsel %vm289, %v2459, %v3465
    %v3498 = vsel %vm289, %v2460, %v3467
    %v3499 = vsel %vm289, %v2461, %v3469
    %v3500 = vsel %vm1654, %v3497, %v3477
    %v3501 = vsel %vm1654, %v3498, %v3479
    %v3502 = vsel %vm1654, %v3499, %v3481
    %v3503 = vsel %vm1658, %v3500, %v3489
    %v3504 = vsel %vm1658, %v3501, %v3491
    %v3505 = vsel %vm1658, %v3502, %v3493
    %s3506 = scalar_lea.vmem %s3, 16
    %v3507 = vld [vmem:[%s3506] sm:$0xf]
    %v3508 = vld [vmem:[%s3506 + $0x4] sm:$0xf]
    %v3509 = vld [vmem:[%s3506 + $0x8] sm:$0xf]
    %v3510 = vld [vmem:[%s3506 + $0xc] sm:$0xf]
    %v3511 = vpack.c.bf16 %v3504, %v3503
    %v3512 = vpack.c.bf16 %v3505, %v3505
    %s3513 = scalar_lea.vmem [#allocation7], 1
    %v3514 = vld [vmem:[%s3513] sm:$0x1]
    %v3516 = vlaneseq
    %v3517 = vshrl.u32 %v3516, 7
    %v3518 = vsub.s32 0, %v3517
    %v3519 = vrot.slane %v3514, %v3518
    %v3525 = vunpack.c.l.b16 %v3507
    %v3526 = vunpack.c.l.b16 %v3508
    %v3527 = vunpack.c.l.b16 %v3509
    %v3528 = vunpack.c.l.b16 %v3510
    %v3529 = vpack.c.b16 %v3526, %v3525
    %v3530 = vpack.c.b16 %v3528, %v3527
    %v3534 = vsel %vm222, %v3511, 0
    %v3537 = vsel %vm222, %v3512, 0
    %3539 = vmatprep.subr.bf16.mxu0 0
    %3540 = vmatpush1.bf16.msra.mxu0 %v3529
    %3541 = vmatprep.subr.bf16.mxu0 0
    %3542 = vmatpush1.bf16.msra.mxu0 %v3530
    %3543 = vmatprep.subr.bf16.mxu0 0
    %3544 = vmatpush1.bf16.msra.mxu0 0
    %3545 = vmatprep.subr.bf16.mxu0 0
    %3546 = vmatpush1.bf16.msra.mxu0 0
    %3547 = vmatprep.subr.bf16.mxu0 0
    %3548 = vmatpush1.bf16.msra.mxu0 0
    %3549 = vmatprep.subr.bf16.mxu0 0
    %3550 = vmatpush1.bf16.msra.mxu0 0
    %3551 = vmatprep.subr.bf16.mxu0 0
    %3552 = vmatpush1.bf16.msra.mxu0 0
    %3553 = vmatprep.subr.bf16.mxu0 0
    %3554 = vmatpush1.bf16.msra.mxu0 0
    %3555 = vmatprep.subr.bf16.mxu0 0
    %3556 = vmatpush1.bf16.msra.mxu0 0
    %3557 = vmatprep.subr.bf16.mxu0 0
    %3558 = vmatpush1.bf16.msra.mxu0 0
    %3559 = vmatprep.subr.bf16.mxu0 0
    %3560 = vmatpush1.bf16.msra.mxu0 0
    %3561 = vmatprep.subr.bf16.mxu0 0
    %3562 = vmatpush1.bf16.msra.mxu0 0
    %3563 = vmatprep.subr.bf16.mxu0 0
    %3564 = vmatpush1.bf16.msra.mxu0 0
    %3565 = vmatprep.subr.bf16.mxu0 0
    %3566 = vmatpush1.bf16.msra.mxu0 0
    %3567 = vmatprep.subr.bf16.mxu0 0
    %3568 = vmatpush1.bf16.msra.mxu0 0
    %3569 = vmatprep.subr.bf16.mxu0 0
    %3570 = vmatpush1.bf16.msra.mxu0 0
    %3571 = vmatprep.mubr.bf16.mxu0 0
    %3572 = vmatmul.mubr.bf16.gmra.mrb[0].mxu0 %v3534
    %v3573 = vpop.f32.mrb[0].mxu0
    %v3574 = vadd.f32 %v3519, %v3573
    %v3575 = vpop.f32.mrb[0].mxu0
    %v3576 = vpop.f32.mrb[0].mxu0
    %v3577 = vadd.f32 %v3519, %v3576
    %v3578 = vpop.f32.mrb[0].mxu0
    %3579 = vmatprep.mubr.bf16.mxu0 0
    %3580 = vmatmul.mubr.bf16.gmra.mrb[0].mxu0 %v3537
    %v3581 = vpop.f32.mrb[0].mxu0
    %v3582 = vadd.f32 %v3519, %v3581
    %v3583 = vpop.f32.mrb[0].mxu0
    %v3584 = vpop.f32.mrb[0].mxu0
    %v3585 = vpop.f32.mrb[0].mxu0
    %3586 = vdwg.mxu0
    %v3587 = vadd.f32 %v2041, %v3574
    %v3588 = vadd.f32 %v2042, %v3577
    %v3589 = vadd.f32 %v2043, %v3582
    %s3590 = scalar_lea.vmem [#allocation8], 1
    %v3591 = vld [vmem:[%s3590] sm:$0x1]
    %s3592 = scalar_lea.vmem [#allocation10], 1
    %v3593 = vld [vmem:[%s3592] sm:$0x1]
    %v3594 = vsel %vm222, %v3587, 0.0
    %3595 = vadd.xlane.f32.xlu0 %v3594
    %v3596 = vpop.xlane.xlu0 %3595
    %v3597 = vsel %vm222, %v3588, 0.0
    %3598 = vadd.xlane.f32.xlu0 %v3597
    %v3599 = vpop.xlane.xlu0 %3598
    %v3600 = vsel %vm222, %v3589, 0.0
    %3601 = vadd.xlane.f32.xlu0 %v3600
    %v3602 = vpop.xlane.xlu0 %3601
    %v3603 = vmul.f32 %v3596, %v1755
    %v3604 = vmul.f32 %v3599, %v1755
    %v3605 = vmul.f32 %v3602, %v1755
    %v3606 = vsub.f32 %v3587, %v3603
    %v3607 = vsub.f32 %v3588, %v3604
    %v3608 = vsub.f32 %v3589, %v3605
    %v3609 = vmul.f32 %v3606, %v3606
    %v3610 = vmul.f32 %v3607, %v3607
    %v3611 = vmul.f32 %v3608, %v3608
    %v3612 = vsel %vm222, %v3609, 0.0
    %3613 = vadd.xlane.f32.xlu0 %v3612
    %v3614 = vpop.xlane.xlu0 %3613
    %v3615 = vsel %vm222, %v3610, 0.0
    %3616 = vadd.xlane.f32.xlu0 %v3615
    %v3617 = vpop.xlane.xlu0 %3616
    %v3618 = vsel %vm222, %v3611, 0.0
    %3619 = vadd.xlane.f32.xlu0 %v3618
    %v3620 = vpop.xlane.xlu0 %3619
    %v3621 = vmul.f32 %v3614, %v1755
    %v3622 = vmul.f32 %v3617, %v1755
    %v3623 = vmul.f32 %v3620, %v1755
    %v3624 = vadd.f32 %v3621, 1e-05
    %v3625 = vadd.f32 %v3622, 1e-05
    %v3626 = vadd.f32 %v3623, 1e-05
    %v3627 = vrsqrt.pop %v3624
    %v3628 = vrsqrt.pop %v3625
    %v3629 = vrsqrt.pop %v3626
    %v3630 = vmul.f32 %v3606, %v3627
    %v3631 = vmul.f32 %v3607, %v3628
    %v3632 = vmul.f32 %v3608, %v3629
    %v3634 = vlaneseq
    %v3635 = vshrl.u32 %v3634, 7
    %v3636 = vsub.s32 0, %v3635
    %v3637 = vrot.slane %v3591, %v3636
    %v3639 = vmul.f32 %v3630, %v3637
    %v3640 = vmul.f32 %v3631, %v3637
    %v3641 = vmul.f32 %v3632, %v3637
    %v3643 = vlaneseq
    %v3644 = vshrl.u32 %v3643, 7
    %v3645 = vsub.s32 0, %v3644
    %v3646 = vrot.slane %v3593, %v3645
    %v3648 = vadd.f32 %v3639, %v3646
    %v3649 = vadd.f32 %v3640, %v3646
    %v3650 = vadd.f32 %v3641, %v3646
    %s3651 = scalar_lea.vmem %s9, 16
    %v3652 = vld [vmem:[%s3651] sm:$0xf]
    %v3653 = vld [vmem:[%s3651 + $0x4] sm:$0xf]
    %v3654 = vld [vmem:[%s3651 + $0x8] sm:$0xf]
    %v3655 = vld [vmem:[%s3651 + $0xc] sm:$0xf]
    %v3656 = vpack.c.bf16 %v3649, %v3648
    %v3657 = vpack.c.bf16 %v3650, %v3650
    %s3658 = scalar_lea.vmem [#allocation14], 1
    %v3659 = vld [vmem:[%s3658] sm:$0x1]
    %v3661 = vlaneseq
    %v3662 = vshrl.u32 %v3661, 7
    %v3663 = vsub.s32 0, %v3662
    %v3664 = vrot.slane %v3659, %v3663
    %v3670 = vunpack.c.l.b16 %v3652
    %v3671 = vunpack.c.l.b16 %v3653
    %v3672 = vunpack.c.l.b16 %v3654
    %v3673 = vunpack.c.l.b16 %v3655
    %v3674 = vpack.c.b16 %v3671, %v3670
    %v3675 = vpack.c.b16 %v3673, %v3672
    %v3679 = vsel %vm222, %v3656, 0
    %v3682 = vsel %vm222, %v3657, 0
    %3684 = vmatprep.subr.bf16.mxu0 0
    %3685 = vmatpush1.bf16.msra.mxu0 %v3674
    %3686 = vmatprep.subr.bf16.mxu0 0
    %3687 = vmatpush1.bf16.msra.mxu0 %v3675
    %3688 = vmatprep.subr.bf16.mxu0 0
    %3689 = vmatpush1.bf16.msra.mxu0 0
    %3690 = vmatprep.subr.bf16.mxu0 0
    %3691 = vmatpush1.bf16.msra.mxu0 0
    %3692 = vmatprep.subr.bf16.mxu0 0
    %3693 = vmatpush1.bf16.msra.mxu0 0
    %3694 = vmatprep.subr.bf16.mxu0 0
    %3695 = vmatpush1.bf16.msra.mxu0 0
    %3696 = vmatprep.subr.bf16.mxu0 0
    %3697 = vmatpush1.bf16.msra.mxu0 0
    %3698 = vmatprep.subr.bf16.mxu0 0
    %3699 = vmatpush1.bf16.msra.mxu0 0
    %3700 = vmatprep.subr.bf16.mxu0 0
    %3701 = vmatpush1.bf16.msra.mxu0 0
    %3702 = vmatprep.subr.bf16.mxu0 0
    %3703 = vmatpush1.bf16.msra.mxu0 0
    %3704 = vmatprep.subr.bf16.mxu0 0
    %3705 = vmatpush1.bf16.msra.mxu0 0
    %3706 = vmatprep.subr.bf16.mxu0 0
    %3707 = vmatpush1.bf16.msra.mxu0 0
    %3708 = vmatprep.subr.bf16.mxu0 0
    %3709 = vmatpush1.bf16.msra.mxu0 0
    %3710 = vmatprep.subr.bf16.mxu0 0
    %3711 = vmatpush1.bf16.msra.mxu0 0
    %3712 = vmatprep.subr.bf16.mxu0 0
    %3713 = vmatpush1.bf16.msra.mxu0 0
    %3714 = vmatprep.subr.bf16.mxu0 0
    %3715 = vmatpush1.bf16.msra.mxu0 0
    %3716 = vmatprep.mubr.bf16.mxu0 0
    %3717 = vmatmul.mubr.bf16.gmra.mrb[0].mxu0 %v3679
    %v3718 = vpop.f32.mrb[0].mxu0
    %v3719 = vadd.f32 %v3664, %v3718
    %v3720 = vpop.f32.mrb[0].mxu0
    %v3721 = vpop.f32.mrb[0].mxu0
    %v3722 = vadd.f32 %v3664, %v3721
    %v3723 = vpop.f32.mrb[0].mxu0
    %3724 = vmatprep.mubr.bf16.mxu0 0
    %3725 = vmatmul.mubr.bf16.gmra.mrb[0].mxu0 %v3682
    %v3726 = vpop.f32.mrb[0].mxu0
    %v3727 = vadd.f32 %v3664, %v3726
    %v3728 = vpop.f32.mrb[0].mxu0
    %v3729 = vpop.f32.mrb[0].mxu0
    %v3730 = vpop.f32.mrb[0].mxu0
    %3731 = vdwg.mxu0
    %v3732 = vmax.f32 %v3719, 0.0
    %v3733 = vmax.f32 %v3722, 0.0
    %v3734 = vmax.f32 %v3727, 0.0
    %s3735 = scalar_lea.vmem %s11, 32
    %v3736 = vld [vmem:[%s3735] sm:$0xf]
    %v3737 = vld [vmem:[%s3735 + $0x4] sm:$0xf]
    %v3738 = vld [vmem:[%s3735 + $0x8] sm:$0xf]
    %v3739 = vld [vmem:[%s3735 + $0xc] sm:$0xf]
    %v3740 = vld [vmem:[%s3735 + $0x10] sm:$0xf]
    %v3741 = vld [vmem:[%s3735 + $0x14] sm:$0xf]
    %v3742 = vld [vmem:[%s3735 + $0x18] sm:$0xf]
    %v3743 = vld [vmem:[%s3735 + $0x1c] sm:$0xf]
    %v3744 = vpack.c.bf16 %v3733, %v3732
    %v3745 = vpack.c.bf16 %v3734, %v3734
    %s3746 = scalar_lea.vmem [#allocation16], 1
    %v3747 = vld [vmem:[%s3746] sm:$0x1]
    %v3749 = vlaneseq
    %v3750 = vshrl.u32 %v3749, 7
    %v3751 = vsub.s32 0, %v3750
    %v3752 = vrot.slane %v3747, %v3751
    %v3762 = vunpack.c.l.b16 %v3736
    %v3763 = vunpack.c.l.b16 %v3737
    %v3764 = vunpack.c.l.b16 %v3738
    %v3765 = vunpack.c.l.b16 %v3739
    %v3766 = vunpack.c.l.b16 %v3740
    %v3767 = vunpack.c.l.b16 %v3741
    %v3768 = vunpack.c.l.b16 %v3742
    %v3769 = vunpack.c.l.b16 %v3743
    %v3770 = vpack.c.b16 %v3763, %v3762
    %v3771 = vpack.c.b16 %v3765, %v3764
    %v3772 = vpack.c.b16 %v3767, %v3766
    %v3773 = vpack.c.b16 %v3769, %v3768
    %v3779 = vsel %vm1927, %v3744, 0
    %v3782 = vsel %vm1927, %v3745, 0
    %3784 = vmatprep.subr.bf16.mxu0 0
    %3785 = vmatpush1.bf16.msra.mxu0 %v3770
    %3786 = vmatprep.subr.bf16.mxu0 0
    %3787 = vmatpush1.bf16.msra.mxu0 %v3771
    %3788 = vmatprep.subr.bf16.mxu0 0
    %3789 = vmatpush1.bf16.msra.mxu0 %v3772
    %3790 = vmatprep.subr.bf16.mxu0 0
    %3791 = vmatpush1.bf16.msra.mxu0 %v3773
    %3792 = vmatprep.subr.bf16.mxu0 0
    %3793 = vmatpush1.bf16.msra.mxu0 0
    %3794 = vmatprep.subr.bf16.mxu0 0
    %3795 = vmatpush1.bf16.msra.mxu0 0
    %3796 = vmatprep.subr.bf16.mxu0 0
    %3797 = vmatpush1.bf16.msra.mxu0 0
    %3798 = vmatprep.subr.bf16.mxu0 0
    %3799 = vmatpush1.bf16.msra.mxu0 0
    %3800 = vmatprep.subr.bf16.mxu0 0
    %3801 = vmatpush1.bf16.msra.mxu0 0
    %3802 = vmatprep.subr.bf16.mxu0 0
    %3803 = vmatpush1.bf16.msra.mxu0 0
    %3804 = vmatprep.subr.bf16.mxu0 0
    %3805 = vmatpush1.bf16.msra.mxu0 0
    %3806 = vmatprep.subr.bf16.mxu0 0
    %3807 = vmatpush1.bf16.msra.mxu0 0
    %3808 = vmatprep.subr.bf16.mxu0 0
    %3809 = vmatpush1.bf16.msra.mxu0 0
    %3810 = vmatprep.subr.bf16.mxu0 0
    %3811 = vmatpush1.bf16.msra.mxu0 0
    %3812 = vmatprep.subr.bf16.mxu0 0
    %3813 = vmatpush1.bf16.msra.mxu0 0
    %3814 = vmatprep.subr.bf16.mxu0 0
    %3815 = vmatpush1.bf16.msra.mxu0 0
    %3816 = vmatprep.mubr.bf16.mxu0 0
    %3817 = vmatmul.mubr.bf16.gmra.mrb[0].mxu0 %v3779
    %v3818 = vpop.f32.mrb[0].mxu0
    %v3819 = vadd.f32 %v3752, %v3818
    %v3820 = vpop.f32.mrb[0].mxu0
    %v3821 = vpop.f32.mrb[0].mxu0
    %v3822 = vadd.f32 %v3752, %v3821
    %v3823 = vpop.f32.mrb[0].mxu0
    %3824 = vmatprep.mubr.bf16.mxu0 0
    %3825 = vmatmul.mubr.bf16.gmra.mrb[0].mxu0 %v3782
    %v3826 = vpop.f32.mrb[0].mxu0
    %v3827 = vadd.f32 %v3752, %v3826
    %v3828 = vpop.f32.mrb[0].mxu0
    %v3829 = vpop.f32.mrb[0].mxu0
    %v3830 = vpop.f32.mrb[0].mxu0
    %3831 = vdwg.mxu0
    %v3832 = vadd.f32 %v3648, %v3819
    %v3833 = vadd.f32 %v3649, %v3822
    %v3834 = vadd.f32 %v3650, %v3827
    %s3835 = scalar_lea.vmem [#allocation11], 1
    %v3836 = vld [vmem:[%s3835] sm:$0x1]
    %s3837 = scalar_lea.vmem [#allocation13], 1
    %v3838 = vld [vmem:[%s3837] sm:$0x1]
    %v3839 = vsel %vm222, %v3832, 0.0
    %3840 = vadd.xlane.f32.xlu0 %v3839
    %v3841 = vpop.xlane.xlu0 %3840
    %v3842 = vsel %vm222, %v3833, 0.0
    %3843 = vadd.xlane.f32.xlu0 %v3842
    %v3844 = vpop.xlane.xlu0 %3843
    %v3845 = vsel %vm222, %v3834, 0.0
    %3846 = vadd.xlane.f32.xlu0 %v3845
    %v3847 = vpop.xlane.xlu0 %3846
    %v3848 = vmul.f32 %v3841, %v1755
    %v3849 = vmul.f32 %v3844, %v1755
    %v3850 = vmul.f32 %v3847, %v1755
    %v3851 = vsub.f32 %v3832, %v3848
    %v3852 = vsub.f32 %v3833, %v3849
    %v3853 = vsub.f32 %v3834, %v3850
    %v3854 = vmul.f32 %v3851, %v3851
    %v3855 = vmul.f32 %v3852, %v3852
    %v3856 = vmul.f32 %v3853, %v3853
    %v3857 = vsel %vm222, %v3854, 0.0
    %3858 = vadd.xlane.f32.xlu0 %v3857
    %v3859 = vpop.xlane.xlu0 %3858
    %v3860 = vsel %vm222, %v3855, 0.0
    %3861 = vadd.xlane.f32.xlu0 %v3860
    %v3862 = vpop.xlane.xlu0 %3861
    %v3863 = vsel %vm222, %v3856, 0.0
    %3864 = vadd.xlane.f32.xlu0 %v3863
    %v3865 = vpop.xlane.xlu0 %3864
    %v3866 = vmul.f32 %v3859, %v1755
    %v3867 = vmul.f32 %v3862, %v1755
    %v3868 = vmul.f32 %v3865, %v1755
    %v3869 = vadd.f32 %v3866, 1e-05
    %v3870 = vadd.f32 %v3867, 1e-05
    %v3871 = vadd.f32 %v3868, 1e-05
    %v3872 = vrsqrt.pop %v3869
    %v3873 = vrsqrt.pop %v3870
    %v3874 = vrsqrt.pop %v3871
    %v3875 = vmul.f32 %v3851, %v3872
    %v3876 = vmul.f32 %v3852, %v3873
    %v3877 = vmul.f32 %v3853, %v3874
    %v3879 = vlaneseq
    %v3880 = vshrl.u32 %v3879, 7
    %v3881 = vsub.s32 0, %v3880
    %v3882 = vrot.slane %v3836, %v3881
    %v3884 = vmul.f32 %v3875, %v3882
    %v3885 = vmul.f32 %v3876, %v3882
    %v3886 = vmul.f32 %v3877, %v3882
    %v3888 = vlaneseq
    %v3889 = vshrl.u32 %v3888, 7
    %v3890 = vsub.s32 0, %v3889
    %v3891 = vrot.slane %v3838, %v3890
    %v3893 = vadd.f32 %v3884, %v3891
    %v3894 = vadd.f32 %v3885, %v3891
    %v3895 = vadd.f32 %v3886, %v3891
    %v3896 = vld [vmem:[%s13] sm:$0xf]
    %v3897 = vld [vmem:[%s13 + $0x4] sm:$0xf]
    %v3898 = vld [vmem:[%s13 + $0x8] sm:$0xf]
    %v3899 = vld [vmem:[%s13 + $0xc] sm:$0xf]
    %v3900 = vpack.c.bf16 %v3894, %v3893
    %v3901 = vpack.c.bf16 %v3895, %v3895
    %v3902 = vld [vmem:[%s14] sm:$0x1]
    %v3904 = vlaneseq
    %v3905 = vshrl.u32 %v3904, 7
    %v3906 = vsub.s32 0, %v3905
    %v3907 = vrot.slane %v3902, %v3906
    %v3913 = vunpack.c.l.b16 %v3896
    %v3914 = vunpack.c.l.b16 %v3897
    %v3915 = vunpack.c.l.b16 %v3898
    %v3916 = vunpack.c.l.b16 %v3899
    %v3917 = vpack.c.b16 %v3914, %v3913
    %v3918 = vpack.c.b16 %v3916, %v3915
    %v3922 = vsel %vm222, %v3900, 0
    %v3925 = vsel %vm222, %v3901, 0
    %3927 = vmatprep.subr.bf16.mxu0 0
    %3928 = vmatpush1.bf16.msra.mxu0 %v3917
    %3929 = vmatprep.subr.bf16.mxu0 0
    %3930 = vmatpush1.bf16.msra.mxu0 %v3918
    %3931 = vmatprep.subr.bf16.mxu0 0
    %3932 = vmatpush1.bf16.msra.mxu0 0
    %3933 = vmatprep.subr.bf16.mxu0 0
    %3934 = vmatpush1.bf16.msra.mxu0 0
    %3935 = vmatprep.subr.bf16.mxu0 0
    %3936 = vmatpush1.bf16.msra.mxu0 0
    %3937 = vmatprep.subr.bf16.mxu0 0
    %3938 = vmatpush1.bf16.msra.mxu0 0
    %3939 = vmatprep.subr.bf16.mxu0 0
    %3940 = vmatpush1.bf16.msra.mxu0 0
    %3941 = vmatprep.subr.bf16.mxu0 0
    %3942 = vmatpush1.bf16.msra.mxu0 0
    %3943 = vmatprep.subr.bf16.mxu0 0
    %3944 = vmatpush1.bf16.msra.mxu0 0
    %3945 = vmatprep.subr.bf16.mxu0 0
    %3946 = vmatpush1.bf16.msra.mxu0 0
    %3947 = vmatprep.subr.bf16.mxu0 0
    %3948 = vmatpush1.bf16.msra.mxu0 0
    %3949 = vmatprep.subr.bf16.mxu0 0
    %3950 = vmatpush1.bf16.msra.mxu0 0
    %3951 = vmatprep.subr.bf16.mxu0 0
    %3952 = vmatpush1.bf16.msra.mxu0 0
    %3953 = vmatprep.subr.bf16.mxu0 0
    %3954 = vmatpush1.bf16.msra.mxu0 0
    %3955 = vmatprep.subr.bf16.mxu0 0
    %3956 = vmatpush1.bf16.msra.mxu0 0
    %3957 = vmatprep.subr.bf16.mxu0 0
    %3958 = vmatpush1.bf16.msra.mxu0 0
    %3959 = vmatprep.mubr.bf16.mxu0 0
    %3960 = vmatmul.mubr.bf16.gmra.mrb[0].mxu0 %v3922
    %v3961 = vpop.f32.mrb[0].mxu0
    %v3962 = vadd.f32 %v3907, %v3961
    %v3963 = vpop.f32.mrb[0].mxu0
    %v3964 = vpop.f32.mrb[0].mxu0
    %v3965 = vadd.f32 %v3907, %v3964
    %v3966 = vpop.f32.mrb[0].mxu0
    %3967 = vmatprep.mubr.bf16.mxu0 0
    %3968 = vmatmul.mubr.bf16.gmra.mrb[0].mxu0 %v3925
    %v3969 = vpop.f32.mrb[0].mxu0
    %v3970 = vadd.f32 %v3907, %v3969
    %v3971 = vpop.f32.mrb[0].mxu0
    %v3972 = vpop.f32.mrb[0].mxu0
    %v3973 = vpop.f32.mrb[0].mxu0
    %3974 = vdwg.mxu0
    %v3975 = vmax.f32 %v3962, 0.0
    %v3976 = vmax.f32 %v3965, 0.0
    %v3977 = vmax.f32 %v3970, 0.0
    %v3978 = vld [vmem:[#allocation17] sm:$0xf]
    %v3979 = vld [vmem:[#allocation17 + $0x4] sm:$0xf]
    %v3980 = vld [vmem:[#allocation17 + $0x8] sm:$0xf]
    %v3981 = vld [vmem:[#allocation17 + $0xc] sm:$0xf]
    %v3982 = vpack.c.bf16 %v3976, %v3975
    %v3983 = vpack.c.bf16 %v3977, %v3977
    %v3984 = vld [vmem:[%s16] sm:$0x1]
    %v3986 = vlaneseq
    %v3987 = vshrl.u32 %v3986, 7
    %v3988 = vsub.s32 0, %v3987
    %v3989 = vrot.slane %v3984, %v3988
    %v3995 = vunpack.c.l.b16 %v3978
    %v3996 = vunpack.c.l.b16 %v3979
    %v3997 = vunpack.c.l.b16 %v3980
    %v3998 = vunpack.c.l.b16 %v3981
    %v3999 = vpack.c.b16 %v3996, %v3995
    %v4000 = vpack.c.b16 %v3998, %v3997
    %v4004 = vsel %vm222, %v3982, 0
    %v4007 = vsel %vm222, %v3983, 0
    %4009 = vmatprep.subr.bf16.mxu0 0
    %4010 = vmatpush1.bf16.msra.mxu0 %v3999
    %4011 = vmatprep.subr.bf16.mxu0 0
    %4012 = vmatpush1.bf16.msra.mxu0 %v4000
    %4013 = vmatprep.subr.bf16.mxu0 0
    %4014 = vmatpush1.bf16.msra.mxu0 0
    %4015 = vmatprep.subr.bf16.mxu0 0
    %4016 = vmatpush1.bf16.msra.mxu0 0
    %4017 = vmatprep.subr.bf16.mxu0 0
    %4018 = vmatpush1.bf16.msra.mxu0 0
    %4019 = vmatprep.subr.bf16.mxu0 0
    %4020 = vmatpush1.bf16.msra.mxu0 0
    %4021 = vmatprep.subr.bf16.mxu0 0
    %4022 = vmatpush1.bf16.msra.mxu0 0
    %4023 = vmatprep.subr.bf16.mxu0 0
    %4024 = vmatpush1.bf16.msra.mxu0 0
    %4025 = vmatprep.subr.bf16.mxu0 0
    %4026 = vmatpush1.bf16.msra.mxu0 0
    %4027 = vmatprep.subr.bf16.mxu0 0
    %4028 = vmatpush1.bf16.msra.mxu0 0
    %4029 = vmatprep.subr.bf16.mxu0 0
    %4030 = vmatpush1.bf16.msra.mxu0 0
    %4031 = vmatprep.subr.bf16.mxu0 0
    %4032 = vmatpush1.bf16.msra.mxu0 0
    %4033 = vmatprep.subr.bf16.mxu0 0
    %4034 = vmatpush1.bf16.msra.mxu0 0
    %4035 = vmatprep.subr.bf16.mxu0 0
    %4036 = vmatpush1.bf16.msra.mxu0 0
    %4037 = vmatprep.subr.bf16.mxu0 0
    %4038 = vmatpush1.bf16.msra.mxu0 0
    %4039 = vmatprep.subr.bf16.mxu0 0
    %4040 = vmatpush1.bf16.msra.mxu0 0
    %4041 = vmatprep.mubr.bf16.mxu0 0
    %4042 = vmatmul.mubr.bf16.gmra.mrb[0].mxu0 %v4004
    %v4043 = vpop.f32.mrb[0].mxu0
    %v4044 = vadd.f32 %v3989, %v4043
    %v4045 = vpop.f32.mrb[0].mxu0
    %v4046 = vpop.f32.mrb[0].mxu0
    %v4047 = vadd.f32 %v3989, %v4046
    %v4048 = vpop.f32.mrb[0].mxu0
    %4049 = vmatprep.mubr.bf16.mxu0 0
    %4050 = vmatmul.mubr.bf16.gmra.mrb[0].mxu0 %v4007
    %v4051 = vpop.f32.mrb[0].mxu0
    %v4052 = vadd.f32 %v3989, %v4051
    %v4053 = vpop.f32.mrb[0].mxu0
    %v4054 = vpop.f32.mrb[0].mxu0
    %v4055 = vpop.f32.mrb[0].mxu0
    %4056 = vdwg.mxu0
    %v4057 = vsel %vm222, %v4044, 0.0
    %v4058 = vrot.slane %v4057, 4
    %v4059 = vadd.f32 %v4057, %v4058
    %v4060 = vrot.slane %v4059, 2
    %v4061 = vadd.f32 %v4059, %v4060
    %v4062 = vrot.slane %v4061, 1
    %v4063 = vadd.f32 %v4061, %v4062
    %v4064 = vsel %vm222, %v4047, 0.0
    %v4065 = vrot.slane %v4064, 4
    %v4066 = vadd.f32 %v4064, %v4065
    %v4067 = vrot.slane %v4066, 2
    %v4068 = vadd.f32 %v4066, %v4067
    %v4069 = vrot.slane %v4068, 1
    %v4070 = vadd.f32 %v4068, %v4069
    %v4071 = vsel %vm222, %v4052, 0.0
    %v4072 = vrot.slane %v4071, 4
    %v4073 = vadd.f32 %v4071, %v4072
    %v4074 = vrot.slane %v4073, 2
    %v4075 = vadd.f32 %v4073, %v4074
    %v4076 = vrot.slane %v4075, 1
    %v4077 = vadd.f32 %v4075, %v4076
    %v4078 = vrcp.pop 8.0
    %v4079 = vmul.f32 %v4063, %v4078
    %v4080 = vmul.f32 %v4070, %v4078
    %v4081 = vmul.f32 %v4077, %v4078
    %vm4085 = vcmask 1041409
    %v4086 = vsel %vm4085, %v4080, %v4079
    %vm4087 = vcmask 1042434
    %v4088 = vsel %vm4087, %v4081, %v4086
    %vm4090 = vcmask 256000
    %4091 = vst.msk [vmem:[#allocation19] sm:$0x7] %vm4090, %v4088
    // Predicated region
    $region110: #{tpu_custom_call.1} parent=1 // pred_check
      _
    $region111: #{tpu_custom_call.1} parent=1 // pred_check_branch
      %4093 = sbr.rel (0) target = $region113
    $region112: #{tpu_custom_call.1} parent=1 // pred_region
      %s4095 = ssub.s32 64, 64
      %4096 = vsyncadd [#allocation4], %s4095
      %s4098 = sshll.u32 [#allocation19], 4
      %s4099 = int_to_ptr.vmem [resolvable:$true] %s4098
      %4101 = dma.vmem_to_hbm [thread:$0]  %s4099, 64, %s17, [#allocation4]
    $region113: #{tpu_custom_call.1} parent=1 // pred_fallthru
      _
    // Predicated region
    $region114: #{tpu_custom_call.1} parent=1 // pred_check
      _
    $region115: #{tpu_custom_call.1} parent=1 // pred_check_branch
      %4103 = sbr.rel (0) target = $region117
    $region116: #{tpu_custom_call.1} parent=1 // pred_region
      %4104 = dma.done [#allocation4], 64
    $region117: #{tpu_custom_call.1} parent=1 // pred_fallthru
      _
    %4105 = vsyncpa [#allocation3], 1
    %4106 = vsyncpa [#allocation6], 1
    %4107 = vsyncpa [#allocation9], 1
    %4108 = vsyncpa [#allocation12], 1
    %4109 = vsyncpa [#allocation15], 1
    %4110 = vsyncpa [#allocation18], 1
    %4111 = vsyncpa [#allocation4], 1

</llo_original>
